<compile_context>
chip_gen: v6e
topology: v6e:2x2x1
jax: 0.10.0
libtpu: 0.0.40
codegen_flags: <defaults>
</compile_context>

<pallas_src>
import jax
import jax.numpy as jnp
from jax.experimental import pallas as pl
from jax.experimental.pallas import tpu as pltpu


def _round_up(n, m):
    return ((n + m - 1) // m) * m


def _cdiv(a, b):
    return -(-a // b)


def _forward_kernel(x_ref,            # [tb, C, HW]   bf16
                    wb_ref, bb_ref,   # [C, F] bf16, [1, F] f32
                    w1_ref, b1_ref,   # [F, 1024] bf16, [1, 1024] f32
                    w2_ref, b2_ref,   # [1024, 1024] bf16, [1, 1024] f32
                    w3_ref, b3_ref,   # [1024, NCp] bf16, [1, NCp] f32
                    o_ref):           # [tb, NCp] f32
    # ---- synthetic backbone: GAP (1/(H*W) folded into wb) + linear + ReLU ----
    # Lane-axis reduce runs on the XLU (co-issues with the MXU matmuls).
    pooled = jnp.sum(x_ref[...].astype(jnp.float32), axis=-1)   # [tb, C] f32
    emb = jnp.dot(pooled.astype(jnp.bfloat16), wb_ref[...],
                  preferred_element_type=jnp.float32) + bb_ref[...]
    emb = jnp.maximum(emb, 0.0)                                  # [tb, F] f32

    # ---- classifier: Linear -> ReLU -> Linear -> ReLU -> Linear ----
    h1 = jnp.dot(emb.astype(jnp.bfloat16), w1_ref[...],
                 preferred_element_type=jnp.float32) + b1_ref[...]
    h1 = jnp.maximum(h1, 0.0)                                    # [tb, 1024] f32

    h2 = jnp.dot(h1.astype(jnp.bfloat16), w2_ref[...],
                 preferred_element_type=jnp.float32) + b2_ref[...]
    h2 = jnp.maximum(h2, 0.0)                                    # [tb, 1024] f32

    o_ref[...] = jnp.dot(h2.astype(jnp.bfloat16), w3_ref[...],
                         preferred_element_type=jnp.float32) + b3_ref[...]


def triplet_classification_forward(x, params):
    """x: [B, C, H, W] float32 (NCHW).  Returns logits [B, num_classes]."""
    B, C, H, W = x.shape
    HW = H * W
    wb, bb, w1, b1, w2, b2, w3, b3 = params
    F = wb.shape[1]
    HIDDEN = w1.shape[1]
    num_classes = w3.shape[1]

    # Fold the 1/(H*W) mean-pool scale into the backbone weight, then bf16.
    wb_bf = (wb.astype(jnp.float32) / jnp.float32(HW)).astype(jnp.bfloat16)
    w1_bf = w1.astype(jnp.bfloat16)
    w2_bf = w2.astype(jnp.bfloat16)

    # Pad the class dimension to a multiple of 128 lanes (unmasked stores).
    NCp = _round_up(num_classes, 128)
    w3_p = jnp.zeros((HIDDEN, NCp), jnp.bfloat16)
    w3_p = w3_p.at[:, :num_classes].set(w3.astype(jnp.bfloat16))
    b3_p = jnp.zeros((1, NCp), jnp.float32)
    b3_p = b3_p.at[:, :num_classes].set(
        b3.reshape(1, num_classes).astype(jnp.float32))

    bb_f = bb.astype(jnp.float32).reshape(1, F)
    b1_f = b1.astype(jnp.float32).reshape(1, HIDDEN)
    b2_f = b2.astype(jnp.float32).reshape(1, HIDDEN)

    # Activation stream in bf16: halves the dominant HBM byte term.
    x3 = x.reshape(B, C, HW).astype(jnp.bfloat16)

    # ---- tile_b from a VMEM budget (v7x has only 64 MiB per TC) ----
    weight_bytes = ((wb_bf.size + w1_bf.size + w2_bf.size + w3_p.size) * 2
                    + (bb_f.size + b1_f.size + b2_f.size + b3_p.size) * 4)
    per_row_bytes = (2 * C * HW * 2                 # x block, 2x-buffered bf16
                     + 2 * NCp * 4                  # out block, 2x-buffered f32
                     + (C + F + 2 * HIDDEN + NCp) * 4)  # f32 intermediates
    budget = 28 << 20
    avail = max(budget - weight_bytes, 8 * per_row_bytes)
    tile_cap = int(min(256, max(8, (avail // per_row_bytes) // 8 * 8)))

    # Even tile sizing: at most one 8-row sublane of batch padding overall.
    n_tiles = _cdiv(B, tile_cap)
    # v7x megacore: keep >= 2 programs when the batch allows it so
    # dimension_semantics=("parallel",) shards across both TensorCores.
    if n_tiles == 1 and _round_up(B, 8) >= 16:
        n_tiles = 2
    tile_b = _round_up(_cdiv(B, n_tiles), 8)
    Bp = n_tiles * tile_b
    if Bp != B:
        x3 = jnp.pad(x3, ((0, Bp - B), (0, 0), (0, 0)))

    grid = (n_tiles,)

    # Footprint-derived scoped-VMEM limit (v5e default is only 16 MiB).
    vmem_limit = int(min(max(2 * (weight_bytes + tile_b * per_row_bytes)
                             + (4 << 20), 16 << 20), 48 << 20))

    flops = (2 * Bp * (C * F + F * HIDDEN + HIDDEN * HIDDEN + HIDDEN * NCp)
             + Bp * C * HW)
    bytes_accessed = (
        Bp * C * HW * 2                                            # x (bf16)
        + (wb_bf.size + w1_bf.size + w2_bf.size + w3_p.size) * 2   # bf16 weights
        + (bb_f.size + b1_f.size + b2_f.size + b3_p.size) * 4      # f32 biases
        + Bp * NCp * 4                                             # logits out
    )

    def _run(single_buffer_weights):
        if single_buffer_weights:
            def wspec(shape):
                return pl.BlockSpec(shape, lambda i: (0,) * len(shape),
                                    pipeline_mode=pl.Buffered(1))
        else:
            def wspec(shape):
                return pl.BlockSpec(shape, lambda i: (0,) * len(shape))

        return pl.pallas_call(
            _forward_kernel,
            out_shape=jax.ShapeDtypeStruct((Bp, NCp), jnp.float32),
            grid=grid,
            in_specs=[
                pl.BlockSpec((tile_b, C, HW), lambda i: (i, 0, 0)),
                wspec((C, F)),
                wspec((1, F)),
                wspec((F, HIDDEN)),
                wspec((1, HIDDEN)),
                wspec((HIDDEN, HIDDEN)),
                wspec((1, HIDDEN)),
                wspec((HIDDEN, NCp)),
                wspec((1, NCp)),
            ],
            out_specs=pl.BlockSpec((tile_b, NCp), lambda i: (i, 0)),
            compiler_params=pltpu.CompilerParams(
                dimension_semantics=("parallel",),
                vmem_limit_bytes=vmem_limit,
            ),
            cost_estimate=pl.CostEstimate(
                flops=flops, transcendentals=0,
                bytes_accessed=bytes_accessed),
        )(x3, wb_bf, bb_f, w1_bf, b1_f, w2_bf, b2_f, w3_p, b3_p)

    try:
        # Resident weights single-buffered (constant index_maps, never
        # re-fetched) -> ~2.6 MiB of VMEM reclaimed for the batch tile.
        out = _run(True)
    except Exception:
        # Fallback for jax versions without BlockSpec(pipeline_mode=...).
        out = _run(False)

    return out[:B, :num_classes]


def init_params(key, in_channels, backbone_out_features, num_classes,
                hidden=1024):
    """Deterministic synthetic parameters (PyTorch-like small init)."""
    ks = jax.random.split(key, 8)

    def lin(kw, fan_in, fan_out):
        scale = 1.0 / jnp.sqrt(jnp.float32(fan_in))
        return jax.random.uniform(kw, (fan_in, fan_out), jnp.float32,
                                  -scale, scale)

    wb = lin(ks[0], in_channels, backbone_out_features)
    bb = jnp.zeros((1, backbone_out_features), jnp.float32)
    w1 = lin(ks[1], backbone_out_features, hidden)
    b1 = 0.01 * jnp.ones((1, hidden), jnp.float32)
    w2 = lin(ks[2], hidden, hidden)
    b2 = 0.01 * jnp.ones((1, hidden), jnp.float32)
    w3 = lin(ks[3], hidden, num_classes)
    b3 = jnp.zeros((1, num_classes), jnp.float32)
    return (wb, bb, w1, b1, w2, b2, w3, b3)


def _reference_forward(x, params):
    """Pure-JAX reference replicating the kernel's bf16-weight math path."""
    wb, bb, w1, b1, w2, b2, w3, b3 = params
    B, C, H, W = x.shape
    HW = H * W

    def lin(a, w, b):
        return jnp.dot(a.astype(jnp.bfloat16), w.astype(jnp.bfloat16),
                       preferred_element_type=jnp.float32) + b.reshape(1, -1)

    xb = x.reshape(B, C, HW).astype(jnp.bfloat16).astype(jnp.float32)
    pooled = jnp.sum(xb, axis=-1)                       # sum; 1/HW folded into wb
    emb = jnp.maximum(lin(pooled, wb.astype(jnp.float32) / HW, bb), 0.0)
    h1 = jnp.maximum(lin(emb, w1, b1), 0.0)
    h2 = jnp.maximum(lin(h1, w2, b2), 0.0)
    return lin(h2, w3, b3)


if __name__ == "__main__":
    key = jax.random.PRNGKey(0)
    k_x, k_p = jax.random.split(key)

    B, C, H, W = 2, 4, 16, 16
    backbone_out_features = 128
    num_classes = 64

    x = jax.random.normal(k_x, (B, C, H, W), jnp.float32)
    params = init_params(k_p, C, backbone_out_features, num_classes)

    logits = triplet_classification_forward(x, params)
    logits = jax.block_until_ready(logits)

    ref = _reference_forward(x, params)
    assert logits.shape == (B, num_classes)
    assert jnp.allclose(logits, ref, atol=2e-2, rtol=2e-2), (
        float(jnp.max(jnp.abs(logits - ref))))

    print("KERNEL_OK")
</pallas_src>

<mosaic_0001>
module attributes {stable_mosaic.version = 11 : i64} {
  func.func @_forward_kernel(%arg0: i32, %arg1: memref<8x4x256xbf16, #tpu.memory_space<vmem>>, %arg2: memref<4x128xbf16, #tpu.memory_space<vmem>>, %arg3: memref<1x128xf32, #tpu.memory_space<vmem>>, %arg4: memref<128x1024xbf16, #tpu.memory_space<vmem>>, %arg5: memref<1x1024xf32, #tpu.memory_space<vmem>>, %arg6: memref<1024x1024xbf16, #tpu.memory_space<vmem>>, %arg7: memref<1x1024xf32, #tpu.memory_space<vmem>>, %arg8: memref<1024x128xbf16, #tpu.memory_space<vmem>>, %arg9: memref<1x128xf32, #tpu.memory_space<vmem>>, %arg10: memref<8x128xf32, #tpu.memory_space<vmem>>) attributes {dimension_semantics = [#tpu.dimension_semantics<parallel>], iteration_bounds = array<i64: 1>, scalar_prefetch = 0 : i64, scratch_operands = 0 : i64, tpu.core_type = #tpu.core_type<tc>, window_params = [{transform_indices = @transform_0, window_bounds = array<i64: 8, 4, 256>}, {pipeline_mode = #tpu.pipeline_mode<synchronous>, transform_indices = @transform_1, window_bounds = array<i64: 4, 128>}, {pipeline_mode = #tpu.pipeline_mode<synchronous>, transform_indices = @transform_2, window_bounds = array<i64: 1, 128>}, {pipeline_mode = #tpu.pipeline_mode<synchronous>, transform_indices = @transform_3, window_bounds = array<i64: 128, 1024>}, {pipeline_mode = #tpu.pipeline_mode<synchronous>, transform_indices = @transform_4, window_bounds = array<i64: 1, 1024>}, {pipeline_mode = #tpu.pipeline_mode<synchronous>, transform_indices = @transform_5, window_bounds = array<i64: 1024, 1024>}, {pipeline_mode = #tpu.pipeline_mode<synchronous>, transform_indices = @transform_6, window_bounds = array<i64: 1, 1024>}, {pipeline_mode = #tpu.pipeline_mode<synchronous>, transform_indices = @transform_7, window_bounds = array<i64: 1024, 128>}, {pipeline_mode = #tpu.pipeline_mode<synchronous>, transform_indices = @transform_8, window_bounds = array<i64: 1, 128>}, {transform_indices = @transform_9, window_bounds = array<i64: 8, 128>}]} {
    %c0 = arith.constant 0 : index
    %c0_0 = arith.constant 0 : index
    %c0_1 = arith.constant 0 : index
    %0 = vector.load %arg1[%c0, %c0_0, %c0_1] : memref<8x4x256xbf16, #tpu.memory_space<vmem>>, vector<8x4x256xbf16>
    %1 = arith.extf %0 : vector<8x4x256xbf16> to vector<8x4x256xf32>
    %cst = arith.constant dense<0.000000e+00> : vector<8x4xf32>
    %2 = vector.multi_reduction <add>, %1, %cst [2] : vector<8x4x256xf32> to vector<8x4xf32>
    %3 = arith.truncf %2 : vector<8x4xf32> to vector<8x4xbf16>
    %c0_2 = arith.constant 0 : index
    %c0_3 = arith.constant 0 : index
    %4 = vector.load %arg2[%c0_2, %c0_3] : memref<4x128xbf16, #tpu.memory_space<vmem>>, vector<4x128xbf16>
    %cst_4 = arith.constant dense<0.000000e+00> : vector<8x128xf32>
    %5 = tpu.matmul %3, %4, %cst_4 {dimension_numbers = #tpu.dot_dimension_numbers<[1], [0], [0], [1], [0, 0, 1, 1], [], []>} : vector<8x4xbf16>, vector<4x128xbf16>, vector<8x128xf32> -> vector<8x128xf32>
    %c0_5 = arith.constant 0 : index
    %c0_6 = arith.constant 0 : index
    %6 = vector.load %arg3[%c0_5, %c0_6] : memref<1x128xf32, #tpu.memory_space<vmem>>, vector<1x128xf32>
    %7 = vector.broadcast %6 : vector<1x128xf32> to vector<8x128xf32>
    %8 = arith.addf %5, %7 : vector<8x128xf32>
    %cst_7 = arith.constant 0.000000e+00 : f32
    %9 = vector.broadcast %cst_7 : f32 to vector<8x128xf32>
    %10 = arith.maximumf %8, %9 : vector<8x128xf32>
    %11 = arith.truncf %10 : vector<8x128xf32> to vector<8x128xbf16>
    %c0_8 = arith.constant 0 : index
    %c0_9 = arith.constant 0 : index
    %12 = vector.load %arg4[%c0_8, %c0_9] : memref<128x1024xbf16, #tpu.memory_space<vmem>>, vector<128x1024xbf16>
    %cst_10 = arith.constant dense<0.000000e+00> : vector<8x1024xf32>
    %13 = tpu.matmul %11, %12, %cst_10 {dimension_numbers = #tpu.dot_dimension_numbers<[1], [0], [0], [1], [0, 0, 1, 1], [], []>} : vector<8x128xbf16>, vector<128x1024xbf16>, vector<8x1024xf32> -> vector<8x1024xf32>
    %c0_11 = arith.constant 0 : index
    %c0_12 = arith.constant 0 : index
    %14 = vector.load %arg5[%c0_11, %c0_12] : memref<1x1024xf32, #tpu.memory_space<vmem>>, vector<1x1024xf32>
    %15 = vector.broadcast %14 : vector<1x1024xf32> to vector<8x1024xf32>
    %16 = arith.addf %13, %15 : vector<8x1024xf32>
    %cst_13 = arith.constant 0.000000e+00 : f32
    %17 = vector.broadcast %cst_13 : f32 to vector<8x1024xf32>
    %18 = arith.maximumf %16, %17 : vector<8x1024xf32>
    %19 = arith.truncf %18 : vector<8x1024xf32> to vector<8x1024xbf16>
    %c0_14 = arith.constant 0 : index
    %c0_15 = arith.constant 0 : index
    %20 = vector.load %arg6[%c0_14, %c0_15] : memref<1024x1024xbf16, #tpu.memory_space<vmem>>, vector<1024x1024xbf16>
    %cst_16 = arith.constant dense<0.000000e+00> : vector<8x1024xf32>
    %21 = tpu.matmul %19, %20, %cst_16 {dimension_numbers = #tpu.dot_dimension_numbers<[1], [0], [0], [1], [0, 0, 1, 1], [], []>} : vector<8x1024xbf16>, vector<1024x1024xbf16>, vector<8x1024xf32> -> vector<8x1024xf32>
    %c0_17 = arith.constant 0 : index
    %c0_18 = arith.constant 0 : index
    %22 = vector.load %arg7[%c0_17, %c0_18] : memref<1x1024xf32, #tpu.memory_space<vmem>>, vector<1x1024xf32>
    %23 = vector.broadcast %22 : vector<1x1024xf32> to vector<8x1024xf32>
    %24 = arith.addf %21, %23 : vector<8x1024xf32>
    %cst_19 = arith.constant 0.000000e+00 : f32
    %25 = vector.broadcast %cst_19 : f32 to vector<8x1024xf32>
    %26 = arith.maximumf %24, %25 : vector<8x1024xf32>
    %27 = arith.truncf %26 : vector<8x1024xf32> to vector<8x1024xbf16>
    %c0_20 = arith.constant 0 : index
    %c0_21 = arith.constant 0 : index
    %28 = vector.load %arg8[%c0_20, %c0_21] : memref<1024x128xbf16, #tpu.memory_space<vmem>>, vector<1024x128xbf16>
    %cst_22 = arith.constant dense<0.000000e+00> : vector<8x128xf32>
    %29 = tpu.matmul %27, %28, %cst_22 {dimension_numbers = #tpu.dot_dimension_numbers<[1], [0], [0], [1], [0, 0, 1, 1], [], []>} : vector<8x1024xbf16>, vector<1024x128xbf16>, vector<8x128xf32> -> vector<8x128xf32>
    %c0_23 = arith.constant 0 : index
    %c0_24 = arith.constant 0 : index
    %30 = vector.load %arg9[%c0_23, %c0_24] : memref<1x128xf32, #tpu.memory_space<vmem>>, vector<1x128xf32>
    %31 = vector.broadcast %30 : vector<1x128xf32> to vector<8x128xf32>
    %32 = arith.addf %29, %31 : vector<8x128xf32>
    %c0_25 = arith.constant 0 : index
    %c0_26 = arith.constant 0 : index
    %33 = vector.load %arg10[%c0_25, %c0_26] : memref<8x128xf32, #tpu.memory_space<vmem>>, vector<8x128xf32>
    tpu.vector_store %arg10[%c0_25, %c0_26], %32 {strides = array<i32>} : memref<8x128xf32, #tpu.memory_space<vmem>>, vector<8x128xf32>,
    return
  }
  func.func @transform_0(%arg0: i32) -> (i32, i32, i32) {
    %c0_i32 = arith.constant 0 : i32
    %c0_i32_0 = arith.constant 0 : i32
    %c0_i32_1 = arith.constant 0 : i32
    return %arg0, %c0_i32, %c0_i32_0 : i32, i32, i32
  }
  func.func @transform_1(%arg0: i32) -> (i32, i32) {
    %c0_i32 = arith.constant 0 : i32
    %c0_i32_0 = arith.constant 0 : i32
    %c0_i32_1 = arith.constant 0 : i32
    return %c0_i32, %c0_i32_0 : i32, i32
  }
  func.func @transform_2(%arg0: i32) -> (i32, i32) {
    %c0_i32 = arith.constant 0 : i32
    %c0_i32_0 = arith.constant 0 : i32
    %c0_i32_1 = arith.constant 0 : i32
    return %c0_i32, %c0_i32_0 : i32, i32
  }
  func.func @transform_3(%arg0: i32) -> (i32, i32) {
    %c0_i32 = arith.constant 0 : i32
    %c0_i32_0 = arith.constant 0 : i32
    %c0_i32_1 = arith.constant 0 : i32
    return %c0_i32, %c0_i32_0 : i32, i32
  }
  func.func @transform_4(%arg0: i32) -> (i32, i32) {
    %c0_i32 = arith.constant 0 : i32
    %c0_i32_0 = arith.constant 0 : i32
    %c0_i32_1 = arith.constant 0 : i32
    return %c0_i32, %c0_i32_0 : i32, i32
  }
  func.func @transform_5(%arg0: i32) -> (i32, i32) {
    %c0_i32 = arith.constant 0 : i32
    %c0_i32_0 = arith.constant 0 : i32
    %c0_i32_1 = arith.constant 0 : i32
    return %c0_i32, %c0_i32_0 : i32, i32
  }
  func.func @transform_6(%arg0: i32) -> (i32, i32) {
    %c0_i32 = arith.constant 0 : i32
    %c0_i32_0 = arith.constant 0 : i32
    %c0_i32_1 = arith.constant 0 : i32
    return %c0_i32, %c0_i32_0 : i32, i32
  }
  func.func @transform_7(%arg0: i32) -> (i32, i32) {
    %c0_i32 = arith.constant 0 : i32
    %c0_i32_0 = arith.constant 0 : i32
    %c0_i32_1 = arith.constant 0 : i32
    return %c0_i32, %c0_i32_0 : i32, i32
  }
  func.func @transform_8(%arg0: i32) -> (i32, i32) {
    %c0_i32 = arith.constant 0 : i32
    %c0_i32_0 = arith.constant 0 : i32
    %c0_i32_1 = arith.constant 0 : i32
    return %c0_i32, %c0_i32_0 : i32, i32
  }
  func.func @transform_9(%arg0: i32) -> (i32, i32) {
    %c0_i32 = arith.constant 0 : i32
    %c0_i32_0 = arith.constant 0 : i32
    return %arg0, %c0_i32 : i32, i32
  }
}

module attributes {stable_mosaic.version = 11 : i64} {
  func.func @_forward_kernel(%arg0: i32, %arg1: memref<8x4x256xbf16, #tpu.memory_space<vmem>>, %arg2: memref<4x128xbf16, #tpu.memory_space<vmem>>, %arg3: memref<1x128xf32, #tpu.memory_space<vmem>>, %arg4: memref<128x1024xbf16, #tpu.memory_space<vmem>>, %arg5: memref<1x1024xf32, #tpu.memory_space<vmem>>, %arg6: memref<1024x1024xbf16, #tpu.memory_space<vmem>>, %arg7: memref<1x1024xf32, #tpu.memory_space<vmem>>, %arg8: memref<1024x128xbf16, #tpu.memory_space<vmem>>, %arg9: memref<1x128xf32, #tpu.memory_space<vmem>>, %arg10: memref<8x128xf32, #tpu.memory_space<vmem>>) attributes {dimension_semantics = [#tpu.dimension_semantics<parallel>], iteration_bounds = array<i64: 1>, scalar_prefetch = 0 : i64, scratch_operands = 0 : i64, tpu.core_type = #tpu.core_type<tc>, window_params = [{transform_indices = @transform_0, window_bounds = array<i64: 8, 4, 256>}, {pipeline_mode = #tpu.pipeline_mode<synchronous>, transform_indices = @transform_1, window_bounds = array<i64: 4, 128>}, {pipeline_mode = #tpu.pipeline_mode<synchronous>, transform_indices = @transform_2, window_bounds = array<i64: 1, 128>}, {pipeline_mode = #tpu.pipeline_mode<synchronous>, transform_indices = @transform_3, window_bounds = array<i64: 128, 1024>}, {pipeline_mode = #tpu.pipeline_mode<synchronous>, transform_indices = @transform_4, window_bounds = array<i64: 1, 1024>}, {pipeline_mode = #tpu.pipeline_mode<synchronous>, transform_indices = @transform_5, window_bounds = array<i64: 1024, 1024>}, {pipeline_mode = #tpu.pipeline_mode<synchronous>, transform_indices = @transform_6, window_bounds = array<i64: 1, 1024>}, {pipeline_mode = #tpu.pipeline_mode<synchronous>, transform_indices = @transform_7, window_bounds = array<i64: 1024, 128>}, {pipeline_mode = #tpu.pipeline_mode<synchronous>, transform_indices = @transform_8, window_bounds = array<i64: 1, 128>}, {transform_indices = @transform_9, window_bounds = array<i64: 8, 128>}]} {
    %c0 = arith.constant 0 : index
    %c0_0 = arith.constant 0 : index
    %c0_1 = arith.constant 0 : index
    %0 = vector.load %arg1[%c0, %c0_0, %c0_1] : memref<8x4x256xbf16, #tpu.memory_space<vmem>>, vector<8x4x256xbf16>
    %1 = arith.extf %0 : vector<8x4x256xbf16> to vector<8x4x256xf32>
    %cst = arith.constant dense<0.000000e+00> : vector<8x4xf32>
    %2 = vector.multi_reduction <add>, %1, %cst [2] : vector<8x4x256xf32> to vector<8x4xf32>
    %3 = arith.truncf %2 : vector<8x4xf32> to vector<8x4xbf16>
    %c0_2 = arith.constant 0 : index
    %c0_3 = arith.constant 0 : index
    %4 = vector.load %arg2[%c0_2, %c0_3] : memref<4x128xbf16, #tpu.memory_space<vmem>>, vector<4x128xbf16>
    %cst_4 = arith.constant dense<0.000000e+00> : vector<8x128xf32>
    %5 = tpu.matmul %3, %4, %cst_4 {dimension_numbers = #tpu.dot_dimension_numbers<[1], [0], [0], [1], [0, 0, 1, 1], [], []>} : vector<8x4xbf16>, vector<4x128xbf16>, vector<8x128xf32> -> vector<8x128xf32>
    %c0_5 = arith.constant 0 : index
    %c0_6 = arith.constant 0 : index
    %6 = vector.load %arg3[%c0_5, %c0_6] : memref<1x128xf32, #tpu.memory_space<vmem>>, vector<1x128xf32>
    %7 = vector.broadcast %6 : vector<1x128xf32> to vector<8x128xf32>
    %8 = arith.addf %5, %7 : vector<8x128xf32>
    %cst_7 = arith.constant 0.000000e+00 : f32
    %9 = vector.broadcast %cst_7 : f32 to vector<8x128xf32>
    %10 = arith.maximumf %8, %9 : vector<8x128xf32>
    %11 = arith.truncf %10 : vector<8x128xf32> to vector<8x128xbf16>
    %c0_8 = arith.constant 0 : index
    %c0_9 = arith.constant 0 : index
    %12 = vector.load %arg4[%c0_8, %c0_9] : memref<128x1024xbf16, #tpu.memory_space<vmem>>, vector<128x1024xbf16>
    %cst_10 = arith.constant dense<0.000000e+00> : vector<8x1024xf32>
    %13 = tpu.matmul %11, %12, %cst_10 {dimension_numbers = #tpu.dot_dimension_numbers<[1], [0], [0], [1], [0, 0, 1, 1], [], []>} : vector<8x128xbf16>, vector<128x1024xbf16>, vector<8x1024xf32> -> vector<8x1024xf32>
    %c0_11 = arith.constant 0 : index
    %c0_12 = arith.constant 0 : index
    %14 = vector.load %arg5[%c0_11, %c0_12] : memref<1x1024xf32, #tpu.memory_space<vmem>>, vector<1x1024xf32>
    %15 = vector.broadcast %14 : vector<1x1024xf32> to vector<8x1024xf32>
    %16 = arith.addf %13, %15 : vector<8x1024xf32>
    %cst_13 = arith.constant 0.000000e+00 : f32
    %17 = vector.broadcast %cst_13 : f32 to vector<8x1024xf32>
    %18 = arith.maximumf %16, %17 : vector<8x1024xf32>
    %19 = arith.truncf %18 : vector<8x1024xf32> to vector<8x1024xbf16>
    %c0_14 = arith.constant 0 : index
    %c0_15 = arith.constant 0 : index
    %20 = vector.load %arg6[%c0_14, %c0_15] : memref<1024x1024xbf16, #tpu.memory_space<vmem>>, vector<1024x1024xbf16>
    %cst_16 = arith.constant dense<0.000000e+00> : vector<8x1024xf32>
    %21 = tpu.matmul %19, %20, %cst_16 {dimension_numbers = #tpu.dot_dimension_numbers<[1], [0], [0], [1], [0, 0, 1, 1], [], []>} : vector<8x1024xbf16>, vector<1024x1024xbf16>, vector<8x1024xf32> -> vector<8x1024xf32>
    %c0_17 = arith.constant 0 : index
    %c0_18 = arith.constant 0 : index
    %22 = vector.load %arg7[%c0_17, %c0_18] : memref<1x1024xf32, #tpu.memory_space<vmem>>, vector<1x1024xf32>
    %23 = vector.broadcast %22 : vector<1x1024xf32> to vector<8x1024xf32>
    %24 = arith.addf %21, %23 : vector<8x1024xf32>
    %cst_19 = arith.constant 0.000000e+00 : f32
    %25 = vector.broadcast %cst_19 : f32 to vector<8x1024xf32>
    %26 = arith.maximumf %24, %25 : vector<8x1024xf32>
    %27 = arith.truncf %26 : vector<8x1024xf32> to vector<8x1024xbf16>
    %c0_20 = arith.constant 0 : index
    %c0_21 = arith.constant 0 : index
    %28 = vector.load %arg8[%c0_20, %c0_21] : memref<1024x128xbf16, #tpu.memory_space<vmem>>, vector<1024x128xbf16>
    %cst_22 = arith.constant dense<0.000000e+00> : vector<8x128xf32>
    %29 = tpu.matmul %27, %28, %cst_22 {dimension_numbers = #tpu.dot_dimension_numbers<[1], [0], [0], [1], [0, 0, 1, 1], [], []>} : vector<8x1024xbf16>, vector<1024x128xbf16>, vector<8x128xf32> -> vector<8x128xf32>
    %c0_23 = arith.constant 0 : index
    %c0_24 = arith.constant 0 : index
    %30 = vector.load %arg9[%c0_23, %c0_24] : memref<1x128xf32, #tpu.memory_space<vmem>>, vector<1x128xf32>
    %31 = vector.broadcast %30 : vector<1x128xf32> to vector<8x128xf32>
    %32 = arith.addf %29, %31 : vector<8x128xf32>
    %c0_25 = arith.constant 0 : index
    %c0_26 = arith.constant 0 : index
    %33 = vector.load %arg10[%c0_25, %c0_26] : memref<8x128xf32, #tpu.memory_space<vmem>>, vector<8x128xf32>
    tpu.vector_store %arg10[%c0_25, %c0_26], %32 {strides = array<i32>} : memref<8x128xf32, #tpu.memory_space<vmem>>, vector<8x128xf32>,
    return
  }
  func.func @transform_0(%arg0: i32) -> (i32, i32, i32) {
    %c0_i32 = arith.constant 0 : i32
    %c0_i32_0 = arith.constant 0 : i32
    %c0_i32_1 = arith.constant 0 : i32
    return %arg0, %c0_i32, %c0_i32_0 : i32, i32, i32
  }
  func.func @transform_1(%arg0: i32) -> (i32, i32) {
    %c0_i32 = arith.constant 0 : i32
    %c0_i32_0 = arith.constant 0 : i32
    %c0_i32_1 = arith.constant 0 : i32
    return %c0_i32, %c0_i32_0 : i32, i32
  }
  func.func @transform_2(%arg0: i32) -> (i32, i32) {
    %c0_i32 = arith.constant 0 : i32
    %c0_i32_0 = arith.constant 0 : i32
    %c0_i32_1 = arith.constant 0 : i32
    return %c0_i32, %c0_i32_0 : i32, i32
  }
  func.func @transform_3(%arg0: i32) -> (i32, i32) {
    %c0_i32 = arith.constant 0 : i32
    %c0_i32_0 = arith.constant 0 : i32
    %c0_i32_1 = arith.constant 0 : i32
    return %c0_i32, %c0_i32_0 : i32, i32
  }
  func.func @transform_4(%arg0: i32) -> (i32, i32) {
    %c0_i32 = arith.constant 0 : i32
    %c0_i32_0 = arith.constant 0 : i32
    %c0_i32_1 = arith.constant 0 : i32
    return %c0_i32, %c0_i32_0 : i32, i32
  }
  func.func @transform_5(%arg0: i32) -> (i32, i32) {
    %c0_i32 = arith.constant 0 : i32
    %c0_i32_0 = arith.constant 0 : i32
    %c0_i32_1 = arith.constant 0 : i32
    return %c0_i32, %c0_i32_0 : i32, i32
  }
  func.func @transform_6(%arg0: i32) -> (i32, i32) {
    %c0_i32 = arith.constant 0 : i32
    %c0_i32_0 = arith.constant 0 : i32
    %c0_i32_1 = arith.constant 0 : i32
    return %c0_i32, %c0_i32_0 : i32, i32
  }
  func.func @transform_7(%arg0: i32) -> (i32, i32) {
    %c0_i32 = arith.constant 0 : i32
    %c0_i32_0 = arith.constant 0 : i32
    %c0_i32_1 = arith.constant 0 : i32
    return %c0_i32, %c0_i32_0 : i32, i32
  }
  func.func @transform_8(%arg0: i32) -> (i32, i32) {
    %c0_i32 = arith.constant 0 : i32
    %c0_i32_0 = arith.constant 0 : i32
    %c0_i32_1 = arith.constant 0 : i32
    return %c0_i32, %c0_i32_0 : i32, i32
  }
  func.func @transform_9(%arg0: i32) -> (i32, i32) {
    %c0_i32 = arith.constant 0 : i32
    %c0_i32_0 = arith.constant 0 : i32
    return %arg0, %c0_i32 : i32, i32
  }
}

</mosaic_0001>

<llo_original>
// kernel: tpu_custom_call.1
$region0: #{tpu_custom_call.1}
  #allocation0 [shape = 'u32[]', space=smem, size = 0x4, offset = 0x4, fixed_abs, tag = 'smem constant byte address 0x4 - core index']
  #allocation1 [shape = 'u32[144,128]{1,0:T(1,128)}', space=vmem, size = 0x12000, scoped, tag = 'internal scratch']
  %s0 = inlined_call_operand.hbm [shape: bf16[8,4,256], index: 0, kind: input, shape index: {}]
  %s1 = inlined_call_operand.hbm [shape: bf16[4,128], index: 1, kind: input, shape index: {}]
  %s2 = inlined_call_operand.hbm [shape: f32[1,128], index: 2, kind: input, shape index: {}]
  %s3 = inlined_call_operand.hbm [shape: bf16[128,1024], index: 3, kind: input, shape index: {}]
  %s4 = inlined_call_operand.hbm [shape: f32[1,1024], index: 4, kind: input, shape index: {}]
  %s5 = inlined_call_operand.hbm [shape: bf16[1024,1024], index: 5, kind: input, shape index: {}]
  %s6 = inlined_call_operand.hbm [shape: f32[1,1024], index: 6, kind: input, shape index: {}]
  %s7 = inlined_call_operand.hbm [shape: bf16[1024,128], index: 7, kind: input, shape index: {}]
  %s8 = inlined_call_operand.hbm [shape: f32[1,128], index: 8, kind: input, shape index: {}]
  %s9 = inlined_call_operand.hbm [shape: f32[8,128], index: 9, kind: output, shape index: {}]
  %s10 = sld [smem:[#allocation0]]
  $region82: #{tpu_custom_call.1} parent=0
    _
  %s12 = ssub.s32 1, %s10
  %s13 = scalar_select 0, %s12, %s10
  $region1: #{tpu_custom_call.1} parent=0
    #allocation2 [shape = 'u8[16384]{0}', space=vmem, size = 0x4000, scoped, tag = 'input window, operand 0, single buffered']
    #allocation3 [shape = 's32[1]{0}', space=sflag, size = 0x4, scoped, tag = 'scoped memory for tpu_custom_call.1']
    #allocation4 [shape = 's32[1]{0}', space=sflag, size = 0x4, scoped, tag = 'scoped memory for tpu_custom_call.1']
    #allocation5 [shape = 'u8[1024]{0}', space=vmem, size = 0x400, scoped, tag = 'input window, operand 1, single buffered']
    #allocation6 [shape = 's32[1]{0}', space=sflag, size = 0x4, scoped, tag = 'scoped memory for tpu_custom_call.1']
    #allocation7 [shape = 'u8[512]{0}', space=vmem, size = 0x400, scoped, tag = 'input window, operand 2, single buffered']
    #allocation8 [shape = 'u8[262144]{0}', space=vmem, size = 0x40000, scoped, tag = 'input window, operand 3, single buffered']
    #allocation9 [shape = 's32[1]{0}', space=sflag, size = 0x4, scoped, tag = 'scoped memory for tpu_custom_call.1']
    #allocation10 [shape = 'u8[4096]{0}', space=vmem, size = 0x1000, scoped, tag = 'input window, operand 4, single buffered']
    #allocation11 [shape = 'u8[2097152]{0}', space=vmem, size = 0x200000, scoped, tag = 'input window, operand 5, single buffered']
    #allocation12 [shape = 's32[1]{0}', space=sflag, size = 0x4, scoped, tag = 'scoped memory for tpu_custom_call.1']
    #allocation13 [shape = 'u8[4096]{0}', space=vmem, size = 0x1000, scoped, tag = 'input window, operand 6, single buffered']
    #allocation14 [shape = 'u8[262144]{0}', space=vmem, size = 0x40000, scoped, tag = 'input window, operand 7, single buffered']
    #allocation15 [shape = 's32[1]{0}', space=sflag, size = 0x4, scoped, tag = 'scoped memory for tpu_custom_call.1']
    #allocation16 [shape = 'u8[512]{0}', space=vmem, size = 0x400, scoped, tag = 'input window, operand 8, single buffered']
    #allocation17 [shape = 'u8[4096]{0}', space=vmem, size = 0x1000, scoped, tag = 'output window, operand 0, single buffered']
    %14 = vsyncpa [#allocation3], 0
    %15 = vsyncpa [#allocation6], 0
    %16 = vsyncpa [#allocation9], 0
    %17 = vsyncpa [#allocation12], 0
    %18 = vsyncpa [#allocation15], 0
    %19 = vsyncpa [#allocation4], 0
    // Predicated region
    $region2: #{tpu_custom_call.1} parent=1 // pred_check
      _
    $region3: #{tpu_custom_call.1} parent=1 // pred_check_branch
      %21 = sbr.rel (0) target = $region5
    $region4: #{tpu_custom_call.1} parent=1 // pred_region
      %s23 = ssub.s32 512, 512
      %24 = vsyncadd [#allocation3], %s23
      %s25 = sshll.u32 [#allocation2], 4
      %s26 = int_to_ptr.vmem [resolvable:$true] %s25
      %31 = dma.hbm_to_vmem [thread:$0]  %s0, 512, %s26, [#allocation3], 64, 64, 4
    $region5: #{tpu_custom_call.1} parent=1 // pred_fallthru
      _
    // Predicated region
    $region6: #{tpu_custom_call.1} parent=1 // pred_check
      _
    $region7: #{tpu_custom_call.1} parent=1 // pred_check_branch
      %33 = sbr.rel (0) target = $region9
    $region8: #{tpu_custom_call.1} parent=1 // pred_region
      %s35 = ssub.s32 32, 32
      %36 = vsyncadd [#allocation6], %s35
      %s38 = sshll.u32 [#allocation5], 4
      %s39 = int_to_ptr.vmem [resolvable:$true] %s38
      %41 = dma.hbm_to_vmem [thread:$0]  %s1, 32, %s39, [#allocation6]
    $region9: #{tpu_custom_call.1} parent=1 // pred_fallthru
      _
    // Predicated region
    $region10: #{tpu_custom_call.1} parent=1 // pred_check
      _
    $region11: #{tpu_custom_call.1} parent=1 // pred_check_branch
      %43 = sbr.rel (0) target = $region13
    $region12: #{tpu_custom_call.1} parent=1 // pred_region
      %s45 = ssub.s32 16, 16
      %46 = vsyncadd [#allocation6], %s45
      %s48 = sshll.u32 [#allocation7], 4
      %s49 = int_to_ptr.vmem [resolvable:$true] %s48
      %51 = dma.hbm_to_vmem [thread:$0]  %s2, 16, %s49, [#allocation6]
    $region13: #{tpu_custom_call.1} parent=1 // pred_fallthru
      _
    // Predicated region
    $region14: #{tpu_custom_call.1} parent=1 // pred_check
      _
    $region15: #{tpu_custom_call.1} parent=1 // pred_check_branch
      %53 = sbr.rel (0) target = $region17
    $region16: #{tpu_custom_call.1} parent=1 // pred_region
      %s55 = ssub.s32 8192, 8192
      %56 = vsyncadd [#allocation9], %s55
      %s57 = sshll.u32 [#allocation8], 4
      %s58 = int_to_ptr.vmem [resolvable:$true] %s57
      %63 = dma.hbm_to_vmem [thread:$0]  %s3, 8192, %s58, [#allocation9], 512, 512, 32
    $region17: #{tpu_custom_call.1} parent=1 // pred_fallthru
      _
    // Predicated region
    $region18: #{tpu_custom_call.1} parent=1 // pred_check
      _
    $region19: #{tpu_custom_call.1} parent=1 // pred_check_branch
      %65 = sbr.rel (0) target = $region21
    $region20: #{tpu_custom_call.1} parent=1 // pred_region
      %s67 = ssub.s32 128, 128
      %68 = vsyncadd [#allocation9], %s67
      %s70 = sshll.u32 [#allocation10], 4
      %s71 = int_to_ptr.vmem [resolvable:$true] %s70
      %73 = dma.hbm_to_vmem [thread:$0]  %s4, 128, %s71, [#allocation9]
    $region21: #{tpu_custom_call.1} parent=1 // pred_fallthru
      _
    // Predicated region
    $region22: #{tpu_custom_call.1} parent=1 // pred_check
      _
    $region23: #{tpu_custom_call.1} parent=1 // pred_check_branch
      %75 = sbr.rel (0) target = $region25
    $region24: #{tpu_custom_call.1} parent=1 // pred_region
      %s77 = ssub.s32 65536, 65536
      %78 = vsyncadd [#allocation12], %s77
      %s79 = sshll.u32 [#allocation11], 4
      %s80 = int_to_ptr.vmem [resolvable:$true] %s79
      %85 = dma.hbm_to_vmem [thread:$0]  %s5, 65536, %s80, [#allocation12], 512, 512, 32
    $region25: #{tpu_custom_call.1} parent=1 // pred_fallthru
      _
    // Predicated region
    $region26: #{tpu_custom_call.1} parent=1 // pred_check
      _
    $region27: #{tpu_custom_call.1} parent=1 // pred_check_branch
      %87 = sbr.rel (0) target = $region29
    $region28: #{tpu_custom_call.1} parent=1 // pred_region
      %s89 = ssub.s32 128, 128
      %90 = vsyncadd [#allocation12], %s89
      %s92 = sshll.u32 [#allocation13], 4
      %s93 = int_to_ptr.vmem [resolvable:$true] %s92
      %95 = dma.hbm_to_vmem [thread:$0]  %s6, 128, %s93, [#allocation12]
    $region29: #{tpu_custom_call.1} parent=1 // pred_fallthru
      _
    // Predicated region
    $region30: #{tpu_custom_call.1} parent=1 // pred_check
      _
    $region31: #{tpu_custom_call.1} parent=1 // pred_check_branch
      %97 = sbr.rel (0) target = $region33
    $region32: #{tpu_custom_call.1} parent=1 // pred_region
      %s99 = ssub.s32 8192, 8192
      %100 = vsyncadd [#allocation15], %s99
      %s101 = sshll.u32 [#allocation14], 4
      %s102 = int_to_ptr.vmem [resolvable:$true] %s101
      %107 = dma.hbm_to_vmem [thread:$0]  %s7, 8192, %s102, [#allocation15], 64, 64, 4
    $region33: #{tpu_custom_call.1} parent=1 // pred_fallthru
      _
    // Predicated region
    $region34: #{tpu_custom_call.1} parent=1 // pred_check
      _
    $region35: #{tpu_custom_call.1} parent=1 // pred_check_branch
      %109 = sbr.rel (0) target = $region37
    $region36: #{tpu_custom_call.1} parent=1 // pred_region
      %s111 = ssub.s32 16, 16
      %112 = vsyncadd [#allocation15], %s111
      %s114 = sshll.u32 [#allocation16], 4
      %s115 = int_to_ptr.vmem [resolvable:$true] %s114
      %117 = dma.hbm_to_vmem [thread:$0]  %s8, 16, %s115, [#allocation15]
    $region37: #{tpu_custom_call.1} parent=1 // pred_fallthru
      _
    // Predicated region
    $region38: #{tpu_custom_call.1} parent=1 // pred_check
      _
    $region39: #{tpu_custom_call.1} parent=1 // pred_check_branch
      %119 = sbr.rel (0) target = $region41
    $region40: #{tpu_custom_call.1} parent=1 // pred_region
      %120 = dma.done [#allocation3], 512
    $region41: #{tpu_custom_call.1} parent=1 // pred_fallthru
      _
    // Predicated region
    $region42: #{tpu_custom_call.1} parent=1 // pred_check
      _
    $region43: #{tpu_custom_call.1} parent=1 // pred_check_branch
      %122 = sbr.rel (0) target = $region45
    $region44: #{tpu_custom_call.1} parent=1 // pred_region
      %123 = dma.done [#allocation6], 32
    $region45: #{tpu_custom_call.1} parent=1 // pred_fallthru
      _
    // Predicated region
    $region46: #{tpu_custom_call.1} parent=1 // pred_check
      _
    $region47: #{tpu_custom_call.1} parent=1 // pred_check_branch
      %125 = sbr.rel (0) target = $region49
    $region48: #{tpu_custom_call.1} parent=1 // pred_region
      %126 = dma.done [#allocation6], 16
    $region49: #{tpu_custom_call.1} parent=1 // pred_fallthru
      _
    // Predicated region
    $region50: #{tpu_custom_call.1} parent=1 // pred_check
      _
    $region51: #{tpu_custom_call.1} parent=1 // pred_check_branch
      %128 = sbr.rel (0) target = $region53
    $region52: #{tpu_custom_call.1} parent=1 // pred_region
      %129 = dma.done [#allocation9], 8192
    $region53: #{tpu_custom_call.1} parent=1 // pred_fallthru
      _
    // Predicated region
    $region54: #{tpu_custom_call.1} parent=1 // pred_check
      _
    $region55: #{tpu_custom_call.1} parent=1 // pred_check_branch
      %131 = sbr.rel (0) target = $region57
    $region56: #{tpu_custom_call.1} parent=1 // pred_region
      %132 = dma.done [#allocation9], 128
    $region57: #{tpu_custom_call.1} parent=1 // pred_fallthru
      _
    // Predicated region
    $region58: #{tpu_custom_call.1} parent=1 // pred_check
      _
    $region59: #{tpu_custom_call.1} parent=1 // pred_check_branch
      %134 = sbr.rel (0) target = $region61
    $region60: #{tpu_custom_call.1} parent=1 // pred_region
      %135 = dma.done [#allocation12], 65536
    $region61: #{tpu_custom_call.1} parent=1 // pred_fallthru
      _
    // Predicated region
    $region62: #{tpu_custom_call.1} parent=1 // pred_check
      _
    $region63: #{tpu_custom_call.1} parent=1 // pred_check_branch
      %137 = sbr.rel (0) target = $region65
    $region64: #{tpu_custom_call.1} parent=1 // pred_region
      %138 = dma.done [#allocation12], 128
    $region65: #{tpu_custom_call.1} parent=1 // pred_fallthru
      _
    // Predicated region
    $region66: #{tpu_custom_call.1} parent=1 // pred_check
      _
    $region67: #{tpu_custom_call.1} parent=1 // pred_check_branch
      %140 = sbr.rel (0) target = $region69
    $region68: #{tpu_custom_call.1} parent=1 // pred_region
      %141 = dma.done [#allocation15], 8192
    $region69: #{tpu_custom_call.1} parent=1 // pred_fallthru
      _
    // Predicated region
    $region70: #{tpu_custom_call.1} parent=1 // pred_check
      _
    $region71: #{tpu_custom_call.1} parent=1 // pred_check_branch
      %143 = sbr.rel (0) target = $region73
    $region72: #{tpu_custom_call.1} parent=1 // pred_region
      %144 = dma.done [#allocation15], 16
    $region73: #{tpu_custom_call.1} parent=1 // pred_fallthru
      _
    %v146 = vld [vmem:[#allocation2] sm:$0xf]
    %v147 = vld [vmem:[#allocation2 + $0x4] sm:$0xf]
    %v148 = vld [vmem:[#allocation2 + $0x8] sm:$0xf]
    %v149 = vld [vmem:[#allocation2 + $0xc] sm:$0xf]
    %v150 = vld [vmem:[#allocation2 + $0x10] sm:$0xf]
    %v151 = vld [vmem:[#allocation2 + $0x14] sm:$0xf]
    %v152 = vld [vmem:[#allocation2 + $0x18] sm:$0xf]
    %v153 = vld [vmem:[#allocation2 + $0x1c] sm:$0xf]
    %v154 = vunpack.c.l.bf16 %v146
    %v155 = vunpack.c.l.bf16 %v147
    %v156 = vunpack.c.l.bf16 %v148
    %v157 = vunpack.c.l.bf16 %v149
    %v158 = vunpack.c.l.bf16 %v150
    %v159 = vunpack.c.l.bf16 %v151
    %v160 = vunpack.c.l.bf16 %v152
    %v161 = vunpack.c.l.bf16 %v153
    %v170 = vcombine.high %v154, %v154
    %v171 = vcombine.high %v155, %v155
    %v172 = vcombine.high %v156, %v156
    %v173 = vcombine.high %v157, %v157
    %v174 = vcombine.high %v158, %v158
    %v175 = vcombine.high %v159, %v159
    %v176 = vcombine.high %v160, %v160
    %v177 = vcombine.high %v161, %v161
    %vm186 = vcmask 1043456
    %v187 = vsel %vm186, %v154, 0.0
    %v188 = vsel %vm186, %v170, 0.0
    %v189 = vadd.f32 %v187, %v188
    %190 = vadd.xlane.f32.xlu0 %v189
    %v191 = vpop.xlane.xlu0 %190
    %v192 = vsel %vm186, %v155, 0.0
    %v193 = vsel %vm186, %v171, 0.0
    %v194 = vadd.f32 %v192, %v193
    %195 = vadd.xlane.f32.xlu0 %v194
    %v196 = vpop.xlane.xlu0 %195
    %v197 = vsel %vm186, %v156, 0.0
    %v198 = vsel %vm186, %v172, 0.0
    %v199 = vadd.f32 %v197, %v198
    %200 = vadd.xlane.f32.xlu0 %v199
    %v201 = vpop.xlane.xlu0 %200
    %v202 = vsel %vm186, %v157, 0.0
    %v203 = vsel %vm186, %v173, 0.0
    %v204 = vadd.f32 %v202, %v203
    %205 = vadd.xlane.f32.xlu0 %v204
    %v206 = vpop.xlane.xlu0 %205
    %v207 = vsel %vm186, %v158, 0.0
    %v208 = vsel %vm186, %v174, 0.0
    %v209 = vadd.f32 %v207, %v208
    %210 = vadd.xlane.f32.xlu0 %v209
    %v211 = vpop.xlane.xlu0 %210
    %v212 = vsel %vm186, %v159, 0.0
    %v213 = vsel %vm186, %v175, 0.0
    %v214 = vadd.f32 %v212, %v213
    %215 = vadd.xlane.f32.xlu0 %v214
    %v216 = vpop.xlane.xlu0 %215
    %v217 = vsel %vm186, %v160, 0.0
    %v218 = vsel %vm186, %v176, 0.0
    %v219 = vadd.f32 %v217, %v218
    %220 = vadd.xlane.f32.xlu0 %v219
    %v221 = vpop.xlane.xlu0 %220
    %v222 = vsel %vm186, %v161, 0.0
    %v223 = vsel %vm186, %v177, 0.0
    %v224 = vadd.f32 %v222, %v223
    %225 = vadd.xlane.f32.xlu0 %v224
    %v226 = vpop.xlane.xlu0 %225
    %v227 = vpack.c.bf16 %v191, %v191
    %v228 = vpack.c.bf16 %v196, %v196
    %v229 = vpack.c.bf16 %v201, %v201
    %v230 = vpack.c.bf16 %v206, %v206
    %v231 = vpack.c.bf16 %v211, %v211
    %v232 = vpack.c.bf16 %v216, %v216
    %v233 = vpack.c.bf16 %v221, %v221
    %v234 = vpack.c.bf16 %v226, %v226
    %v235 = vld [vmem:[#allocation5] sm:$0x3]
    %v236 = vld [vmem:[#allocation7] sm:$0x1]
    %v238 = vlaneseq
    %v239 = vshrl.u32 %v238, 7
    %v240 = vsub.s32 0, %v239
    %v241 = vrot.slane %v236, %v240
    %v251 = vunpack.c.l.b16 %v227
    %v252 = vunpack.c.l.b16 %v228
    %v253 = vunpack.c.l.b16 %v229
    %v254 = vunpack.c.l.b16 %v230
    %v255 = vunpack.c.l.b16 %v231
    %v256 = vunpack.c.l.b16 %v232
    %v257 = vunpack.c.l.b16 %v233
    %v258 = vunpack.c.l.b16 %v234
    %v259 = vlaneseq
    %v260 = vand.u32 %v259, 127
    %v261 = vlaneseq
    %v262 = vshrl.u32 %v261, 7
    %v263 = vsub.s32 %v260, %v262
    %v264 = vrot.slane %v251, %v263
    %v265 = vlaneseq
    %v266 = vshrl.u32 %v265, 7
    %v267 = vsub.s32 %v260, %v266
    %v268 = vrot.slane %v252, %v267
    %v269 = vlaneseq
    %v270 = vshrl.u32 %v269, 7
    %v271 = vsub.s32 %v260, %v270
    %v272 = vrot.slane %v253, %v271
    %v273 = vlaneseq
    %v274 = vshrl.u32 %v273, 7
    %v275 = vsub.s32 %v260, %v274
    %v276 = vrot.slane %v254, %v275
    %v277 = vlaneseq
    %v278 = vshrl.u32 %v277, 7
    %v279 = vsub.s32 %v260, %v278
    %v280 = vrot.slane %v255, %v279
    %v281 = vlaneseq
    %v282 = vshrl.u32 %v281, 7
    %v283 = vsub.s32 %v260, %v282
    %v284 = vrot.slane %v256, %v283
    %v285 = vlaneseq
    %v286 = vshrl.u32 %v285, 7
    %v287 = vsub.s32 %v260, %v286
    %v288 = vrot.slane %v257, %v287
    %v289 = vlaneseq
    %v290 = vshrl.u32 %v289, 7
    %v291 = vsub.s32 %v260, %v290
    %v292 = vrot.slane %v258, %v291
    %vm293 = vcmask 1041409
    %v294 = vsel %vm293, %v268, %v264
    %vm295 = vcmask 1042434
    %v296 = vsel %vm295, %v272, %v294
    %vm297 = vcmask 1043459
    %v298 = vsel %vm297, %v276, %v296
    %vm299 = vcmask 1044484
    %v300 = vsel %vm299, %v280, %v298
    %vm301 = vcmask 1045509
    %v302 = vsel %vm301, %v284, %v300
    %vm303 = vcmask 1046534
    %v304 = vsel %vm303, %v288, %v302
    %vm305 = vcmask 1047559
    %v306 = vsel %vm305, %v292, %v304
    %v307 = vpack.c.b16 %v306, %v306
    %vm308 = vcmask 31744
    %v310 = vsel %vm308, %v307, 0
    %vm312 = vcmask 1041408
    %v314 = vsel %vm312, %v235, 0
    %316 = vmatprep.subr.bf16.mxu0 0
    %317 = vmatpush1.bf16.msra.mxu0 0
    %318 = vmatprep.subr.bf16.mxu0 0
    %319 = vmatpush1.bf16.msra.mxu0 0
    %320 = vmatprep.subr.bf16.mxu0 0
    %321 = vmatpush1.bf16.msra.mxu0 0
    %322 = vmatprep.subr.bf16.mxu0 0
    %323 = vmatpush1.bf16.msra.mxu0 0
    %324 = vmatprep.subr.bf16.mxu0 0
    %325 = vmatpush1.bf16.msra.mxu0 0
    %326 = vmatprep.subr.bf16.mxu0 0
    %327 = vmatpush1.bf16.msra.mxu0 0
    %328 = vmatprep.subr.bf16.mxu0 0
    %329 = vmatpush1.bf16.msra.mxu0 0
    %330 = vmatprep.subr.bf16.mxu0 0
    %331 = vmatpush1.bf16.msra.mxu0 %v314
    %332 = vmatprep.subr.bf16.mxu0 0
    %333 = vmatpush2.bf16.msra.mxu0 0
    %334 = vmatprep.subr.bf16.mxu0 0
    %335 = vmatpush2.bf16.msra.mxu0 0
    %336 = vmatprep.subr.bf16.mxu0 0
    %337 = vmatpush2.bf16.msra.mxu0 0
    %338 = vmatprep.subr.bf16.mxu0 0
    %339 = vmatpush2.bf16.msra.mxu0 0
    %340 = vmatprep.subr.bf16.mxu0 0
    %341 = vmatpush2.bf16.msra.mxu0 0
    %342 = vmatprep.subr.bf16.mxu0 0
    %343 = vmatpush2.bf16.msra.mxu0 0
    %344 = vmatprep.subr.bf16.mxu0 0
    %345 = vmatpush2.bf16.msra.mxu0 0
    %346 = vmatprep.subr.bf16.mxu0 0
    %347 = vmatpush2.bf16.msra.mxu0 0
    %348 = vmatprep.mubr.bf16.mxu0 0
    %349 = vmatmul.mubr.bf16.gmra.mxu0 %v310
    %v350 = vpop.f32.mrf.mxu0
    %v351 = vadd.f32 %v241, %v350
    %v352 = vpop.f32.mrf.mxu0
    %v353 = vpop.f32.mrf.mxu0
    %v354 = vpop.f32.mrf.mxu0
    %355 = vdwg.mxu0
    %v356 = vmax.f32 %v351, 0.0
    %v357 = vpack.c.bf16 %v356, %v356
    %v358 = vld [vmem:[#allocation8] sm:$0xff]
    %v359 = vld [vmem:[#allocation8 + $0x8] sm:$0xff]
    %v360 = vld [vmem:[#allocation8 + $0x10] sm:$0xff]
    %v361 = vld [vmem:[#allocation8 + $0x18] sm:$0xff]
    %v362 = vld [vmem:[#allocation8 + $0x20] sm:$0xff]
    %v363 = vld [vmem:[#allocation8 + $0x28] sm:$0xff]
    %v364 = vld [vmem:[#allocation8 + $0x30] sm:$0xff]
    %v365 = vld [vmem:[#allocation8 + $0x38] sm:$0xff]
    %v366 = vld [vmem:[#allocation8 + $0x40] sm:$0xff]
    %v367 = vld [vmem:[#allocation8 + $0x48] sm:$0xff]
    %v368 = vld [vmem:[#allocation8 + $0x50] sm:$0xff]
    %v369 = vld [vmem:[#allocation8 + $0x58] sm:$0xff]
    %v370 = vld [vmem:[#allocation8 + $0x60] sm:$0xff]
    %v371 = vld [vmem:[#allocation8 + $0x68] sm:$0xff]
    %v372 = vld [vmem:[#allocation8 + $0x70] sm:$0xff]
    %v373 = vld [vmem:[#allocation8 + $0x78] sm:$0xff]
    %v374 = vld [vmem:[#allocation8 + $0x80] sm:$0xff]
    %v375 = vld [vmem:[#allocation8 + $0x88] sm:$0xff]
    %v376 = vld [vmem:[#allocation8 + $0x90] sm:$0xff]
    %v377 = vld [vmem:[#allocation8 + $0x98] sm:$0xff]
    %v378 = vld [vmem:[#allocation8 + $0xa0] sm:$0xff]
    %v379 = vld [vmem:[#allocation8 + $0xa8] sm:$0xff]
    %v380 = vld [vmem:[#allocation8 + $0xb0] sm:$0xff]
    %v381 = vld [vmem:[#allocation8 + $0xb8] sm:$0xff]
    %v382 = vld [vmem:[#allocation8 + $0xc0] sm:$0xff]
    %v383 = vld [vmem:[#allocation8 + $0xc8] sm:$0xff]
    %v384 = vld [vmem:[#allocation8 + $0xd0] sm:$0xff]
    %v385 = vld [vmem:[#allocation8 + $0xd8] sm:$0xff]
    %v386 = vld [vmem:[#allocation8 + $0xe0] sm:$0xff]
    %v387 = vld [vmem:[#allocation8 + $0xe8] sm:$0xff]
    %v388 = vld [vmem:[#allocation8 + $0xf0] sm:$0xff]
    %v389 = vld [vmem:[#allocation8 + $0xf8] sm:$0xff]
    %v390 = vld [vmem:[#allocation8 + $0x100] sm:$0xff]
    %v391 = vld [vmem:[#allocation8 + $0x108] sm:$0xff]
    %v392 = vld [vmem:[#allocation8 + $0x110] sm:$0xff]
    %v393 = vld [vmem:[#allocation8 + $0x118] sm:$0xff]
    %v394 = vld [vmem:[#allocation8 + $0x120] sm:$0xff]
    %v395 = vld [vmem:[#allocation8 + $0x128] sm:$0xff]
    %v396 = vld [vmem:[#allocation8 + $0x130] sm:$0xff]
    %v397 = vld [vmem:[#allocation8 + $0x138] sm:$0xff]
    %v398 = vld [vmem:[#allocation8 + $0x140] sm:$0xff]
    %v399 = vld [vmem:[#allocation8 + $0x148] sm:$0xff]
    %v400 = vld [vmem:[#allocation8 + $0x150] sm:$0xff]
    %v401 = vld [vmem:[#allocation8 + $0x158] sm:$0xff]
    %v402 = vld [vmem:[#allocation8 + $0x160] sm:$0xff]
    %v403 = vld [vmem:[#allocation8 + $0x168] sm:$0xff]
    %v404 = vld [vmem:[#allocation8 + $0x170] sm:$0xff]
    %v405 = vld [vmem:[#allocation8 + $0x178] sm:$0xff]
    %v406 = vld [vmem:[#allocation8 + $0x180] sm:$0xff]
    %v407 = vld [vmem:[#allocation8 + $0x188] sm:$0xff]
    %v408 = vld [vmem:[#allocation8 + $0x190] sm:$0xff]
    %v409 = vld [vmem:[#allocation8 + $0x198] sm:$0xff]
    %v410 = vld [vmem:[#allocation8 + $0x1a0] sm:$0xff]
    %v411 = vld [vmem:[#allocation8 + $0x1a8] sm:$0xff]
    %v412 = vld [vmem:[#allocation8 + $0x1b0] sm:$0xff]
    %v413 = vld [vmem:[#allocation8 + $0x1b8] sm:$0xff]
    %v414 = vld [vmem:[#allocation8 + $0x1c0] sm:$0xff]
    %v415 = vld [vmem:[#allocation8 + $0x1c8] sm:$0xff]
    %v416 = vld [vmem:[#allocation8 + $0x1d0] sm:$0xff]
    %v417 = vld [vmem:[#allocation8 + $0x1d8] sm:$0xff]
    %v418 = vld [vmem:[#allocation8 + $0x1e0] sm:$0xff]
    %v419 = vld [vmem:[#allocation8 + $0x1e8] sm:$0xff]
    %v420 = vld [vmem:[#allocation8 + $0x1f0] sm:$0xff]
    %v421 = vld [vmem:[#allocation8 + $0x1f8] sm:$0xff]
    %v422 = vld [vmem:[#allocation10] sm:$0xff]
    %v424 = vlaneseq
    %v425 = vshrl.u32 %v424, 7
    %v426 = vsub.s32 0, %v425
    %v427 = vrot.slane %v422, %v426
    %v428 = vlaneseq
    %v429 = vshrl.u32 %v428, 7
    %v430 = vsub.s32 1, %v429
    %v431 = vrot.slane %v422, %v430
    %v432 = vlaneseq
    %v433 = vshrl.u32 %v432, 7
    %v434 = vsub.s32 2, %v433
    %v435 = vrot.slane %v422, %v434
    %v436 = vlaneseq
    %v437 = vshrl.u32 %v436, 7
    %v438 = vsub.s32 3, %v437
    %v439 = vrot.slane %v422, %v438
    %v440 = vlaneseq
    %v441 = vshrl.u32 %v440, 7
    %v442 = vsub.s32 4, %v441
    %v443 = vrot.slane %v422, %v442
    %v444 = vlaneseq
    %v445 = vshrl.u32 %v444, 7
    %v446 = vsub.s32 5, %v445
    %v447 = vrot.slane %v422, %v446
    %v448 = vlaneseq
    %v449 = vshrl.u32 %v448, 7
    %v450 = vsub.s32 6, %v449
    %v451 = vrot.slane %v422, %v450
    %v452 = vlaneseq
    %v453 = vshrl.u32 %v452, 7
    %v454 = vsub.s32 7, %v453
    %v455 = vrot.slane %v422, %v454
    %v528 = vunpack.c.l.b16 %v358
    %v529 = vunpack.c.h.b16 %v358
    %v530 = vunpack.c.l.b16 %v359
    %v531 = vunpack.c.h.b16 %v359
    %v532 = vunpack.c.l.b16 %v360
    %v533 = vunpack.c.h.b16 %v360
    %v534 = vunpack.c.l.b16 %v361
    %v535 = vunpack.c.h.b16 %v361
    %v536 = vunpack.c.l.b16 %v362
    %v537 = vunpack.c.h.b16 %v362
    %v538 = vunpack.c.l.b16 %v363
    %v539 = vunpack.c.h.b16 %v363
    %v540 = vunpack.c.l.b16 %v364
    %v541 = vunpack.c.h.b16 %v364
    %v542 = vunpack.c.l.b16 %v365
    %v543 = vunpack.c.h.b16 %v365
    %v544 = vunpack.c.l.b16 %v366
    %v545 = vunpack.c.h.b16 %v366
    %v546 = vunpack.c.l.b16 %v367
    %v547 = vunpack.c.h.b16 %v367
    %v548 = vunpack.c.l.b16 %v368
    %v549 = vunpack.c.h.b16 %v368
    %v550 = vunpack.c.l.b16 %v369
    %v551 = vunpack.c.h.b16 %v369
    %v552 = vunpack.c.l.b16 %v370
    %v553 = vunpack.c.h.b16 %v370
    %v554 = vunpack.c.l.b16 %v371
    %v555 = vunpack.c.h.b16 %v371
    %v556 = vunpack.c.l.b16 %v372
    %v557 = vunpack.c.h.b16 %v372
    %v558 = vunpack.c.l.b16 %v373
    %v559 = vunpack.c.h.b16 %v373
    %v560 = vunpack.c.l.b16 %v374
    %v561 = vunpack.c.h.b16 %v374
    %v562 = vunpack.c.l.b16 %v375
    %v563 = vunpack.c.h.b16 %v375
    %v564 = vunpack.c.l.b16 %v376
    %v565 = vunpack.c.h.b16 %v376
    %v566 = vunpack.c.l.b16 %v377
    %v567 = vunpack.c.h.b16 %v377
    %v568 = vunpack.c.l.b16 %v378
    %v569 = vunpack.c.h.b16 %v378
    %v570 = vunpack.c.l.b16 %v379
    %v571 = vunpack.c.h.b16 %v379
    %v572 = vunpack.c.l.b16 %v380
    %v573 = vunpack.c.h.b16 %v380
    %v574 = vunpack.c.l.b16 %v381
    %v575 = vunpack.c.h.b16 %v381
    %v576 = vunpack.c.l.b16 %v382
    %v577 = vunpack.c.h.b16 %v382
    %v578 = vunpack.c.l.b16 %v383
    %v579 = vunpack.c.h.b16 %v383
    %v580 = vunpack.c.l.b16 %v384
    %v581 = vunpack.c.h.b16 %v384
    %v582 = vunpack.c.l.b16 %v385
    %v583 = vunpack.c.h.b16 %v385
    %v584 = vunpack.c.l.b16 %v386
    %v585 = vunpack.c.h.b16 %v386
    %v586 = vunpack.c.l.b16 %v387
    %v587 = vunpack.c.h.b16 %v387
    %v588 = vunpack.c.l.b16 %v388
    %v589 = vunpack.c.h.b16 %v388
    %v590 = vunpack.c.l.b16 %v389
    %v591 = vunpack.c.h.b16 %v389
    %v592 = vunpack.c.l.b16 %v390
    %v593 = vunpack.c.h.b16 %v390
    %v594 = vunpack.c.l.b16 %v391
    %v595 = vunpack.c.h.b16 %v391
    %v596 = vunpack.c.l.b16 %v392
    %v597 = vunpack.c.h.b16 %v392
    %v598 = vunpack.c.l.b16 %v393
    %v599 = vunpack.c.h.b16 %v393
    %v600 = vunpack.c.l.b16 %v394
    %v601 = vunpack.c.h.b16 %v394
    %v602 = vunpack.c.l.b16 %v395
    %v603 = vunpack.c.h.b16 %v395
    %v604 = vunpack.c.l.b16 %v396
    %v605 = vunpack.c.h.b16 %v396
    %v606 = vunpack.c.l.b16 %v397
    %v607 = vunpack.c.h.b16 %v397
    %v608 = vunpack.c.l.b16 %v398
    %v609 = vunpack.c.h.b16 %v398
    %v610 = vunpack.c.l.b16 %v399
    %v611 = vunpack.c.h.b16 %v399
    %v612 = vunpack.c.l.b16 %v400
    %v613 = vunpack.c.h.b16 %v400
    %v614 = vunpack.c.l.b16 %v401
    %v615 = vunpack.c.h.b16 %v401
    %v616 = vunpack.c.l.b16 %v402
    %v617 = vunpack.c.h.b16 %v402
    %v618 = vunpack.c.l.b16 %v403
    %v619 = vunpack.c.h.b16 %v403
    %v620 = vunpack.c.l.b16 %v404
    %v621 = vunpack.c.h.b16 %v404
    %v622 = vunpack.c.l.b16 %v405
    %v623 = vunpack.c.h.b16 %v405
    %v624 = vunpack.c.l.b16 %v406
    %v625 = vunpack.c.h.b16 %v406
    %v626 = vunpack.c.l.b16 %v407
    %v627 = vunpack.c.h.b16 %v407
    %v628 = vunpack.c.l.b16 %v408
    %v629 = vunpack.c.h.b16 %v408
    %v630 = vunpack.c.l.b16 %v409
    %v631 = vunpack.c.h.b16 %v409
    %v632 = vunpack.c.l.b16 %v410
    %v633 = vunpack.c.h.b16 %v410
    %v634 = vunpack.c.l.b16 %v411
    %v635 = vunpack.c.h.b16 %v411
    %v636 = vunpack.c.l.b16 %v412
    %v637 = vunpack.c.h.b16 %v412
    %v638 = vunpack.c.l.b16 %v413
    %v639 = vunpack.c.h.b16 %v413
    %v640 = vunpack.c.l.b16 %v414
    %v641 = vunpack.c.h.b16 %v414
    %v642 = vunpack.c.l.b16 %v415
    %v643 = vunpack.c.h.b16 %v415
    %v644 = vunpack.c.l.b16 %v416
    %v645 = vunpack.c.h.b16 %v416
    %v646 = vunpack.c.l.b16 %v417
    %v647 = vunpack.c.h.b16 %v417
    %v648 = vunpack.c.l.b16 %v418
    %v649 = vunpack.c.h.b16 %v418
    %v650 = vunpack.c.l.b16 %v419
    %v651 = vunpack.c.h.b16 %v419
    %v652 = vunpack.c.l.b16 %v420
    %v653 = vunpack.c.h.b16 %v420
    %v654 = vunpack.c.l.b16 %v421
    %v655 = vunpack.c.h.b16 %v421
    %v656 = vpack.c.b16 %v536, %v528
    %v657 = vpack.c.b16 %v537, %v529
    %v658 = vpack.c.b16 %v538, %v530
    %v659 = vpack.c.b16 %v539, %v531
    %v660 = vpack.c.b16 %v540, %v532
    %v661 = vpack.c.b16 %v541, %v533
    %v662 = vpack.c.b16 %v542, %v534
    %v663 = vpack.c.b16 %v543, %v535
    %v664 = vpack.c.b16 %v552, %v544
    %v665 = vpack.c.b16 %v553, %v545
    %v666 = vpack.c.b16 %v554, %v546
    %v667 = vpack.c.b16 %v555, %v547
    %v668 = vpack.c.b16 %v556, %v548
    %v669 = vpack.c.b16 %v557, %v549
    %v670 = vpack.c.b16 %v558, %v550
    %v671 = vpack.c.b16 %v559, %v551
    %v672 = vpack.c.b16 %v568, %v560
    %v673 = vpack.c.b16 %v569, %v561
    %v674 = vpack.c.b16 %v570, %v562
    %v675 = vpack.c.b16 %v571, %v563
    %v676 = vpack.c.b16 %v572, %v564
    %v677 = vpack.c.b16 %v573, %v565
    %v678 = vpack.c.b16 %v574, %v566
    %v679 = vpack.c.b16 %v575, %v567
    %v680 = vpack.c.b16 %v584, %v576
    %v681 = vpack.c.b16 %v585, %v577
    %v682 = vpack.c.b16 %v586, %v578
    %v683 = vpack.c.b16 %v587, %v579
    %v684 = vpack.c.b16 %v588, %v580
    %v685 = vpack.c.b16 %v589, %v581
    %v686 = vpack.c.b16 %v590, %v582
    %v687 = vpack.c.b16 %v591, %v583
    %v688 = vpack.c.b16 %v600, %v592
    %v689 = vpack.c.b16 %v601, %v593
    %v690 = vpack.c.b16 %v602, %v594
    %v691 = vpack.c.b16 %v603, %v595
    %v692 = vpack.c.b16 %v604, %v596
    %v693 = vpack.c.b16 %v605, %v597
    %v694 = vpack.c.b16 %v606, %v598
    %v695 = vpack.c.b16 %v607, %v599
    %v696 = vpack.c.b16 %v616, %v608
    %v697 = vpack.c.b16 %v617, %v609
    %v698 = vpack.c.b16 %v618, %v610
    %v699 = vpack.c.b16 %v619, %v611
    %v700 = vpack.c.b16 %v620, %v612
    %v701 = vpack.c.b16 %v621, %v613
    %v702 = vpack.c.b16 %v622, %v614
    %v703 = vpack.c.b16 %v623, %v615
    %v704 = vpack.c.b16 %v632, %v624
    %v705 = vpack.c.b16 %v633, %v625
    %v706 = vpack.c.b16 %v634, %v626
    %v707 = vpack.c.b16 %v635, %v627
    %v708 = vpack.c.b16 %v636, %v628
    %v709 = vpack.c.b16 %v637, %v629
    %v710 = vpack.c.b16 %v638, %v630
    %v711 = vpack.c.b16 %v639, %v631
    %v712 = vpack.c.b16 %v648, %v640
    %v713 = vpack.c.b16 %v649, %v641
    %v714 = vpack.c.b16 %v650, %v642
    %v715 = vpack.c.b16 %v651, %v643
    %v716 = vpack.c.b16 %v652, %v644
    %v717 = vpack.c.b16 %v653, %v645
    %v718 = vpack.c.b16 %v654, %v646
    %v719 = vpack.c.b16 %v655, %v647
    %784 = vmatprep.subr.bf16.mxu0 %v713
    %785 = vmatpush1.bf16.msra.mxu0 %v712
    %786 = vmatprep.subr.bf16.mxu0 %v705
    %787 = vmatpush1.bf16.msra.mxu0 %v704
    %788 = vmatprep.subr.bf16.mxu0 %v697
    %789 = vmatpush1.bf16.msra.mxu0 %v696
    %790 = vmatprep.subr.bf16.mxu0 %v689
    %791 = vmatpush1.bf16.msra.mxu0 %v688
    %792 = vmatprep.subr.bf16.mxu0 %v681
    %793 = vmatpush1.bf16.msra.mxu0 %v680
    %794 = vmatprep.subr.bf16.mxu0 %v673
    %795 = vmatpush1.bf16.msra.mxu0 %v672
    %796 = vmatprep.subr.bf16.mxu0 %v665
    %797 = vmatpush1.bf16.msra.mxu0 %v664
    %798 = vmatprep.subr.bf16.mxu0 %v657
    %799 = vmatpush1.bf16.msra.mxu0 %v656
    %800 = vmatprep.subr.bf16.mxu0 0
    %801 = vmatpush2.bf16.msra.mxu0 0
    %802 = vmatprep.subr.bf16.mxu0 0
    %803 = vmatpush2.bf16.msra.mxu0 0
    %804 = vmatprep.subr.bf16.mxu0 0
    %805 = vmatpush2.bf16.msra.mxu0 0
    %806 = vmatprep.subr.bf16.mxu0 0
    %807 = vmatpush2.bf16.msra.mxu0 0
    %808 = vmatprep.subr.bf16.mxu0 0
    %809 = vmatpush2.bf16.msra.mxu0 0
    %810 = vmatprep.subr.bf16.mxu0 0
    %811 = vmatpush2.bf16.msra.mxu0 0
    %812 = vmatprep.subr.bf16.mxu0 0
    %813 = vmatpush2.bf16.msra.mxu0 0
    %814 = vmatprep.subr.bf16.mxu0 0
    %815 = vmatpush2.bf16.msra.mxu0 0
    %816 = vmatprep.mubr.bf16.mxu0 0
    %817 = vmatmul.mubr.bf16.gmra.mxu0 %v357
    %v818 = vpop.f32.mrf.mxu0
    %v819 = vadd.f32 %v427, %v818
    %v820 = vpop.f32.mrf.mxu0
    %v821 = vadd.f32 %v431, %v820
    %v822 = vpop.f32.mrf.mxu0
    %v823 = vpop.f32.mrf.mxu0
    %824 = vdwg.mxu0
    %825 = vmatprep.subr.bf16.mxu0 %v715
    %826 = vmatpush1.bf16.msra.mxu0 %v714
    %827 = vmatprep.subr.bf16.mxu0 %v707
    %828 = vmatpush1.bf16.msra.mxu0 %v706
    %829 = vmatprep.subr.bf16.mxu0 %v699
    %830 = vmatpush1.bf16.msra.mxu0 %v698
    %831 = vmatprep.subr.bf16.mxu0 %v691
    %832 = vmatpush1.bf16.msra.mxu0 %v690
    %833 = vmatprep.subr.bf16.mxu0 %v683
    %834 = vmatpush1.bf16.msra.mxu0 %v682
    %835 = vmatprep.subr.bf16.mxu0 %v675
    %836 = vmatpush1.bf16.msra.mxu0 %v674
    %837 = vmatprep.subr.bf16.mxu0 %v667
    %838 = vmatpush1.bf16.msra.mxu0 %v666
    %839 = vmatprep.subr.bf16.mxu0 %v659
    %840 = vmatpush1.bf16.msra.mxu0 %v658
    %841 = vmatprep.subr.bf16.mxu0 0
    %842 = vmatpush2.bf16.msra.mxu0 0
    %843 = vmatprep.subr.bf16.mxu0 0
    %844 = vmatpush2.bf16.msra.mxu0 0
    %845 = vmatprep.subr.bf16.mxu0 0
    %846 = vmatpush2.bf16.msra.mxu0 0
    %847 = vmatprep.subr.bf16.mxu0 0
    %848 = vmatpush2.bf16.msra.mxu0 0
    %849 = vmatprep.subr.bf16.mxu0 0
    %850 = vmatpush2.bf16.msra.mxu0 0
    %851 = vmatprep.subr.bf16.mxu0 0
    %852 = vmatpush2.bf16.msra.mxu0 0
    %853 = vmatprep.subr.bf16.mxu0 0
    %854 = vmatpush2.bf16.msra.mxu0 0
    %855 = vmatprep.subr.bf16.mxu0 0
    %856 = vmatpush2.bf16.msra.mxu0 0
    %857 = vmatprep.mubr.bf16.mxu0 0
    %858 = vmatmul.mubr.bf16.gmra.mxu0 %v357
    %v859 = vpop.f32.mrf.mxu0
    %v860 = vadd.f32 %v435, %v859
    %v861 = vpop.f32.mrf.mxu0
    %v862 = vadd.f32 %v439, %v861
    %v863 = vpop.f32.mrf.mxu0
    %v864 = vpop.f32.mrf.mxu0
    %865 = vdwg.mxu0
    %866 = vmatprep.subr.bf16.mxu0 %v717
    %867 = vmatpush1.bf16.msra.mxu0 %v716
    %868 = vmatprep.subr.bf16.mxu0 %v709
    %869 = vmatpush1.bf16.msra.mxu0 %v708
    %870 = vmatprep.subr.bf16.mxu0 %v701
    %871 = vmatpush1.bf16.msra.mxu0 %v700
    %872 = vmatprep.subr.bf16.mxu0 %v693
    %873 = vmatpush1.bf16.msra.mxu0 %v692
    %874 = vmatprep.subr.bf16.mxu0 %v685
    %875 = vmatpush1.bf16.msra.mxu0 %v684
    %876 = vmatprep.subr.bf16.mxu0 %v677
    %877 = vmatpush1.bf16.msra.mxu0 %v676
    %878 = vmatprep.subr.bf16.mxu0 %v669
    %879 = vmatpush1.bf16.msra.mxu0 %v668
    %880 = vmatprep.subr.bf16.mxu0 %v661
    %881 = vmatpush1.bf16.msra.mxu0 %v660
    %882 = vmatprep.subr.bf16.mxu0 0
    %883 = vmatpush2.bf16.msra.mxu0 0
    %884 = vmatprep.subr.bf16.mxu0 0
    %885 = vmatpush2.bf16.msra.mxu0 0
    %886 = vmatprep.subr.bf16.mxu0 0
    %887 = vmatpush2.bf16.msra.mxu0 0
    %888 = vmatprep.subr.bf16.mxu0 0
    %889 = vmatpush2.bf16.msra.mxu0 0
    %890 = vmatprep.subr.bf16.mxu0 0
    %891 = vmatpush2.bf16.msra.mxu0 0
    %892 = vmatprep.subr.bf16.mxu0 0
    %893 = vmatpush2.bf16.msra.mxu0 0
    %894 = vmatprep.subr.bf16.mxu0 0
    %895 = vmatpush2.bf16.msra.mxu0 0
    %896 = vmatprep.subr.bf16.mxu0 0
    %897 = vmatpush2.bf16.msra.mxu0 0
    %898 = vmatprep.mubr.bf16.mxu0 0
    %899 = vmatmul.mubr.bf16.gmra.mxu0 %v357
    %v900 = vpop.f32.mrf.mxu0
    %v901 = vadd.f32 %v443, %v900
    %v902 = vpop.f32.mrf.mxu0
    %v903 = vadd.f32 %v447, %v902
    %v904 = vpop.f32.mrf.mxu0
    %v905 = vpop.f32.mrf.mxu0
    %906 = vdwg.mxu0
    %907 = vmatprep.subr.bf16.mxu0 %v719
    %908 = vmatpush1.bf16.msra.mxu0 %v718
    %909 = vmatprep.subr.bf16.mxu0 %v711
    %910 = vmatpush1.bf16.msra.mxu0 %v710
    %911 = vmatprep.subr.bf16.mxu0 %v703
    %912 = vmatpush1.bf16.msra.mxu0 %v702
    %913 = vmatprep.subr.bf16.mxu0 %v695
    %914 = vmatpush1.bf16.msra.mxu0 %v694
    %915 = vmatprep.subr.bf16.mxu0 %v687
    %916 = vmatpush1.bf16.msra.mxu0 %v686
    %917 = vmatprep.subr.bf16.mxu0 %v679
    %918 = vmatpush1.bf16.msra.mxu0 %v678
    %919 = vmatprep.subr.bf16.mxu0 %v671
    %920 = vmatpush1.bf16.msra.mxu0 %v670
    %921 = vmatprep.subr.bf16.mxu0 %v663
    %922 = vmatpush1.bf16.msra.mxu0 %v662
    %923 = vmatprep.subr.bf16.mxu0 0
    %924 = vmatpush2.bf16.msra.mxu0 0
    %925 = vmatprep.subr.bf16.mxu0 0
    %926 = vmatpush2.bf16.msra.mxu0 0
    %927 = vmatprep.subr.bf16.mxu0 0
    %928 = vmatpush2.bf16.msra.mxu0 0
    %929 = vmatprep.subr.bf16.mxu0 0
    %930 = vmatpush2.bf16.msra.mxu0 0
    %931 = vmatprep.subr.bf16.mxu0 0
    %932 = vmatpush2.bf16.msra.mxu0 0
    %933 = vmatprep.subr.bf16.mxu0 0
    %934 = vmatpush2.bf16.msra.mxu0 0
    %935 = vmatprep.subr.bf16.mxu0 0
    %936 = vmatpush2.bf16.msra.mxu0 0
    %937 = vmatprep.subr.bf16.mxu0 0
    %938 = vmatpush2.bf16.msra.mxu0 0
    %939 = vmatprep.mubr.bf16.mxu0 0
    %940 = vmatmul.mubr.bf16.gmra.mxu0 %v357
    %v941 = vpop.f32.mrf.mxu0
    %v942 = vadd.f32 %v451, %v941
    %v943 = vpop.f32.mrf.mxu0
    %v944 = vadd.f32 %v455, %v943
    %v945 = vpop.f32.mrf.mxu0
    %v946 = vpop.f32.mrf.mxu0
    %947 = vdwg.mxu0
    %v948 = vmax.f32 %v819, 0.0
    %v949 = vmax.f32 %v821, 0.0
    %v950 = vmax.f32 %v860, 0.0
    %v951 = vmax.f32 %v862, 0.0
    %v952 = vmax.f32 %v901, 0.0
    %v953 = vmax.f32 %v903, 0.0
    %v954 = vmax.f32 %v942, 0.0
    %v955 = vmax.f32 %v944, 0.0
    %v956 = vpack.c.bf16 %v948, %v948
    %v957 = vpack.c.bf16 %v949, %v949
    %v958 = vpack.c.bf16 %v950, %v950
    %v959 = vpack.c.bf16 %v951, %v951
    %v960 = vpack.c.bf16 %v952, %v952
    %v961 = vpack.c.bf16 %v953, %v953
    %v962 = vpack.c.bf16 %v954, %v954
    %v963 = vpack.c.bf16 %v955, %v955
    %v964 = vld [vmem:[#allocation11] sm:$0xff]
    %v965 = vld [vmem:[#allocation11 + $0x8] sm:$0xff]
    %v966 = vld [vmem:[#allocation11 + $0x10] sm:$0xff]
    %v967 = vld [vmem:[#allocation11 + $0x18] sm:$0xff]
    %v968 = vld [vmem:[#allocation11 + $0x20] sm:$0xff]
    %v969 = vld [vmem:[#allocation11 + $0x28] sm:$0xff]
    %v970 = vld [vmem:[#allocation11 + $0x30] sm:$0xff]
    %v971 = vld [vmem:[#allocation11 + $0x38] sm:$0xff]
    %v972 = vld [vmem:[#allocation11 + $0x40] sm:$0xff]
    %v973 = vld [vmem:[#allocation11 + $0x48] sm:$0xff]
    %v974 = vld [vmem:[#allocation11 + $0x50] sm:$0xff]
    %v975 = vld [vmem:[#allocation11 + $0x58] sm:$0xff]
    %v976 = vld [vmem:[#allocation11 + $0x60] sm:$0xff]
    %v977 = vld [vmem:[#allocation11 + $0x68] sm:$0xff]
    %v978 = vld [vmem:[#allocation11 + $0x70] sm:$0xff]
    %v979 = vld [vmem:[#allocation11 + $0x78] sm:$0xff]
    %v980 = vld [vmem:[#allocation11 + $0x80] sm:$0xff]
    %v981 = vld [vmem:[#allocation11 + $0x88] sm:$0xff]
    %v982 = vld [vmem:[#allocation11 + $0x90] sm:$0xff]
    %v983 = vld [vmem:[#allocation11 + $0x98] sm:$0xff]
    %v984 = vld [vmem:[#allocation11 + $0xa0] sm:$0xff]
    %v985 = vld [vmem:[#allocation11 + $0xa8] sm:$0xff]
    %v986 = vld [vmem:[#allocation11 + $0xb0] sm:$0xff]
    %v987 = vld [vmem:[#allocation11 + $0xb8] sm:$0xff]
    %v988 = vld [vmem:[#allocation11 + $0xc0] sm:$0xff]
    %v989 = vld [vmem:[#allocation11 + $0xc8] sm:$0xff]
    %v990 = vld [vmem:[#allocation11 + $0xd0] sm:$0xff]
    %v991 = vld [vmem:[#allocation11 + $0xd8] sm:$0xff]
    %v992 = vld [vmem:[#allocation11 + $0xe0] sm:$0xff]
    %v993 = vld [vmem:[#allocation11 + $0xe8] sm:$0xff]
    %v994 = vld [vmem:[#allocation11 + $0xf0] sm:$0xff]
    %v995 = vld [vmem:[#allocation11 + $0xf8] sm:$0xff]
    %v996 = vld [vmem:[#allocation11 + $0x100] sm:$0xff]
    %v997 = vld [vmem:[#allocation11 + $0x108] sm:$0xff]
    %v998 = vld [vmem:[#allocation11 + $0x110] sm:$0xff]
    %v999 = vld [vmem:[#allocation11 + $0x118] sm:$0xff]
    %v1000 = vld [vmem:[#allocation11 + $0x120] sm:$0xff]
    %v1001 = vld [vmem:[#allocation11 + $0x128] sm:$0xff]
    %v1002 = vld [vmem:[#allocation11 + $0x130] sm:$0xff]
    %v1003 = vld [vmem:[#allocation11 + $0x138] sm:$0xff]
    %v1004 = vld [vmem:[#allocation11 + $0x140] sm:$0xff]
    %v1005 = vld [vmem:[#allocation11 + $0x148] sm:$0xff]
    %v1006 = vld [vmem:[#allocation11 + $0x150] sm:$0xff]
    %v1007 = vld [vmem:[#allocation11 + $0x158] sm:$0xff]
    %v1008 = vld [vmem:[#allocation11 + $0x160] sm:$0xff]
    %v1009 = vld [vmem:[#allocation11 + $0x168] sm:$0xff]
    %v1010 = vld [vmem:[#allocation11 + $0x170] sm:$0xff]
    %v1011 = vld [vmem:[#allocation11 + $0x178] sm:$0xff]
    %v1012 = vld [vmem:[#allocation11 + $0x180] sm:$0xff]
    %v1013 = vld [vmem:[#allocation11 + $0x188] sm:$0xff]
    %v1014 = vld [vmem:[#allocation11 + $0x190] sm:$0xff]
    %v1015 = vld [vmem:[#allocation11 + $0x198] sm:$0xff]
    %v1016 = vld [vmem:[#allocation11 + $0x1a0] sm:$0xff]
    %v1017 = vld [vmem:[#allocation11 + $0x1a8] sm:$0xff]
    %v1018 = vld [vmem:[#allocation11 + $0x1b0] sm:$0xff]
    %v1019 = vld [vmem:[#allocation11 + $0x1b8] sm:$0xff]
    %v1020 = vld [vmem:[#allocation11 + $0x1c0] sm:$0xff]
    %v1021 = vld [vmem:[#allocation11 + $0x1c8] sm:$0xff]
    %v1022 = vld [vmem:[#allocation11 + $0x1d0] sm:$0xff]
    %v1023 = vld [vmem:[#allocation11 + $0x1d8] sm:$0xff]
    %v1024 = vld [vmem:[#allocation11 + $0x1e0] sm:$0xff]
    %v1025 = vld [vmem:[#allocation11 + $0x1e8] sm:$0xff]
    %v1026 = vld [vmem:[#allocation11 + $0x1f0] sm:$0xff]
    %v1027 = vld [vmem:[#allocation11 + $0x1f8] sm:$0xff]
    %v1028 = vld [vmem:[#allocation11 + $0x200] sm:$0xff]
    %v1029 = vld [vmem:[#allocation11 + $0x208] sm:$0xff]
    %v1030 = vld [vmem:[#allocation11 + $0x210] sm:$0xff]
    %v1031 = vld [vmem:[#allocation11 + $0x218] sm:$0xff]
    %v1032 = vld [vmem:[#allocation11 + $0x220] sm:$0xff]
    %v1033 = vld [vmem:[#allocation11 + $0x228] sm:$0xff]
    %v1034 = vld [vmem:[#allocation11 + $0x230] sm:$0xff]
    %v1035 = vld [vmem:[#allocation11 + $0x238] sm:$0xff]
    %v1036 = vld [vmem:[#allocation11 + $0x240] sm:$0xff]
    %v1037 = vld [vmem:[#allocation11 + $0x248] sm:$0xff]
    %v1038 = vld [vmem:[#allocation11 + $0x250] sm:$0xff]
    %v1039 = vld [vmem:[#allocation11 + $0x258] sm:$0xff]
    %v1040 = vld [vmem:[#allocation11 + $0x260] sm:$0xff]
    %v1041 = vld [vmem:[#allocation11 + $0x268] sm:$0xff]
    %v1042 = vld [vmem:[#allocation11 + $0x270] sm:$0xff]
    %v1043 = vld [vmem:[#allocation11 + $0x278] sm:$0xff]
    %v1044 = vld [vmem:[#allocation11 + $0x280] sm:$0xff]
    %v1045 = vld [vmem:[#allocation11 + $0x288] sm:$0xff]
    %v1046 = vld [vmem:[#allocation11 + $0x290] sm:$0xff]
    %v1047 = vld [vmem:[#allocation11 + $0x298] sm:$0xff]
    %v1048 = vld [vmem:[#allocation11 + $0x2a0] sm:$0xff]
    %v1049 = vld [vmem:[#allocation11 + $0x2a8] sm:$0xff]
    %v1050 = vld [vmem:[#allocation11 + $0x2b0] sm:$0xff]
    %v1051 = vld [vmem:[#allocation11 + $0x2b8] sm:$0xff]
    %v1052 = vld [vmem:[#allocation11 + $0x2c0] sm:$0xff]
    %v1053 = vld [vmem:[#allocation11 + $0x2c8] sm:$0xff]
    %v1054 = vld [vmem:[#allocation11 + $0x2d0] sm:$0xff]
    %v1055 = vld [vmem:[#allocation11 + $0x2d8] sm:$0xff]
    %v1056 = vld [vmem:[#allocation11 + $0x2e0] sm:$0xff]
    %v1057 = vld [vmem:[#allocation11 + $0x2e8] sm:$0xff]
    %v1058 = vld [vmem:[#allocation11 + $0x2f0] sm:$0xff]
    %v1059 = vld [vmem:[#allocation11 + $0x2f8] sm:$0xff]
    %v1060 = vld [vmem:[#allocation11 + $0x300] sm:$0xff]
    %v1061 = vld [vmem:[#allocation11 + $0x308] sm:$0xff]
    %v1062 = vld [vmem:[#allocation11 + $0x310] sm:$0xff]
    %v1063 = vld [vmem:[#allocation11 + $0x318] sm:$0xff]
    %v1064 = vld [vmem:[#allocation11 + $0x320] sm:$0xff]
    %v1065 = vld [vmem:[#allocation11 + $0x328] sm:$0xff]
    %v1066 = vld [vmem:[#allocation11 + $0x330] sm:$0xff]
    %v1067 = vld [vmem:[#allocation11 + $0x338] sm:$0xff]
    %v1068 = vld [vmem:[#allocation11 + $0x340] sm:$0xff]
    %v1069 = vld [vmem:[#allocation11 + $0x348] sm:$0xff]
    %v1070 = vld [vmem:[#allocation11 + $0x350] sm:$0xff]
    %v1071 = vld [vmem:[#allocation11 + $0x358] sm:$0xff]
    %v1072 = vld [vmem:[#allocation11 + $0x360] sm:$0xff]
    %v1073 = vld [vmem:[#allocation11 + $0x368] sm:$0xff]
    %v1074 = vld [vmem:[#allocation11 + $0x370] sm:$0xff]
    %v1075 = vld [vmem:[#allocation11 + $0x378] sm:$0xff]
    %v1076 = vld [vmem:[#allocation11 + $0x380] sm:$0xff]
    %v1077 = vld [vmem:[#allocation11 + $0x388] sm:$0xff]
    %v1078 = vld [vmem:[#allocation11 + $0x390] sm:$0xff]
    %v1079 = vld [vmem:[#allocation11 + $0x398] sm:$0xff]
    %v1080 = vld [vmem:[#allocation11 + $0x3a0] sm:$0xff]
    %v1081 = vld [vmem:[#allocation11 + $0x3a8] sm:$0xff]
    %v1082 = vld [vmem:[#allocation11 + $0x3b0] sm:$0xff]
    %v1083 = vld [vmem:[#allocation11 + $0x3b8] sm:$0xff]
    %v1084 = vld [vmem:[#allocation11 + $0x3c0] sm:$0xff]
    %v1085 = vld [vmem:[#allocation11 + $0x3c8] sm:$0xff]
    %v1086 = vld [vmem:[#allocation11 + $0x3d0] sm:$0xff]
    %v1087 = vld [vmem:[#allocation11 + $0x3d8] sm:$0xff]
    %v1088 = vld [vmem:[#allocation11 + $0x3e0] sm:$0xff]
    %v1089 = vld [vmem:[#allocation11 + $0x3e8] sm:$0xff]
    %v1090 = vld [vmem:[#allocation11 + $0x3f0] sm:$0xff]
    %v1091 = vld [vmem:[#allocation11 + $0x3f8] sm:$0xff]
    %v1092 = vld [vmem:[#allocation11 + $0x400] sm:$0xff]
    %v1093 = vld [vmem:[#allocation11 + $0x408] sm:$0xff]
    %v1094 = vld [vmem:[#allocation11 + $0x410] sm:$0xff]
    %v1095 = vld [vmem:[#allocation11 + $0x418] sm:$0xff]
    %v1096 = vld [vmem:[#allocation11 + $0x420] sm:$0xff]
    %v1097 = vld [vmem:[#allocation11 + $0x428] sm:$0xff]
    %v1098 = vld [vmem:[#allocation11 + $0x430] sm:$0xff]
    %v1099 = vld [vmem:[#allocation11 + $0x438] sm:$0xff]
    %v1100 = vld [vmem:[#allocation11 + $0x440] sm:$0xff]
    %v1101 = vld [vmem:[#allocation11 + $0x448] sm:$0xff]
    %v1102 = vld [vmem:[#allocation11 + $0x450] sm:$0xff]
    %v1103 = vld [vmem:[#allocation11 + $0x458] sm:$0xff]
    %v1104 = vld [vmem:[#allocation11 + $0x460] sm:$0xff]
    %v1105 = vld [vmem:[#allocation11 + $0x468] sm:$0xff]
    %v1106 = vld [vmem:[#allocation11 + $0x470] sm:$0xff]
    %v1107 = vld [vmem:[#allocation11 + $0x478] sm:$0xff]
    %v1108 = vld [vmem:[#allocation11 + $0x480] sm:$0xff]
    %v1109 = vld [vmem:[#allocation11 + $0x488] sm:$0xff]
    %v1110 = vld [vmem:[#allocation11 + $0x490] sm:$0xff]
    %v1111 = vld [vmem:[#allocation11 + $0x498] sm:$0xff]
    %v1112 = vld [vmem:[#allocation11 + $0x4a0] sm:$0xff]
    %v1113 = vld [vmem:[#allocation11 + $0x4a8] sm:$0xff]
    %v1114 = vld [vmem:[#allocation11 + $0x4b0] sm:$0xff]
    %v1115 = vld [vmem:[#allocation11 + $0x4b8] sm:$0xff]
    %v1116 = vld [vmem:[#allocation11 + $0x4c0] sm:$0xff]
    %v1117 = vld [vmem:[#allocation11 + $0x4c8] sm:$0xff]
    %v1118 = vld [vmem:[#allocation11 + $0x4d0] sm:$0xff]
    %v1119 = vld [vmem:[#allocation11 + $0x4d8] sm:$0xff]
    %v1120 = vld [vmem:[#allocation11 + $0x4e0] sm:$0xff]
    %v1121 = vld [vmem:[#allocation11 + $0x4e8] sm:$0xff]
    %v1122 = vld [vmem:[#allocation11 + $0x4f0] sm:$0xff]
    %v1123 = vld [vmem:[#allocation11 + $0x4f8] sm:$0xff]
    %v1124 = vld [vmem:[#allocation11 + $0x500] sm:$0xff]
    %v1125 = vld [vmem:[#allocation11 + $0x508] sm:$0xff]
    %v1126 = vld [vmem:[#allocation11 + $0x510] sm:$0xff]
    %v1127 = vld [vmem:[#allocation11 + $0x518] sm:$0xff]
    %v1128 = vld [vmem:[#allocation11 + $0x520] sm:$0xff]
    %v1129 = vld [vmem:[#allocation11 + $0x528] sm:$0xff]
    %v1130 = vld [vmem:[#allocation11 + $0x530] sm:$0xff]
    %v1131 = vld [vmem:[#allocation11 + $0x538] sm:$0xff]
    %v1132 = vld [vmem:[#allocation11 + $0x540] sm:$0xff]
    %v1133 = vld [vmem:[#allocation11 + $0x548] sm:$0xff]
    %v1134 = vld [vmem:[#allocation11 + $0x550] sm:$0xff]
    %v1135 = vld [vmem:[#allocation11 + $0x558] sm:$0xff]
    %v1136 = vld [vmem:[#allocation11 + $0x560] sm:$0xff]
    %v1137 = vld [vmem:[#allocation11 + $0x568] sm:$0xff]
    %v1138 = vld [vmem:[#allocation11 + $0x570] sm:$0xff]
    %v1139 = vld [vmem:[#allocation11 + $0x578] sm:$0xff]
    %v1140 = vld [vmem:[#allocation11 + $0x580] sm:$0xff]
    %v1141 = vld [vmem:[#allocation11 + $0x588] sm:$0xff]
    %v1142 = vld [vmem:[#allocation11 + $0x590] sm:$0xff]
    %v1143 = vld [vmem:[#allocation11 + $0x598] sm:$0xff]
    %v1144 = vld [vmem:[#allocation11 + $0x5a0] sm:$0xff]
    %v1145 = vld [vmem:[#allocation11 + $0x5a8] sm:$0xff]
    %v1146 = vld [vmem:[#allocation11 + $0x5b0] sm:$0xff]
    %v1147 = vld [vmem:[#allocation11 + $0x5b8] sm:$0xff]
    %v1148 = vld [vmem:[#allocation11 + $0x5c0] sm:$0xff]
    %v1149 = vld [vmem:[#allocation11 + $0x5c8] sm:$0xff]
    %v1150 = vld [vmem:[#allocation11 + $0x5d0] sm:$0xff]
    %v1151 = vld [vmem:[#allocation11 + $0x5d8] sm:$0xff]
    %v1152 = vld [vmem:[#allocation11 + $0x5e0] sm:$0xff]
    %v1153 = vld [vmem:[#allocation11 + $0x5e8] sm:$0xff]
    %v1154 = vld [vmem:[#allocation11 + $0x5f0] sm:$0xff]
    %v1155 = vld [vmem:[#allocation11 + $0x5f8] sm:$0xff]
    %v1156 = vld [vmem:[#allocation11 + $0x600] sm:$0xff]
    %v1157 = vld [vmem:[#allocation11 + $0x608] sm:$0xff]
    %v1158 = vld [vmem:[#allocation11 + $0x610] sm:$0xff]
    %v1159 = vld [vmem:[#allocation11 + $0x618] sm:$0xff]
    %v1160 = vld [vmem:[#allocation11 + $0x620] sm:$0xff]
    %v1161 = vld [vmem:[#allocation11 + $0x628] sm:$0xff]
    %v1162 = vld [vmem:[#allocation11 + $0x630] sm:$0xff]
    %v1163 = vld [vmem:[#allocation11 + $0x638] sm:$0xff]
    %v1164 = vld [vmem:[#allocation11 + $0x640] sm:$0xff]
    %v1165 = vld [vmem:[#allocation11 + $0x648] sm:$0xff]
    %v1166 = vld [vmem:[#allocation11 + $0x650] sm:$0xff]
    %v1167 = vld [vmem:[#allocation11 + $0x658] sm:$0xff]
    %v1168 = vld [vmem:[#allocation11 + $0x660] sm:$0xff]
    %v1169 = vld [vmem:[#allocation11 + $0x668] sm:$0xff]
    %v1170 = vld [vmem:[#allocation11 + $0x670] sm:$0xff]
    %v1171 = vld [vmem:[#allocation11 + $0x678] sm:$0xff]
    %v1172 = vld [vmem:[#allocation11 + $0x680] sm:$0xff]
    %v1173 = vld [vmem:[#allocation11 + $0x688] sm:$0xff]
    %v1174 = vld [vmem:[#allocation11 + $0x690] sm:$0xff]
    %v1175 = vld [vmem:[#allocation11 + $0x698] sm:$0xff]
    %v1176 = vld [vmem:[#allocation11 + $0x6a0] sm:$0xff]
    %v1177 = vld [vmem:[#allocation11 + $0x6a8] sm:$0xff]
    %v1178 = vld [vmem:[#allocation11 + $0x6b0] sm:$0xff]
    %v1179 = vld [vmem:[#allocation11 + $0x6b8] sm:$0xff]
    %v1180 = vld [vmem:[#allocation11 + $0x6c0] sm:$0xff]
    %v1181 = vld [vmem:[#allocation11 + $0x6c8] sm:$0xff]
    %v1182 = vld [vmem:[#allocation11 + $0x6d0] sm:$0xff]
    %v1183 = vld [vmem:[#allocation11 + $0x6d8] sm:$0xff]
    %v1184 = vld [vmem:[#allocation11 + $0x6e0] sm:$0xff]
    %v1185 = vld [vmem:[#allocation11 + $0x6e8] sm:$0xff]
    %v1186 = vld [vmem:[#allocation11 + $0x6f0] sm:$0xff]
    %v1187 = vld [vmem:[#allocation11 + $0x6f8] sm:$0xff]
    %v1188 = vld [vmem:[#allocation11 + $0x700] sm:$0xff]
    %v1189 = vld [vmem:[#allocation11 + $0x708] sm:$0xff]
    %v1190 = vld [vmem:[#allocation11 + $0x710] sm:$0xff]
    %v1191 = vld [vmem:[#allocation11 + $0x718] sm:$0xff]
    %v1192 = vld [vmem:[#allocation11 + $0x720] sm:$0xff]
    %v1193 = vld [vmem:[#allocation11 + $0x728] sm:$0xff]
    %v1194 = vld [vmem:[#allocation11 + $0x730] sm:$0xff]
    %v1195 = vld [vmem:[#allocation11 + $0x738] sm:$0xff]
    %v1196 = vld [vmem:[#allocation11 + $0x740] sm:$0xff]
    %v1197 = vld [vmem:[#allocation11 + $0x748] sm:$0xff]
    %v1198 = vld [vmem:[#allocation11 + $0x750] sm:$0xff]
    %v1199 = vld [vmem:[#allocation11 + $0x758] sm:$0xff]
    %v1200 = vld [vmem:[#allocation11 + $0x760] sm:$0xff]
    %v1201 = vld [vmem:[#allocation11 + $0x768] sm:$0xff]
    %v1202 = vld [vmem:[#allocation11 + $0x770] sm:$0xff]
    %v1203 = vld [vmem:[#allocation11 + $0x778] sm:$0xff]
    %v1204 = vld [vmem:[#allocation11 + $0x780] sm:$0xff]
    %v1205 = vld [vmem:[#allocation11 + $0x788] sm:$0xff]
    %v1206 = vld [vmem:[#allocation11 + $0x790] sm:$0xff]
    %v1207 = vld [vmem:[#allocation11 + $0x798] sm:$0xff]
    %v1208 = vld [vmem:[#allocation11 + $0x7a0] sm:$0xff]
    %v1209 = vld [vmem:[#allocation11 + $0x7a8] sm:$0xff]
    %v1210 = vld [vmem:[#allocation11 + $0x7b0] sm:$0xff]
    %v1211 = vld [vmem:[#allocation11 + $0x7b8] sm:$0xff]
    %v1212 = vld [vmem:[#allocation11 + $0x7c0] sm:$0xff]
    %v1213 = vld [vmem:[#allocation11 + $0x7c8] sm:$0xff]
    %v1214 = vld [vmem:[#allocation11 + $0x7d0] sm:$0xff]
    %v1215 = vld [vmem:[#allocation11 + $0x7d8] sm:$0xff]
    %v1216 = vld [vmem:[#allocation11 + $0x7e0] sm:$0xff]
    %v1217 = vld [vmem:[#allocation11 + $0x7e8] sm:$0xff]
    %v1218 = vld [vmem:[#allocation11 + $0x7f0] sm:$0xff]
    %v1219 = vld [vmem:[#allocation11 + $0x7f8] sm:$0xff]
    %v1220 = vld [vmem:[#allocation11 + $0x800] sm:$0xff]
    %v1221 = vld [vmem:[#allocation11 + $0x808] sm:$0xff]
    %v1222 = vld [vmem:[#allocation11 + $0x810] sm:$0xff]
    %v1223 = vld [vmem:[#allocation11 + $0x818] sm:$0xff]
    %v1224 = vld [vmem:[#allocation11 + $0x820] sm:$0xff]
    %v1225 = vld [vmem:[#allocation11 + $0x828] sm:$0xff]
    %v1226 = vld [vmem:[#allocation11 + $0x830] sm:$0xff]
    %v1227 = vld [vmem:[#allocation11 + $0x838] sm:$0xff]
    %v1228 = vld [vmem:[#allocation11 + $0x840] sm:$0xff]
    %v1229 = vld [vmem:[#allocation11 + $0x848] sm:$0xff]
    %v1230 = vld [vmem:[#allocation11 + $0x850] sm:$0xff]
    %v1231 = vld [vmem:[#allocation11 + $0x858] sm:$0xff]
    %v1232 = vld [vmem:[#allocation11 + $0x860] sm:$0xff]
    %v1233 = vld [vmem:[#allocation11 + $0x868] sm:$0xff]
    %v1234 = vld [vmem:[#allocation11 + $0x870] sm:$0xff]
    %v1235 = vld [vmem:[#allocation11 + $0x878] sm:$0xff]
    %v1236 = vld [vmem:[#allocation11 + $0x880] sm:$0xff]
    %v1237 = vld [vmem:[#allocation11 + $0x888] sm:$0xff]
    %v1238 = vld [vmem:[#allocation11 + $0x890] sm:$0xff]
    %v1239 = vld [vmem:[#allocation11 + $0x898] sm:$0xff]
    %v1240 = vld [vmem:[#allocation11 + $0x8a0] sm:$0xff]
    %v1241 = vld [vmem:[#allocation11 + $0x8a8] sm:$0xff]
    %v1242 = vld [vmem:[#allocation11 + $0x8b0] sm:$0xff]
    %v1243 = vld [vmem:[#allocation11 + $0x8b8] sm:$0xff]
    %v1244 = vld [vmem:[#allocation11 + $0x8c0] sm:$0xff]
    %v1245 = vld [vmem:[#allocation11 + $0x8c8] sm:$0xff]
    %v1246 = vld [vmem:[#allocation11 + $0x8d0] sm:$0xff]
    %v1247 = vld [vmem:[#allocation11 + $0x8d8] sm:$0xff]
    %v1248 = vld [vmem:[#allocation11 + $0x8e0] sm:$0xff]
    %v1249 = vld [vmem:[#allocation11 + $0x8e8] sm:$0xff]
    %v1250 = vld [vmem:[#allocation11 + $0x8f0] sm:$0xff]
    %v1251 = vld [vmem:[#allocation11 + $0x8f8] sm:$0xff]
    %v1252 = vld [vmem:[#allocation11 + $0x900] sm:$0xff]
    %v1253 = vld [vmem:[#allocation11 + $0x908] sm:$0xff]
    %v1254 = vld [vmem:[#allocation11 + $0x910] sm:$0xff]
    %v1255 = vld [vmem:[#allocation11 + $0x918] sm:$0xff]
    %v1256 = vld [vmem:[#allocation11 + $0x920] sm:$0xff]
    %v1257 = vld [vmem:[#allocation11 + $0x928] sm:$0xff]
    %v1258 = vld [vmem:[#allocation11 + $0x930] sm:$0xff]
    %v1259 = vld [vmem:[#allocation11 + $0x938] sm:$0xff]
    %v1260 = vld [vmem:[#allocation11 + $0x940] sm:$0xff]
    %v1261 = vld [vmem:[#allocation11 + $0x948] sm:$0xff]
    %v1262 = vld [vmem:[#allocation11 + $0x950] sm:$0xff]
    %v1263 = vld [vmem:[#allocation11 + $0x958] sm:$0xff]
    %v1264 = vld [vmem:[#allocation11 + $0x960] sm:$0xff]
    %v1265 = vld [vmem:[#allocation11 + $0x968] sm:$0xff]
    %v1266 = vld [vmem:[#allocation11 + $0x970] sm:$0xff]
    %v1267 = vld [vmem:[#allocation11 + $0x978] sm:$0xff]
    %v1268 = vld [vmem:[#allocation11 + $0x980] sm:$0xff]
    %v1269 = vld [vmem:[#allocation11 + $0x988] sm:$0xff]
    %v1270 = vld [vmem:[#allocation11 + $0x990] sm:$0xff]
    %v1271 = vld [vmem:[#allocation11 + $0x998] sm:$0xff]
    %v1272 = vld [vmem:[#allocation11 + $0x9a0] sm:$0xff]
    %v1273 = vld [vmem:[#allocation11 + $0x9a8] sm:$0xff]
    %v1274 = vld [vmem:[#allocation11 + $0x9b0] sm:$0xff]
    %v1275 = vld [vmem:[#allocation11 + $0x9b8] sm:$0xff]
    %v1276 = vld [vmem:[#allocation11 + $0x9c0] sm:$0xff]
    %v1277 = vld [vmem:[#allocation11 + $0x9c8] sm:$0xff]
    %v1278 = vld [vmem:[#allocation11 + $0x9d0] sm:$0xff]
    %v1279 = vld [vmem:[#allocation11 + $0x9d8] sm:$0xff]
    %v1280 = vld [vmem:[#allocation11 + $0x9e0] sm:$0xff]
    %v1281 = vld [vmem:[#allocation11 + $0x9e8] sm:$0xff]
    %v1282 = vld [vmem:[#allocation11 + $0x9f0] sm:$0xff]
    %v1283 = vld [vmem:[#allocation11 + $0x9f8] sm:$0xff]
    %v1284 = vld [vmem:[#allocation11 + $0xa00] sm:$0xff]
    %v1285 = vld [vmem:[#allocation11 + $0xa08] sm:$0xff]
    %v1286 = vld [vmem:[#allocation11 + $0xa10] sm:$0xff]
    %v1287 = vld [vmem:[#allocation11 + $0xa18] sm:$0xff]
    %v1288 = vld [vmem:[#allocation11 + $0xa20] sm:$0xff]
    %v1289 = vld [vmem:[#allocation11 + $0xa28] sm:$0xff]
    %v1290 = vld [vmem:[#allocation11 + $0xa30] sm:$0xff]
    %v1291 = vld [vmem:[#allocation11 + $0xa38] sm:$0xff]
    %v1292 = vld [vmem:[#allocation11 + $0xa40] sm:$0xff]
    %v1293 = vld [vmem:[#allocation11 + $0xa48] sm:$0xff]
    %v1294 = vld [vmem:[#allocation11 + $0xa50] sm:$0xff]
    %v1295 = vld [vmem:[#allocation11 + $0xa58] sm:$0xff]
    %v1296 = vld [vmem:[#allocation11 + $0xa60] sm:$0xff]
    %v1297 = vld [vmem:[#allocation11 + $0xa68] sm:$0xff]
    %v1298 = vld [vmem:[#allocation11 + $0xa70] sm:$0xff]
    %v1299 = vld [vmem:[#allocation11 + $0xa78] sm:$0xff]
    %v1300 = vld [vmem:[#allocation11 + $0xa80] sm:$0xff]
    %v1301 = vld [vmem:[#allocation11 + $0xa88] sm:$0xff]
    %v1302 = vld [vmem:[#allocation11 + $0xa90] sm:$0xff]
    %v1303 = vld [vmem:[#allocation11 + $0xa98] sm:$0xff]
    %v1304 = vld [vmem:[#allocation11 + $0xaa0] sm:$0xff]
    %v1305 = vld [vmem:[#allocation11 + $0xaa8] sm:$0xff]
    %v1306 = vld [vmem:[#allocation11 + $0xab0] sm:$0xff]
    %v1307 = vld [vmem:[#allocation11 + $0xab8] sm:$0xff]
    %v1308 = vld [vmem:[#allocation11 + $0xac0] sm:$0xff]
    %v1309 = vld [vmem:[#allocation11 + $0xac8] sm:$0xff]
    %v1310 = vld [vmem:[#allocation11 + $0xad0] sm:$0xff]
    %v1311 = vld [vmem:[#allocation11 + $0xad8] sm:$0xff]
    %v1312 = vld [vmem:[#allocation11 + $0xae0] sm:$0xff]
    %v1313 = vld [vmem:[#allocation11 + $0xae8] sm:$0xff]
    %v1314 = vld [vmem:[#allocation11 + $0xaf0] sm:$0xff]
    %v1315 = vld [vmem:[#allocation11 + $0xaf8] sm:$0xff]
    %v1316 = vld [vmem:[#allocation11 + $0xb00] sm:$0xff]
    %v1317 = vld [vmem:[#allocation11 + $0xb08] sm:$0xff]
    %v1318 = vld [vmem:[#allocation11 + $0xb10] sm:$0xff]
    %v1319 = vld [vmem:[#allocation11 + $0xb18] sm:$0xff]
    %v1320 = vld [vmem:[#allocation11 + $0xb20] sm:$0xff]
    %v1321 = vld [vmem:[#allocation11 + $0xb28] sm:$0xff]
    %v1322 = vld [vmem:[#allocation11 + $0xb30] sm:$0xff]
    %v1323 = vld [vmem:[#allocation11 + $0xb38] sm:$0xff]
    %v1324 = vld [vmem:[#allocation11 + $0xb40] sm:$0xff]
    %v1325 = vld [vmem:[#allocation11 + $0xb48] sm:$0xff]
    %v1326 = vld [vmem:[#allocation11 + $0xb50] sm:$0xff]
    %v1327 = vld [vmem:[#allocation11 + $0xb58] sm:$0xff]
    %v1328 = vld [vmem:[#allocation11 + $0xb60] sm:$0xff]
    %v1329 = vld [vmem:[#allocation11 + $0xb68] sm:$0xff]
    %v1330 = vld [vmem:[#allocation11 + $0xb70] sm:$0xff]
    %v1331 = vld [vmem:[#allocation11 + $0xb78] sm:$0xff]
    %v1332 = vld [vmem:[#allocation11 + $0xb80] sm:$0xff]
    %v1333 = vld [vmem:[#allocation11 + $0xb88] sm:$0xff]
    %v1334 = vld [vmem:[#allocation11 + $0xb90] sm:$0xff]
    %v1335 = vld [vmem:[#allocation11 + $0xb98] sm:$0xff]
    %v1336 = vld [vmem:[#allocation11 + $0xba0] sm:$0xff]
    %v1337 = vld [vmem:[#allocation11 + $0xba8] sm:$0xff]
    %v1338 = vld [vmem:[#allocation11 + $0xbb0] sm:$0xff]
    %v1339 = vld [vmem:[#allocation11 + $0xbb8] sm:$0xff]
    %v1340 = vld [vmem:[#allocation11 + $0xbc0] sm:$0xff]
    %v1341 = vld [vmem:[#allocation11 + $0xbc8] sm:$0xff]
    %v1342 = vld [vmem:[#allocation11 + $0xbd0] sm:$0xff]
    %v1343 = vld [vmem:[#allocation11 + $0xbd8] sm:$0xff]
    %v1344 = vld [vmem:[#allocation11 + $0xbe0] sm:$0xff]
    %v1345 = vld [vmem:[#allocation11 + $0xbe8] sm:$0xff]
    %v1346 = vld [vmem:[#allocation11 + $0xbf0] sm:$0xff]
    %v1347 = vld [vmem:[#allocation11 + $0xbf8] sm:$0xff]
    %v1348 = vld [vmem:[#allocation11 + $0xc00] sm:$0xff]
    %v1349 = vld [vmem:[#allocation11 + $0xc08] sm:$0xff]
    %v1350 = vld [vmem:[#allocation11 + $0xc10] sm:$0xff]
    %v1351 = vld [vmem:[#allocation11 + $0xc18] sm:$0xff]
    %v1352 = vld [vmem:[#allocation11 + $0xc20] sm:$0xff]
    %v1353 = vld [vmem:[#allocation11 + $0xc28] sm:$0xff]
    %v1354 = vld [vmem:[#allocation11 + $0xc30] sm:$0xff]
    %v1355 = vld [vmem:[#allocation11 + $0xc38] sm:$0xff]
    %v1356 = vld [vmem:[#allocation11 + $0xc40] sm:$0xff]
    %v1357 = vld [vmem:[#allocation11 + $0xc48] sm:$0xff]
    %v1358 = vld [vmem:[#allocation11 + $0xc50] sm:$0xff]
    %v1359 = vld [vmem:[#allocation11 + $0xc58] sm:$0xff]
    %v1360 = vld [vmem:[#allocation11 + $0xc60] sm:$0xff]
    %v1361 = vld [vmem:[#allocation11 + $0xc68] sm:$0xff]
    %v1362 = vld [vmem:[#allocation11 + $0xc70] sm:$0xff]
    %v1363 = vld [vmem:[#allocation11 + $0xc78] sm:$0xff]
    %v1364 = vld [vmem:[#allocation11 + $0xc80] sm:$0xff]
    %v1365 = vld [vmem:[#allocation11 + $0xc88] sm:$0xff]
    %v1366 = vld [vmem:[#allocation11 + $0xc90] sm:$0xff]
    %v1367 = vld [vmem:[#allocation11 + $0xc98] sm:$0xff]
    %v1368 = vld [vmem:[#allocation11 + $0xca0] sm:$0xff]
    %v1369 = vld [vmem:[#allocation11 + $0xca8] sm:$0xff]
    %v1370 = vld [vmem:[#allocation11 + $0xcb0] sm:$0xff]
    %v1371 = vld [vmem:[#allocation11 + $0xcb8] sm:$0xff]
    %v1372 = vld [vmem:[#allocation11 + $0xcc0] sm:$0xff]
    %v1373 = vld [vmem:[#allocation11 + $0xcc8] sm:$0xff]
    %v1374 = vld [vmem:[#allocation11 + $0xcd0] sm:$0xff]
    %v1375 = vld [vmem:[#allocation11 + $0xcd8] sm:$0xff]
    %v1376 = vld [vmem:[#allocation11 + $0xce0] sm:$0xff]
    %v1377 = vld [vmem:[#allocation11 + $0xce8] sm:$0xff]
    %v1378 = vld [vmem:[#allocation11 + $0xcf0] sm:$0xff]
    %v1379 = vld [vmem:[#allocation11 + $0xcf8] sm:$0xff]
    %v1380 = vld [vmem:[#allocation11 + $0xd00] sm:$0xff]
    %v1381 = vld [vmem:[#allocation11 + $0xd08] sm:$0xff]
    %v1382 = vld [vmem:[#allocation11 + $0xd10] sm:$0xff]
    %v1383 = vld [vmem:[#allocation11 + $0xd18] sm:$0xff]
    %v1384 = vld [vmem:[#allocation11 + $0xd20] sm:$0xff]
    %v1385 = vld [vmem:[#allocation11 + $0xd28] sm:$0xff]
    %v1386 = vld [vmem:[#allocation11 + $0xd30] sm:$0xff]
    %v1387 = vld [vmem:[#allocation11 + $0xd38] sm:$0xff]
    %v1388 = vld [vmem:[#allocation11 + $0xd40] sm:$0xff]
    %v1389 = vld [vmem:[#allocation11 + $0xd48] sm:$0xff]
    %v1390 = vld [vmem:[#allocation11 + $0xd50] sm:$0xff]
    %v1391 = vld [vmem:[#allocation11 + $0xd58] sm:$0xff]
    %v1392 = vld [vmem:[#allocation11 + $0xd60] sm:$0xff]
    %v1393 = vld [vmem:[#allocation11 + $0xd68] sm:$0xff]
    %v1394 = vld [vmem:[#allocation11 + $0xd70] sm:$0xff]
    %v1395 = vld [vmem:[#allocation11 + $0xd78] sm:$0xff]
    %v1396 = vld [vmem:[#allocation11 + $0xd80] sm:$0xff]
    %v1397 = vld [vmem:[#allocation11 + $0xd88] sm:$0xff]
    %v1398 = vld [vmem:[#allocation11 + $0xd90] sm:$0xff]
    %v1399 = vld [vmem:[#allocation11 + $0xd98] sm:$0xff]
    %v1400 = vld [vmem:[#allocation11 + $0xda0] sm:$0xff]
    %v1401 = vld [vmem:[#allocation11 + $0xda8] sm:$0xff]
    %v1402 = vld [vmem:[#allocation11 + $0xdb0] sm:$0xff]
    %v1403 = vld [vmem:[#allocation11 + $0xdb8] sm:$0xff]
    %v1404 = vld [vmem:[#allocation11 + $0xdc0] sm:$0xff]
    %v1405 = vld [vmem:[#allocation11 + $0xdc8] sm:$0xff]
    %v1406 = vld [vmem:[#allocation11 + $0xdd0] sm:$0xff]
    %v1407 = vld [vmem:[#allocation11 + $0xdd8] sm:$0xff]
    %v1408 = vld [vmem:[#allocation11 + $0xde0] sm:$0xff]
    %v1409 = vld [vmem:[#allocation11 + $0xde8] sm:$0xff]
    %v1410 = vld [vmem:[#allocation11 + $0xdf0] sm:$0xff]
    %v1411 = vld [vmem:[#allocation11 + $0xdf8] sm:$0xff]
    %v1412 = vld [vmem:[#allocation11 + $0xe00] sm:$0xff]
    %v1413 = vld [vmem:[#allocation11 + $0xe08] sm:$0xff]
    %v1414 = vld [vmem:[#allocation11 + $0xe10] sm:$0xff]
    %v1415 = vld [vmem:[#allocation11 + $0xe18] sm:$0xff]
    %v1416 = vld [vmem:[#allocation11 + $0xe20] sm:$0xff]
    %v1417 = vld [vmem:[#allocation11 + $0xe28] sm:$0xff]
    %v1418 = vld [vmem:[#allocation11 + $0xe30] sm:$0xff]
    %v1419 = vld [vmem:[#allocation11 + $0xe38] sm:$0xff]
    %v1420 = vld [vmem:[#allocation11 + $0xe40] sm:$0xff]
    %v1421 = vld [vmem:[#allocation11 + $0xe48] sm:$0xff]
    %v1422 = vld [vmem:[#allocation11 + $0xe50] sm:$0xff]
    %v1423 = vld [vmem:[#allocation11 + $0xe58] sm:$0xff]
    %v1424 = vld [vmem:[#allocation11 + $0xe60] sm:$0xff]
    %v1425 = vld [vmem:[#allocation11 + $0xe68] sm:$0xff]
    %v1426 = vld [vmem:[#allocation11 + $0xe70] sm:$0xff]
    %v1427 = vld [vmem:[#allocation11 + $0xe78] sm:$0xff]
    %v1428 = vld [vmem:[#allocation11 + $0xe80] sm:$0xff]
    %v1429 = vld [vmem:[#allocation11 + $0xe88] sm:$0xff]
    %v1430 = vld [vmem:[#allocation11 + $0xe90] sm:$0xff]
    %v1431 = vld [vmem:[#allocation11 + $0xe98] sm:$0xff]
    %v1432 = vld [vmem:[#allocation11 + $0xea0] sm:$0xff]
    %v1433 = vld [vmem:[#allocation11 + $0xea8] sm:$0xff]
    %v1434 = vld [vmem:[#allocation11 + $0xeb0] sm:$0xff]
    %v1435 = vld [vmem:[#allocation11 + $0xeb8] sm:$0xff]
    %v1436 = vld [vmem:[#allocation11 + $0xec0] sm:$0xff]
    %v1437 = vld [vmem:[#allocation11 + $0xec8] sm:$0xff]
    %v1438 = vld [vmem:[#allocation11 + $0xed0] sm:$0xff]
    %v1439 = vld [vmem:[#allocation11 + $0xed8] sm:$0xff]
    %v1440 = vld [vmem:[#allocation11 + $0xee0] sm:$0xff]
    %v1441 = vld [vmem:[#allocation11 + $0xee8] sm:$0xff]
    %v1442 = vld [vmem:[#allocation11 + $0xef0] sm:$0xff]
    %v1443 = vld [vmem:[#allocation11 + $0xef8] sm:$0xff]
    %v1444 = vld [vmem:[#allocation11 + $0xf00] sm:$0xff]
    %v1445 = vld [vmem:[#allocation11 + $0xf08] sm:$0xff]
    %v1446 = vld [vmem:[#allocation11 + $0xf10] sm:$0xff]
    %v1447 = vld [vmem:[#allocation11 + $0xf18] sm:$0xff]
    %v1448 = vld [vmem:[#allocation11 + $0xf20] sm:$0xff]
    %v1449 = vld [vmem:[#allocation11 + $0xf28] sm:$0xff]
    %v1450 = vld [vmem:[#allocation11 + $0xf30] sm:$0xff]
    %v1451 = vld [vmem:[#allocation11 + $0xf38] sm:$0xff]
    %v1452 = vld [vmem:[#allocation11 + $0xf40] sm:$0xff]
    %v1453 = vld [vmem:[#allocation11 + $0xf48] sm:$0xff]
    %v1454 = vld [vmem:[#allocation11 + $0xf50] sm:$0xff]
    %v1455 = vld [vmem:[#allocation11 + $0xf58] sm:$0xff]
    %v1456 = vld [vmem:[#allocation11 + $0xf60] sm:$0xff]
    %v1457 = vld [vmem:[#allocation11 + $0xf68] sm:$0xff]
    %v1458 = vld [vmem:[#allocation11 + $0xf70] sm:$0xff]
    %v1459 = vld [vmem:[#allocation11 + $0xf78] sm:$0xff]
    %v1460 = vld [vmem:[#allocation11 + $0xf80] sm:$0xff]
    %v1461 = vld [vmem:[#allocation11 + $0xf88] sm:$0xff]
    %v1462 = vld [vmem:[#allocation11 + $0xf90] sm:$0xff]
    %v1463 = vld [vmem:[#allocation11 + $0xf98] sm:$0xff]
    %v1464 = vld [vmem:[#allocation11 + $0xfa0] sm:$0xff]
    %v1465 = vld [vmem:[#allocation11 + $0xfa8] sm:$0xff]
    %v1466 = vld [vmem:[#allocation11 + $0xfb0] sm:$0xff]
    %v1467 = vld [vmem:[#allocation11 + $0xfb8] sm:$0xff]
    %v1468 = vld [vmem:[#allocation11 + $0xfc0] sm:$0xff]
    %v1469 = vld [vmem:[#allocation11 + $0xfc8] sm:$0xff]
    %v1470 = vld [vmem:[#allocation11 + $0xfd0] sm:$0xff]
    %v1471 = vld [vmem:[#allocation11 + $0xfd8] sm:$0xff]
    %v1472 = vld [vmem:[#allocation11 + $0xfe0] sm:$0xff]
    %v1473 = vld [vmem:[#allocation11 + $0xfe8] sm:$0xff]
    %v1474 = vld [vmem:[#allocation11 + $0xff0] sm:$0xff]
    %v1475 = vld [vmem:[#allocation11 + $0xff8] sm:$0xff]
    %v1476 = vld [vmem:[#allocation13] sm:$0xff]
    %v1478 = vlaneseq
    %v1479 = vshrl.u32 %v1478, 7
    %v1480 = vsub.s32 0, %v1479
    %v1481 = vrot.slane %v1476, %v1480
    %v1482 = vlaneseq
    %v1483 = vshrl.u32 %v1482, 7
    %v1484 = vsub.s32 1, %v1483
    %v1485 = vrot.slane %v1476, %v1484
    %v1486 = vlaneseq
    %v1487 = vshrl.u32 %v1486, 7
    %v1488 = vsub.s32 2, %v1487
    %v1489 = vrot.slane %v1476, %v1488
    %v1490 = vlaneseq
    %v1491 = vshrl.u32 %v1490, 7
    %v1492 = vsub.s32 3, %v1491
    %v1493 = vrot.slane %v1476, %v1492
    %v1494 = vlaneseq
    %v1495 = vshrl.u32 %v1494, 7
    %v1496 = vsub.s32 4, %v1495
    %v1497 = vrot.slane %v1476, %v1496
    %v1498 = vlaneseq
    %v1499 = vshrl.u32 %v1498, 7
    %v1500 = vsub.s32 5, %v1499
    %v1501 = vrot.slane %v1476, %v1500
    %v1502 = vlaneseq
    %v1503 = vshrl.u32 %v1502, 7
    %v1504 = vsub.s32 6, %v1503
    %v1505 = vrot.slane %v1476, %v1504
    %v1506 = vlaneseq
    %v1507 = vshrl.u32 %v1506, 7
    %v1508 = vsub.s32 7, %v1507
    %v1509 = vrot.slane %v1476, %v1508
    %v2030 = vunpack.c.l.b16 %v964
    %v2031 = vunpack.c.h.b16 %v964
    %v2032 = vunpack.c.l.b16 %v965
    %v2033 = vunpack.c.h.b16 %v965
    %v2034 = vunpack.c.l.b16 %v966
    %v2035 = vunpack.c.h.b16 %v966
    %v2036 = vunpack.c.l.b16 %v967
    %v2037 = vunpack.c.h.b16 %v967
    %v2038 = vunpack.c.l.b16 %v968
    %v2039 = vunpack.c.h.b16 %v968
    %v2040 = vunpack.c.l.b16 %v969
    %v2041 = vunpack.c.h.b16 %v969
    %v2042 = vunpack.c.l.b16 %v970
    %v2043 = vunpack.c.h.b16 %v970
    %v2044 = vunpack.c.l.b16 %v971
    %v2045 = vunpack.c.h.b16 %v971
    %v2046 = vunpack.c.l.b16 %v972
    %v2047 = vunpack.c.h.b16 %v972
    %v2048 = vunpack.c.l.b16 %v973
    %v2049 = vunpack.c.h.b16 %v973
    %v2050 = vunpack.c.l.b16 %v974
    %v2051 = vunpack.c.h.b16 %v974
    %v2052 = vunpack.c.l.b16 %v975
    %v2053 = vunpack.c.h.b16 %v975
    %v2054 = vunpack.c.l.b16 %v976
    %v2055 = vunpack.c.h.b16 %v976
    %v2056 = vunpack.c.l.b16 %v977
    %v2057 = vunpack.c.h.b16 %v977
    %v2058 = vunpack.c.l.b16 %v978
    %v2059 = vunpack.c.h.b16 %v978
    %v2060 = vunpack.c.l.b16 %v979
    %v2061 = vunpack.c.h.b16 %v979
    %v2062 = vunpack.c.l.b16 %v980
    %v2063 = vunpack.c.h.b16 %v980
    %v2064 = vunpack.c.l.b16 %v981
    %v2065 = vunpack.c.h.b16 %v981
    %v2066 = vunpack.c.l.b16 %v982
    %v2067 = vunpack.c.h.b16 %v982
    %v2068 = vunpack.c.l.b16 %v983
    %v2069 = vunpack.c.h.b16 %v983
    %v2070 = vunpack.c.l.b16 %v984
    %v2071 = vunpack.c.h.b16 %v984
    %v2072 = vunpack.c.l.b16 %v985
    %v2073 = vunpack.c.h.b16 %v985
    %v2074 = vunpack.c.l.b16 %v986
    %v2075 = vunpack.c.h.b16 %v986
    %v2076 = vunpack.c.l.b16 %v987
    %v2077 = vunpack.c.h.b16 %v987
    %v2078 = vunpack.c.l.b16 %v988
    %v2079 = vunpack.c.h.b16 %v988
    %v2080 = vunpack.c.l.b16 %v989
    %v2081 = vunpack.c.h.b16 %v989
    %v2082 = vunpack.c.l.b16 %v990
    %v2083 = vunpack.c.h.b16 %v990
    %v2084 = vunpack.c.l.b16 %v991
    %v2085 = vunpack.c.h.b16 %v991
    %v2086 = vunpack.c.l.b16 %v992
    %v2087 = vunpack.c.h.b16 %v992
    %v2088 = vunpack.c.l.b16 %v993
    %v2089 = vunpack.c.h.b16 %v993
    %v2090 = vunpack.c.l.b16 %v994
    %v2091 = vunpack.c.h.b16 %v994
    %v2092 = vunpack.c.l.b16 %v995
    %v2093 = vunpack.c.h.b16 %v995
    %v2094 = vunpack.c.l.b16 %v996
    %v2095 = vunpack.c.h.b16 %v996
    %v2096 = vunpack.c.l.b16 %v997
    %v2097 = vunpack.c.h.b16 %v997
    %v2098 = vunpack.c.l.b16 %v998
    %v2099 = vunpack.c.h.b16 %v998
    %v2100 = vunpack.c.l.b16 %v999
    %v2101 = vunpack.c.h.b16 %v999
    %v2102 = vunpack.c.l.b16 %v1000
    %v2103 = vunpack.c.h.b16 %v1000
    %v2104 = vunpack.c.l.b16 %v1001
    %v2105 = vunpack.c.h.b16 %v1001
    %v2106 = vunpack.c.l.b16 %v1002
    %v2107 = vunpack.c.h.b16 %v1002
    %v2108 = vunpack.c.l.b16 %v1003
    %v2109 = vunpack.c.h.b16 %v1003
    %v2110 = vunpack.c.l.b16 %v1004
    %v2111 = vunpack.c.h.b16 %v1004
    %v2112 = vunpack.c.l.b16 %v1005
    %v2113 = vunpack.c.h.b16 %v1005
    %v2114 = vunpack.c.l.b16 %v1006
    %v2115 = vunpack.c.h.b16 %v1006
    %v2116 = vunpack.c.l.b16 %v1007
    %v2117 = vunpack.c.h.b16 %v1007
    %v2118 = vunpack.c.l.b16 %v1008
    %v2119 = vunpack.c.h.b16 %v1008
    %v2120 = vunpack.c.l.b16 %v1009
    %v2121 = vunpack.c.h.b16 %v1009
    %v2122 = vunpack.c.l.b16 %v1010
    %v2123 = vunpack.c.h.b16 %v1010
    %v2124 = vunpack.c.l.b16 %v1011
    %v2125 = vunpack.c.h.b16 %v1011
    %v2126 = vunpack.c.l.b16 %v1012
    %v2127 = vunpack.c.h.b16 %v1012
    %v2128 = vunpack.c.l.b16 %v1013
    %v2129 = vunpack.c.h.b16 %v1013
    %v2130 = vunpack.c.l.b16 %v1014
    %v2131 = vunpack.c.h.b16 %v1014
    %v2132 = vunpack.c.l.b16 %v1015
    %v2133 = vunpack.c.h.b16 %v1015
    %v2134 = vunpack.c.l.b16 %v1016
    %v2135 = vunpack.c.h.b16 %v1016
    %v2136 = vunpack.c.l.b16 %v1017
    %v2137 = vunpack.c.h.b16 %v1017
    %v2138 = vunpack.c.l.b16 %v1018
    %v2139 = vunpack.c.h.b16 %v1018
    %v2140 = vunpack.c.l.b16 %v1019
    %v2141 = vunpack.c.h.b16 %v1019
    %v2142 = vunpack.c.l.b16 %v1020
    %v2143 = vunpack.c.h.b16 %v1020
    %v2144 = vunpack.c.l.b16 %v1021
    %v2145 = vunpack.c.h.b16 %v1021
    %v2146 = vunpack.c.l.b16 %v1022
    %v2147 = vunpack.c.h.b16 %v1022
    %v2148 = vunpack.c.l.b16 %v1023
    %v2149 = vunpack.c.h.b16 %v1023
    %v2150 = vunpack.c.l.b16 %v1024
    %v2151 = vunpack.c.h.b16 %v1024
    %v2152 = vunpack.c.l.b16 %v1025
    %v2153 = vunpack.c.h.b16 %v1025
    %v2154 = vunpack.c.l.b16 %v1026
    %v2155 = vunpack.c.h.b16 %v1026
    %v2156 = vunpack.c.l.b16 %v1027
    %v2157 = vunpack.c.h.b16 %v1027
    %v2158 = vunpack.c.l.b16 %v1028
    %v2159 = vunpack.c.h.b16 %v1028
    %v2160 = vunpack.c.l.b16 %v1029
    %v2161 = vunpack.c.h.b16 %v1029
    %v2162 = vunpack.c.l.b16 %v1030
    %v2163 = vunpack.c.h.b16 %v1030
    %v2164 = vunpack.c.l.b16 %v1031
    %v2165 = vunpack.c.h.b16 %v1031
    %v2166 = vunpack.c.l.b16 %v1032
    %v2167 = vunpack.c.h.b16 %v1032
    %v2168 = vunpack.c.l.b16 %v1033
    %v2169 = vunpack.c.h.b16 %v1033
    %v2170 = vunpack.c.l.b16 %v1034
    %v2171 = vunpack.c.h.b16 %v1034
    %v2172 = vunpack.c.l.b16 %v1035
    %v2173 = vunpack.c.h.b16 %v1035
    %v2174 = vunpack.c.l.b16 %v1036
    %v2175 = vunpack.c.h.b16 %v1036
    %v2176 = vunpack.c.l.b16 %v1037
    %v2177 = vunpack.c.h.b16 %v1037
    %v2178 = vunpack.c.l.b16 %v1038
    %v2179 = vunpack.c.h.b16 %v1038
    %v2180 = vunpack.c.l.b16 %v1039
    %v2181 = vunpack.c.h.b16 %v1039
    %v2182 = vunpack.c.l.b16 %v1040
    %v2183 = vunpack.c.h.b16 %v1040
    %v2184 = vunpack.c.l.b16 %v1041
    %v2185 = vunpack.c.h.b16 %v1041
    %v2186 = vunpack.c.l.b16 %v1042
    %v2187 = vunpack.c.h.b16 %v1042
    %v2188 = vunpack.c.l.b16 %v1043
    %v2189 = vunpack.c.h.b16 %v1043
    %v2190 = vunpack.c.l.b16 %v1044
    %v2191 = vunpack.c.h.b16 %v1044
    %v2192 = vunpack.c.l.b16 %v1045
    %v2193 = vunpack.c.h.b16 %v1045
    %v2194 = vunpack.c.l.b16 %v1046
    %v2195 = vunpack.c.h.b16 %v1046
    %v2196 = vunpack.c.l.b16 %v1047
    %v2197 = vunpack.c.h.b16 %v1047
    %v2198 = vunpack.c.l.b16 %v1048
    %v2199 = vunpack.c.h.b16 %v1048
    %v2200 = vunpack.c.l.b16 %v1049
    %v2201 = vunpack.c.h.b16 %v1049
    %v2202 = vunpack.c.l.b16 %v1050
    %v2203 = vunpack.c.h.b16 %v1050
    %v2204 = vunpack.c.l.b16 %v1051
    %v2205 = vunpack.c.h.b16 %v1051
    %v2206 = vunpack.c.l.b16 %v1052
    %v2207 = vunpack.c.h.b16 %v1052
    %v2208 = vunpack.c.l.b16 %v1053
    %v2209 = vunpack.c.h.b16 %v1053
    %v2210 = vunpack.c.l.b16 %v1054
    %v2211 = vunpack.c.h.b16 %v1054
    %v2212 = vunpack.c.l.b16 %v1055
    %v2213 = vunpack.c.h.b16 %v1055
    %v2214 = vunpack.c.l.b16 %v1056
    %v2215 = vunpack.c.h.b16 %v1056
    %v2216 = vunpack.c.l.b16 %v1057
    %v2217 = vunpack.c.h.b16 %v1057
    %v2218 = vunpack.c.l.b16 %v1058
    %v2219 = vunpack.c.h.b16 %v1058
    %v2220 = vunpack.c.l.b16 %v1059
    %v2221 = vunpack.c.h.b16 %v1059
    %v2222 = vunpack.c.l.b16 %v1060
    %v2223 = vunpack.c.h.b16 %v1060
    %v2224 = vunpack.c.l.b16 %v1061
    %v2225 = vunpack.c.h.b16 %v1061
    %v2226 = vunpack.c.l.b16 %v1062
    %v2227 = vunpack.c.h.b16 %v1062
    %v2228 = vunpack.c.l.b16 %v1063
    %v2229 = vunpack.c.h.b16 %v1063
    %v2230 = vunpack.c.l.b16 %v1064
    %v2231 = vunpack.c.h.b16 %v1064
    %v2232 = vunpack.c.l.b16 %v1065
    %v2233 = vunpack.c.h.b16 %v1065
    %v2234 = vunpack.c.l.b16 %v1066
    %v2235 = vunpack.c.h.b16 %v1066
    %v2236 = vunpack.c.l.b16 %v1067
    %v2237 = vunpack.c.h.b16 %v1067
    %v2238 = vunpack.c.l.b16 %v1068
    %v2239 = vunpack.c.h.b16 %v1068
    %v2240 = vunpack.c.l.b16 %v1069
    %v2241 = vunpack.c.h.b16 %v1069
    %v2242 = vunpack.c.l.b16 %v1070
    %v2243 = vunpack.c.h.b16 %v1070
    %v2244 = vunpack.c.l.b16 %v1071
    %v2245 = vunpack.c.h.b16 %v1071
    %v2246 = vunpack.c.l.b16 %v1072
    %v2247 = vunpack.c.h.b16 %v1072
    %v2248 = vunpack.c.l.b16 %v1073
    %v2249 = vunpack.c.h.b16 %v1073
    %v2250 = vunpack.c.l.b16 %v1074
    %v2251 = vunpack.c.h.b16 %v1074
    %v2252 = vunpack.c.l.b16 %v1075
    %v2253 = vunpack.c.h.b16 %v1075
    %v2254 = vunpack.c.l.b16 %v1076
    %v2255 = vunpack.c.h.b16 %v1076
    %v2256 = vunpack.c.l.b16 %v1077
    %v2257 = vunpack.c.h.b16 %v1077
    %v2258 = vunpack.c.l.b16 %v1078
    %v2259 = vunpack.c.h.b16 %v1078
    %v2260 = vunpack.c.l.b16 %v1079
    %v2261 = vunpack.c.h.b16 %v1079
    %v2262 = vunpack.c.l.b16 %v1080
    %v2263 = vunpack.c.h.b16 %v1080
    %v2264 = vunpack.c.l.b16 %v1081
    %v2265 = vunpack.c.h.b16 %v1081
    %v2266 = vunpack.c.l.b16 %v1082
    %v2267 = vunpack.c.h.b16 %v1082
    %v2268 = vunpack.c.l.b16 %v1083
    %v2269 = vunpack.c.h.b16 %v1083
    %v2270 = vunpack.c.l.b16 %v1084
    %v2271 = vunpack.c.h.b16 %v1084
    %v2272 = vunpack.c.l.b16 %v1085
    %v2273 = vunpack.c.h.b16 %v1085
    %v2274 = vunpack.c.l.b16 %v1086
    %v2275 = vunpack.c.h.b16 %v1086
    %v2276 = vunpack.c.l.b16 %v1087
    %v2277 = vunpack.c.h.b16 %v1087
    %v2278 = vunpack.c.l.b16 %v1088
    %v2279 = vunpack.c.h.b16 %v1088
    %v2280 = vunpack.c.l.b16 %v1089
    %v2281 = vunpack.c.h.b16 %v1089
    %v2282 = vunpack.c.l.b16 %v1090
    %v2283 = vunpack.c.h.b16 %v1090
    %v2284 = vunpack.c.l.b16 %v1091
    %v2285 = vunpack.c.h.b16 %v1091
    %v2286 = vunpack.c.l.b16 %v1092
    %v2287 = vunpack.c.h.b16 %v1092
    %v2288 = vunpack.c.l.b16 %v1093
    %v2289 = vunpack.c.h.b16 %v1093
    %v2290 = vunpack.c.l.b16 %v1094
    %v2291 = vunpack.c.h.b16 %v1094
    %v2292 = vunpack.c.l.b16 %v1095
    %v2293 = vunpack.c.h.b16 %v1095
    %v2294 = vunpack.c.l.b16 %v1096
    %v2295 = vunpack.c.h.b16 %v1096
    %v2296 = vunpack.c.l.b16 %v1097
    %v2297 = vunpack.c.h.b16 %v1097
    %v2298 = vunpack.c.l.b16 %v1098
    %v2299 = vunpack.c.h.b16 %v1098
    %v2300 = vunpack.c.l.b16 %v1099
    %v2301 = vunpack.c.h.b16 %v1099
    %v2302 = vunpack.c.l.b16 %v1100
    %v2303 = vunpack.c.h.b16 %v1100
    %v2304 = vunpack.c.l.b16 %v1101
    %v2305 = vunpack.c.h.b16 %v1101
    %v2306 = vunpack.c.l.b16 %v1102
    %v2307 = vunpack.c.h.b16 %v1102
    %v2308 = vunpack.c.l.b16 %v1103
    %v2309 = vunpack.c.h.b16 %v1103
    %v2310 = vunpack.c.l.b16 %v1104
    %v2311 = vunpack.c.h.b16 %v1104
    %v2312 = vunpack.c.l.b16 %v1105
    %v2313 = vunpack.c.h.b16 %v1105
    %v2314 = vunpack.c.l.b16 %v1106
    %v2315 = vunpack.c.h.b16 %v1106
    %v2316 = vunpack.c.l.b16 %v1107
    %v2317 = vunpack.c.h.b16 %v1107
    %v2318 = vunpack.c.l.b16 %v1108
    %v2319 = vunpack.c.h.b16 %v1108
    %v2320 = vunpack.c.l.b16 %v1109
    %v2321 = vunpack.c.h.b16 %v1109
    %v2322 = vunpack.c.l.b16 %v1110
    %v2323 = vunpack.c.h.b16 %v1110
    %v2324 = vunpack.c.l.b16 %v1111
    %v2325 = vunpack.c.h.b16 %v1111
    %v2326 = vunpack.c.l.b16 %v1112
    %v2327 = vunpack.c.h.b16 %v1112
    %v2328 = vunpack.c.l.b16 %v1113
    %v2329 = vunpack.c.h.b16 %v1113
    %v2330 = vunpack.c.l.b16 %v1114
    %v2331 = vunpack.c.h.b16 %v1114
    %v2332 = vunpack.c.l.b16 %v1115
    %v2333 = vunpack.c.h.b16 %v1115
    %v2334 = vunpack.c.l.b16 %v1116
    %v2335 = vunpack.c.h.b16 %v1116
    %v2336 = vunpack.c.l.b16 %v1117
    %v2337 = vunpack.c.h.b16 %v1117
    %v2338 = vunpack.c.l.b16 %v1118
    %v2339 = vunpack.c.h.b16 %v1118
    %v2340 = vunpack.c.l.b16 %v1119
    %v2341 = vunpack.c.h.b16 %v1119
    %v2342 = vunpack.c.l.b16 %v1120
    %v2343 = vunpack.c.h.b16 %v1120
    %v2344 = vunpack.c.l.b16 %v1121
    %v2345 = vunpack.c.h.b16 %v1121
    %v2346 = vunpack.c.l.b16 %v1122
    %v2347 = vunpack.c.h.b16 %v1122
    %v2348 = vunpack.c.l.b16 %v1123
    %v2349 = vunpack.c.h.b16 %v1123
    %v2350 = vunpack.c.l.b16 %v1124
    %v2351 = vunpack.c.h.b16 %v1124
    %v2352 = vunpack.c.l.b16 %v1125
    %v2353 = vunpack.c.h.b16 %v1125
    %v2354 = vunpack.c.l.b16 %v1126
    %v2355 = vunpack.c.h.b16 %v1126
    %v2356 = vunpack.c.l.b16 %v1127
    %v2357 = vunpack.c.h.b16 %v1127
    %v2358 = vunpack.c.l.b16 %v1128
    %v2359 = vunpack.c.h.b16 %v1128
    %v2360 = vunpack.c.l.b16 %v1129
    %v2361 = vunpack.c.h.b16 %v1129
    %v2362 = vunpack.c.l.b16 %v1130
    %v2363 = vunpack.c.h.b16 %v1130
    %v2364 = vunpack.c.l.b16 %v1131
    %v2365 = vunpack.c.h.b16 %v1131
    %v2366 = vunpack.c.l.b16 %v1132
    %v2367 = vunpack.c.h.b16 %v1132
    %v2368 = vunpack.c.l.b16 %v1133
    %v2369 = vunpack.c.h.b16 %v1133
    %v2370 = vunpack.c.l.b16 %v1134
    %v2371 = vunpack.c.h.b16 %v1134
    %v2372 = vunpack.c.l.b16 %v1135
    %v2373 = vunpack.c.h.b16 %v1135
    %v2374 = vunpack.c.l.b16 %v1136
    %v2375 = vunpack.c.h.b16 %v1136
    %v2376 = vunpack.c.l.b16 %v1137
    %v2377 = vunpack.c.h.b16 %v1137
    %v2378 = vunpack.c.l.b16 %v1138
    %v2379 = vunpack.c.h.b16 %v1138
    %v2380 = vunpack.c.l.b16 %v1139
    %v2381 = vunpack.c.h.b16 %v1139
    %v2382 = vunpack.c.l.b16 %v1140
    %v2383 = vunpack.c.h.b16 %v1140
    %v2384 = vunpack.c.l.b16 %v1141
    %v2385 = vunpack.c.h.b16 %v1141
    %v2386 = vunpack.c.l.b16 %v1142
    %v2387 = vunpack.c.h.b16 %v1142
    %v2388 = vunpack.c.l.b16 %v1143
    %v2389 = vunpack.c.h.b16 %v1143
    %v2390 = vunpack.c.l.b16 %v1144
    %v2391 = vunpack.c.h.b16 %v1144
    %v2392 = vunpack.c.l.b16 %v1145
    %v2393 = vunpack.c.h.b16 %v1145
    %v2394 = vunpack.c.l.b16 %v1146
    %v2395 = vunpack.c.h.b16 %v1146
    %v2396 = vunpack.c.l.b16 %v1147
    %v2397 = vunpack.c.h.b16 %v1147
    %v2398 = vunpack.c.l.b16 %v1148
    %v2399 = vunpack.c.h.b16 %v1148
    %v2400 = vunpack.c.l.b16 %v1149
    %v2401 = vunpack.c.h.b16 %v1149
    %v2402 = vunpack.c.l.b16 %v1150
    %v2403 = vunpack.c.h.b16 %v1150
    %v2404 = vunpack.c.l.b16 %v1151
    %v2405 = vunpack.c.h.b16 %v1151
    %v2406 = vunpack.c.l.b16 %v1152
    %v2407 = vunpack.c.h.b16 %v1152
    %v2408 = vunpack.c.l.b16 %v1153
    %v2409 = vunpack.c.h.b16 %v1153
    %v2410 = vunpack.c.l.b16 %v1154
    %v2411 = vunpack.c.h.b16 %v1154
    %v2412 = vunpack.c.l.b16 %v1155
    %v2413 = vunpack.c.h.b16 %v1155
    %v2414 = vunpack.c.l.b16 %v1156
    %v2415 = vunpack.c.h.b16 %v1156
    %v2416 = vunpack.c.l.b16 %v1157
    %v2417 = vunpack.c.h.b16 %v1157
    %v2418 = vunpack.c.l.b16 %v1158
    %v2419 = vunpack.c.h.b16 %v1158
    %v2420 = vunpack.c.l.b16 %v1159
    %v2421 = vunpack.c.h.b16 %v1159
    %v2422 = vunpack.c.l.b16 %v1160
    %v2423 = vunpack.c.h.b16 %v1160
    %v2424 = vunpack.c.l.b16 %v1161
    %v2425 = vunpack.c.h.b16 %v1161
    %v2426 = vunpack.c.l.b16 %v1162
    %v2427 = vunpack.c.h.b16 %v1162
    %v2428 = vunpack.c.l.b16 %v1163
    %v2429 = vunpack.c.h.b16 %v1163
    %v2430 = vunpack.c.l.b16 %v1164
    %v2431 = vunpack.c.h.b16 %v1164
    %v2432 = vunpack.c.l.b16 %v1165
    %v2433 = vunpack.c.h.b16 %v1165
    %v2434 = vunpack.c.l.b16 %v1166
    %v2435 = vunpack.c.h.b16 %v1166
    %v2436 = vunpack.c.l.b16 %v1167
    %v2437 = vunpack.c.h.b16 %v1167
    %v2438 = vunpack.c.l.b16 %v1168
    %v2439 = vunpack.c.h.b16 %v1168
    %v2440 = vunpack.c.l.b16 %v1169
    %v2441 = vunpack.c.h.b16 %v1169
    %v2442 = vunpack.c.l.b16 %v1170
    %v2443 = vunpack.c.h.b16 %v1170
    %v2444 = vunpack.c.l.b16 %v1171
    %v2445 = vunpack.c.h.b16 %v1171
    %v2446 = vunpack.c.l.b16 %v1172
    %v2447 = vunpack.c.h.b16 %v1172
    %v2448 = vunpack.c.l.b16 %v1173
    %v2449 = vunpack.c.h.b16 %v1173
    %v2450 = vunpack.c.l.b16 %v1174
    %v2451 = vunpack.c.h.b16 %v1174
    %v2452 = vunpack.c.l.b16 %v1175
    %v2453 = vunpack.c.h.b16 %v1175
    %v2454 = vunpack.c.l.b16 %v1176
    %v2455 = vunpack.c.h.b16 %v1176
    %v2456 = vunpack.c.l.b16 %v1177
    %v2457 = vunpack.c.h.b16 %v1177
    %v2458 = vunpack.c.l.b16 %v1178
    %v2459 = vunpack.c.h.b16 %v1178
    %v2460 = vunpack.c.l.b16 %v1179
    %v2461 = vunpack.c.h.b16 %v1179
    %v2462 = vunpack.c.l.b16 %v1180
    %v2463 = vunpack.c.h.b16 %v1180
    %v2464 = vunpack.c.l.b16 %v1181
    %v2465 = vunpack.c.h.b16 %v1181
    %v2466 = vunpack.c.l.b16 %v1182
    %v2467 = vunpack.c.h.b16 %v1182
    %v2468 = vunpack.c.l.b16 %v1183
    %v2469 = vunpack.c.h.b16 %v1183
    %v2470 = vunpack.c.l.b16 %v1184
    %v2471 = vunpack.c.h.b16 %v1184
    %v2472 = vunpack.c.l.b16 %v1185
    %v2473 = vunpack.c.h.b16 %v1185
    %v2474 = vunpack.c.l.b16 %v1186
    %v2475 = vunpack.c.h.b16 %v1186
    %v2476 = vunpack.c.l.b16 %v1187
    %v2477 = vunpack.c.h.b16 %v1187
    %v2478 = vunpack.c.l.b16 %v1188
    %v2479 = vunpack.c.h.b16 %v1188
    %v2480 = vunpack.c.l.b16 %v1189
    %v2481 = vunpack.c.h.b16 %v1189
    %v2482 = vunpack.c.l.b16 %v1190
    %v2483 = vunpack.c.h.b16 %v1190
    %v2484 = vunpack.c.l.b16 %v1191
    %v2485 = vunpack.c.h.b16 %v1191
    %v2486 = vunpack.c.l.b16 %v1192
    %v2487 = vunpack.c.h.b16 %v1192
    %v2488 = vunpack.c.l.b16 %v1193
    %v2489 = vunpack.c.h.b16 %v1193
    %v2490 = vunpack.c.l.b16 %v1194
    %v2491 = vunpack.c.h.b16 %v1194
    %v2492 = vunpack.c.l.b16 %v1195
    %v2493 = vunpack.c.h.b16 %v1195
    %v2494 = vunpack.c.l.b16 %v1196
    %v2495 = vunpack.c.h.b16 %v1196
    %v2496 = vunpack.c.l.b16 %v1197
    %v2497 = vunpack.c.h.b16 %v1197
    %v2498 = vunpack.c.l.b16 %v1198
    %v2499 = vunpack.c.h.b16 %v1198
    %v2500 = vunpack.c.l.b16 %v1199
    %v2501 = vunpack.c.h.b16 %v1199
    %v2502 = vunpack.c.l.b16 %v1200
    %v2503 = vunpack.c.h.b16 %v1200
    %v2504 = vunpack.c.l.b16 %v1201
    %v2505 = vunpack.c.h.b16 %v1201
    %v2506 = vunpack.c.l.b16 %v1202
    %v2507 = vunpack.c.h.b16 %v1202
    %v2508 = vunpack.c.l.b16 %v1203
    %v2509 = vunpack.c.h.b16 %v1203
    %v2510 = vunpack.c.l.b16 %v1204
    %v2511 = vunpack.c.h.b16 %v1204
    %v2512 = vunpack.c.l.b16 %v1205
    %v2513 = vunpack.c.h.b16 %v1205
    %v2514 = vunpack.c.l.b16 %v1206
    %v2515 = vunpack.c.h.b16 %v1206
    %v2516 = vunpack.c.l.b16 %v1207
    %v2517 = vunpack.c.h.b16 %v1207
    %v2518 = vunpack.c.l.b16 %v1208
    %v2519 = vunpack.c.h.b16 %v1208
    %v2520 = vunpack.c.l.b16 %v1209
    %v2521 = vunpack.c.h.b16 %v1209
    %v2522 = vunpack.c.l.b16 %v1210
    %v2523 = vunpack.c.h.b16 %v1210
    %v2524 = vunpack.c.l.b16 %v1211
    %v2525 = vunpack.c.h.b16 %v1211
    %v2526 = vunpack.c.l.b16 %v1212
    %v2527 = vunpack.c.h.b16 %v1212
    %v2528 = vunpack.c.l.b16 %v1213
    %v2529 = vunpack.c.h.b16 %v1213
    %v2530 = vunpack.c.l.b16 %v1214
    %v2531 = vunpack.c.h.b16 %v1214
    %v2532 = vunpack.c.l.b16 %v1215
    %v2533 = vunpack.c.h.b16 %v1215
    %v2534 = vunpack.c.l.b16 %v1216
    %v2535 = vunpack.c.h.b16 %v1216
    %v2536 = vunpack.c.l.b16 %v1217
    %v2537 = vunpack.c.h.b16 %v1217
    %v2538 = vunpack.c.l.b16 %v1218
    %v2539 = vunpack.c.h.b16 %v1218
    %v2540 = vunpack.c.l.b16 %v1219
    %v2541 = vunpack.c.h.b16 %v1219
    %v2542 = vunpack.c.l.b16 %v1220
    %v2543 = vunpack.c.h.b16 %v1220
    %v2544 = vunpack.c.l.b16 %v1221
    %v2545 = vunpack.c.h.b16 %v1221
    %v2546 = vunpack.c.l.b16 %v1222
    %v2547 = vunpack.c.h.b16 %v1222
    %v2548 = vunpack.c.l.b16 %v1223
    %v2549 = vunpack.c.h.b16 %v1223
    %v2550 = vunpack.c.l.b16 %v1224
    %v2551 = vunpack.c.h.b16 %v1224
    %v2552 = vunpack.c.l.b16 %v1225
    %v2553 = vunpack.c.h.b16 %v1225
    %v2554 = vunpack.c.l.b16 %v1226
    %v2555 = vunpack.c.h.b16 %v1226
    %v2556 = vunpack.c.l.b16 %v1227
    %v2557 = vunpack.c.h.b16 %v1227
    %v2558 = vunpack.c.l.b16 %v1228
    %v2559 = vunpack.c.h.b16 %v1228
    %v2560 = vunpack.c.l.b16 %v1229
    %v2561 = vunpack.c.h.b16 %v1229
    %v2562 = vunpack.c.l.b16 %v1230
    %v2563 = vunpack.c.h.b16 %v1230
    %v2564 = vunpack.c.l.b16 %v1231
    %v2565 = vunpack.c.h.b16 %v1231
    %v2566 = vunpack.c.l.b16 %v1232
    %v2567 = vunpack.c.h.b16 %v1232
    %v2568 = vunpack.c.l.b16 %v1233
    %v2569 = vunpack.c.h.b16 %v1233
    %v2570 = vunpack.c.l.b16 %v1234
    %v2571 = vunpack.c.h.b16 %v1234
    %v2572 = vunpack.c.l.b16 %v1235
    %v2573 = vunpack.c.h.b16 %v1235
    %v2574 = vunpack.c.l.b16 %v1236
    %v2575 = vunpack.c.h.b16 %v1236
    %v2576 = vunpack.c.l.b16 %v1237
    %v2577 = vunpack.c.h.b16 %v1237
    %v2578 = vunpack.c.l.b16 %v1238
    %v2579 = vunpack.c.h.b16 %v1238
    %v2580 = vunpack.c.l.b16 %v1239
    %v2581 = vunpack.c.h.b16 %v1239
    %v2582 = vunpack.c.l.b16 %v1240
    %v2583 = vunpack.c.h.b16 %v1240
    %v2584 = vunpack.c.l.b16 %v1241
    %v2585 = vunpack.c.h.b16 %v1241
    %v2586 = vunpack.c.l.b16 %v1242
    %v2587 = vunpack.c.h.b16 %v1242
    %v2588 = vunpack.c.l.b16 %v1243
    %v2589 = vunpack.c.h.b16 %v1243
    %v2590 = vunpack.c.l.b16 %v1244
    %v2591 = vunpack.c.h.b16 %v1244
    %v2592 = vunpack.c.l.b16 %v1245
    %v2593 = vunpack.c.h.b16 %v1245
    %v2594 = vunpack.c.l.b16 %v1246
    %v2595 = vunpack.c.h.b16 %v1246
    %v2596 = vunpack.c.l.b16 %v1247
    %v2597 = vunpack.c.h.b16 %v1247
    %v2598 = vunpack.c.l.b16 %v1248
    %v2599 = vunpack.c.h.b16 %v1248
    %v2600 = vunpack.c.l.b16 %v1249
    %v2601 = vunpack.c.h.b16 %v1249
    %v2602 = vunpack.c.l.b16 %v1250
    %v2603 = vunpack.c.h.b16 %v1250
    %v2604 = vunpack.c.l.b16 %v1251
    %v2605 = vunpack.c.h.b16 %v1251
    %v2606 = vunpack.c.l.b16 %v1252
    %v2607 = vunpack.c.h.b16 %v1252
    %v2608 = vunpack.c.l.b16 %v1253
    %v2609 = vunpack.c.h.b16 %v1253
    %v2610 = vunpack.c.l.b16 %v1254
    %v2611 = vunpack.c.h.b16 %v1254
    %v2612 = vunpack.c.l.b16 %v1255
    %v2613 = vunpack.c.h.b16 %v1255
    %v2614 = vunpack.c.l.b16 %v1256
    %v2615 = vunpack.c.h.b16 %v1256
    %v2616 = vunpack.c.l.b16 %v1257
    %v2617 = vunpack.c.h.b16 %v1257
    %v2618 = vunpack.c.l.b16 %v1258
    %v2619 = vunpack.c.h.b16 %v1258
    %v2620 = vunpack.c.l.b16 %v1259
    %v2621 = vunpack.c.h.b16 %v1259
    %v2622 = vunpack.c.l.b16 %v1260
    %v2623 = vunpack.c.h.b16 %v1260
    %v2624 = vunpack.c.l.b16 %v1261
    %v2625 = vunpack.c.h.b16 %v1261
    %v2626 = vunpack.c.l.b16 %v1262
    %v2627 = vunpack.c.h.b16 %v1262
    %v2628 = vunpack.c.l.b16 %v1263
    %v2629 = vunpack.c.h.b16 %v1263
    %v2630 = vunpack.c.l.b16 %v1264
    %v2631 = vunpack.c.h.b16 %v1264
    %v2632 = vunpack.c.l.b16 %v1265
    %v2633 = vunpack.c.h.b16 %v1265
    %v2634 = vunpack.c.l.b16 %v1266
    %v2635 = vunpack.c.h.b16 %v1266
    %v2636 = vunpack.c.l.b16 %v1267
    %v2637 = vunpack.c.h.b16 %v1267
    %v2638 = vunpack.c.l.b16 %v1268
    %v2639 = vunpack.c.h.b16 %v1268
    %v2640 = vunpack.c.l.b16 %v1269
    %v2641 = vunpack.c.h.b16 %v1269
    %v2642 = vunpack.c.l.b16 %v1270
    %v2643 = vunpack.c.h.b16 %v1270
    %v2644 = vunpack.c.l.b16 %v1271
    %v2645 = vunpack.c.h.b16 %v1271
    %v2646 = vunpack.c.l.b16 %v1272
    %v2647 = vunpack.c.h.b16 %v1272
    %v2648 = vunpack.c.l.b16 %v1273
    %v2649 = vunpack.c.h.b16 %v1273
    %v2650 = vunpack.c.l.b16 %v1274
    %v2651 = vunpack.c.h.b16 %v1274
    %v2652 = vunpack.c.l.b16 %v1275
    %v2653 = vunpack.c.h.b16 %v1275
    %v2654 = vunpack.c.l.b16 %v1276
    %v2655 = vunpack.c.h.b16 %v1276
    %v2656 = vunpack.c.l.b16 %v1277
    %v2657 = vunpack.c.h.b16 %v1277
    %v2658 = vunpack.c.l.b16 %v1278
    %v2659 = vunpack.c.h.b16 %v1278
    %v2660 = vunpack.c.l.b16 %v1279
    %v2661 = vunpack.c.h.b16 %v1279
    %v2662 = vunpack.c.l.b16 %v1280
    %v2663 = vunpack.c.h.b16 %v1280
    %v2664 = vunpack.c.l.b16 %v1281
    %v2665 = vunpack.c.h.b16 %v1281
    %v2666 = vunpack.c.l.b16 %v1282
    %v2667 = vunpack.c.h.b16 %v1282
    %v2668 = vunpack.c.l.b16 %v1283
    %v2669 = vunpack.c.h.b16 %v1283
    %v2670 = vunpack.c.l.b16 %v1284
    %v2671 = vunpack.c.h.b16 %v1284
    %v2672 = vunpack.c.l.b16 %v1285
    %v2673 = vunpack.c.h.b16 %v1285
    %v2674 = vunpack.c.l.b16 %v1286
    %v2675 = vunpack.c.h.b16 %v1286
    %v2676 = vunpack.c.l.b16 %v1287
    %v2677 = vunpack.c.h.b16 %v1287
    %v2678 = vunpack.c.l.b16 %v1288
    %v2679 = vunpack.c.h.b16 %v1288
    %v2680 = vunpack.c.l.b16 %v1289
    %v2681 = vunpack.c.h.b16 %v1289
    %v2682 = vunpack.c.l.b16 %v1290
    %v2683 = vunpack.c.h.b16 %v1290
    %v2684 = vunpack.c.l.b16 %v1291
    %v2685 = vunpack.c.h.b16 %v1291
    %v2686 = vunpack.c.l.b16 %v1292
    %v2687 = vunpack.c.h.b16 %v1292
    %v2688 = vunpack.c.l.b16 %v1293
    %v2689 = vunpack.c.h.b16 %v1293
    %v2690 = vunpack.c.l.b16 %v1294
    %v2691 = vunpack.c.h.b16 %v1294
    %v2692 = vunpack.c.l.b16 %v1295
    %v2693 = vunpack.c.h.b16 %v1295
    %v2694 = vunpack.c.l.b16 %v1296
    %v2695 = vunpack.c.h.b16 %v1296
    %v2696 = vunpack.c.l.b16 %v1297
    %v2697 = vunpack.c.h.b16 %v1297
    %v2698 = vunpack.c.l.b16 %v1298
    %v2699 = vunpack.c.h.b16 %v1298
    %v2700 = vunpack.c.l.b16 %v1299
    %v2701 = vunpack.c.h.b16 %v1299
    %v2702 = vunpack.c.l.b16 %v1300
    %v2703 = vunpack.c.h.b16 %v1300
    %v2704 = vunpack.c.l.b16 %v1301
    %v2705 = vunpack.c.h.b16 %v1301
    %v2706 = vunpack.c.l.b16 %v1302
    %v2707 = vunpack.c.h.b16 %v1302
    %v2708 = vunpack.c.l.b16 %v1303
    %v2709 = vunpack.c.h.b16 %v1303
    %v2710 = vunpack.c.l.b16 %v1304
    %v2711 = vunpack.c.h.b16 %v1304
    %v2712 = vunpack.c.l.b16 %v1305
    %v2713 = vunpack.c.h.b16 %v1305
    %v2714 = vunpack.c.l.b16 %v1306
    %v2715 = vunpack.c.h.b16 %v1306
    %v2716 = vunpack.c.l.b16 %v1307
    %v2717 = vunpack.c.h.b16 %v1307
    %v2718 = vunpack.c.l.b16 %v1308
    %v2719 = vunpack.c.h.b16 %v1308
    %v2720 = vunpack.c.l.b16 %v1309
    %v2721 = vunpack.c.h.b16 %v1309
    %v2722 = vunpack.c.l.b16 %v1310
    %v2723 = vunpack.c.h.b16 %v1310
    %v2724 = vunpack.c.l.b16 %v1311
    %v2725 = vunpack.c.h.b16 %v1311
    %v2726 = vunpack.c.l.b16 %v1312
    %v2727 = vunpack.c.h.b16 %v1312
    %v2728 = vunpack.c.l.b16 %v1313
    %v2729 = vunpack.c.h.b16 %v1313
    %v2730 = vunpack.c.l.b16 %v1314
    %v2731 = vunpack.c.h.b16 %v1314
    %v2732 = vunpack.c.l.b16 %v1315
    %v2733 = vunpack.c.h.b16 %v1315
    %v2734 = vunpack.c.l.b16 %v1316
    %v2735 = vunpack.c.h.b16 %v1316
    %v2736 = vunpack.c.l.b16 %v1317
    %v2737 = vunpack.c.h.b16 %v1317
    %v2738 = vunpack.c.l.b16 %v1318
    %v2739 = vunpack.c.h.b16 %v1318
    %v2740 = vunpack.c.l.b16 %v1319
    %v2741 = vunpack.c.h.b16 %v1319
    %v2742 = vunpack.c.l.b16 %v1320
    %v2743 = vunpack.c.h.b16 %v1320
    %v2744 = vunpack.c.l.b16 %v1321
    %v2745 = vunpack.c.h.b16 %v1321
    %v2746 = vunpack.c.l.b16 %v1322
    %v2747 = vunpack.c.h.b16 %v1322
    %v2748 = vunpack.c.l.b16 %v1323
    %v2749 = vunpack.c.h.b16 %v1323
    %v2750 = vunpack.c.l.b16 %v1324
    %v2751 = vunpack.c.h.b16 %v1324
    %v2752 = vunpack.c.l.b16 %v1325
    %v2753 = vunpack.c.h.b16 %v1325
    %v2754 = vunpack.c.l.b16 %v1326
    %v2755 = vunpack.c.h.b16 %v1326
    %v2756 = vunpack.c.l.b16 %v1327
    %v2757 = vunpack.c.h.b16 %v1327
    %v2758 = vunpack.c.l.b16 %v1328
    %v2759 = vunpack.c.h.b16 %v1328
    %v2760 = vunpack.c.l.b16 %v1329
    %v2761 = vunpack.c.h.b16 %v1329
    %v2762 = vunpack.c.l.b16 %v1330
    %v2763 = vunpack.c.h.b16 %v1330
    %v2764 = vunpack.c.l.b16 %v1331
    %v2765 = vunpack.c.h.b16 %v1331
    %v2766 = vunpack.c.l.b16 %v1332
    %v2767 = vunpack.c.h.b16 %v1332
    %v2768 = vunpack.c.l.b16 %v1333
    %v2769 = vunpack.c.h.b16 %v1333
    %v2770 = vunpack.c.l.b16 %v1334
    %v2771 = vunpack.c.h.b16 %v1334
    %v2772 = vunpack.c.l.b16 %v1335
    %v2773 = vunpack.c.h.b16 %v1335
    %v2774 = vunpack.c.l.b16 %v1336
    %v2775 = vunpack.c.h.b16 %v1336
    %v2776 = vunpack.c.l.b16 %v1337
    %v2777 = vunpack.c.h.b16 %v1337
    %v2778 = vunpack.c.l.b16 %v1338
    %v2779 = vunpack.c.h.b16 %v1338
    %v2780 = vunpack.c.l.b16 %v1339
    %v2781 = vunpack.c.h.b16 %v1339
    %v2782 = vunpack.c.l.b16 %v1340
    %v2783 = vunpack.c.h.b16 %v1340
    %v2784 = vunpack.c.l.b16 %v1341
    %v2785 = vunpack.c.h.b16 %v1341
    %v2786 = vunpack.c.l.b16 %v1342
    %v2787 = vunpack.c.h.b16 %v1342
    %v2788 = vunpack.c.l.b16 %v1343
    %v2789 = vunpack.c.h.b16 %v1343
    %v2790 = vunpack.c.l.b16 %v1344
    %v2791 = vunpack.c.h.b16 %v1344
    %v2792 = vunpack.c.l.b16 %v1345
    %v2793 = vunpack.c.h.b16 %v1345
    %v2794 = vunpack.c.l.b16 %v1346
    %v2795 = vunpack.c.h.b16 %v1346
    %v2796 = vunpack.c.l.b16 %v1347
    %v2797 = vunpack.c.h.b16 %v1347
    %v2798 = vunpack.c.l.b16 %v1348
    %v2799 = vunpack.c.h.b16 %v1348
    %v2800 = vunpack.c.l.b16 %v1349
    %v2801 = vunpack.c.h.b16 %v1349
    %v2802 = vunpack.c.l.b16 %v1350
    %v2803 = vunpack.c.h.b16 %v1350
    %v2804 = vunpack.c.l.b16 %v1351
    %v2805 = vunpack.c.h.b16 %v1351
    %v2806 = vunpack.c.l.b16 %v1352
    %v2807 = vunpack.c.h.b16 %v1352
    %v2808 = vunpack.c.l.b16 %v1353
    %v2809 = vunpack.c.h.b16 %v1353
    %v2810 = vunpack.c.l.b16 %v1354
    %v2811 = vunpack.c.h.b16 %v1354
    %v2812 = vunpack.c.l.b16 %v1355
    %v2813 = vunpack.c.h.b16 %v1355
    %v2814 = vunpack.c.l.b16 %v1356
    %v2815 = vunpack.c.h.b16 %v1356
    %v2816 = vunpack.c.l.b16 %v1357
    %v2817 = vunpack.c.h.b16 %v1357
    %v2818 = vunpack.c.l.b16 %v1358
    %v2819 = vunpack.c.h.b16 %v1358
    %v2820 = vunpack.c.l.b16 %v1359
    %v2821 = vunpack.c.h.b16 %v1359
    %v2822 = vunpack.c.l.b16 %v1360
    %v2823 = vunpack.c.h.b16 %v1360
    %v2824 = vunpack.c.l.b16 %v1361
    %v2825 = vunpack.c.h.b16 %v1361
    %v2826 = vunpack.c.l.b16 %v1362
    %v2827 = vunpack.c.h.b16 %v1362
    %v2828 = vunpack.c.l.b16 %v1363
    %v2829 = vunpack.c.h.b16 %v1363
    %v2830 = vunpack.c.l.b16 %v1364
    %v2831 = vunpack.c.h.b16 %v1364
    %v2832 = vunpack.c.l.b16 %v1365
    %v2833 = vunpack.c.h.b16 %v1365
    %v2834 = vunpack.c.l.b16 %v1366
    %v2835 = vunpack.c.h.b16 %v1366
    %v2836 = vunpack.c.l.b16 %v1367
    %v2837 = vunpack.c.h.b16 %v1367
    %v2838 = vunpack.c.l.b16 %v1368
    %v2839 = vunpack.c.h.b16 %v1368
    %v2840 = vunpack.c.l.b16 %v1369
    %v2841 = vunpack.c.h.b16 %v1369
    %v2842 = vunpack.c.l.b16 %v1370
    %v2843 = vunpack.c.h.b16 %v1370
    %v2844 = vunpack.c.l.b16 %v1371
    %v2845 = vunpack.c.h.b16 %v1371
    %v2846 = vunpack.c.l.b16 %v1372
    %v2847 = vunpack.c.h.b16 %v1372
    %v2848 = vunpack.c.l.b16 %v1373
    %v2849 = vunpack.c.h.b16 %v1373
    %v2850 = vunpack.c.l.b16 %v1374
    %v2851 = vunpack.c.h.b16 %v1374
    %v2852 = vunpack.c.l.b16 %v1375
    %v2853 = vunpack.c.h.b16 %v1375
    %v2854 = vunpack.c.l.b16 %v1376
    %v2855 = vunpack.c.h.b16 %v1376
    %v2856 = vunpack.c.l.b16 %v1377
    %v2857 = vunpack.c.h.b16 %v1377
    %v2858 = vunpack.c.l.b16 %v1378
    %v2859 = vunpack.c.h.b16 %v1378
    %v2860 = vunpack.c.l.b16 %v1379
    %v2861 = vunpack.c.h.b16 %v1379
    %v2862 = vunpack.c.l.b16 %v1380
    %v2863 = vunpack.c.h.b16 %v1380
    %v2864 = vunpack.c.l.b16 %v1381
    %v2865 = vunpack.c.h.b16 %v1381
    %v2866 = vunpack.c.l.b16 %v1382
    %v2867 = vunpack.c.h.b16 %v1382
    %v2868 = vunpack.c.l.b16 %v1383
    %v2869 = vunpack.c.h.b16 %v1383
    %v2870 = vunpack.c.l.b16 %v1384
    %v2871 = vunpack.c.h.b16 %v1384
    %v2872 = vunpack.c.l.b16 %v1385
    %v2873 = vunpack.c.h.b16 %v1385
    %v2874 = vunpack.c.l.b16 %v1386
    %v2875 = vunpack.c.h.b16 %v1386
    %v2876 = vunpack.c.l.b16 %v1387
    %v2877 = vunpack.c.h.b16 %v1387
    %v2878 = vunpack.c.l.b16 %v1388
    %v2879 = vunpack.c.h.b16 %v1388
    %v2880 = vunpack.c.l.b16 %v1389
    %v2881 = vunpack.c.h.b16 %v1389
    %v2882 = vunpack.c.l.b16 %v1390
    %v2883 = vunpack.c.h.b16 %v1390
    %v2884 = vunpack.c.l.b16 %v1391
    %v2885 = vunpack.c.h.b16 %v1391
    %v2886 = vunpack.c.l.b16 %v1392
    %v2887 = vunpack.c.h.b16 %v1392
    %v2888 = vunpack.c.l.b16 %v1393
    %v2889 = vunpack.c.h.b16 %v1393
    %v2890 = vunpack.c.l.b16 %v1394
    %v2891 = vunpack.c.h.b16 %v1394
    %v2892 = vunpack.c.l.b16 %v1395
    %v2893 = vunpack.c.h.b16 %v1395
    %v2894 = vunpack.c.l.b16 %v1396
    %v2895 = vunpack.c.h.b16 %v1396
    %v2896 = vunpack.c.l.b16 %v1397
    %v2897 = vunpack.c.h.b16 %v1397
    %v2898 = vunpack.c.l.b16 %v1398
    %v2899 = vunpack.c.h.b16 %v1398
    %v2900 = vunpack.c.l.b16 %v1399
    %v2901 = vunpack.c.h.b16 %v1399
    %v2902 = vunpack.c.l.b16 %v1400
    %v2903 = vunpack.c.h.b16 %v1400
    %v2904 = vunpack.c.l.b16 %v1401
    %v2905 = vunpack.c.h.b16 %v1401
    %v2906 = vunpack.c.l.b16 %v1402
    %v2907 = vunpack.c.h.b16 %v1402
    %v2908 = vunpack.c.l.b16 %v1403
    %v2909 = vunpack.c.h.b16 %v1403
    %v2910 = vunpack.c.l.b16 %v1404
    %v2911 = vunpack.c.h.b16 %v1404
    %v2912 = vunpack.c.l.b16 %v1405
    %v2913 = vunpack.c.h.b16 %v1405
    %v2914 = vunpack.c.l.b16 %v1406
    %v2915 = vunpack.c.h.b16 %v1406
    %v2916 = vunpack.c.l.b16 %v1407
    %v2917 = vunpack.c.h.b16 %v1407
    %v2918 = vunpack.c.l.b16 %v1408
    %v2919 = vunpack.c.h.b16 %v1408
    %v2920 = vunpack.c.l.b16 %v1409
    %v2921 = vunpack.c.h.b16 %v1409
    %v2922 = vunpack.c.l.b16 %v1410
    %v2923 = vunpack.c.h.b16 %v1410
    %v2924 = vunpack.c.l.b16 %v1411
    %v2925 = vunpack.c.h.b16 %v1411
    %v2926 = vunpack.c.l.b16 %v1412
    %v2927 = vunpack.c.h.b16 %v1412
    %v2928 = vunpack.c.l.b16 %v1413
    %v2929 = vunpack.c.h.b16 %v1413
    %v2930 = vunpack.c.l.b16 %v1414
    %v2931 = vunpack.c.h.b16 %v1414
    %v2932 = vunpack.c.l.b16 %v1415
    %v2933 = vunpack.c.h.b16 %v1415
    %v2934 = vunpack.c.l.b16 %v1416
    %v2935 = vunpack.c.h.b16 %v1416
    %v2936 = vunpack.c.l.b16 %v1417
    %v2937 = vunpack.c.h.b16 %v1417
    %v2938 = vunpack.c.l.b16 %v1418
    %v2939 = vunpack.c.h.b16 %v1418
    %v2940 = vunpack.c.l.b16 %v1419
    %v2941 = vunpack.c.h.b16 %v1419
    %v2942 = vunpack.c.l.b16 %v1420
    %v2943 = vunpack.c.h.b16 %v1420
    %v2944 = vunpack.c.l.b16 %v1421
    %v2945 = vunpack.c.h.b16 %v1421
    %v2946 = vunpack.c.l.b16 %v1422
    %v2947 = vunpack.c.h.b16 %v1422
    %v2948 = vunpack.c.l.b16 %v1423
    %v2949 = vunpack.c.h.b16 %v1423
    %v2950 = vunpack.c.l.b16 %v1424
    %v2951 = vunpack.c.h.b16 %v1424
    %v2952 = vunpack.c.l.b16 %v1425
    %v2953 = vunpack.c.h.b16 %v1425
    %v2954 = vunpack.c.l.b16 %v1426
    %v2955 = vunpack.c.h.b16 %v1426
    %v2956 = vunpack.c.l.b16 %v1427
    %v2957 = vunpack.c.h.b16 %v1427
    %v2958 = vunpack.c.l.b16 %v1428
    %v2959 = vunpack.c.h.b16 %v1428
    %v2960 = vunpack.c.l.b16 %v1429
    %v2961 = vunpack.c.h.b16 %v1429
    %v2962 = vunpack.c.l.b16 %v1430
    %v2963 = vunpack.c.h.b16 %v1430
    %v2964 = vunpack.c.l.b16 %v1431
    %v2965 = vunpack.c.h.b16 %v1431
    %v2966 = vunpack.c.l.b16 %v1432
    %v2967 = vunpack.c.h.b16 %v1432
    %v2968 = vunpack.c.l.b16 %v1433
    %v2969 = vunpack.c.h.b16 %v1433
    %v2970 = vunpack.c.l.b16 %v1434
    %v2971 = vunpack.c.h.b16 %v1434
    %v2972 = vunpack.c.l.b16 %v1435
    %v2973 = vunpack.c.h.b16 %v1435
    %v2974 = vunpack.c.l.b16 %v1436
    %v2975 = vunpack.c.h.b16 %v1436
    %v2976 = vunpack.c.l.b16 %v1437
    %v2977 = vunpack.c.h.b16 %v1437
    %v2978 = vunpack.c.l.b16 %v1438
    %v2979 = vunpack.c.h.b16 %v1438
    %v2980 = vunpack.c.l.b16 %v1439
    %v2981 = vunpack.c.h.b16 %v1439
    %v2982 = vunpack.c.l.b16 %v1440
    %v2983 = vunpack.c.h.b16 %v1440
    %v2984 = vunpack.c.l.b16 %v1441
    %v2985 = vunpack.c.h.b16 %v1441
    %v2986 = vunpack.c.l.b16 %v1442
    %v2987 = vunpack.c.h.b16 %v1442
    %v2988 = vunpack.c.l.b16 %v1443
    %v2989 = vunpack.c.h.b16 %v1443
    %v2990 = vunpack.c.l.b16 %v1444
    %v2991 = vunpack.c.h.b16 %v1444
    %v2992 = vunpack.c.l.b16 %v1445
    %v2993 = vunpack.c.h.b16 %v1445
    %v2994 = vunpack.c.l.b16 %v1446
    %v2995 = vunpack.c.h.b16 %v1446
    %v2996 = vunpack.c.l.b16 %v1447
    %v2997 = vunpack.c.h.b16 %v1447
    %v2998 = vunpack.c.l.b16 %v1448
    %v2999 = vunpack.c.h.b16 %v1448
    %v3000 = vunpack.c.l.b16 %v1449
    %v3001 = vunpack.c.h.b16 %v1449
    %v3002 = vunpack.c.l.b16 %v1450
    %v3003 = vunpack.c.h.b16 %v1450
    %v3004 = vunpack.c.l.b16 %v1451
    %v3005 = vunpack.c.h.b16 %v1451
    %v3006 = vunpack.c.l.b16 %v1452
    %v3007 = vunpack.c.h.b16 %v1452
    %v3008 = vunpack.c.l.b16 %v1453
    %v3009 = vunpack.c.h.b16 %v1453
    %v3010 = vunpack.c.l.b16 %v1454
    %v3011 = vunpack.c.h.b16 %v1454
    %v3012 = vunpack.c.l.b16 %v1455
    %v3013 = vunpack.c.h.b16 %v1455
    %v3014 = vunpack.c.l.b16 %v1456
    %v3015 = vunpack.c.h.b16 %v1456
    %v3016 = vunpack.c.l.b16 %v1457
    %v3017 = vunpack.c.h.b16 %v1457
    %v3018 = vunpack.c.l.b16 %v1458
    %v3019 = vunpack.c.h.b16 %v1458
    %v3020 = vunpack.c.l.b16 %v1459
    %v3021 = vunpack.c.h.b16 %v1459
    %v3022 = vunpack.c.l.b16 %v1460
    %v3023 = vunpack.c.h.b16 %v1460
    %v3024 = vunpack.c.l.b16 %v1461
    %v3025 = vunpack.c.h.b16 %v1461
    %v3026 = vunpack.c.l.b16 %v1462
    %v3027 = vunpack.c.h.b16 %v1462
    %v3028 = vunpack.c.l.b16 %v1463
    %v3029 = vunpack.c.h.b16 %v1463
    %v3030 = vunpack.c.l.b16 %v1464
    %v3031 = vunpack.c.h.b16 %v1464
    %v3032 = vunpack.c.l.b16 %v1465
    %v3033 = vunpack.c.h.b16 %v1465
    %v3034 = vunpack.c.l.b16 %v1466
    %v3035 = vunpack.c.h.b16 %v1466
    %v3036 = vunpack.c.l.b16 %v1467
    %v3037 = vunpack.c.h.b16 %v1467
    %v3038 = vunpack.c.l.b16 %v1468
    %v3039 = vunpack.c.h.b16 %v1468
    %v3040 = vunpack.c.l.b16 %v1469
    %v3041 = vunpack.c.h.b16 %v1469
    %v3042 = vunpack.c.l.b16 %v1470
    %v3043 = vunpack.c.h.b16 %v1470
    %v3044 = vunpack.c.l.b16 %v1471
    %v3045 = vunpack.c.h.b16 %v1471
    %v3046 = vunpack.c.l.b16 %v1472
    %v3047 = vunpack.c.h.b16 %v1472
    %v3048 = vunpack.c.l.b16 %v1473
    %v3049 = vunpack.c.h.b16 %v1473
    %v3050 = vunpack.c.l.b16 %v1474
    %v3051 = vunpack.c.h.b16 %v1474
    %v3052 = vunpack.c.l.b16 %v1475
    %v3053 = vunpack.c.h.b16 %v1475
    %v3054 = vpack.c.b16 %v2038, %v2030
    %v3055 = vpack.c.b16 %v2039, %v2031
    %v3056 = vpack.c.b16 %v2040, %v2032
    %v3057 = vpack.c.b16 %v2041, %v2033
    %v3058 = vpack.c.b16 %v2042, %v2034
    %v3059 = vpack.c.b16 %v2043, %v2035
    %v3060 = vpack.c.b16 %v2044, %v2036
    %v3061 = vpack.c.b16 %v2045, %v2037
    %v3062 = vpack.c.b16 %v2054, %v2046
    %v3063 = vpack.c.b16 %v2055, %v2047
    %v3064 = vpack.c.b16 %v2056, %v2048
    %v3065 = vpack.c.b16 %v2057, %v2049
    %v3066 = vpack.c.b16 %v2058, %v2050
    %v3067 = vpack.c.b16 %v2059, %v2051
    %v3068 = vpack.c.b16 %v2060, %v2052
    %v3069 = vpack.c.b16 %v2061, %v2053
    %v3070 = vpack.c.b16 %v2070, %v2062
    %v3071 = vpack.c.b16 %v2071, %v2063
    %v3072 = vpack.c.b16 %v2072, %v2064
    %v3073 = vpack.c.b16 %v2073, %v2065
    %v3074 = vpack.c.b16 %v2074, %v2066
    %v3075 = vpack.c.b16 %v2075, %v2067
    %v3076 = vpack.c.b16 %v2076, %v2068
    %v3077 = vpack.c.b16 %v2077, %v2069
    %v3078 = vpack.c.b16 %v2086, %v2078
    %v3079 = vpack.c.b16 %v2087, %v2079
    %v3080 = vpack.c.b16 %v2088, %v2080
    %v3081 = vpack.c.b16 %v2089, %v2081
    %v3082 = vpack.c.b16 %v2090, %v2082
    %v3083 = vpack.c.b16 %v2091, %v2083
    %v3084 = vpack.c.b16 %v2092, %v2084
    %v3085 = vpack.c.b16 %v2093, %v2085
    %v3086 = vpack.c.b16 %v2102, %v2094
    %v3087 = vpack.c.b16 %v2103, %v2095
    %v3088 = vpack.c.b16 %v2104, %v2096
    %v3089 = vpack.c.b16 %v2105, %v2097
    %v3090 = vpack.c.b16 %v2106, %v2098
    %v3091 = vpack.c.b16 %v2107, %v2099
    %v3092 = vpack.c.b16 %v2108, %v2100
    %v3093 = vpack.c.b16 %v2109, %v2101
    %v3094 = vpack.c.b16 %v2118, %v2110
    %v3095 = vpack.c.b16 %v2119, %v2111
    %v3096 = vpack.c.b16 %v2120, %v2112
    %v3097 = vpack.c.b16 %v2121, %v2113
    %v3098 = vpack.c.b16 %v2122, %v2114
    %v3099 = vpack.c.b16 %v2123, %v2115
    %v3100 = vpack.c.b16 %v2124, %v2116
    %v3101 = vpack.c.b16 %v2125, %v2117
    %v3102 = vpack.c.b16 %v2134, %v2126
    %v3103 = vpack.c.b16 %v2135, %v2127
    %v3104 = vpack.c.b16 %v2136, %v2128
    %v3105 = vpack.c.b16 %v2137, %v2129
    %v3106 = vpack.c.b16 %v2138, %v2130
    %v3107 = vpack.c.b16 %v2139, %v2131
    %v3108 = vpack.c.b16 %v2140, %v2132
    %v3109 = vpack.c.b16 %v2141, %v2133
    %v3110 = vpack.c.b16 %v2150, %v2142
    %v3111 = vpack.c.b16 %v2151, %v2143
    %v3112 = vpack.c.b16 %v2152, %v2144
    %v3113 = vpack.c.b16 %v2153, %v2145
    %v3114 = vpack.c.b16 %v2154, %v2146
    %v3115 = vpack.c.b16 %v2155, %v2147
    %v3116 = vpack.c.b16 %v2156, %v2148
    %v3117 = vpack.c.b16 %v2157, %v2149
    %v3118 = vpack.c.b16 %v2166, %v2158
    %v3119 = vpack.c.b16 %v2167, %v2159
    %v3120 = vpack.c.b16 %v2168, %v2160
    %v3121 = vpack.c.b16 %v2169, %v2161
    %v3122 = vpack.c.b16 %v2170, %v2162
    %v3123 = vpack.c.b16 %v2171, %v2163
    %v3124 = vpack.c.b16 %v2172, %v2164
    %v3125 = vpack.c.b16 %v2173, %v2165
    %v3126 = vpack.c.b16 %v2182, %v2174
    %v3127 = vpack.c.b16 %v2183, %v2175
    %v3128 = vpack.c.b16 %v2184, %v2176
    %v3129 = vpack.c.b16 %v2185, %v2177
    %v3130 = vpack.c.b16 %v2186, %v2178
    %v3131 = vpack.c.b16 %v2187, %v2179
    %v3132 = vpack.c.b16 %v2188, %v2180
    %v3133 = vpack.c.b16 %v2189, %v2181
    %v3134 = vpack.c.b16 %v2198, %v2190
    %v3135 = vpack.c.b16 %v2199, %v2191
    %v3136 = vpack.c.b16 %v2200, %v2192
    %v3137 = vpack.c.b16 %v2201, %v2193
    %v3138 = vpack.c.b16 %v2202, %v2194
    %v3139 = vpack.c.b16 %v2203, %v2195
    %v3140 = vpack.c.b16 %v2204, %v2196
    %v3141 = vpack.c.b16 %v2205, %v2197
    %v3142 = vpack.c.b16 %v2214, %v2206
    %v3143 = vpack.c.b16 %v2215, %v2207
    %v3144 = vpack.c.b16 %v2216, %v2208
    %v3145 = vpack.c.b16 %v2217, %v2209
    %v3146 = vpack.c.b16 %v2218, %v2210
    %v3147 = vpack.c.b16 %v2219, %v2211
    %v3148 = vpack.c.b16 %v2220, %v2212
    %v3149 = vpack.c.b16 %v2221, %v2213
    %v3150 = vpack.c.b16 %v2230, %v2222
    %v3151 = vpack.c.b16 %v2231, %v2223
    %v3152 = vpack.c.b16 %v2232, %v2224
    %v3153 = vpack.c.b16 %v2233, %v2225
    %v3154 = vpack.c.b16 %v2234, %v2226
    %v3155 = vpack.c.b16 %v2235, %v2227
    %v3156 = vpack.c.b16 %v2236, %v2228
    %v3157 = vpack.c.b16 %v2237, %v2229
    %v3158 = vpack.c.b16 %v2246, %v2238
    %v3159 = vpack.c.b16 %v2247, %v2239
    %v3160 = vpack.c.b16 %v2248, %v2240
    %v3161 = vpack.c.b16 %v2249, %v2241
    %v3162 = vpack.c.b16 %v2250, %v2242
    %v3163 = vpack.c.b16 %v2251, %v2243
    %v3164 = vpack.c.b16 %v2252, %v2244
    %v3165 = vpack.c.b16 %v2253, %v2245
    %v3166 = vpack.c.b16 %v2262, %v2254
    %v3167 = vpack.c.b16 %v2263, %v2255
    %v3168 = vpack.c.b16 %v2264, %v2256
    %v3169 = vpack.c.b16 %v2265, %v2257
    %v3170 = vpack.c.b16 %v2266, %v2258
    %v3171 = vpack.c.b16 %v2267, %v2259
    %v3172 = vpack.c.b16 %v2268, %v2260
    %v3173 = vpack.c.b16 %v2269, %v2261
    %v3174 = vpack.c.b16 %v2278, %v2270
    %v3175 = vpack.c.b16 %v2279, %v2271
    %v3176 = vpack.c.b16 %v2280, %v2272
    %v3177 = vpack.c.b16 %v2281, %v2273
    %v3178 = vpack.c.b16 %v2282, %v2274
    %v3179 = vpack.c.b16 %v2283, %v2275
    %v3180 = vpack.c.b16 %v2284, %v2276
    %v3181 = vpack.c.b16 %v2285, %v2277
    %v3182 = vpack.c.b16 %v2294, %v2286
    %v3183 = vpack.c.b16 %v2295, %v2287
    %v3184 = vpack.c.b16 %v2296, %v2288
    %v3185 = vpack.c.b16 %v2297, %v2289
    %v3186 = vpack.c.b16 %v2298, %v2290
    %v3187 = vpack.c.b16 %v2299, %v2291
    %v3188 = vpack.c.b16 %v2300, %v2292
    %v3189 = vpack.c.b16 %v2301, %v2293
    %v3190 = vpack.c.b16 %v2310, %v2302
    %v3191 = vpack.c.b16 %v2311, %v2303
    %v3192 = vpack.c.b16 %v2312, %v2304
    %v3193 = vpack.c.b16 %v2313, %v2305
    %v3194 = vpack.c.b16 %v2314, %v2306
    %v3195 = vpack.c.b16 %v2315, %v2307
    %v3196 = vpack.c.b16 %v2316, %v2308
    %v3197 = vpack.c.b16 %v2317, %v2309
    %v3198 = vpack.c.b16 %v2326, %v2318
    %v3199 = vpack.c.b16 %v2327, %v2319
    %v3200 = vpack.c.b16 %v2328, %v2320
    %v3201 = vpack.c.b16 %v2329, %v2321
    %v3202 = vpack.c.b16 %v2330, %v2322
    %v3203 = vpack.c.b16 %v2331, %v2323
    %v3204 = vpack.c.b16 %v2332, %v2324
    %v3205 = vpack.c.b16 %v2333, %v2325
    %v3206 = vpack.c.b16 %v2342, %v2334
    %v3207 = vpack.c.b16 %v2343, %v2335
    %v3208 = vpack.c.b16 %v2344, %v2336
    %v3209 = vpack.c.b16 %v2345, %v2337
    %v3210 = vpack.c.b16 %v2346, %v2338
    %v3211 = vpack.c.b16 %v2347, %v2339
    %v3212 = vpack.c.b16 %v2348, %v2340
    %v3213 = vpack.c.b16 %v2349, %v2341
    %v3214 = vpack.c.b16 %v2358, %v2350
    %v3215 = vpack.c.b16 %v2359, %v2351
    %v3216 = vpack.c.b16 %v2360, %v2352
    %v3217 = vpack.c.b16 %v2361, %v2353
    %v3218 = vpack.c.b16 %v2362, %v2354
    %v3219 = vpack.c.b16 %v2363, %v2355
    %v3220 = vpack.c.b16 %v2364, %v2356
    %v3221 = vpack.c.b16 %v2365, %v2357
    %v3222 = vpack.c.b16 %v2374, %v2366
    %v3223 = vpack.c.b16 %v2375, %v2367
    %v3224 = vpack.c.b16 %v2376, %v2368
    %v3225 = vpack.c.b16 %v2377, %v2369
    %v3226 = vpack.c.b16 %v2378, %v2370
    %v3227 = vpack.c.b16 %v2379, %v2371
    %v3228 = vpack.c.b16 %v2380, %v2372
    %v3229 = vpack.c.b16 %v2381, %v2373
    %v3230 = vpack.c.b16 %v2390, %v2382
    %v3231 = vpack.c.b16 %v2391, %v2383
    %v3232 = vpack.c.b16 %v2392, %v2384
    %v3233 = vpack.c.b16 %v2393, %v2385
    %v3234 = vpack.c.b16 %v2394, %v2386
    %v3235 = vpack.c.b16 %v2395, %v2387
    %v3236 = vpack.c.b16 %v2396, %v2388
    %v3237 = vpack.c.b16 %v2397, %v2389
    %v3238 = vpack.c.b16 %v2406, %v2398
    %v3239 = vpack.c.b16 %v2407, %v2399
    %v3240 = vpack.c.b16 %v2408, %v2400
    %v3241 = vpack.c.b16 %v2409, %v2401
    %v3242 = vpack.c.b16 %v2410, %v2402
    %v3243 = vpack.c.b16 %v2411, %v2403
    %v3244 = vpack.c.b16 %v2412, %v2404
    %v3245 = vpack.c.b16 %v2413, %v2405
    %v3246 = vpack.c.b16 %v2422, %v2414
    %v3247 = vpack.c.b16 %v2423, %v2415
    %v3248 = vpack.c.b16 %v2424, %v2416
    %v3249 = vpack.c.b16 %v2425, %v2417
    %v3250 = vpack.c.b16 %v2426, %v2418
    %v3251 = vpack.c.b16 %v2427, %v2419
    %v3252 = vpack.c.b16 %v2428, %v2420
    %v3253 = vpack.c.b16 %v2429, %v2421
    %v3254 = vpack.c.b16 %v2438, %v2430
    %v3255 = vpack.c.b16 %v2439, %v2431
    %v3256 = vpack.c.b16 %v2440, %v2432
    %v3257 = vpack.c.b16 %v2441, %v2433
    %v3258 = vpack.c.b16 %v2442, %v2434
    %v3259 = vpack.c.b16 %v2443, %v2435
    %v3260 = vpack.c.b16 %v2444, %v2436
    %v3261 = vpack.c.b16 %v2445, %v2437
    %v3262 = vpack.c.b16 %v2454, %v2446
    %v3263 = vpack.c.b16 %v2455, %v2447
    %v3264 = vpack.c.b16 %v2456, %v2448
    %v3265 = vpack.c.b16 %v2457, %v2449
    %v3266 = vpack.c.b16 %v2458, %v2450
    %v3267 = vpack.c.b16 %v2459, %v2451
    %v3268 = vpack.c.b16 %v2460, %v2452
    %v3269 = vpack.c.b16 %v2461, %v2453
    %v3270 = vpack.c.b16 %v2470, %v2462
    %v3271 = vpack.c.b16 %v2471, %v2463
    %v3272 = vpack.c.b16 %v2472, %v2464
    %v3273 = vpack.c.b16 %v2473, %v2465
    %v3274 = vpack.c.b16 %v2474, %v2466
    %v3275 = vpack.c.b16 %v2475, %v2467
    %v3276 = vpack.c.b16 %v2476, %v2468
    %v3277 = vpack.c.b16 %v2477, %v2469
    %v3278 = vpack.c.b16 %v2486, %v2478
    %v3279 = vpack.c.b16 %v2487, %v2479
    %v3280 = vpack.c.b16 %v2488, %v2480
    %v3281 = vpack.c.b16 %v2489, %v2481
    %v3282 = vpack.c.b16 %v2490, %v2482
    %v3283 = vpack.c.b16 %v2491, %v2483
    %v3284 = vpack.c.b16 %v2492, %v2484
    %v3285 = vpack.c.b16 %v2493, %v2485
    %v3286 = vpack.c.b16 %v2502, %v2494
    %v3287 = vpack.c.b16 %v2503, %v2495
    %v3288 = vpack.c.b16 %v2504, %v2496
    %v3289 = vpack.c.b16 %v2505, %v2497
    %v3290 = vpack.c.b16 %v2506, %v2498
    %v3291 = vpack.c.b16 %v2507, %v2499
    %v3292 = vpack.c.b16 %v2508, %v2500
    %v3293 = vpack.c.b16 %v2509, %v2501
    %v3294 = vpack.c.b16 %v2518, %v2510
    %v3295 = vpack.c.b16 %v2519, %v2511
    %v3296 = vpack.c.b16 %v2520, %v2512
    %v3297 = vpack.c.b16 %v2521, %v2513
    %v3298 = vpack.c.b16 %v2522, %v2514
    %v3299 = vpack.c.b16 %v2523, %v2515
    %v3300 = vpack.c.b16 %v2524, %v2516
    %v3301 = vpack.c.b16 %v2525, %v2517
    %v3302 = vpack.c.b16 %v2534, %v2526
    %v3303 = vpack.c.b16 %v2535, %v2527
    %v3304 = vpack.c.b16 %v2536, %v2528
    %v3305 = vpack.c.b16 %v2537, %v2529
    %v3306 = vpack.c.b16 %v2538, %v2530
    %v3307 = vpack.c.b16 %v2539, %v2531
    %v3308 = vpack.c.b16 %v2540, %v2532
    %v3309 = vpack.c.b16 %v2541, %v2533
    %v3310 = vpack.c.b16 %v2550, %v2542
    %v3311 = vpack.c.b16 %v2551, %v2543
    %v3312 = vpack.c.b16 %v2552, %v2544
    %v3313 = vpack.c.b16 %v2553, %v2545
    %v3314 = vpack.c.b16 %v2554, %v2546
    %v3315 = vpack.c.b16 %v2555, %v2547
    %v3316 = vpack.c.b16 %v2556, %v2548
    %v3317 = vpack.c.b16 %v2557, %v2549
    %v3318 = vpack.c.b16 %v2566, %v2558
    %v3319 = vpack.c.b16 %v2567, %v2559
    %v3320 = vpack.c.b16 %v2568, %v2560
    %v3321 = vpack.c.b16 %v2569, %v2561
    %v3322 = vpack.c.b16 %v2570, %v2562
    %v3323 = vpack.c.b16 %v2571, %v2563
    %v3324 = vpack.c.b16 %v2572, %v2564
    %v3325 = vpack.c.b16 %v2573, %v2565
    %v3326 = vpack.c.b16 %v2582, %v2574
    %v3327 = vpack.c.b16 %v2583, %v2575
    %v3328 = vpack.c.b16 %v2584, %v2576
    %v3329 = vpack.c.b16 %v2585, %v2577
    %v3330 = vpack.c.b16 %v2586, %v2578
    %v3331 = vpack.c.b16 %v2587, %v2579
    %v3332 = vpack.c.b16 %v2588, %v2580
    %v3333 = vpack.c.b16 %v2589, %v2581
    %v3334 = vpack.c.b16 %v2598, %v2590
    %v3335 = vpack.c.b16 %v2599, %v2591
    %v3336 = vpack.c.b16 %v2600, %v2592
    %v3337 = vpack.c.b16 %v2601, %v2593
    %v3338 = vpack.c.b16 %v2602, %v2594
    %v3339 = vpack.c.b16 %v2603, %v2595
    %v3340 = vpack.c.b16 %v2604, %v2596
    %v3341 = vpack.c.b16 %v2605, %v2597
    %v3342 = vpack.c.b16 %v2614, %v2606
    %v3343 = vpack.c.b16 %v2615, %v2607
    %v3344 = vpack.c.b16 %v2616, %v2608
    %v3345 = vpack.c.b16 %v2617, %v2609
    %v3346 = vpack.c.b16 %v2618, %v2610
    %v3347 = vpack.c.b16 %v2619, %v2611
    %v3348 = vpack.c.b16 %v2620, %v2612
    %v3349 = vpack.c.b16 %v2621, %v2613
    %v3350 = vpack.c.b16 %v2630, %v2622
    %v3351 = vpack.c.b16 %v2631, %v2623
    %v3352 = vpack.c.b16 %v2632, %v2624
    %v3353 = vpack.c.b16 %v2633, %v2625
    %v3354 = vpack.c.b16 %v2634, %v2626
    %v3355 = vpack.c.b16 %v2635, %v2627
    %v3356 = vpack.c.b16 %v2636, %v2628
    %v3357 = vpack.c.b16 %v2637, %v2629
    %v3358 = vpack.c.b16 %v2646, %v2638
    %v3359 = vpack.c.b16 %v2647, %v2639
    %v3360 = vpack.c.b16 %v2648, %v2640
    %v3361 = vpack.c.b16 %v2649, %v2641
    %v3362 = vpack.c.b16 %v2650, %v2642
    %v3363 = vpack.c.b16 %v2651, %v2643
    %v3364 = vpack.c.b16 %v2652, %v2644
    %v3365 = vpack.c.b16 %v2653, %v2645
    %v3366 = vpack.c.b16 %v2662, %v2654
    %v3367 = vpack.c.b16 %v2663, %v2655
    %v3368 = vpack.c.b16 %v2664, %v2656
    %v3369 = vpack.c.b16 %v2665, %v2657
    %v3370 = vpack.c.b16 %v2666, %v2658
    %v3371 = vpack.c.b16 %v2667, %v2659
    %v3372 = vpack.c.b16 %v2668, %v2660
    %v3373 = vpack.c.b16 %v2669, %v2661
    %v3374 = vpack.c.b16 %v2678, %v2670
    %v3375 = vpack.c.b16 %v2679, %v2671
    %v3376 = vpack.c.b16 %v2680, %v2672
    %v3377 = vpack.c.b16 %v2681, %v2673
    %v3378 = vpack.c.b16 %v2682, %v2674
    %v3379 = vpack.c.b16 %v2683, %v2675
    %v3380 = vpack.c.b16 %v2684, %v2676
    %v3381 = vpack.c.b16 %v2685, %v2677
    %v3382 = vpack.c.b16 %v2694, %v2686
    %v3383 = vpack.c.b16 %v2695, %v2687
    %v3384 = vpack.c.b16 %v2696, %v2688
    %v3385 = vpack.c.b16 %v2697, %v2689
    %v3386 = vpack.c.b16 %v2698, %v2690
    %v3387 = vpack.c.b16 %v2699, %v2691
    %v3388 = vpack.c.b16 %v2700, %v2692
    %v3389 = vpack.c.b16 %v2701, %v2693
    %v3390 = vpack.c.b16 %v2710, %v2702
    %v3391 = vpack.c.b16 %v2711, %v2703
    %v3392 = vpack.c.b16 %v2712, %v2704
    %v3393 = vpack.c.b16 %v2713, %v2705
    %v3394 = vpack.c.b16 %v2714, %v2706
    %v3395 = vpack.c.b16 %v2715, %v2707
    %v3396 = vpack.c.b16 %v2716, %v2708
    %v3397 = vpack.c.b16 %v2717, %v2709
    %v3398 = vpack.c.b16 %v2726, %v2718
    %v3399 = vpack.c.b16 %v2727, %v2719
    %v3400 = vpack.c.b16 %v2728, %v2720
    %v3401 = vpack.c.b16 %v2729, %v2721
    %v3402 = vpack.c.b16 %v2730, %v2722
    %v3403 = vpack.c.b16 %v2731, %v2723
    %v3404 = vpack.c.b16 %v2732, %v2724
    %v3405 = vpack.c.b16 %v2733, %v2725
    %v3406 = vpack.c.b16 %v2742, %v2734
    %v3407 = vpack.c.b16 %v2743, %v2735
    %v3408 = vpack.c.b16 %v2744, %v2736
    %v3409 = vpack.c.b16 %v2745, %v2737
    %v3410 = vpack.c.b16 %v2746, %v2738
    %v3411 = vpack.c.b16 %v2747, %v2739
    %v3412 = vpack.c.b16 %v2748, %v2740
    %v3413 = vpack.c.b16 %v2749, %v2741
    %v3414 = vpack.c.b16 %v2758, %v2750
    %v3415 = vpack.c.b16 %v2759, %v2751
    %v3416 = vpack.c.b16 %v2760, %v2752
    %v3417 = vpack.c.b16 %v2761, %v2753
    %v3418 = vpack.c.b16 %v2762, %v2754
    %v3419 = vpack.c.b16 %v2763, %v2755
    %v3420 = vpack.c.b16 %v2764, %v2756
    %v3421 = vpack.c.b16 %v2765, %v2757
    %v3422 = vpack.c.b16 %v2774, %v2766
    %v3423 = vpack.c.b16 %v2775, %v2767
    %v3424 = vpack.c.b16 %v2776, %v2768
    %v3425 = vpack.c.b16 %v2777, %v2769
    %v3426 = vpack.c.b16 %v2778, %v2770
    %v3427 = vpack.c.b16 %v2779, %v2771
    %v3428 = vpack.c.b16 %v2780, %v2772
    %v3429 = vpack.c.b16 %v2781, %v2773
    %v3430 = vpack.c.b16 %v2790, %v2782
    %v3431 = vpack.c.b16 %v2791, %v2783
    %v3432 = vpack.c.b16 %v2792, %v2784
    %v3433 = vpack.c.b16 %v2793, %v2785
    %v3434 = vpack.c.b16 %v2794, %v2786
    %v3435 = vpack.c.b16 %v2795, %v2787
    %v3436 = vpack.c.b16 %v2796, %v2788
    %v3437 = vpack.c.b16 %v2797, %v2789
    %v3438 = vpack.c.b16 %v2806, %v2798
    %v3439 = vpack.c.b16 %v2807, %v2799
    %v3440 = vpack.c.b16 %v2808, %v2800
    %v3441 = vpack.c.b16 %v2809, %v2801
    %v3442 = vpack.c.b16 %v2810, %v2802
    %v3443 = vpack.c.b16 %v2811, %v2803
    %v3444 = vpack.c.b16 %v2812, %v2804
    %v3445 = vpack.c.b16 %v2813, %v2805
    %v3446 = vpack.c.b16 %v2822, %v2814
    %v3447 = vpack.c.b16 %v2823, %v2815
    %v3448 = vpack.c.b16 %v2824, %v2816
    %v3449 = vpack.c.b16 %v2825, %v2817
    %v3450 = vpack.c.b16 %v2826, %v2818
    %v3451 = vpack.c.b16 %v2827, %v2819
    %v3452 = vpack.c.b16 %v2828, %v2820
    %v3453 = vpack.c.b16 %v2829, %v2821
    %v3454 = vpack.c.b16 %v2838, %v2830
    %v3455 = vpack.c.b16 %v2839, %v2831
    %v3456 = vpack.c.b16 %v2840, %v2832
    %v3457 = vpack.c.b16 %v2841, %v2833
    %v3458 = vpack.c.b16 %v2842, %v2834
    %v3459 = vpack.c.b16 %v2843, %v2835
    %v3460 = vpack.c.b16 %v2844, %v2836
    %v3461 = vpack.c.b16 %v2845, %v2837
    %v3462 = vpack.c.b16 %v2854, %v2846
    %v3463 = vpack.c.b16 %v2855, %v2847
    %v3464 = vpack.c.b16 %v2856, %v2848
    %v3465 = vpack.c.b16 %v2857, %v2849
    %v3466 = vpack.c.b16 %v2858, %v2850
    %v3467 = vpack.c.b16 %v2859, %v2851
    %v3468 = vpack.c.b16 %v2860, %v2852
    %v3469 = vpack.c.b16 %v2861, %v2853
    %v3470 = vpack.c.b16 %v2870, %v2862
    %v3471 = vpack.c.b16 %v2871, %v2863
    %v3472 = vpack.c.b16 %v2872, %v2864
    %v3473 = vpack.c.b16 %v2873, %v2865
    %v3474 = vpack.c.b16 %v2874, %v2866
    %v3475 = vpack.c.b16 %v2875, %v2867
    %v3476 = vpack.c.b16 %v2876, %v2868
    %v3477 = vpack.c.b16 %v2877, %v2869
    %v3478 = vpack.c.b16 %v2886, %v2878
    %v3479 = vpack.c.b16 %v2887, %v2879
    %v3480 = vpack.c.b16 %v2888, %v2880
    %v3481 = vpack.c.b16 %v2889, %v2881
    %v3482 = vpack.c.b16 %v2890, %v2882
    %v3483 = vpack.c.b16 %v2891, %v2883
    %v3484 = vpack.c.b16 %v2892, %v2884
    %v3485 = vpack.c.b16 %v2893, %v2885
    %v3486 = vpack.c.b16 %v2902, %v2894
    %v3487 = vpack.c.b16 %v2903, %v2895
    %v3488 = vpack.c.b16 %v2904, %v2896
    %v3489 = vpack.c.b16 %v2905, %v2897
    %v3490 = vpack.c.b16 %v2906, %v2898
    %v3491 = vpack.c.b16 %v2907, %v2899
    %v3492 = vpack.c.b16 %v2908, %v2900
    %v3493 = vpack.c.b16 %v2909, %v2901
    %v3494 = vpack.c.b16 %v2918, %v2910
    %v3495 = vpack.c.b16 %v2919, %v2911
    %v3496 = vpack.c.b16 %v2920, %v2912
    %v3497 = vpack.c.b16 %v2921, %v2913
    %v3498 = vpack.c.b16 %v2922, %v2914
    %v3499 = vpack.c.b16 %v2923, %v2915
    %v3500 = vpack.c.b16 %v2924, %v2916
    %v3501 = vpack.c.b16 %v2925, %v2917
    %v3502 = vpack.c.b16 %v2934, %v2926
    %v3503 = vpack.c.b16 %v2935, %v2927
    %v3504 = vpack.c.b16 %v2936, %v2928
    %v3505 = vpack.c.b16 %v2937, %v2929
    %v3506 = vpack.c.b16 %v2938, %v2930
    %v3507 = vpack.c.b16 %v2939, %v2931
    %v3508 = vpack.c.b16 %v2940, %v2932
    %v3509 = vpack.c.b16 %v2941, %v2933
    %v3510 = vpack.c.b16 %v2950, %v2942
    %v3511 = vpack.c.b16 %v2951, %v2943
    %v3512 = vpack.c.b16 %v2952, %v2944
    %v3513 = vpack.c.b16 %v2953, %v2945
    %v3514 = vpack.c.b16 %v2954, %v2946
    %v3515 = vpack.c.b16 %v2955, %v2947
    %v3516 = vpack.c.b16 %v2956, %v2948
    %v3517 = vpack.c.b16 %v2957, %v2949
    %v3518 = vpack.c.b16 %v2966, %v2958
    %v3519 = vpack.c.b16 %v2967, %v2959
    %v3520 = vpack.c.b16 %v2968, %v2960
    %v3521 = vpack.c.b16 %v2969, %v2961
    %v3522 = vpack.c.b16 %v2970, %v2962
    %v3523 = vpack.c.b16 %v2971, %v2963
    %v3524 = vpack.c.b16 %v2972, %v2964
    %v3525 = vpack.c.b16 %v2973, %v2965
    %v3526 = vpack.c.b16 %v2982, %v2974
    %v3527 = vpack.c.b16 %v2983, %v2975
    %v3528 = vpack.c.b16 %v2984, %v2976
    %v3529 = vpack.c.b16 %v2985, %v2977
    %v3530 = vpack.c.b16 %v2986, %v2978
    %v3531 = vpack.c.b16 %v2987, %v2979
    %v3532 = vpack.c.b16 %v2988, %v2980
    %v3533 = vpack.c.b16 %v2989, %v2981
    %v3534 = vpack.c.b16 %v2998, %v2990
    %v3535 = vpack.c.b16 %v2999, %v2991
    %v3536 = vpack.c.b16 %v3000, %v2992
    %v3537 = vpack.c.b16 %v3001, %v2993
    %v3538 = vpack.c.b16 %v3002, %v2994
    %v3539 = vpack.c.b16 %v3003, %v2995
    %v3540 = vpack.c.b16 %v3004, %v2996
    %v3541 = vpack.c.b16 %v3005, %v2997
    %v3542 = vpack.c.b16 %v3014, %v3006
    %v3543 = vpack.c.b16 %v3015, %v3007
    %v3544 = vpack.c.b16 %v3016, %v3008
    %v3545 = vpack.c.b16 %v3017, %v3009
    %v3546 = vpack.c.b16 %v3018, %v3010
    %v3547 = vpack.c.b16 %v3019, %v3011
    %v3548 = vpack.c.b16 %v3020, %v3012
    %v3549 = vpack.c.b16 %v3021, %v3013
    %v3550 = vpack.c.b16 %v3030, %v3022
    %v3551 = vpack.c.b16 %v3031, %v3023
    %v3552 = vpack.c.b16 %v3032, %v3024
    %v3553 = vpack.c.b16 %v3033, %v3025
    %v3554 = vpack.c.b16 %v3034, %v3026
    %v3555 = vpack.c.b16 %v3035, %v3027
    %v3556 = vpack.c.b16 %v3036, %v3028
    %v3557 = vpack.c.b16 %v3037, %v3029
    %v3558 = vpack.c.b16 %v3046, %v3038
    %v3559 = vpack.c.b16 %v3047, %v3039
    %v3560 = vpack.c.b16 %v3048, %v3040
    %v3561 = vpack.c.b16 %v3049, %v3041
    %v3562 = vpack.c.b16 %v3050, %v3042
    %v3563 = vpack.c.b16 %v3051, %v3043
    %v3564 = vpack.c.b16 %v3052, %v3044
    %v3565 = vpack.c.b16 %v3053, %v3045
    %4078 = vmatprep.subr.bf16.mxu0 %v3111
    %4079 = vmatpush1.bf16.msra.mxu0 %v3110
    %4080 = vmatprep.subr.bf16.mxu0 %v3103
    %4081 = vmatpush1.bf16.msra.mxu0 %v3102
    %4082 = vmatprep.subr.bf16.mxu0 %v3095
    %4083 = vmatpush1.bf16.msra.mxu0 %v3094
    %4084 = vmatprep.subr.bf16.mxu0 %v3087
    %4085 = vmatpush1.bf16.msra.mxu0 %v3086
    %4086 = vmatprep.subr.bf16.mxu0 %v3079
    %4087 = vmatpush1.bf16.msra.mxu0 %v3078
    %4088 = vmatprep.subr.bf16.mxu0 %v3071
    %4089 = vmatpush1.bf16.msra.mxu0 %v3070
    %4090 = vmatprep.subr.bf16.mxu0 %v3063
    %4091 = vmatpush1.bf16.msra.mxu0 %v3062
    %4092 = vmatprep.subr.bf16.mxu0 %v3055
    %4093 = vmatpush1.bf16.msra.mxu0 %v3054
    %4094 = vmatprep.subr.bf16.mxu0 %v3175
    %4095 = vmatpush2.bf16.msra.mxu0 %v3174
    %4096 = vmatprep.subr.bf16.mxu0 %v3167
    %4097 = vmatpush2.bf16.msra.mxu0 %v3166
    %4098 = vmatprep.subr.bf16.mxu0 %v3159
    %4099 = vmatpush2.bf16.msra.mxu0 %v3158
    %4100 = vmatprep.subr.bf16.mxu0 %v3151
    %4101 = vmatpush2.bf16.msra.mxu0 %v3150
    %4102 = vmatprep.subr.bf16.mxu0 %v3143
    %4103 = vmatpush2.bf16.msra.mxu0 %v3142
    %4104 = vmatprep.subr.bf16.mxu0 %v3135
    %4105 = vmatpush2.bf16.msra.mxu0 %v3134
    %4106 = vmatprep.subr.bf16.mxu0 %v3127
    %4107 = vmatpush2.bf16.msra.mxu0 %v3126
    %4108 = vmatprep.subr.bf16.mxu0 %v3119
    %4109 = vmatpush2.bf16.msra.mxu0 %v3118
    %4110 = vmatprep.mubr.bf16.mxu0 %v957
    %4111 = vmatmul.mubr.bf16.gmra.mxu0 %v956
    %v4112 = vpop.f32.mrf.mxu0
    %v4113 = vadd.f32 %v1481, %v4112
    %v4114 = vpop.f32.mrf.mxu0
    %v4115 = vadd.f32 %v1485, %v4114
    %v4116 = vpop.f32.mrf.mxu0
    %v4117 = vpop.f32.mrf.mxu0
    %4118 = vdwg.mxu0
    %4119 = vmatprep.subr.bf16.mxu0 %v3239
    %4120 = vmatpush1.bf16.msra.mxu0 %v3238
    %4121 = vmatprep.subr.bf16.mxu0 %v3231
    %4122 = vmatpush1.bf16.msra.mxu0 %v3230
    %4123 = vmatprep.subr.bf16.mxu0 %v3223
    %4124 = vmatpush1.bf16.msra.mxu0 %v3222
    %4125 = vmatprep.subr.bf16.mxu0 %v3215
    %4126 = vmatpush1.bf16.msra.mxu0 %v3214
    %4127 = vmatprep.subr.bf16.mxu0 %v3207
    %4128 = vmatpush1.bf16.msra.mxu0 %v3206
    %4129 = vmatprep.subr.bf16.mxu0 %v3199
    %4130 = vmatpush1.bf16.msra.mxu0 %v3198
    %4131 = vmatprep.subr.bf16.mxu0 %v3191
    %4132 = vmatpush1.bf16.msra.mxu0 %v3190
    %4133 = vmatprep.subr.bf16.mxu0 %v3183
    %4134 = vmatpush1.bf16.msra.mxu0 %v3182
    %4135 = vmatprep.subr.bf16.mxu0 %v3303
    %4136 = vmatpush2.bf16.msra.mxu0 %v3302
    %4137 = vmatprep.subr.bf16.mxu0 %v3295
    %4138 = vmatpush2.bf16.msra.mxu0 %v3294
    %4139 = vmatprep.subr.bf16.mxu0 %v3287
    %4140 = vmatpush2.bf16.msra.mxu0 %v3286
    %4141 = vmatprep.subr.bf16.mxu0 %v3279
    %4142 = vmatpush2.bf16.msra.mxu0 %v3278
    %4143 = vmatprep.subr.bf16.mxu0 %v3271
    %4144 = vmatpush2.bf16.msra.mxu0 %v3270
    %4145 = vmatprep.subr.bf16.mxu0 %v3263
    %4146 = vmatpush2.bf16.msra.mxu0 %v3262
    %4147 = vmatprep.subr.bf16.mxu0 %v3255
    %4148 = vmatpush2.bf16.msra.mxu0 %v3254
    %4149 = vmatprep.subr.bf16.mxu0 %v3247
    %4150 = vmatpush2.bf16.msra.mxu0 %v3246
    %4151 = vmatprep.mubr.bf16.mxu0 %v959
    %4152 = vmatmul.mubr.bf16.gmra.mxu0 %v958
    %v4153 = vpop.f32.mrf.mxu0
    %v4154 = vadd.f32 %v4113, %v4153
    %v4155 = vpop.f32.mrf.mxu0
    %v4156 = vadd.f32 %v4115, %v4155
    %v4157 = vpop.f32.mrf.mxu0
    %v4158 = vpop.f32.mrf.mxu0
    %4159 = vdwg.mxu0
    %4160 = vmatprep.subr.bf16.mxu0 %v3367
    %4161 = vmatpush1.bf16.msra.mxu0 %v3366
    %4162 = vmatprep.subr.bf16.mxu0 %v3359
    %4163 = vmatpush1.bf16.msra.mxu0 %v3358
    %4164 = vmatprep.subr.bf16.mxu0 %v3351
    %4165 = vmatpush1.bf16.msra.mxu0 %v3350
    %4166 = vmatprep.subr.bf16.mxu0 %v3343
    %4167 = vmatpush1.bf16.msra.mxu0 %v3342
    %4168 = vmatprep.subr.bf16.mxu0 %v3335
    %4169 = vmatpush1.bf16.msra.mxu0 %v3334
    %4170 = vmatprep.subr.bf16.mxu0 %v3327
    %4171 = vmatpush1.bf16.msra.mxu0 %v3326
    %4172 = vmatprep.subr.bf16.mxu0 %v3319
    %4173 = vmatpush1.bf16.msra.mxu0 %v3318
    %4174 = vmatprep.subr.bf16.mxu0 %v3311
    %4175 = vmatpush1.bf16.msra.mxu0 %v3310
    %4176 = vmatprep.subr.bf16.mxu0 %v3431
    %4177 = vmatpush2.bf16.msra.mxu0 %v3430
    %4178 = vmatprep.subr.bf16.mxu0 %v3423
    %4179 = vmatpush2.bf16.msra.mxu0 %v3422
    %4180 = vmatprep.subr.bf16.mxu0 %v3415
    %4181 = vmatpush2.bf16.msra.mxu0 %v3414
    %4182 = vmatprep.subr.bf16.mxu0 %v3407
    %4183 = vmatpush2.bf16.msra.mxu0 %v3406
    %4184 = vmatprep.subr.bf16.mxu0 %v3399
    %4185 = vmatpush2.bf16.msra.mxu0 %v3398
    %4186 = vmatprep.subr.bf16.mxu0 %v3391
    %4187 = vmatpush2.bf16.msra.mxu0 %v3390
    %4188 = vmatprep.subr.bf16.mxu0 %v3383
    %4189 = vmatpush2.bf16.msra.mxu0 %v3382
    %4190 = vmatprep.subr.bf16.mxu0 %v3375
    %4191 = vmatpush2.bf16.msra.mxu0 %v3374
    %4192 = vmatprep.mubr.bf16.mxu0 %v961
    %4193 = vmatmul.mubr.bf16.gmra.mxu0 %v960
    %v4194 = vpop.f32.mrf.mxu0
    %v4195 = vadd.f32 %v4154, %v4194
    %v4196 = vpop.f32.mrf.mxu0
    %v4197 = vadd.f32 %v4156, %v4196
    %v4198 = vpop.f32.mrf.mxu0
    %v4199 = vpop.f32.mrf.mxu0
    %4200 = vdwg.mxu0
    %4201 = vmatprep.subr.bf16.mxu0 %v3495
    %4202 = vmatpush1.bf16.msra.mxu0 %v3494
    %4203 = vmatprep.subr.bf16.mxu0 %v3487
    %4204 = vmatpush1.bf16.msra.mxu0 %v3486
    %4205 = vmatprep.subr.bf16.mxu0 %v3479
    %4206 = vmatpush1.bf16.msra.mxu0 %v3478
    %4207 = vmatprep.subr.bf16.mxu0 %v3471
    %4208 = vmatpush1.bf16.msra.mxu0 %v3470
    %4209 = vmatprep.subr.bf16.mxu0 %v3463
    %4210 = vmatpush1.bf16.msra.mxu0 %v3462
    %4211 = vmatprep.subr.bf16.mxu0 %v3455
    %4212 = vmatpush1.bf16.msra.mxu0 %v3454
    %4213 = vmatprep.subr.bf16.mxu0 %v3447
    %4214 = vmatpush1.bf16.msra.mxu0 %v3446
    %4215 = vmatprep.subr.bf16.mxu0 %v3439
    %4216 = vmatpush1.bf16.msra.mxu0 %v3438
    %4217 = vmatprep.subr.bf16.mxu0 %v3559
    %4218 = vmatpush2.bf16.msra.mxu0 %v3558
    %4219 = vmatprep.subr.bf16.mxu0 %v3551
    %4220 = vmatpush2.bf16.msra.mxu0 %v3550
    %4221 = vmatprep.subr.bf16.mxu0 %v3543
    %4222 = vmatpush2.bf16.msra.mxu0 %v3542
    %4223 = vmatprep.subr.bf16.mxu0 %v3535
    %4224 = vmatpush2.bf16.msra.mxu0 %v3534
    %4225 = vmatprep.subr.bf16.mxu0 %v3527
    %4226 = vmatpush2.bf16.msra.mxu0 %v3526
    %4227 = vmatprep.subr.bf16.mxu0 %v3519
    %4228 = vmatpush2.bf16.msra.mxu0 %v3518
    %4229 = vmatprep.subr.bf16.mxu0 %v3511
    %4230 = vmatpush2.bf16.msra.mxu0 %v3510
    %4231 = vmatprep.subr.bf16.mxu0 %v3503
    %4232 = vmatpush2.bf16.msra.mxu0 %v3502
    %4233 = vmatprep.mubr.bf16.mxu0 %v963
    %4234 = vmatmul.mubr.bf16.gmra.mxu0 %v962
    %v4235 = vpop.f32.mrf.mxu0
    %v4236 = vadd.f32 %v4195, %v4235
    %v4237 = vpop.f32.mrf.mxu0
    %v4238 = vadd.f32 %v4197, %v4237
    %v4239 = vpop.f32.mrf.mxu0
    %v4240 = vpop.f32.mrf.mxu0
    %4241 = vdwg.mxu0
    %4242 = vmatprep.subr.bf16.mxu0 %v3113
    %4243 = vmatpush1.bf16.msra.mxu0 %v3112
    %4244 = vmatprep.subr.bf16.mxu0 %v3105
    %4245 = vmatpush1.bf16.msra.mxu0 %v3104
    %4246 = vmatprep.subr.bf16.mxu0 %v3097
    %4247 = vmatpush1.bf16.msra.mxu0 %v3096
    %4248 = vmatprep.subr.bf16.mxu0 %v3089
    %4249 = vmatpush1.bf16.msra.mxu0 %v3088
    %4250 = vmatprep.subr.bf16.mxu0 %v3081
    %4251 = vmatpush1.bf16.msra.mxu0 %v3080
    %4252 = vmatprep.subr.bf16.mxu0 %v3073
    %4253 = vmatpush1.bf16.msra.mxu0 %v3072
    %4254 = vmatprep.subr.bf16.mxu0 %v3065
    %4255 = vmatpush1.bf16.msra.mxu0 %v3064
    %4256 = vmatprep.subr.bf16.mxu0 %v3057
    %4257 = vmatpush1.bf16.msra.mxu0 %v3056
    %4258 = vmatprep.subr.bf16.mxu0 %v3177
    %4259 = vmatpush2.bf16.msra.mxu0 %v3176
    %4260 = vmatprep.subr.bf16.mxu0 %v3169
    %4261 = vmatpush2.bf16.msra.mxu0 %v3168
    %4262 = vmatprep.subr.bf16.mxu0 %v3161
    %4263 = vmatpush2.bf16.msra.mxu0 %v3160
    %4264 = vmatprep.subr.bf16.mxu0 %v3153
    %4265 = vmatpush2.bf16.msra.mxu0 %v3152
    %4266 = vmatprep.subr.bf16.mxu0 %v3145
    %4267 = vmatpush2.bf16.msra.mxu0 %v3144
    %4268 = vmatprep.subr.bf16.mxu0 %v3137
    %4269 = vmatpush2.bf16.msra.mxu0 %v3136
    %4270 = vmatprep.subr.bf16.mxu0 %v3129
    %4271 = vmatpush2.bf16.msra.mxu0 %v3128
    %4272 = vmatprep.subr.bf16.mxu0 %v3121
    %4273 = vmatpush2.bf16.msra.mxu0 %v3120
    %4274 = vmatprep.mubr.bf16.mxu0 %v957
    %4275 = vmatmul.mubr.bf16.gmra.mxu0 %v956
    %v4276 = vpop.f32.mrf.mxu0
    %v4277 = vadd.f32 %v1489, %v4276
    %v4278 = vpop.f32.mrf.mxu0
    %v4279 = vadd.f32 %v1493, %v4278
    %v4280 = vpop.f32.mrf.mxu0
    %v4281 = vpop.f32.mrf.mxu0
    %4282 = vdwg.mxu0
    %4283 = vmatprep.subr.bf16.mxu0 %v3241
    %4284 = vmatpush1.bf16.msra.mxu0 %v3240
    %4285 = vmatprep.subr.bf16.mxu0 %v3233
    %4286 = vmatpush1.bf16.msra.mxu0 %v3232
    %4287 = vmatprep.subr.bf16.mxu0 %v3225
    %4288 = vmatpush1.bf16.msra.mxu0 %v3224
    %4289 = vmatprep.subr.bf16.mxu0 %v3217
    %4290 = vmatpush1.bf16.msra.mxu0 %v3216
    %4291 = vmatprep.subr.bf16.mxu0 %v3209
    %4292 = vmatpush1.bf16.msra.mxu0 %v3208
    %4293 = vmatprep.subr.bf16.mxu0 %v3201
    %4294 = vmatpush1.bf16.msra.mxu0 %v3200
    %4295 = vmatprep.subr.bf16.mxu0 %v3193
    %4296 = vmatpush1.bf16.msra.mxu0 %v3192
    %4297 = vmatprep.subr.bf16.mxu0 %v3185
    %4298 = vmatpush1.bf16.msra.mxu0 %v3184
    %4299 = vmatprep.subr.bf16.mxu0 %v3305
    %4300 = vmatpush2.bf16.msra.mxu0 %v3304
    %4301 = vmatprep.subr.bf16.mxu0 %v3297
    %4302 = vmatpush2.bf16.msra.mxu0 %v3296
    %4303 = vmatprep.subr.bf16.mxu0 %v3289
    %4304 = vmatpush2.bf16.msra.mxu0 %v3288
    %4305 = vmatprep.subr.bf16.mxu0 %v3281
    %4306 = vmatpush2.bf16.msra.mxu0 %v3280
    %4307 = vmatprep.subr.bf16.mxu0 %v3273
    %4308 = vmatpush2.bf16.msra.mxu0 %v3272
    %4309 = vmatprep.subr.bf16.mxu0 %v3265
    %4310 = vmatpush2.bf16.msra.mxu0 %v3264
    %4311 = vmatprep.subr.bf16.mxu0 %v3257
    %4312 = vmatpush2.bf16.msra.mxu0 %v3256
    %4313 = vmatprep.subr.bf16.mxu0 %v3249
    %4314 = vmatpush2.bf16.msra.mxu0 %v3248
    %4315 = vmatprep.mubr.bf16.mxu0 %v959
    %4316 = vmatmul.mubr.bf16.gmra.mxu0 %v958
    %v4317 = vpop.f32.mrf.mxu0
    %v4318 = vadd.f32 %v4277, %v4317
    %v4319 = vpop.f32.mrf.mxu0
    %v4320 = vadd.f32 %v4279, %v4319
    %v4321 = vpop.f32.mrf.mxu0
    %v4322 = vpop.f32.mrf.mxu0
    %4323 = vdwg.mxu0
    %4324 = vmatprep.subr.bf16.mxu0 %v3369
    %4325 = vmatpush1.bf16.msra.mxu0 %v3368
    %4326 = vmatprep.subr.bf16.mxu0 %v3361
    %4327 = vmatpush1.bf16.msra.mxu0 %v3360
    %4328 = vmatprep.subr.bf16.mxu0 %v3353
    %4329 = vmatpush1.bf16.msra.mxu0 %v3352
    %4330 = vmatprep.subr.bf16.mxu0 %v3345
    %4331 = vmatpush1.bf16.msra.mxu0 %v3344
    %4332 = vmatprep.subr.bf16.mxu0 %v3337
    %4333 = vmatpush1.bf16.msra.mxu0 %v3336
    %4334 = vmatprep.subr.bf16.mxu0 %v3329
    %4335 = vmatpush1.bf16.msra.mxu0 %v3328
    %4336 = vmatprep.subr.bf16.mxu0 %v3321
    %4337 = vmatpush1.bf16.msra.mxu0 %v3320
    %4338 = vmatprep.subr.bf16.mxu0 %v3313
    %4339 = vmatpush1.bf16.msra.mxu0 %v3312
    %4340 = vmatprep.subr.bf16.mxu0 %v3433
    %4341 = vmatpush2.bf16.msra.mxu0 %v3432
    %4342 = vmatprep.subr.bf16.mxu0 %v3425
    %4343 = vmatpush2.bf16.msra.mxu0 %v3424
    %4344 = vmatprep.subr.bf16.mxu0 %v3417
    %4345 = vmatpush2.bf16.msra.mxu0 %v3416
    %4346 = vmatprep.subr.bf16.mxu0 %v3409
    %4347 = vmatpush2.bf16.msra.mxu0 %v3408
    %4348 = vmatprep.subr.bf16.mxu0 %v3401
    %4349 = vmatpush2.bf16.msra.mxu0 %v3400
    %4350 = vmatprep.subr.bf16.mxu0 %v3393
    %4351 = vmatpush2.bf16.msra.mxu0 %v3392
    %4352 = vmatprep.subr.bf16.mxu0 %v3385
    %4353 = vmatpush2.bf16.msra.mxu0 %v3384
    %4354 = vmatprep.subr.bf16.mxu0 %v3377
    %4355 = vmatpush2.bf16.msra.mxu0 %v3376
    %4356 = vmatprep.mubr.bf16.mxu0 %v961
    %4357 = vmatmul.mubr.bf16.gmra.mxu0 %v960
    %v4358 = vpop.f32.mrf.mxu0
    %v4359 = vadd.f32 %v4318, %v4358
    %v4360 = vpop.f32.mrf.mxu0
    %v4361 = vadd.f32 %v4320, %v4360
    %v4362 = vpop.f32.mrf.mxu0
    %v4363 = vpop.f32.mrf.mxu0
    %4364 = vdwg.mxu0
    %4365 = vmatprep.subr.bf16.mxu0 %v3497
    %4366 = vmatpush1.bf16.msra.mxu0 %v3496
    %4367 = vmatprep.subr.bf16.mxu0 %v3489
    %4368 = vmatpush1.bf16.msra.mxu0 %v3488
    %4369 = vmatprep.subr.bf16.mxu0 %v3481
    %4370 = vmatpush1.bf16.msra.mxu0 %v3480
    %4371 = vmatprep.subr.bf16.mxu0 %v3473
    %4372 = vmatpush1.bf16.msra.mxu0 %v3472
    %4373 = vmatprep.subr.bf16.mxu0 %v3465
    %4374 = vmatpush1.bf16.msra.mxu0 %v3464
    %4375 = vmatprep.subr.bf16.mxu0 %v3457
    %4376 = vmatpush1.bf16.msra.mxu0 %v3456
    %4377 = vmatprep.subr.bf16.mxu0 %v3449
    %4378 = vmatpush1.bf16.msra.mxu0 %v3448
    %4379 = vmatprep.subr.bf16.mxu0 %v3441
    %4380 = vmatpush1.bf16.msra.mxu0 %v3440
    %4381 = vmatprep.subr.bf16.mxu0 %v3561
    %4382 = vmatpush2.bf16.msra.mxu0 %v3560
    %4383 = vmatprep.subr.bf16.mxu0 %v3553
    %4384 = vmatpush2.bf16.msra.mxu0 %v3552
    %4385 = vmatprep.subr.bf16.mxu0 %v3545
    %4386 = vmatpush2.bf16.msra.mxu0 %v3544
    %4387 = vmatprep.subr.bf16.mxu0 %v3537
    %4388 = vmatpush2.bf16.msra.mxu0 %v3536
    %4389 = vmatprep.subr.bf16.mxu0 %v3529
    %4390 = vmatpush2.bf16.msra.mxu0 %v3528
    %4391 = vmatprep.subr.bf16.mxu0 %v3521
    %4392 = vmatpush2.bf16.msra.mxu0 %v3520
    %4393 = vmatprep.subr.bf16.mxu0 %v3513
    %4394 = vmatpush2.bf16.msra.mxu0 %v3512
    %4395 = vmatprep.subr.bf16.mxu0 %v3505
    %4396 = vmatpush2.bf16.msra.mxu0 %v3504
    %4397 = vmatprep.mubr.bf16.mxu0 %v963
    %4398 = vmatmul.mubr.bf16.gmra.mxu0 %v962
    %v4399 = vpop.f32.mrf.mxu0
    %v4400 = vadd.f32 %v4359, %v4399
    %v4401 = vpop.f32.mrf.mxu0
    %v4402 = vadd.f32 %v4361, %v4401
    %v4403 = vpop.f32.mrf.mxu0
    %v4404 = vpop.f32.mrf.mxu0
    %4405 = vdwg.mxu0
    %4406 = vmatprep.subr.bf16.mxu0 %v3115
    %4407 = vmatpush1.bf16.msra.mxu0 %v3114
    %4408 = vmatprep.subr.bf16.mxu0 %v3107
    %4409 = vmatpush1.bf16.msra.mxu0 %v3106
    %4410 = vmatprep.subr.bf16.mxu0 %v3099
    %4411 = vmatpush1.bf16.msra.mxu0 %v3098
    %4412 = vmatprep.subr.bf16.mxu0 %v3091
    %4413 = vmatpush1.bf16.msra.mxu0 %v3090
    %4414 = vmatprep.subr.bf16.mxu0 %v3083
    %4415 = vmatpush1.bf16.msra.mxu0 %v3082
    %4416 = vmatprep.subr.bf16.mxu0 %v3075
    %4417 = vmatpush1.bf16.msra.mxu0 %v3074
    %4418 = vmatprep.subr.bf16.mxu0 %v3067
    %4419 = vmatpush1.bf16.msra.mxu0 %v3066
    %4420 = vmatprep.subr.bf16.mxu0 %v3059
    %4421 = vmatpush1.bf16.msra.mxu0 %v3058
    %4422 = vmatprep.subr.bf16.mxu0 %v3179
    %4423 = vmatpush2.bf16.msra.mxu0 %v3178
    %4424 = vmatprep.subr.bf16.mxu0 %v3171
    %4425 = vmatpush2.bf16.msra.mxu0 %v3170
    %4426 = vmatprep.subr.bf16.mxu0 %v3163
    %4427 = vmatpush2.bf16.msra.mxu0 %v3162
    %4428 = vmatprep.subr.bf16.mxu0 %v3155
    %4429 = vmatpush2.bf16.msra.mxu0 %v3154
    %4430 = vmatprep.subr.bf16.mxu0 %v3147
    %4431 = vmatpush2.bf16.msra.mxu0 %v3146
    %4432 = vmatprep.subr.bf16.mxu0 %v3139
    %4433 = vmatpush2.bf16.msra.mxu0 %v3138
    %4434 = vmatprep.subr.bf16.mxu0 %v3131
    %4435 = vmatpush2.bf16.msra.mxu0 %v3130
    %4436 = vmatprep.subr.bf16.mxu0 %v3123
    %4437 = vmatpush2.bf16.msra.mxu0 %v3122
    %4438 = vmatprep.mubr.bf16.mxu0 %v957
    %4439 = vmatmul.mubr.bf16.gmra.mxu0 %v956
    %v4440 = vpop.f32.mrf.mxu0
    %v4441 = vadd.f32 %v1497, %v4440
    %v4442 = vpop.f32.mrf.mxu0
    %v4443 = vadd.f32 %v1501, %v4442
    %v4444 = vpop.f32.mrf.mxu0
    %v4445 = vpop.f32.mrf.mxu0
    %4446 = vdwg.mxu0
    %4447 = vmatprep.subr.bf16.mxu0 %v3243
    %4448 = vmatpush1.bf16.msra.mxu0 %v3242
    %4449 = vmatprep.subr.bf16.mxu0 %v3235
    %4450 = vmatpush1.bf16.msra.mxu0 %v3234
    %4451 = vmatprep.subr.bf16.mxu0 %v3227
    %4452 = vmatpush1.bf16.msra.mxu0 %v3226
    %4453 = vmatprep.subr.bf16.mxu0 %v3219
    %4454 = vmatpush1.bf16.msra.mxu0 %v3218
    %4455 = vmatprep.subr.bf16.mxu0 %v3211
    %4456 = vmatpush1.bf16.msra.mxu0 %v3210
    %4457 = vmatprep.subr.bf16.mxu0 %v3203
    %4458 = vmatpush1.bf16.msra.mxu0 %v3202
    %4459 = vmatprep.subr.bf16.mxu0 %v3195
    %4460 = vmatpush1.bf16.msra.mxu0 %v3194
    %4461 = vmatprep.subr.bf16.mxu0 %v3187
    %4462 = vmatpush1.bf16.msra.mxu0 %v3186
    %4463 = vmatprep.subr.bf16.mxu0 %v3307
    %4464 = vmatpush2.bf16.msra.mxu0 %v3306
    %4465 = vmatprep.subr.bf16.mxu0 %v3299
    %4466 = vmatpush2.bf16.msra.mxu0 %v3298
    %4467 = vmatprep.subr.bf16.mxu0 %v3291
    %4468 = vmatpush2.bf16.msra.mxu0 %v3290
    %4469 = vmatprep.subr.bf16.mxu0 %v3283
    %4470 = vmatpush2.bf16.msra.mxu0 %v3282
    %4471 = vmatprep.subr.bf16.mxu0 %v3275
    %4472 = vmatpush2.bf16.msra.mxu0 %v3274
    %4473 = vmatprep.subr.bf16.mxu0 %v3267
    %4474 = vmatpush2.bf16.msra.mxu0 %v3266
    %4475 = vmatprep.subr.bf16.mxu0 %v3259
    %4476 = vmatpush2.bf16.msra.mxu0 %v3258
    %4477 = vmatprep.subr.bf16.mxu0 %v3251
    %4478 = vmatpush2.bf16.msra.mxu0 %v3250
    %4479 = vmatprep.mubr.bf16.mxu0 %v959
    %4480 = vmatmul.mubr.bf16.gmra.mxu0 %v958
    %v4481 = vpop.f32.mrf.mxu0
    %v4482 = vadd.f32 %v4441, %v4481
    %v4483 = vpop.f32.mrf.mxu0
    %v4484 = vadd.f32 %v4443, %v4483
    %v4485 = vpop.f32.mrf.mxu0
    %v4486 = vpop.f32.mrf.mxu0
    %4487 = vdwg.mxu0
    %4488 = vmatprep.subr.bf16.mxu0 %v3371
    %4489 = vmatpush1.bf16.msra.mxu0 %v3370
    %4490 = vmatprep.subr.bf16.mxu0 %v3363
    %4491 = vmatpush1.bf16.msra.mxu0 %v3362
    %4492 = vmatprep.subr.bf16.mxu0 %v3355
    %4493 = vmatpush1.bf16.msra.mxu0 %v3354
    %4494 = vmatprep.subr.bf16.mxu0 %v3347
    %4495 = vmatpush1.bf16.msra.mxu0 %v3346
    %4496 = vmatprep.subr.bf16.mxu0 %v3339
    %4497 = vmatpush1.bf16.msra.mxu0 %v3338
    %4498 = vmatprep.subr.bf16.mxu0 %v3331
    %4499 = vmatpush1.bf16.msra.mxu0 %v3330
    %4500 = vmatprep.subr.bf16.mxu0 %v3323
    %4501 = vmatpush1.bf16.msra.mxu0 %v3322
    %4502 = vmatprep.subr.bf16.mxu0 %v3315
    %4503 = vmatpush1.bf16.msra.mxu0 %v3314
    %4504 = vmatprep.subr.bf16.mxu0 %v3435
    %4505 = vmatpush2.bf16.msra.mxu0 %v3434
    %4506 = vmatprep.subr.bf16.mxu0 %v3427
    %4507 = vmatpush2.bf16.msra.mxu0 %v3426
    %4508 = vmatprep.subr.bf16.mxu0 %v3419
    %4509 = vmatpush2.bf16.msra.mxu0 %v3418
    %4510 = vmatprep.subr.bf16.mxu0 %v3411
    %4511 = vmatpush2.bf16.msra.mxu0 %v3410
    %4512 = vmatprep.subr.bf16.mxu0 %v3403
    %4513 = vmatpush2.bf16.msra.mxu0 %v3402
    %4514 = vmatprep.subr.bf16.mxu0 %v3395
    %4515 = vmatpush2.bf16.msra.mxu0 %v3394
    %4516 = vmatprep.subr.bf16.mxu0 %v3387
    %4517 = vmatpush2.bf16.msra.mxu0 %v3386
    %4518 = vmatprep.subr.bf16.mxu0 %v3379
    %4519 = vmatpush2.bf16.msra.mxu0 %v3378
    %4520 = vmatprep.mubr.bf16.mxu0 %v961
    %4521 = vmatmul.mubr.bf16.gmra.mxu0 %v960
    %v4522 = vpop.f32.mrf.mxu0
    %v4523 = vadd.f32 %v4482, %v4522
    %v4524 = vpop.f32.mrf.mxu0
    %v4525 = vadd.f32 %v4484, %v4524
    %v4526 = vpop.f32.mrf.mxu0
    %v4527 = vpop.f32.mrf.mxu0
    %4528 = vdwg.mxu0
    %4529 = vmatprep.subr.bf16.mxu0 %v3499
    %4530 = vmatpush1.bf16.msra.mxu0 %v3498
    %4531 = vmatprep.subr.bf16.mxu0 %v3491
    %4532 = vmatpush1.bf16.msra.mxu0 %v3490
    %4533 = vmatprep.subr.bf16.mxu0 %v3483
    %4534 = vmatpush1.bf16.msra.mxu0 %v3482
    %4535 = vmatprep.subr.bf16.mxu0 %v3475
    %4536 = vmatpush1.bf16.msra.mxu0 %v3474
    %4537 = vmatprep.subr.bf16.mxu0 %v3467
    %4538 = vmatpush1.bf16.msra.mxu0 %v3466
    %4539 = vmatprep.subr.bf16.mxu0 %v3459
    %4540 = vmatpush1.bf16.msra.mxu0 %v3458
    %4541 = vmatprep.subr.bf16.mxu0 %v3451
    %4542 = vmatpush1.bf16.msra.mxu0 %v3450
    %4543 = vmatprep.subr.bf16.mxu0 %v3443
    %4544 = vmatpush1.bf16.msra.mxu0 %v3442
    %4545 = vmatprep.subr.bf16.mxu0 %v3563
    %4546 = vmatpush2.bf16.msra.mxu0 %v3562
    %4547 = vmatprep.subr.bf16.mxu0 %v3555
    %4548 = vmatpush2.bf16.msra.mxu0 %v3554
    %4549 = vmatprep.subr.bf16.mxu0 %v3547
    %4550 = vmatpush2.bf16.msra.mxu0 %v3546
    %4551 = vmatprep.subr.bf16.mxu0 %v3539
    %4552 = vmatpush2.bf16.msra.mxu0 %v3538
    %4553 = vmatprep.subr.bf16.mxu0 %v3531
    %4554 = vmatpush2.bf16.msra.mxu0 %v3530
    %4555 = vmatprep.subr.bf16.mxu0 %v3523
    %4556 = vmatpush2.bf16.msra.mxu0 %v3522
    %4557 = vmatprep.subr.bf16.mxu0 %v3515
    %4558 = vmatpush2.bf16.msra.mxu0 %v3514
    %4559 = vmatprep.subr.bf16.mxu0 %v3507
    %4560 = vmatpush2.bf16.msra.mxu0 %v3506
    %4561 = vmatprep.mubr.bf16.mxu0 %v963
    %4562 = vmatmul.mubr.bf16.gmra.mxu0 %v962
    %v4563 = vpop.f32.mrf.mxu0
    %v4564 = vadd.f32 %v4523, %v4563
    %v4565 = vpop.f32.mrf.mxu0
    %v4566 = vadd.f32 %v4525, %v4565
    %v4567 = vpop.f32.mrf.mxu0
    %v4568 = vpop.f32.mrf.mxu0
    %4569 = vdwg.mxu0
    %4570 = vmatprep.subr.bf16.mxu0 %v3117
    %4571 = vmatpush1.bf16.msra.mxu0 %v3116
    %4572 = vmatprep.subr.bf16.mxu0 %v3109
    %4573 = vmatpush1.bf16.msra.mxu0 %v3108
    %4574 = vmatprep.subr.bf16.mxu0 %v3101
    %4575 = vmatpush1.bf16.msra.mxu0 %v3100
    %4576 = vmatprep.subr.bf16.mxu0 %v3093
    %4577 = vmatpush1.bf16.msra.mxu0 %v3092
    %4578 = vmatprep.subr.bf16.mxu0 %v3085
    %4579 = vmatpush1.bf16.msra.mxu0 %v3084
    %4580 = vmatprep.subr.bf16.mxu0 %v3077
    %4581 = vmatpush1.bf16.msra.mxu0 %v3076
    %4582 = vmatprep.subr.bf16.mxu0 %v3069
    %4583 = vmatpush1.bf16.msra.mxu0 %v3068
    %4584 = vmatprep.subr.bf16.mxu0 %v3061
    %4585 = vmatpush1.bf16.msra.mxu0 %v3060
    %4586 = vmatprep.subr.bf16.mxu0 %v3181
    %4587 = vmatpush2.bf16.msra.mxu0 %v3180
    %4588 = vmatprep.subr.bf16.mxu0 %v3173
    %4589 = vmatpush2.bf16.msra.mxu0 %v3172
    %4590 = vmatprep.subr.bf16.mxu0 %v3165
    %4591 = vmatpush2.bf16.msra.mxu0 %v3164
    %4592 = vmatprep.subr.bf16.mxu0 %v3157
    %4593 = vmatpush2.bf16.msra.mxu0 %v3156
    %4594 = vmatprep.subr.bf16.mxu0 %v3149
    %4595 = vmatpush2.bf16.msra.mxu0 %v3148
    %4596 = vmatprep.subr.bf16.mxu0 %v3141
    %4597 = vmatpush2.bf16.msra.mxu0 %v3140
    %4598 = vmatprep.subr.bf16.mxu0 %v3133
    %4599 = vmatpush2.bf16.msra.mxu0 %v3132
    %4600 = vmatprep.subr.bf16.mxu0 %v3125
    %4601 = vmatpush2.bf16.msra.mxu0 %v3124
    %4602 = vmatprep.mubr.bf16.mxu0 %v957
    %4603 = vmatmul.mubr.bf16.gmra.mxu0 %v956
    %v4604 = vpop.f32.mrf.mxu0
    %v4605 = vadd.f32 %v1505, %v4604
    %v4606 = vpop.f32.mrf.mxu0
    %v4607 = vadd.f32 %v1509, %v4606
    %v4608 = vpop.f32.mrf.mxu0
    %v4609 = vpop.f32.mrf.mxu0
    %4610 = vdwg.mxu0
    %4611 = vmatprep.subr.bf16.mxu0 %v3245
    %4612 = vmatpush1.bf16.msra.mxu0 %v3244
    %4613 = vmatprep.subr.bf16.mxu0 %v3237
    %4614 = vmatpush1.bf16.msra.mxu0 %v3236
    %4615 = vmatprep.subr.bf16.mxu0 %v3229
    %4616 = vmatpush1.bf16.msra.mxu0 %v3228
    %4617 = vmatprep.subr.bf16.mxu0 %v3221
    %4618 = vmatpush1.bf16.msra.mxu0 %v3220
    %4619 = vmatprep.subr.bf16.mxu0 %v3213
    %4620 = vmatpush1.bf16.msra.mxu0 %v3212
    %4621 = vmatprep.subr.bf16.mxu0 %v3205
    %4622 = vmatpush1.bf16.msra.mxu0 %v3204
    %4623 = vmatprep.subr.bf16.mxu0 %v3197
    %4624 = vmatpush1.bf16.msra.mxu0 %v3196
    %4625 = vmatprep.subr.bf16.mxu0 %v3189
    %4626 = vmatpush1.bf16.msra.mxu0 %v3188
    %4627 = vmatprep.subr.bf16.mxu0 %v3309
    %4628 = vmatpush2.bf16.msra.mxu0 %v3308
    %4629 = vmatprep.subr.bf16.mxu0 %v3301
    %4630 = vmatpush2.bf16.msra.mxu0 %v3300
    %4631 = vmatprep.subr.bf16.mxu0 %v3293
    %4632 = vmatpush2.bf16.msra.mxu0 %v3292
    %4633 = vmatprep.subr.bf16.mxu0 %v3285
    %4634 = vmatpush2.bf16.msra.mxu0 %v3284
    %4635 = vmatprep.subr.bf16.mxu0 %v3277
    %4636 = vmatpush2.bf16.msra.mxu0 %v3276
    %4637 = vmatprep.subr.bf16.mxu0 %v3269
    %4638 = vmatpush2.bf16.msra.mxu0 %v3268
    %4639 = vmatprep.subr.bf16.mxu0 %v3261
    %4640 = vmatpush2.bf16.msra.mxu0 %v3260
    %4641 = vmatprep.subr.bf16.mxu0 %v3253
    %4642 = vmatpush2.bf16.msra.mxu0 %v3252
    %4643 = vmatprep.mubr.bf16.mxu0 %v959
    %4644 = vmatmul.mubr.bf16.gmra.mxu0 %v958
    %v4645 = vpop.f32.mrf.mxu0
    %v4646 = vadd.f32 %v4605, %v4645
    %v4647 = vpop.f32.mrf.mxu0
    %v4648 = vadd.f32 %v4607, %v4647
    %v4649 = vpop.f32.mrf.mxu0
    %v4650 = vpop.f32.mrf.mxu0
    %4651 = vdwg.mxu0
    %4652 = vmatprep.subr.bf16.mxu0 %v3373
    %4653 = vmatpush1.bf16.msra.mxu0 %v3372
    %4654 = vmatprep.subr.bf16.mxu0 %v3365
    %4655 = vmatpush1.bf16.msra.mxu0 %v3364
    %4656 = vmatprep.subr.bf16.mxu0 %v3357
    %4657 = vmatpush1.bf16.msra.mxu0 %v3356
    %4658 = vmatprep.subr.bf16.mxu0 %v3349
    %4659 = vmatpush1.bf16.msra.mxu0 %v3348
    %4660 = vmatprep.subr.bf16.mxu0 %v3341
    %4661 = vmatpush1.bf16.msra.mxu0 %v3340
    %4662 = vmatprep.subr.bf16.mxu0 %v3333
    %4663 = vmatpush1.bf16.msra.mxu0 %v3332
    %4664 = vmatprep.subr.bf16.mxu0 %v3325
    %4665 = vmatpush1.bf16.msra.mxu0 %v3324
    %4666 = vmatprep.subr.bf16.mxu0 %v3317
    %4667 = vmatpush1.bf16.msra.mxu0 %v3316
    %4668 = vmatprep.subr.bf16.mxu0 %v3437
    %4669 = vmatpush2.bf16.msra.mxu0 %v3436
    %4670 = vmatprep.subr.bf16.mxu0 %v3429
    %4671 = vmatpush2.bf16.msra.mxu0 %v3428
    %4672 = vmatprep.subr.bf16.mxu0 %v3421
    %4673 = vmatpush2.bf16.msra.mxu0 %v3420
    %4674 = vmatprep.subr.bf16.mxu0 %v3413
    %4675 = vmatpush2.bf16.msra.mxu0 %v3412
    %4676 = vmatprep.subr.bf16.mxu0 %v3405
    %4677 = vmatpush2.bf16.msra.mxu0 %v3404
    %4678 = vmatprep.subr.bf16.mxu0 %v3397
    %4679 = vmatpush2.bf16.msra.mxu0 %v3396
    %4680 = vmatprep.subr.bf16.mxu0 %v3389
    %4681 = vmatpush2.bf16.msra.mxu0 %v3388
    %4682 = vmatprep.subr.bf16.mxu0 %v3381
    %4683 = vmatpush2.bf16.msra.mxu0 %v3380
    %4684 = vmatprep.mubr.bf16.mxu0 %v961
    %4685 = vmatmul.mubr.bf16.gmra.mxu0 %v960
    %v4686 = vpop.f32.mrf.mxu0
    %v4687 = vadd.f32 %v4646, %v4686
    %v4688 = vpop.f32.mrf.mxu0
    %v4689 = vadd.f32 %v4648, %v4688
    %v4690 = vpop.f32.mrf.mxu0
    %v4691 = vpop.f32.mrf.mxu0
    %4692 = vdwg.mxu0
    %4693 = vmatprep.subr.bf16.mxu0 %v3501
    %4694 = vmatpush1.bf16.msra.mxu0 %v3500
    %4695 = vmatprep.subr.bf16.mxu0 %v3493
    %4696 = vmatpush1.bf16.msra.mxu0 %v3492
    %4697 = vmatprep.subr.bf16.mxu0 %v3485
    %4698 = vmatpush1.bf16.msra.mxu0 %v3484
    %4699 = vmatprep.subr.bf16.mxu0 %v3477
    %4700 = vmatpush1.bf16.msra.mxu0 %v3476
    %4701 = vmatprep.subr.bf16.mxu0 %v3469
    %4702 = vmatpush1.bf16.msra.mxu0 %v3468
    %4703 = vmatprep.subr.bf16.mxu0 %v3461
    %4704 = vmatpush1.bf16.msra.mxu0 %v3460
    %4705 = vmatprep.subr.bf16.mxu0 %v3453
    %4706 = vmatpush1.bf16.msra.mxu0 %v3452
    %4707 = vmatprep.subr.bf16.mxu0 %v3445
    %4708 = vmatpush1.bf16.msra.mxu0 %v3444
    %4709 = vmatprep.subr.bf16.mxu0 %v3565
    %4710 = vmatpush2.bf16.msra.mxu0 %v3564
    %4711 = vmatprep.subr.bf16.mxu0 %v3557
    %4712 = vmatpush2.bf16.msra.mxu0 %v3556
    %4713 = vmatprep.subr.bf16.mxu0 %v3549
    %4714 = vmatpush2.bf16.msra.mxu0 %v3548
    %4715 = vmatprep.subr.bf16.mxu0 %v3541
    %4716 = vmatpush2.bf16.msra.mxu0 %v3540
    %4717 = vmatprep.subr.bf16.mxu0 %v3533
    %4718 = vmatpush2.bf16.msra.mxu0 %v3532
    %4719 = vmatprep.subr.bf16.mxu0 %v3525
    %4720 = vmatpush2.bf16.msra.mxu0 %v3524
    %4721 = vmatprep.subr.bf16.mxu0 %v3517
    %4722 = vmatpush2.bf16.msra.mxu0 %v3516
    %4723 = vmatprep.subr.bf16.mxu0 %v3509
    %4724 = vmatpush2.bf16.msra.mxu0 %v3508
    %4725 = vmatprep.mubr.bf16.mxu0 %v963
    %4726 = vmatmul.mubr.bf16.gmra.mxu0 %v962
    %v4727 = vpop.f32.mrf.mxu0
    %v4728 = vadd.f32 %v4687, %v4727
    %v4729 = vpop.f32.mrf.mxu0
    %v4730 = vadd.f32 %v4689, %v4729
    %v4731 = vpop.f32.mrf.mxu0
    %v4732 = vpop.f32.mrf.mxu0
    %4733 = vdwg.mxu0
    %v4734 = vmax.f32 %v4236, 0.0
    %v4735 = vmax.f32 %v4238, 0.0
    %v4736 = vmax.f32 %v4400, 0.0
    %v4737 = vmax.f32 %v4402, 0.0
    %v4738 = vmax.f32 %v4564, 0.0
    %v4739 = vmax.f32 %v4566, 0.0
    %v4740 = vmax.f32 %v4728, 0.0
    %v4741 = vmax.f32 %v4730, 0.0
    %v4742 = vpack.c.bf16 %v4734, %v4734
    %v4743 = vpack.c.bf16 %v4735, %v4735
    %v4744 = vpack.c.bf16 %v4736, %v4736
    %v4745 = vpack.c.bf16 %v4737, %v4737
    %v4746 = vpack.c.bf16 %v4738, %v4738
    %v4747 = vpack.c.bf16 %v4739, %v4739
    %v4748 = vpack.c.bf16 %v4740, %v4740
    %v4749 = vpack.c.bf16 %v4741, %v4741
    %v4750 = vld [vmem:[#allocation14] sm:$0xf]
    %v4751 = vld [vmem:[#allocation14 + $0x4] sm:$0xf]
    %v4752 = vld [vmem:[#allocation14 + $0x8] sm:$0xf]
    %v4753 = vld [vmem:[#allocation14 + $0xc] sm:$0xf]
    %v4754 = vld [vmem:[#allocation14 + $0x10] sm:$0xf]
    %v4755 = vld [vmem:[#allocation14 + $0x14] sm:$0xf]
    %v4756 = vld [vmem:[#allocation14 + $0x18] sm:$0xf]
    %v4757 = vld [vmem:[#allocation14 + $0x1c] sm:$0xf]
    %v4758 = vld [vmem:[#allocation14 + $0x20] sm:$0xf]
    %v4759 = vld [vmem:[#allocation14 + $0x24] sm:$0xf]
    %v4760 = vld [vmem:[#allocation14 + $0x28] sm:$0xf]
    %v4761 = vld [vmem:[#allocation14 + $0x2c] sm:$0xf]
    %v4762 = vld [vmem:[#allocation14 + $0x30] sm:$0xf]
    %v4763 = vld [vmem:[#allocation14 + $0x34] sm:$0xf]
    %v4764 = vld [vmem:[#allocation14 + $0x38] sm:$0xf]
    %v4765 = vld [vmem:[#allocation14 + $0x3c] sm:$0xf]
    %v4766 = vld [vmem:[#allocation14 + $0x40] sm:$0xf]
    %v4767 = vld [vmem:[#allocation14 + $0x44] sm:$0xf]
    %v4768 = vld [vmem:[#allocation14 + $0x48] sm:$0xf]
    %v4769 = vld [vmem:[#allocation14 + $0x4c] sm:$0xf]
    %v4770 = vld [vmem:[#allocation14 + $0x50] sm:$0xf]
    %v4771 = vld [vmem:[#allocation14 + $0x54] sm:$0xf]
    %v4772 = vld [vmem:[#allocation14 + $0x58] sm:$0xf]
    %v4773 = vld [vmem:[#allocation14 + $0x5c] sm:$0xf]
    %v4774 = vld [vmem:[#allocation14 + $0x60] sm:$0xf]
    %v4775 = vld [vmem:[#allocation14 + $0x64] sm:$0xf]
    %v4776 = vld [vmem:[#allocation14 + $0x68] sm:$0xf]
    %v4777 = vld [vmem:[#allocation14 + $0x6c] sm:$0xf]
    %v4778 = vld [vmem:[#allocation14 + $0x70] sm:$0xf]
    %v4779 = vld [vmem:[#allocation14 + $0x74] sm:$0xf]
    %v4780 = vld [vmem:[#allocation14 + $0x78] sm:$0xf]
    %v4781 = vld [vmem:[#allocation14 + $0x7c] sm:$0xf]
    %v4782 = vld [vmem:[#allocation14 + $0x80] sm:$0xf]
    %v4783 = vld [vmem:[#allocation14 + $0x84] sm:$0xf]
    %v4784 = vld [vmem:[#allocation14 + $0x88] sm:$0xf]
    %v4785 = vld [vmem:[#allocation14 + $0x8c] sm:$0xf]
    %v4786 = vld [vmem:[#allocation14 + $0x90] sm:$0xf]
    %v4787 = vld [vmem:[#allocation14 + $0x94] sm:$0xf]
    %v4788 = vld [vmem:[#allocation14 + $0x98] sm:$0xf]
    %v4789 = vld [vmem:[#allocation14 + $0x9c] sm:$0xf]
    %v4790 = vld [vmem:[#allocation14 + $0xa0] sm:$0xf]
    %v4791 = vld [vmem:[#allocation14 + $0xa4] sm:$0xf]
    %v4792 = vld [vmem:[#allocation14 + $0xa8] sm:$0xf]
    %v4793 = vld [vmem:[#allocation14 + $0xac] sm:$0xf]
    %v4794 = vld [vmem:[#allocation14 + $0xb0] sm:$0xf]
    %v4795 = vld [vmem:[#allocation14 + $0xb4] sm:$0xf]
    %v4796 = vld [vmem:[#allocation14 + $0xb8] sm:$0xf]
    %v4797 = vld [vmem:[#allocation14 + $0xbc] sm:$0xf]
    %v4798 = vld [vmem:[#allocation14 + $0xc0] sm:$0xf]
    %v4799 = vld [vmem:[#allocation14 + $0xc4] sm:$0xf]
    %v4800 = vld [vmem:[#allocation14 + $0xc8] sm:$0xf]
    %v4801 = vld [vmem:[#allocation14 + $0xcc] sm:$0xf]
    %v4802 = vld [vmem:[#allocation14 + $0xd0] sm:$0xf]
    %v4803 = vld [vmem:[#allocation14 + $0xd4] sm:$0xf]
    %v4804 = vld [vmem:[#allocation14 + $0xd8] sm:$0xf]
    %v4805 = vld [vmem:[#allocation14 + $0xdc] sm:$0xf]
    %v4806 = vld [vmem:[#allocation14 + $0xe0] sm:$0xf]
    %v4807 = vld [vmem:[#allocation14 + $0xe4] sm:$0xf]
    %v4808 = vld [vmem:[#allocation14 + $0xe8] sm:$0xf]
    %v4809 = vld [vmem:[#allocation14 + $0xec] sm:$0xf]
    %v4810 = vld [vmem:[#allocation14 + $0xf0] sm:$0xf]
    %v4811 = vld [vmem:[#allocation14 + $0xf4] sm:$0xf]
    %v4812 = vld [vmem:[#allocation14 + $0xf8] sm:$0xf]
    %v4813 = vld [vmem:[#allocation14 + $0xfc] sm:$0xf]
    %v4814 = vld [vmem:[#allocation14 + $0x100] sm:$0xf]
    %v4815 = vld [vmem:[#allocation14 + $0x104] sm:$0xf]
    %v4816 = vld [vmem:[#allocation14 + $0x108] sm:$0xf]
    %v4817 = vld [vmem:[#allocation14 + $0x10c] sm:$0xf]
    %v4818 = vld [vmem:[#allocation14 + $0x110] sm:$0xf]
    %v4819 = vld [vmem:[#allocation14 + $0x114] sm:$0xf]
    %v4820 = vld [vmem:[#allocation14 + $0x118] sm:$0xf]
    %v4821 = vld [vmem:[#allocation14 + $0x11c] sm:$0xf]
    %v4822 = vld [vmem:[#allocation14 + $0x120] sm:$0xf]
    %v4823 = vld [vmem:[#allocation14 + $0x124] sm:$0xf]
    %v4824 = vld [vmem:[#allocation14 + $0x128] sm:$0xf]
    %v4825 = vld [vmem:[#allocation14 + $0x12c] sm:$0xf]
    %v4826 = vld [vmem:[#allocation14 + $0x130] sm:$0xf]
    %v4827 = vld [vmem:[#allocation14 + $0x134] sm:$0xf]
    %v4828 = vld [vmem:[#allocation14 + $0x138] sm:$0xf]
    %v4829 = vld [vmem:[#allocation14 + $0x13c] sm:$0xf]
    %v4830 = vld [vmem:[#allocation14 + $0x140] sm:$0xf]
    %v4831 = vld [vmem:[#allocation14 + $0x144] sm:$0xf]
    %v4832 = vld [vmem:[#allocation14 + $0x148] sm:$0xf]
    %v4833 = vld [vmem:[#allocation14 + $0x14c] sm:$0xf]
    %v4834 = vld [vmem:[#allocation14 + $0x150] sm:$0xf]
    %v4835 = vld [vmem:[#allocation14 + $0x154] sm:$0xf]
    %v4836 = vld [vmem:[#allocation14 + $0x158] sm:$0xf]
    %v4837 = vld [vmem:[#allocation14 + $0x15c] sm:$0xf]
    %v4838 = vld [vmem:[#allocation14 + $0x160] sm:$0xf]
    %v4839 = vld [vmem:[#allocation14 + $0x164] sm:$0xf]
    %v4840 = vld [vmem:[#allocation14 + $0x168] sm:$0xf]
    %v4841 = vld [vmem:[#allocation14 + $0x16c] sm:$0xf]
    %v4842 = vld [vmem:[#allocation14 + $0x170] sm:$0xf]
    %v4843 = vld [vmem:[#allocation14 + $0x174] sm:$0xf]
    %v4844 = vld [vmem:[#allocation14 + $0x178] sm:$0xf]
    %v4845 = vld [vmem:[#allocation14 + $0x17c] sm:$0xf]
    %v4846 = vld [vmem:[#allocation14 + $0x180] sm:$0xf]
    %v4847 = vld [vmem:[#allocation14 + $0x184] sm:$0xf]
    %v4848 = vld [vmem:[#allocation14 + $0x188] sm:$0xf]
    %v4849 = vld [vmem:[#allocation14 + $0x18c] sm:$0xf]
    %v4850 = vld [vmem:[#allocation14 + $0x190] sm:$0xf]
    %v4851 = vld [vmem:[#allocation14 + $0x194] sm:$0xf]
    %v4852 = vld [vmem:[#allocation14 + $0x198] sm:$0xf]
    %v4853 = vld [vmem:[#allocation14 + $0x19c] sm:$0xf]
    %v4854 = vld [vmem:[#allocation14 + $0x1a0] sm:$0xf]
    %v4855 = vld [vmem:[#allocation14 + $0x1a4] sm:$0xf]
    %v4856 = vld [vmem:[#allocation14 + $0x1a8] sm:$0xf]
    %v4857 = vld [vmem:[#allocation14 + $0x1ac] sm:$0xf]
    %v4858 = vld [vmem:[#allocation14 + $0x1b0] sm:$0xf]
    %v4859 = vld [vmem:[#allocation14 + $0x1b4] sm:$0xf]
    %v4860 = vld [vmem:[#allocation14 + $0x1b8] sm:$0xf]
    %v4861 = vld [vmem:[#allocation14 + $0x1bc] sm:$0xf]
    %v4862 = vld [vmem:[#allocation14 + $0x1c0] sm:$0xf]
    %v4863 = vld [vmem:[#allocation14 + $0x1c4] sm:$0xf]
    %v4864 = vld [vmem:[#allocation14 + $0x1c8] sm:$0xf]
    %v4865 = vld [vmem:[#allocation14 + $0x1cc] sm:$0xf]
    %v4866 = vld [vmem:[#allocation14 + $0x1d0] sm:$0xf]
    %v4867 = vld [vmem:[#allocation14 + $0x1d4] sm:$0xf]
    %v4868 = vld [vmem:[#allocation14 + $0x1d8] sm:$0xf]
    %v4869 = vld [vmem:[#allocation14 + $0x1dc] sm:$0xf]
    %v4870 = vld [vmem:[#allocation14 + $0x1e0] sm:$0xf]
    %v4871 = vld [vmem:[#allocation14 + $0x1e4] sm:$0xf]
    %v4872 = vld [vmem:[#allocation14 + $0x1e8] sm:$0xf]
    %v4873 = vld [vmem:[#allocation14 + $0x1ec] sm:$0xf]
    %v4874 = vld [vmem:[#allocation14 + $0x1f0] sm:$0xf]
    %v4875 = vld [vmem:[#allocation14 + $0x1f4] sm:$0xf]
    %v4876 = vld [vmem:[#allocation14 + $0x1f8] sm:$0xf]
    %v4877 = vld [vmem:[#allocation14 + $0x1fc] sm:$0xf]
    %v4878 = vld [vmem:[#allocation16] sm:$0x1]
    %v4880 = vlaneseq
    %v4881 = vshrl.u32 %v4880, 7
    %v4882 = vsub.s32 0, %v4881
    %v4883 = vrot.slane %v4878, %v4882
    %v5013 = vunpack.c.l.b16 %v4750
    %v5014 = vunpack.c.l.b16 %v4751
    %v5015 = vunpack.c.l.b16 %v4752
    %v5016 = vunpack.c.l.b16 %v4753
    %v5017 = vunpack.c.l.b16 %v4754
    %v5018 = vunpack.c.l.b16 %v4755
    %v5019 = vunpack.c.l.b16 %v4756
    %v5020 = vunpack.c.l.b16 %v4757
    %v5021 = vunpack.c.l.b16 %v4758
    %v5022 = vunpack.c.l.b16 %v4759
    %v5023 = vunpack.c.l.b16 %v4760
    %v5024 = vunpack.c.l.b16 %v4761
    %v5025 = vunpack.c.l.b16 %v4762
    %v5026 = vunpack.c.l.b16 %v4763
    %v5027 = vunpack.c.l.b16 %v4764
    %v5028 = vunpack.c.l.b16 %v4765
    %v5029 = vunpack.c.l.b16 %v4766
    %v5030 = vunpack.c.l.b16 %v4767
    %v5031 = vunpack.c.l.b16 %v4768
    %v5032 = vunpack.c.l.b16 %v4769
    %v5033 = vunpack.c.l.b16 %v4770
    %v5034 = vunpack.c.l.b16 %v4771
    %v5035 = vunpack.c.l.b16 %v4772
    %v5036 = vunpack.c.l.b16 %v4773
    %v5037 = vunpack.c.l.b16 %v4774
    %v5038 = vunpack.c.l.b16 %v4775
    %v5039 = vunpack.c.l.b16 %v4776
    %v5040 = vunpack.c.l.b16 %v4777
    %v5041 = vunpack.c.l.b16 %v4778
    %v5042 = vunpack.c.l.b16 %v4779
    %v5043 = vunpack.c.l.b16 %v4780
    %v5044 = vunpack.c.l.b16 %v4781
    %v5045 = vunpack.c.l.b16 %v4782
    %v5046 = vunpack.c.l.b16 %v4783
    %v5047 = vunpack.c.l.b16 %v4784
    %v5048 = vunpack.c.l.b16 %v4785
    %v5049 = vunpack.c.l.b16 %v4786
    %v5050 = vunpack.c.l.b16 %v4787
    %v5051 = vunpack.c.l.b16 %v4788
    %v5052 = vunpack.c.l.b16 %v4789
    %v5053 = vunpack.c.l.b16 %v4790
    %v5054 = vunpack.c.l.b16 %v4791
    %v5055 = vunpack.c.l.b16 %v4792
    %v5056 = vunpack.c.l.b16 %v4793
    %v5057 = vunpack.c.l.b16 %v4794
    %v5058 = vunpack.c.l.b16 %v4795
    %v5059 = vunpack.c.l.b16 %v4796
    %v5060 = vunpack.c.l.b16 %v4797
    %v5061 = vunpack.c.l.b16 %v4798
    %v5062 = vunpack.c.l.b16 %v4799
    %v5063 = vunpack.c.l.b16 %v4800
    %v5064 = vunpack.c.l.b16 %v4801
    %v5065 = vunpack.c.l.b16 %v4802
    %v5066 = vunpack.c.l.b16 %v4803
    %v5067 = vunpack.c.l.b16 %v4804
    %v5068 = vunpack.c.l.b16 %v4805
    %v5069 = vunpack.c.l.b16 %v4806
    %v5070 = vunpack.c.l.b16 %v4807
    %v5071 = vunpack.c.l.b16 %v4808
    %v5072 = vunpack.c.l.b16 %v4809
    %v5073 = vunpack.c.l.b16 %v4810
    %v5074 = vunpack.c.l.b16 %v4811
    %v5075 = vunpack.c.l.b16 %v4812
    %v5076 = vunpack.c.l.b16 %v4813
    %v5077 = vunpack.c.l.b16 %v4814
    %v5078 = vunpack.c.l.b16 %v4815
    %v5079 = vunpack.c.l.b16 %v4816
    %v5080 = vunpack.c.l.b16 %v4817
    %v5081 = vunpack.c.l.b16 %v4818
    %v5082 = vunpack.c.l.b16 %v4819
    %v5083 = vunpack.c.l.b16 %v4820
    %v5084 = vunpack.c.l.b16 %v4821
    %v5085 = vunpack.c.l.b16 %v4822
    %v5086 = vunpack.c.l.b16 %v4823
    %v5087 = vunpack.c.l.b16 %v4824
    %v5088 = vunpack.c.l.b16 %v4825
    %v5089 = vunpack.c.l.b16 %v4826
    %v5090 = vunpack.c.l.b16 %v4827
    %v5091 = vunpack.c.l.b16 %v4828
    %v5092 = vunpack.c.l.b16 %v4829
    %v5093 = vunpack.c.l.b16 %v4830
    %v5094 = vunpack.c.l.b16 %v4831
    %v5095 = vunpack.c.l.b16 %v4832
    %v5096 = vunpack.c.l.b16 %v4833
    %v5097 = vunpack.c.l.b16 %v4834
    %v5098 = vunpack.c.l.b16 %v4835
    %v5099 = vunpack.c.l.b16 %v4836
    %v5100 = vunpack.c.l.b16 %v4837
    %v5101 = vunpack.c.l.b16 %v4838
    %v5102 = vunpack.c.l.b16 %v4839
    %v5103 = vunpack.c.l.b16 %v4840
    %v5104 = vunpack.c.l.b16 %v4841
    %v5105 = vunpack.c.l.b16 %v4842
    %v5106 = vunpack.c.l.b16 %v4843
    %v5107 = vunpack.c.l.b16 %v4844
    %v5108 = vunpack.c.l.b16 %v4845
    %v5109 = vunpack.c.l.b16 %v4846
    %v5110 = vunpack.c.l.b16 %v4847
    %v5111 = vunpack.c.l.b16 %v4848
    %v5112 = vunpack.c.l.b16 %v4849
    %v5113 = vunpack.c.l.b16 %v4850
    %v5114 = vunpack.c.l.b16 %v4851
    %v5115 = vunpack.c.l.b16 %v4852
    %v5116 = vunpack.c.l.b16 %v4853
    %v5117 = vunpack.c.l.b16 %v4854
    %v5118 = vunpack.c.l.b16 %v4855
    %v5119 = vunpack.c.l.b16 %v4856
    %v5120 = vunpack.c.l.b16 %v4857
    %v5121 = vunpack.c.l.b16 %v4858
    %v5122 = vunpack.c.l.b16 %v4859
    %v5123 = vunpack.c.l.b16 %v4860
    %v5124 = vunpack.c.l.b16 %v4861
    %v5125 = vunpack.c.l.b16 %v4862
    %v5126 = vunpack.c.l.b16 %v4863
    %v5127 = vunpack.c.l.b16 %v4864
    %v5128 = vunpack.c.l.b16 %v4865
    %v5129 = vunpack.c.l.b16 %v4866
    %v5130 = vunpack.c.l.b16 %v4867
    %v5131 = vunpack.c.l.b16 %v4868
    %v5132 = vunpack.c.l.b16 %v4869
    %v5133 = vunpack.c.l.b16 %v4870
    %v5134 = vunpack.c.l.b16 %v4871
    %v5135 = vunpack.c.l.b16 %v4872
    %v5136 = vunpack.c.l.b16 %v4873
    %v5137 = vunpack.c.l.b16 %v4874
    %v5138 = vunpack.c.l.b16 %v4875
    %v5139 = vunpack.c.l.b16 %v4876
    %v5140 = vunpack.c.l.b16 %v4877
    %v5141 = vpack.c.b16 %v5014, %v5013
    %v5142 = vpack.c.b16 %v5016, %v5015
    %v5143 = vpack.c.b16 %v5018, %v5017
    %v5144 = vpack.c.b16 %v5020, %v5019
    %v5145 = vpack.c.b16 %v5022, %v5021
    %v5146 = vpack.c.b16 %v5024, %v5023
    %v5147 = vpack.c.b16 %v5026, %v5025
    %v5148 = vpack.c.b16 %v5028, %v5027
    %v5149 = vpack.c.b16 %v5030, %v5029
    %v5150 = vpack.c.b16 %v5032, %v5031
    %v5151 = vpack.c.b16 %v5034, %v5033
    %v5152 = vpack.c.b16 %v5036, %v5035
    %v5153 = vpack.c.b16 %v5038, %v5037
    %v5154 = vpack.c.b16 %v5040, %v5039
    %v5155 = vpack.c.b16 %v5042, %v5041
    %v5156 = vpack.c.b16 %v5044, %v5043
    %v5157 = vpack.c.b16 %v5046, %v5045
    %v5158 = vpack.c.b16 %v5048, %v5047
    %v5159 = vpack.c.b16 %v5050, %v5049
    %v5160 = vpack.c.b16 %v5052, %v5051
    %v5161 = vpack.c.b16 %v5054, %v5053
    %v5162 = vpack.c.b16 %v5056, %v5055
    %v5163 = vpack.c.b16 %v5058, %v5057
    %v5164 = vpack.c.b16 %v5060, %v5059
    %v5165 = vpack.c.b16 %v5062, %v5061
    %v5166 = vpack.c.b16 %v5064, %v5063
    %v5167 = vpack.c.b16 %v5066, %v5065
    %v5168 = vpack.c.b16 %v5068, %v5067
    %v5169 = vpack.c.b16 %v5070, %v5069
    %v5170 = vpack.c.b16 %v5072, %v5071
    %v5171 = vpack.c.b16 %v5074, %v5073
    %v5172 = vpack.c.b16 %v5076, %v5075
    %v5173 = vpack.c.b16 %v5078, %v5077
    %v5174 = vpack.c.b16 %v5080, %v5079
    %v5175 = vpack.c.b16 %v5082, %v5081
    %v5176 = vpack.c.b16 %v5084, %v5083
    %v5177 = vpack.c.b16 %v5086, %v5085
    %v5178 = vpack.c.b16 %v5088, %v5087
    %v5179 = vpack.c.b16 %v5090, %v5089
    %v5180 = vpack.c.b16 %v5092, %v5091
    %v5181 = vpack.c.b16 %v5094, %v5093
    %v5182 = vpack.c.b16 %v5096, %v5095
    %v5183 = vpack.c.b16 %v5098, %v5097
    %v5184 = vpack.c.b16 %v5100, %v5099
    %v5185 = vpack.c.b16 %v5102, %v5101
    %v5186 = vpack.c.b16 %v5104, %v5103
    %v5187 = vpack.c.b16 %v5106, %v5105
    %v5188 = vpack.c.b16 %v5108, %v5107
    %v5189 = vpack.c.b16 %v5110, %v5109
    %v5190 = vpack.c.b16 %v5112, %v5111
    %v5191 = vpack.c.b16 %v5114, %v5113
    %v5192 = vpack.c.b16 %v5116, %v5115
    %v5193 = vpack.c.b16 %v5118, %v5117
    %v5194 = vpack.c.b16 %v5120, %v5119
    %v5195 = vpack.c.b16 %v5122, %v5121
    %v5196 = vpack.c.b16 %v5124, %v5123
    %v5197 = vpack.c.b16 %v5126, %v5125
    %v5198 = vpack.c.b16 %v5128, %v5127
    %v5199 = vpack.c.b16 %v5130, %v5129
    %v5200 = vpack.c.b16 %v5132, %v5131
    %v5201 = vpack.c.b16 %v5134, %v5133
    %v5202 = vpack.c.b16 %v5136, %v5135
    %v5203 = vpack.c.b16 %v5138, %v5137
    %v5204 = vpack.c.b16 %v5140, %v5139
    %5269 = vmatprep.subr.bf16.mxu0 0
    %5270 = vmatpush1.bf16.msra.mxu0 %v5148
    %5271 = vmatprep.subr.bf16.mxu0 0
    %5272 = vmatpush1.bf16.msra.mxu0 %v5147
    %5273 = vmatprep.subr.bf16.mxu0 0
    %5274 = vmatpush1.bf16.msra.mxu0 %v5146
    %5275 = vmatprep.subr.bf16.mxu0 0
    %5276 = vmatpush1.bf16.msra.mxu0 %v5145
    %5277 = vmatprep.subr.bf16.mxu0 0
    %5278 = vmatpush1.bf16.msra.mxu0 %v5144
    %5279 = vmatprep.subr.bf16.mxu0 0
    %5280 = vmatpush1.bf16.msra.mxu0 %v5143
    %5281 = vmatprep.subr.bf16.mxu0 0
    %5282 = vmatpush1.bf16.msra.mxu0 %v5142
    %5283 = vmatprep.subr.bf16.mxu0 0
    %5284 = vmatpush1.bf16.msra.mxu0 %v5141
    %5285 = vmatprep.subr.bf16.mxu0 0
    %5286 = vmatpush2.bf16.msra.mxu0 %v5156
    %5287 = vmatprep.subr.bf16.mxu0 0
    %5288 = vmatpush2.bf16.msra.mxu0 %v5155
    %5289 = vmatprep.subr.bf16.mxu0 0
    %5290 = vmatpush2.bf16.msra.mxu0 %v5154
    %5291 = vmatprep.subr.bf16.mxu0 0
    %5292 = vmatpush2.bf16.msra.mxu0 %v5153
    %5293 = vmatprep.subr.bf16.mxu0 0
    %5294 = vmatpush2.bf16.msra.mxu0 %v5152
    %5295 = vmatprep.subr.bf16.mxu0 0
    %5296 = vmatpush2.bf16.msra.mxu0 %v5151
    %5297 = vmatprep.subr.bf16.mxu0 0
    %5298 = vmatpush2.bf16.msra.mxu0 %v5150
    %5299 = vmatprep.subr.bf16.mxu0 0
    %5300 = vmatpush2.bf16.msra.mxu0 %v5149
    %5301 = vmatprep.mubr.bf16.mxu0 %v4743
    %5302 = vmatmul.mubr.bf16.gmra.mxu0 %v4742
    %v5303 = vpop.f32.mrf.mxu0
    %v5304 = vadd.f32 %v4883, %v5303
    %v5305 = vpop.f32.mrf.mxu0
    %v5306 = vpop.f32.mrf.mxu0
    %v5307 = vpop.f32.mrf.mxu0
    %5308 = vdwg.mxu0
    %5309 = vmatprep.subr.bf16.mxu0 0
    %5310 = vmatpush1.bf16.msra.mxu0 %v5164
    %5311 = vmatprep.subr.bf16.mxu0 0
    %5312 = vmatpush1.bf16.msra.mxu0 %v5163
    %5313 = vmatprep.subr.bf16.mxu0 0
    %5314 = vmatpush1.bf16.msra.mxu0 %v5162
    %5315 = vmatprep.subr.bf16.mxu0 0
    %5316 = vmatpush1.bf16.msra.mxu0 %v5161
    %5317 = vmatprep.subr.bf16.mxu0 0
    %5318 = vmatpush1.bf16.msra.mxu0 %v5160
    %5319 = vmatprep.subr.bf16.mxu0 0
    %5320 = vmatpush1.bf16.msra.mxu0 %v5159
    %5321 = vmatprep.subr.bf16.mxu0 0
    %5322 = vmatpush1.bf16.msra.mxu0 %v5158
    %5323 = vmatprep.subr.bf16.mxu0 0
    %5324 = vmatpush1.bf16.msra.mxu0 %v5157
    %5325 = vmatprep.subr.bf16.mxu0 0
    %5326 = vmatpush2.bf16.msra.mxu0 %v5172
    %5327 = vmatprep.subr.bf16.mxu0 0
    %5328 = vmatpush2.bf16.msra.mxu0 %v5171
    %5329 = vmatprep.subr.bf16.mxu0 0
    %5330 = vmatpush2.bf16.msra.mxu0 %v5170
    %5331 = vmatprep.subr.bf16.mxu0 0
    %5332 = vmatpush2.bf16.msra.mxu0 %v5169
    %5333 = vmatprep.subr.bf16.mxu0 0
    %5334 = vmatpush2.bf16.msra.mxu0 %v5168
    %5335 = vmatprep.subr.bf16.mxu0 0
    %5336 = vmatpush2.bf16.msra.mxu0 %v5167
    %5337 = vmatprep.subr.bf16.mxu0 0
    %5338 = vmatpush2.bf16.msra.mxu0 %v5166
    %5339 = vmatprep.subr.bf16.mxu0 0
    %5340 = vmatpush2.bf16.msra.mxu0 %v5165
    %5341 = vmatprep.mubr.bf16.mxu0 %v4745
    %5342 = vmatmul.mubr.bf16.gmra.mxu0 %v4744
    %v5343 = vpop.f32.mrf.mxu0
    %v5344 = vadd.f32 %v5304, %v5343
    %v5345 = vpop.f32.mrf.mxu0
    %v5346 = vpop.f32.mrf.mxu0
    %v5347 = vpop.f32.mrf.mxu0
    %5348 = vdwg.mxu0
    %5349 = vmatprep.subr.bf16.mxu0 0
    %5350 = vmatpush1.bf16.msra.mxu0 %v5180
    %5351 = vmatprep.subr.bf16.mxu0 0
    %5352 = vmatpush1.bf16.msra.mxu0 %v5179
    %5353 = vmatprep.subr.bf16.mxu0 0
    %5354 = vmatpush1.bf16.msra.mxu0 %v5178
    %5355 = vmatprep.subr.bf16.mxu0 0
    %5356 = vmatpush1.bf16.msra.mxu0 %v5177
    %5357 = vmatprep.subr.bf16.mxu0 0
    %5358 = vmatpush1.bf16.msra.mxu0 %v5176
    %5359 = vmatprep.subr.bf16.mxu0 0
    %5360 = vmatpush1.bf16.msra.mxu0 %v5175
    %5361 = vmatprep.subr.bf16.mxu0 0
    %5362 = vmatpush1.bf16.msra.mxu0 %v5174
    %5363 = vmatprep.subr.bf16.mxu0 0
    %5364 = vmatpush1.bf16.msra.mxu0 %v5173
    %5365 = vmatprep.subr.bf16.mxu0 0
    %5366 = vmatpush2.bf16.msra.mxu0 %v5188
    %5367 = vmatprep.subr.bf16.mxu0 0
    %5368 = vmatpush2.bf16.msra.mxu0 %v5187
    %5369 = vmatprep.subr.bf16.mxu0 0
    %5370 = vmatpush2.bf16.msra.mxu0 %v5186
    %5371 = vmatprep.subr.bf16.mxu0 0
    %5372 = vmatpush2.bf16.msra.mxu0 %v5185
    %5373 = vmatprep.subr.bf16.mxu0 0
    %5374 = vmatpush2.bf16.msra.mxu0 %v5184
    %5375 = vmatprep.subr.bf16.mxu0 0
    %5376 = vmatpush2.bf16.msra.mxu0 %v5183
    %5377 = vmatprep.subr.bf16.mxu0 0
    %5378 = vmatpush2.bf16.msra.mxu0 %v5182
    %5379 = vmatprep.subr.bf16.mxu0 0
    %5380 = vmatpush2.bf16.msra.mxu0 %v5181
    %5381 = vmatprep.mubr.bf16.mxu0 %v4747
    %5382 = vmatmul.mubr.bf16.gmra.mxu0 %v4746
    %v5383 = vpop.f32.mrf.mxu0
    %v5384 = vadd.f32 %v5344, %v5383
    %v5385 = vpop.f32.mrf.mxu0
    %v5386 = vpop.f32.mrf.mxu0
    %v5387 = vpop.f32.mrf.mxu0
    %5388 = vdwg.mxu0
    %5389 = vmatprep.subr.bf16.mxu0 0
    %5390 = vmatpush1.bf16.msra.mxu0 %v5196
    %5391 = vmatprep.subr.bf16.mxu0 0
    %5392 = vmatpush1.bf16.msra.mxu0 %v5195
    %5393 = vmatprep.subr.bf16.mxu0 0
    %5394 = vmatpush1.bf16.msra.mxu0 %v5194
    %5395 = vmatprep.subr.bf16.mxu0 0
    %5396 = vmatpush1.bf16.msra.mxu0 %v5193
    %5397 = vmatprep.subr.bf16.mxu0 0
    %5398 = vmatpush1.bf16.msra.mxu0 %v5192
    %5399 = vmatprep.subr.bf16.mxu0 0
    %5400 = vmatpush1.bf16.msra.mxu0 %v5191
    %5401 = vmatprep.subr.bf16.mxu0 0
    %5402 = vmatpush1.bf16.msra.mxu0 %v5190
    %5403 = vmatprep.subr.bf16.mxu0 0
    %5404 = vmatpush1.bf16.msra.mxu0 %v5189
    %5405 = vmatprep.subr.bf16.mxu0 0
    %5406 = vmatpush2.bf16.msra.mxu0 %v5204
    %5407 = vmatprep.subr.bf16.mxu0 0
    %5408 = vmatpush2.bf16.msra.mxu0 %v5203
    %5409 = vmatprep.subr.bf16.mxu0 0
    %5410 = vmatpush2.bf16.msra.mxu0 %v5202
    %5411 = vmatprep.subr.bf16.mxu0 0
    %5412 = vmatpush2.bf16.msra.mxu0 %v5201
    %5413 = vmatprep.subr.bf16.mxu0 0
    %5414 = vmatpush2.bf16.msra.mxu0 %v5200
    %5415 = vmatprep.subr.bf16.mxu0 0
    %5416 = vmatpush2.bf16.msra.mxu0 %v5199
    %5417 = vmatprep.subr.bf16.mxu0 0
    %5418 = vmatpush2.bf16.msra.mxu0 %v5198
    %5419 = vmatprep.subr.bf16.mxu0 0
    %5420 = vmatpush2.bf16.msra.mxu0 %v5197
    %5421 = vmatprep.mubr.bf16.mxu0 %v4749
    %5422 = vmatmul.mubr.bf16.gmra.mxu0 %v4748
    %v5423 = vpop.f32.mrf.mxu0
    %v5424 = vadd.f32 %v5384, %v5423
    %v5425 = vpop.f32.mrf.mxu0
    %v5426 = vpop.f32.mrf.mxu0
    %v5427 = vpop.f32.mrf.mxu0
    %5428 = vdwg.mxu0
    %5429 = vst [vmem:[#allocation17] sm:$0xff] %v5424
    // Predicated region
    $region74: #{tpu_custom_call.1} parent=1 // pred_check
      _
    $region75: #{tpu_custom_call.1} parent=1 // pred_check_branch
      %5431 = sbr.rel (0) target = $region77
    $region76: #{tpu_custom_call.1} parent=1 // pred_region
      %s5433 = ssub.s32 128, 128
      %5434 = vsyncadd [#allocation4], %s5433
      %s5436 = sshll.u32 [#allocation17], 4
      %s5437 = int_to_ptr.vmem [resolvable:$true] %s5436
      %5439 = dma.vmem_to_hbm [thread:$0]  %s5437, 128, %s9, [#allocation4]
    $region77: #{tpu_custom_call.1} parent=1 // pred_fallthru
      _
    // Predicated region
    $region78: #{tpu_custom_call.1} parent=1 // pred_check
      _
    $region79: #{tpu_custom_call.1} parent=1 // pred_check_branch
      %5441 = sbr.rel (0) target = $region81
    $region80: #{tpu_custom_call.1} parent=1 // pred_region
      %5442 = dma.done [#allocation4], 128
    $region81: #{tpu_custom_call.1} parent=1 // pred_fallthru
      _
    %5443 = vsyncpa [#allocation3], 1
    %5444 = vsyncpa [#allocation6], 1
    %5445 = vsyncpa [#allocation9], 1
    %5446 = vsyncpa [#allocation12], 1
    %5447 = vsyncpa [#allocation15], 1
    %5448 = vsyncpa [#allocation4], 1

// kernel: tpu_custom_call.1
$region0: #{tpu_custom_call.1}
  #allocation0 [shape = 'u32[]', space=smem, size = 0x4, offset = 0x4, fixed_abs, tag = 'smem constant byte address 0x4 - core index']
  #allocation1 [shape = 'u32[144,128]{1,0:T(1,128)}', space=vmem, size = 0x12000, scoped, tag = 'internal scratch']
  %s0 = inlined_call_operand.hbm [shape: bf16[8,4,256], index: 0, kind: input, shape index: {}]
  %s1 = inlined_call_operand.hbm [shape: bf16[4,128], index: 1, kind: input, shape index: {}]
  %s2 = inlined_call_operand.hbm [shape: f32[1,128], index: 2, kind: input, shape index: {}]
  %s3 = inlined_call_operand.hbm [shape: bf16[128,1024], index: 3, kind: input, shape index: {}]
  %s4 = inlined_call_operand.hbm [shape: f32[1,1024], index: 4, kind: input, shape index: {}]
  %s5 = inlined_call_operand.hbm [shape: bf16[1024,1024], index: 5, kind: input, shape index: {}]
  %s6 = inlined_call_operand.hbm [shape: f32[1,1024], index: 6, kind: input, shape index: {}]
  %s7 = inlined_call_operand.hbm [shape: bf16[1024,128], index: 7, kind: input, shape index: {}]
  %s8 = inlined_call_operand.hbm [shape: f32[1,128], index: 8, kind: input, shape index: {}]
  %s9 = inlined_call_operand.hbm [shape: f32[8,128], index: 9, kind: output, shape index: {}]
  %s10 = sld [smem:[#allocation0]]
  $region82: #{tpu_custom_call.1} parent=0
    _
  %s12 = ssub.s32 1, %s10
  %s13 = scalar_select 0, %s12, %s10
  $region1: #{tpu_custom_call.1} parent=0
    #allocation2 [shape = 'u8[16384]{0}', space=vmem, size = 0x4000, scoped, tag = 'input window, operand 0, single buffered']
    #allocation3 [shape = 's32[1]{0}', space=sflag, size = 0x4, scoped, tag = 'scoped memory for tpu_custom_call.1']
    #allocation4 [shape = 's32[1]{0}', space=sflag, size = 0x4, scoped, tag = 'scoped memory for tpu_custom_call.1']
    #allocation5 [shape = 'u8[1024]{0}', space=vmem, size = 0x400, scoped, tag = 'input window, operand 1, single buffered']
    #allocation6 [shape = 's32[1]{0}', space=sflag, size = 0x4, scoped, tag = 'scoped memory for tpu_custom_call.1']
    #allocation7 [shape = 'u8[512]{0}', space=vmem, size = 0x400, scoped, tag = 'input window, operand 2, single buffered']
    #allocation8 [shape = 'u8[262144]{0}', space=vmem, size = 0x40000, scoped, tag = 'input window, operand 3, single buffered']
    #allocation9 [shape = 's32[1]{0}', space=sflag, size = 0x4, scoped, tag = 'scoped memory for tpu_custom_call.1']
    #allocation10 [shape = 'u8[4096]{0}', space=vmem, size = 0x1000, scoped, tag = 'input window, operand 4, single buffered']
    #allocation11 [shape = 'u8[2097152]{0}', space=vmem, size = 0x200000, scoped, tag = 'input window, operand 5, single buffered']
    #allocation12 [shape = 's32[1]{0}', space=sflag, size = 0x4, scoped, tag = 'scoped memory for tpu_custom_call.1']
    #allocation13 [shape = 'u8[4096]{0}', space=vmem, size = 0x1000, scoped, tag = 'input window, operand 6, single buffered']
    #allocation14 [shape = 'u8[262144]{0}', space=vmem, size = 0x40000, scoped, tag = 'input window, operand 7, single buffered']
    #allocation15 [shape = 's32[1]{0}', space=sflag, size = 0x4, scoped, tag = 'scoped memory for tpu_custom_call.1']
    #allocation16 [shape = 'u8[512]{0}', space=vmem, size = 0x400, scoped, tag = 'input window, operand 8, single buffered']
    #allocation17 [shape = 'u8[4096]{0}', space=vmem, size = 0x1000, scoped, tag = 'output window, operand 0, single buffered']
    %14 = vsyncpa [#allocation3], 0
    %15 = vsyncpa [#allocation6], 0
    %16 = vsyncpa [#allocation9], 0
    %17 = vsyncpa [#allocation12], 0
    %18 = vsyncpa [#allocation15], 0
    %19 = vsyncpa [#allocation4], 0
    // Predicated region
    $region2: #{tpu_custom_call.1} parent=1 // pred_check
      _
    $region3: #{tpu_custom_call.1} parent=1 // pred_check_branch
      %21 = sbr.rel (0) target = $region5
    $region4: #{tpu_custom_call.1} parent=1 // pred_region
      %s23 = ssub.s32 512, 512
      %24 = vsyncadd [#allocation3], %s23
      %s25 = sshll.u32 [#allocation2], 4
      %s26 = int_to_ptr.vmem [resolvable:$true] %s25
      %31 = dma.hbm_to_vmem [thread:$0]  %s0, 512, %s26, [#allocation3], 64, 64, 4
    $region5: #{tpu_custom_call.1} parent=1 // pred_fallthru
      _
    // Predicated region
    $region6: #{tpu_custom_call.1} parent=1 // pred_check
      _
    $region7: #{tpu_custom_call.1} parent=1 // pred_check_branch
      %33 = sbr.rel (0) target = $region9
    $region8: #{tpu_custom_call.1} parent=1 // pred_region
      %s35 = ssub.s32 32, 32
      %36 = vsyncadd [#allocation6], %s35
      %s38 = sshll.u32 [#allocation5], 4
      %s39 = int_to_ptr.vmem [resolvable:$true] %s38
      %41 = dma.hbm_to_vmem [thread:$0]  %s1, 32, %s39, [#allocation6]
    $region9: #{tpu_custom_call.1} parent=1 // pred_fallthru
      _
    // Predicated region
    $region10: #{tpu_custom_call.1} parent=1 // pred_check
      _
    $region11: #{tpu_custom_call.1} parent=1 // pred_check_branch
      %43 = sbr.rel (0) target = $region13
    $region12: #{tpu_custom_call.1} parent=1 // pred_region
      %s45 = ssub.s32 16, 16
      %46 = vsyncadd [#allocation6], %s45
      %s48 = sshll.u32 [#allocation7], 4
      %s49 = int_to_ptr.vmem [resolvable:$true] %s48
      %51 = dma.hbm_to_vmem [thread:$0]  %s2, 16, %s49, [#allocation6]
    $region13: #{tpu_custom_call.1} parent=1 // pred_fallthru
      _
    // Predicated region
    $region14: #{tpu_custom_call.1} parent=1 // pred_check
      _
    $region15: #{tpu_custom_call.1} parent=1 // pred_check_branch
      %53 = sbr.rel (0) target = $region17
    $region16: #{tpu_custom_call.1} parent=1 // pred_region
      %s55 = ssub.s32 8192, 8192
      %56 = vsyncadd [#allocation9], %s55
      %s57 = sshll.u32 [#allocation8], 4
      %s58 = int_to_ptr.vmem [resolvable:$true] %s57
      %63 = dma.hbm_to_vmem [thread:$0]  %s3, 8192, %s58, [#allocation9], 512, 512, 32
    $region17: #{tpu_custom_call.1} parent=1 // pred_fallthru
      _
    // Predicated region
    $region18: #{tpu_custom_call.1} parent=1 // pred_check
      _
    $region19: #{tpu_custom_call.1} parent=1 // pred_check_branch
      %65 = sbr.rel (0) target = $region21
    $region20: #{tpu_custom_call.1} parent=1 // pred_region
      %s67 = ssub.s32 128, 128
      %68 = vsyncadd [#allocation9], %s67
      %s70 = sshll.u32 [#allocation10], 4
      %s71 = int_to_ptr.vmem [resolvable:$true] %s70
      %73 = dma.hbm_to_vmem [thread:$0]  %s4, 128, %s71, [#allocation9]
    $region21: #{tpu_custom_call.1} parent=1 // pred_fallthru
      _
    // Predicated region
    $region22: #{tpu_custom_call.1} parent=1 // pred_check
      _
    $region23: #{tpu_custom_call.1} parent=1 // pred_check_branch
      %75 = sbr.rel (0) target = $region25
    $region24: #{tpu_custom_call.1} parent=1 // pred_region
      %s77 = ssub.s32 65536, 65536
      %78 = vsyncadd [#allocation12], %s77
      %s79 = sshll.u32 [#allocation11], 4
      %s80 = int_to_ptr.vmem [resolvable:$true] %s79
      %85 = dma.hbm_to_vmem [thread:$0]  %s5, 65536, %s80, [#allocation12], 512, 512, 32
    $region25: #{tpu_custom_call.1} parent=1 // pred_fallthru
      _
    // Predicated region
    $region26: #{tpu_custom_call.1} parent=1 // pred_check
      _
    $region27: #{tpu_custom_call.1} parent=1 // pred_check_branch
      %87 = sbr.rel (0) target = $region29
    $region28: #{tpu_custom_call.1} parent=1 // pred_region
      %s89 = ssub.s32 128, 128
      %90 = vsyncadd [#allocation12], %s89
      %s92 = sshll.u32 [#allocation13], 4
      %s93 = int_to_ptr.vmem [resolvable:$true] %s92
      %95 = dma.hbm_to_vmem [thread:$0]  %s6, 128, %s93, [#allocation12]
    $region29: #{tpu_custom_call.1} parent=1 // pred_fallthru
      _
    // Predicated region
    $region30: #{tpu_custom_call.1} parent=1 // pred_check
      _
    $region31: #{tpu_custom_call.1} parent=1 // pred_check_branch
      %97 = sbr.rel (0) target = $region33
    $region32: #{tpu_custom_call.1} parent=1 // pred_region
      %s99 = ssub.s32 8192, 8192
      %100 = vsyncadd [#allocation15], %s99
      %s101 = sshll.u32 [#allocation14], 4
      %s102 = int_to_ptr.vmem [resolvable:$true] %s101
      %107 = dma.hbm_to_vmem [thread:$0]  %s7, 8192, %s102, [#allocation15], 64, 64, 4
    $region33: #{tpu_custom_call.1} parent=1 // pred_fallthru
      _
    // Predicated region
    $region34: #{tpu_custom_call.1} parent=1 // pred_check
      _
    $region35: #{tpu_custom_call.1} parent=1 // pred_check_branch
      %109 = sbr.rel (0) target = $region37
    $region36: #{tpu_custom_call.1} parent=1 // pred_region
      %s111 = ssub.s32 16, 16
      %112 = vsyncadd [#allocation15], %s111
      %s114 = sshll.u32 [#allocation16], 4
      %s115 = int_to_ptr.vmem [resolvable:$true] %s114
      %117 = dma.hbm_to_vmem [thread:$0]  %s8, 16, %s115, [#allocation15]
    $region37: #{tpu_custom_call.1} parent=1 // pred_fallthru
      _
    // Predicated region
    $region38: #{tpu_custom_call.1} parent=1 // pred_check
      _
    $region39: #{tpu_custom_call.1} parent=1 // pred_check_branch
      %119 = sbr.rel (0) target = $region41
    $region40: #{tpu_custom_call.1} parent=1 // pred_region
      %120 = dma.done [#allocation3], 512
    $region41: #{tpu_custom_call.1} parent=1 // pred_fallthru
      _
    // Predicated region
    $region42: #{tpu_custom_call.1} parent=1 // pred_check
      _
    $region43: #{tpu_custom_call.1} parent=1 // pred_check_branch
      %122 = sbr.rel (0) target = $region45
    $region44: #{tpu_custom_call.1} parent=1 // pred_region
      %123 = dma.done [#allocation6], 32
    $region45: #{tpu_custom_call.1} parent=1 // pred_fallthru
      _
    // Predicated region
    $region46: #{tpu_custom_call.1} parent=1 // pred_check
      _
    $region47: #{tpu_custom_call.1} parent=1 // pred_check_branch
      %125 = sbr.rel (0) target = $region49
    $region48: #{tpu_custom_call.1} parent=1 // pred_region
      %126 = dma.done [#allocation6], 16
    $region49: #{tpu_custom_call.1} parent=1 // pred_fallthru
      _
    // Predicated region
    $region50: #{tpu_custom_call.1} parent=1 // pred_check
      _
    $region51: #{tpu_custom_call.1} parent=1 // pred_check_branch
      %128 = sbr.rel (0) target = $region53
    $region52: #{tpu_custom_call.1} parent=1 // pred_region
      %129 = dma.done [#allocation9], 8192
    $region53: #{tpu_custom_call.1} parent=1 // pred_fallthru
      _
    // Predicated region
    $region54: #{tpu_custom_call.1} parent=1 // pred_check
      _
    $region55: #{tpu_custom_call.1} parent=1 // pred_check_branch
      %131 = sbr.rel (0) target = $region57
    $region56: #{tpu_custom_call.1} parent=1 // pred_region
      %132 = dma.done [#allocation9], 128
    $region57: #{tpu_custom_call.1} parent=1 // pred_fallthru
      _
    // Predicated region
    $region58: #{tpu_custom_call.1} parent=1 // pred_check
      _
    $region59: #{tpu_custom_call.1} parent=1 // pred_check_branch
      %134 = sbr.rel (0) target = $region61
    $region60: #{tpu_custom_call.1} parent=1 // pred_region
      %135 = dma.done [#allocation12], 65536
    $region61: #{tpu_custom_call.1} parent=1 // pred_fallthru
      _
    // Predicated region
    $region62: #{tpu_custom_call.1} parent=1 // pred_check
      _
    $region63: #{tpu_custom_call.1} parent=1 // pred_check_branch
      %137 = sbr.rel (0) target = $region65
    $region64: #{tpu_custom_call.1} parent=1 // pred_region
      %138 = dma.done [#allocation12], 128
    $region65: #{tpu_custom_call.1} parent=1 // pred_fallthru
      _
    // Predicated region
    $region66: #{tpu_custom_call.1} parent=1 // pred_check
      _
    $region67: #{tpu_custom_call.1} parent=1 // pred_check_branch
      %140 = sbr.rel (0) target = $region69
    $region68: #{tpu_custom_call.1} parent=1 // pred_region
      %141 = dma.done [#allocation15], 8192
    $region69: #{tpu_custom_call.1} parent=1 // pred_fallthru
      _
    // Predicated region
    $region70: #{tpu_custom_call.1} parent=1 // pred_check
      _
    $region71: #{tpu_custom_call.1} parent=1 // pred_check_branch
      %143 = sbr.rel (0) target = $region73
    $region72: #{tpu_custom_call.1} parent=1 // pred_region
      %144 = dma.done [#allocation15], 16
    $region73: #{tpu_custom_call.1} parent=1 // pred_fallthru
      _
    %v146 = vld [vmem:[#allocation2] sm:$0xf]
    %v147 = vld [vmem:[#allocation2 + $0x4] sm:$0xf]
    %v148 = vld [vmem:[#allocation2 + $0x8] sm:$0xf]
    %v149 = vld [vmem:[#allocation2 + $0xc] sm:$0xf]
    %v150 = vld [vmem:[#allocation2 + $0x10] sm:$0xf]
    %v151 = vld [vmem:[#allocation2 + $0x14] sm:$0xf]
    %v152 = vld [vmem:[#allocation2 + $0x18] sm:$0xf]
    %v153 = vld [vmem:[#allocation2 + $0x1c] sm:$0xf]
    %v154 = vunpack.c.l.bf16 %v146
    %v155 = vunpack.c.l.bf16 %v147
    %v156 = vunpack.c.l.bf16 %v148
    %v157 = vunpack.c.l.bf16 %v149
    %v158 = vunpack.c.l.bf16 %v150
    %v159 = vunpack.c.l.bf16 %v151
    %v160 = vunpack.c.l.bf16 %v152
    %v161 = vunpack.c.l.bf16 %v153
    %v170 = vcombine.high %v154, %v154
    %v171 = vcombine.high %v155, %v155
    %v172 = vcombine.high %v156, %v156
    %v173 = vcombine.high %v157, %v157
    %v174 = vcombine.high %v158, %v158
    %v175 = vcombine.high %v159, %v159
    %v176 = vcombine.high %v160, %v160
    %v177 = vcombine.high %v161, %v161
    %vm186 = vcmask 1043456
    %v187 = vsel %vm186, %v154, 0.0
    %v188 = vsel %vm186, %v170, 0.0
    %v189 = vadd.f32 %v187, %v188
    %190 = vadd.xlane.f32.xlu0 %v189
    %v191 = vpop.xlane.xlu0 %190
    %v192 = vsel %vm186, %v155, 0.0
    %v193 = vsel %vm186, %v171, 0.0
    %v194 = vadd.f32 %v192, %v193
    %195 = vadd.xlane.f32.xlu0 %v194
    %v196 = vpop.xlane.xlu0 %195
    %v197 = vsel %vm186, %v156, 0.0
    %v198 = vsel %vm186, %v172, 0.0
    %v199 = vadd.f32 %v197, %v198
    %200 = vadd.xlane.f32.xlu0 %v199
    %v201 = vpop.xlane.xlu0 %200
    %v202 = vsel %vm186, %v157, 0.0
    %v203 = vsel %vm186, %v173, 0.0
    %v204 = vadd.f32 %v202, %v203
    %205 = vadd.xlane.f32.xlu0 %v204
    %v206 = vpop.xlane.xlu0 %205
    %v207 = vsel %vm186, %v158, 0.0
    %v208 = vsel %vm186, %v174, 0.0
    %v209 = vadd.f32 %v207, %v208
    %210 = vadd.xlane.f32.xlu0 %v209
    %v211 = vpop.xlane.xlu0 %210
    %v212 = vsel %vm186, %v159, 0.0
    %v213 = vsel %vm186, %v175, 0.0
    %v214 = vadd.f32 %v212, %v213
    %215 = vadd.xlane.f32.xlu0 %v214
    %v216 = vpop.xlane.xlu0 %215
    %v217 = vsel %vm186, %v160, 0.0
    %v218 = vsel %vm186, %v176, 0.0
    %v219 = vadd.f32 %v217, %v218
    %220 = vadd.xlane.f32.xlu0 %v219
    %v221 = vpop.xlane.xlu0 %220
    %v222 = vsel %vm186, %v161, 0.0
    %v223 = vsel %vm186, %v177, 0.0
    %v224 = vadd.f32 %v222, %v223
    %225 = vadd.xlane.f32.xlu0 %v224
    %v226 = vpop.xlane.xlu0 %225
    %v227 = vpack.c.bf16 %v191, %v191
    %v228 = vpack.c.bf16 %v196, %v196
    %v229 = vpack.c.bf16 %v201, %v201
    %v230 = vpack.c.bf16 %v206, %v206
    %v231 = vpack.c.bf16 %v211, %v211
    %v232 = vpack.c.bf16 %v216, %v216
    %v233 = vpack.c.bf16 %v221, %v221
    %v234 = vpack.c.bf16 %v226, %v226
    %v235 = vld [vmem:[#allocation5] sm:$0x3]
    %v236 = vld [vmem:[#allocation7] sm:$0x1]
    %v238 = vlaneseq
    %v239 = vshrl.u32 %v238, 7
    %v240 = vsub.s32 0, %v239
    %v241 = vrot.slane %v236, %v240
    %v251 = vunpack.c.l.b16 %v227
    %v252 = vunpack.c.l.b16 %v228
    %v253 = vunpack.c.l.b16 %v229
    %v254 = vunpack.c.l.b16 %v230
    %v255 = vunpack.c.l.b16 %v231
    %v256 = vunpack.c.l.b16 %v232
    %v257 = vunpack.c.l.b16 %v233
    %v258 = vunpack.c.l.b16 %v234
    %v259 = vlaneseq
    %v260 = vand.u32 %v259, 127
    %v261 = vlaneseq
    %v262 = vshrl.u32 %v261, 7
    %v263 = vsub.s32 %v260, %v262
    %v264 = vrot.slane %v251, %v263
    %v265 = vlaneseq
    %v266 = vshrl.u32 %v265, 7
    %v267 = vsub.s32 %v260, %v266
    %v268 = vrot.slane %v252, %v267
    %v269 = vlaneseq
    %v270 = vshrl.u32 %v269, 7
    %v271 = vsub.s32 %v260, %v270
    %v272 = vrot.slane %v253, %v271
    %v273 = vlaneseq
    %v274 = vshrl.u32 %v273, 7
    %v275 = vsub.s32 %v260, %v274
    %v276 = vrot.slane %v254, %v275
    %v277 = vlaneseq
    %v278 = vshrl.u32 %v277, 7
    %v279 = vsub.s32 %v260, %v278
    %v280 = vrot.slane %v255, %v279
    %v281 = vlaneseq
    %v282 = vshrl.u32 %v281, 7
    %v283 = vsub.s32 %v260, %v282
    %v284 = vrot.slane %v256, %v283
    %v285 = vlaneseq
    %v286 = vshrl.u32 %v285, 7
    %v287 = vsub.s32 %v260, %v286
    %v288 = vrot.slane %v257, %v287
    %v289 = vlaneseq
    %v290 = vshrl.u32 %v289, 7
    %v291 = vsub.s32 %v260, %v290
    %v292 = vrot.slane %v258, %v291
    %vm293 = vcmask 1041409
    %v294 = vsel %vm293, %v268, %v264
    %vm295 = vcmask 1042434
    %v296 = vsel %vm295, %v272, %v294
    %vm297 = vcmask 1043459
    %v298 = vsel %vm297, %v276, %v296
    %vm299 = vcmask 1044484
    %v300 = vsel %vm299, %v280, %v298
    %vm301 = vcmask 1045509
    %v302 = vsel %vm301, %v284, %v300
    %vm303 = vcmask 1046534
    %v304 = vsel %vm303, %v288, %v302
    %vm305 = vcmask 1047559
    %v306 = vsel %vm305, %v292, %v304
    %v307 = vpack.c.b16 %v306, %v306
    %vm308 = vcmask 31744
    %v310 = vsel %vm308, %v307, 0
    %vm312 = vcmask 1041408
    %v314 = vsel %vm312, %v235, 0
    %316 = vmatprep.subr.bf16.mxu0 0
    %317 = vmatpush1.bf16.msra.mxu0 0
    %318 = vmatprep.subr.bf16.mxu0 0
    %319 = vmatpush1.bf16.msra.mxu0 0
    %320 = vmatprep.subr.bf16.mxu0 0
    %321 = vmatpush1.bf16.msra.mxu0 0
    %322 = vmatprep.subr.bf16.mxu0 0
    %323 = vmatpush1.bf16.msra.mxu0 0
    %324 = vmatprep.subr.bf16.mxu0 0
    %325 = vmatpush1.bf16.msra.mxu0 0
    %326 = vmatprep.subr.bf16.mxu0 0
    %327 = vmatpush1.bf16.msra.mxu0 0
    %328 = vmatprep.subr.bf16.mxu0 0
    %329 = vmatpush1.bf16.msra.mxu0 0
    %330 = vmatprep.subr.bf16.mxu0 0
    %331 = vmatpush1.bf16.msra.mxu0 %v314
    %332 = vmatprep.subr.bf16.mxu0 0
    %333 = vmatpush2.bf16.msra.mxu0 0
    %334 = vmatprep.subr.bf16.mxu0 0
    %335 = vmatpush2.bf16.msra.mxu0 0
    %336 = vmatprep.subr.bf16.mxu0 0
    %337 = vmatpush2.bf16.msra.mxu0 0
    %338 = vmatprep.subr.bf16.mxu0 0
    %339 = vmatpush2.bf16.msra.mxu0 0
    %340 = vmatprep.subr.bf16.mxu0 0
    %341 = vmatpush2.bf16.msra.mxu0 0
    %342 = vmatprep.subr.bf16.mxu0 0
    %343 = vmatpush2.bf16.msra.mxu0 0
    %344 = vmatprep.subr.bf16.mxu0 0
    %345 = vmatpush2.bf16.msra.mxu0 0
    %346 = vmatprep.subr.bf16.mxu0 0
    %347 = vmatpush2.bf16.msra.mxu0 0
    %348 = vmatprep.mubr.bf16.mxu0 0
    %349 = vmatmul.mubr.bf16.gmra.mxu0 %v310
    %v350 = vpop.f32.mrf.mxu0
    %v351 = vadd.f32 %v241, %v350
    %v352 = vpop.f32.mrf.mxu0
    %v353 = vpop.f32.mrf.mxu0
    %v354 = vpop.f32.mrf.mxu0
    %355 = vdwg.mxu0
    %v356 = vmax.f32 %v351, 0.0
    %v357 = vpack.c.bf16 %v356, %v356
    %v358 = vld [vmem:[#allocation8] sm:$0xff]
    %v359 = vld [vmem:[#allocation8 + $0x8] sm:$0xff]
    %v360 = vld [vmem:[#allocation8 + $0x10] sm:$0xff]
    %v361 = vld [vmem:[#allocation8 + $0x18] sm:$0xff]
    %v362 = vld [vmem:[#allocation8 + $0x20] sm:$0xff]
    %v363 = vld [vmem:[#allocation8 + $0x28] sm:$0xff]
    %v364 = vld [vmem:[#allocation8 + $0x30] sm:$0xff]
    %v365 = vld [vmem:[#allocation8 + $0x38] sm:$0xff]
    %v366 = vld [vmem:[#allocation8 + $0x40] sm:$0xff]
    %v367 = vld [vmem:[#allocation8 + $0x48] sm:$0xff]
    %v368 = vld [vmem:[#allocation8 + $0x50] sm:$0xff]
    %v369 = vld [vmem:[#allocation8 + $0x58] sm:$0xff]
    %v370 = vld [vmem:[#allocation8 + $0x60] sm:$0xff]
    %v371 = vld [vmem:[#allocation8 + $0x68] sm:$0xff]
    %v372 = vld [vmem:[#allocation8 + $0x70] sm:$0xff]
    %v373 = vld [vmem:[#allocation8 + $0x78] sm:$0xff]
    %v374 = vld [vmem:[#allocation8 + $0x80] sm:$0xff]
    %v375 = vld [vmem:[#allocation8 + $0x88] sm:$0xff]
    %v376 = vld [vmem:[#allocation8 + $0x90] sm:$0xff]
    %v377 = vld [vmem:[#allocation8 + $0x98] sm:$0xff]
    %v378 = vld [vmem:[#allocation8 + $0xa0] sm:$0xff]
    %v379 = vld [vmem:[#allocation8 + $0xa8] sm:$0xff]
    %v380 = vld [vmem:[#allocation8 + $0xb0] sm:$0xff]
    %v381 = vld [vmem:[#allocation8 + $0xb8] sm:$0xff]
    %v382 = vld [vmem:[#allocation8 + $0xc0] sm:$0xff]
    %v383 = vld [vmem:[#allocation8 + $0xc8] sm:$0xff]
    %v384 = vld [vmem:[#allocation8 + $0xd0] sm:$0xff]
    %v385 = vld [vmem:[#allocation8 + $0xd8] sm:$0xff]
    %v386 = vld [vmem:[#allocation8 + $0xe0] sm:$0xff]
    %v387 = vld [vmem:[#allocation8 + $0xe8] sm:$0xff]
    %v388 = vld [vmem:[#allocation8 + $0xf0] sm:$0xff]
    %v389 = vld [vmem:[#allocation8 + $0xf8] sm:$0xff]
    %v390 = vld [vmem:[#allocation8 + $0x100] sm:$0xff]
    %v391 = vld [vmem:[#allocation8 + $0x108] sm:$0xff]
    %v392 = vld [vmem:[#allocation8 + $0x110] sm:$0xff]
    %v393 = vld [vmem:[#allocation8 + $0x118] sm:$0xff]
    %v394 = vld [vmem:[#allocation8 + $0x120] sm:$0xff]
    %v395 = vld [vmem:[#allocation8 + $0x128] sm:$0xff]
    %v396 = vld [vmem:[#allocation8 + $0x130] sm:$0xff]
    %v397 = vld [vmem:[#allocation8 + $0x138] sm:$0xff]
    %v398 = vld [vmem:[#allocation8 + $0x140] sm:$0xff]
    %v399 = vld [vmem:[#allocation8 + $0x148] sm:$0xff]
    %v400 = vld [vmem:[#allocation8 + $0x150] sm:$0xff]
    %v401 = vld [vmem:[#allocation8 + $0x158] sm:$0xff]
    %v402 = vld [vmem:[#allocation8 + $0x160] sm:$0xff]
    %v403 = vld [vmem:[#allocation8 + $0x168] sm:$0xff]
    %v404 = vld [vmem:[#allocation8 + $0x170] sm:$0xff]
    %v405 = vld [vmem:[#allocation8 + $0x178] sm:$0xff]
    %v406 = vld [vmem:[#allocation8 + $0x180] sm:$0xff]
    %v407 = vld [vmem:[#allocation8 + $0x188] sm:$0xff]
    %v408 = vld [vmem:[#allocation8 + $0x190] sm:$0xff]
    %v409 = vld [vmem:[#allocation8 + $0x198] sm:$0xff]
    %v410 = vld [vmem:[#allocation8 + $0x1a0] sm:$0xff]
    %v411 = vld [vmem:[#allocation8 + $0x1a8] sm:$0xff]
    %v412 = vld [vmem:[#allocation8 + $0x1b0] sm:$0xff]
    %v413 = vld [vmem:[#allocation8 + $0x1b8] sm:$0xff]
    %v414 = vld [vmem:[#allocation8 + $0x1c0] sm:$0xff]
    %v415 = vld [vmem:[#allocation8 + $0x1c8] sm:$0xff]
    %v416 = vld [vmem:[#allocation8 + $0x1d0] sm:$0xff]
    %v417 = vld [vmem:[#allocation8 + $0x1d8] sm:$0xff]
    %v418 = vld [vmem:[#allocation8 + $0x1e0] sm:$0xff]
    %v419 = vld [vmem:[#allocation8 + $0x1e8] sm:$0xff]
    %v420 = vld [vmem:[#allocation8 + $0x1f0] sm:$0xff]
    %v421 = vld [vmem:[#allocation8 + $0x1f8] sm:$0xff]
    %v422 = vld [vmem:[#allocation10] sm:$0xff]
    %v424 = vlaneseq
    %v425 = vshrl.u32 %v424, 7
    %v426 = vsub.s32 0, %v425
    %v427 = vrot.slane %v422, %v426
    %v428 = vlaneseq
    %v429 = vshrl.u32 %v428, 7
    %v430 = vsub.s32 1, %v429
    %v431 = vrot.slane %v422, %v430
    %v432 = vlaneseq
    %v433 = vshrl.u32 %v432, 7
    %v434 = vsub.s32 2, %v433
    %v435 = vrot.slane %v422, %v434
    %v436 = vlaneseq
    %v437 = vshrl.u32 %v436, 7
    %v438 = vsub.s32 3, %v437
    %v439 = vrot.slane %v422, %v438
    %v440 = vlaneseq
    %v441 = vshrl.u32 %v440, 7
    %v442 = vsub.s32 4, %v441
    %v443 = vrot.slane %v422, %v442
    %v444 = vlaneseq
    %v445 = vshrl.u32 %v444, 7
    %v446 = vsub.s32 5, %v445
    %v447 = vrot.slane %v422, %v446
    %v448 = vlaneseq
    %v449 = vshrl.u32 %v448, 7
    %v450 = vsub.s32 6, %v449
    %v451 = vrot.slane %v422, %v450
    %v452 = vlaneseq
    %v453 = vshrl.u32 %v452, 7
    %v454 = vsub.s32 7, %v453
    %v455 = vrot.slane %v422, %v454
    %v528 = vunpack.c.l.b16 %v358
    %v529 = vunpack.c.h.b16 %v358
    %v530 = vunpack.c.l.b16 %v359
    %v531 = vunpack.c.h.b16 %v359
    %v532 = vunpack.c.l.b16 %v360
    %v533 = vunpack.c.h.b16 %v360
    %v534 = vunpack.c.l.b16 %v361
    %v535 = vunpack.c.h.b16 %v361
    %v536 = vunpack.c.l.b16 %v362
    %v537 = vunpack.c.h.b16 %v362
    %v538 = vunpack.c.l.b16 %v363
    %v539 = vunpack.c.h.b16 %v363
    %v540 = vunpack.c.l.b16 %v364
    %v541 = vunpack.c.h.b16 %v364
    %v542 = vunpack.c.l.b16 %v365
    %v543 = vunpack.c.h.b16 %v365
    %v544 = vunpack.c.l.b16 %v366
    %v545 = vunpack.c.h.b16 %v366
    %v546 = vunpack.c.l.b16 %v367
    %v547 = vunpack.c.h.b16 %v367
    %v548 = vunpack.c.l.b16 %v368
    %v549 = vunpack.c.h.b16 %v368
    %v550 = vunpack.c.l.b16 %v369
    %v551 = vunpack.c.h.b16 %v369
    %v552 = vunpack.c.l.b16 %v370
    %v553 = vunpack.c.h.b16 %v370
    %v554 = vunpack.c.l.b16 %v371
    %v555 = vunpack.c.h.b16 %v371
    %v556 = vunpack.c.l.b16 %v372
    %v557 = vunpack.c.h.b16 %v372
    %v558 = vunpack.c.l.b16 %v373
    %v559 = vunpack.c.h.b16 %v373
    %v560 = vunpack.c.l.b16 %v374
    %v561 = vunpack.c.h.b16 %v374
    %v562 = vunpack.c.l.b16 %v375
    %v563 = vunpack.c.h.b16 %v375
    %v564 = vunpack.c.l.b16 %v376
    %v565 = vunpack.c.h.b16 %v376
    %v566 = vunpack.c.l.b16 %v377
    %v567 = vunpack.c.h.b16 %v377
    %v568 = vunpack.c.l.b16 %v378
    %v569 = vunpack.c.h.b16 %v378
    %v570 = vunpack.c.l.b16 %v379
    %v571 = vunpack.c.h.b16 %v379
    %v572 = vunpack.c.l.b16 %v380
    %v573 = vunpack.c.h.b16 %v380
    %v574 = vunpack.c.l.b16 %v381
    %v575 = vunpack.c.h.b16 %v381
    %v576 = vunpack.c.l.b16 %v382
    %v577 = vunpack.c.h.b16 %v382
    %v578 = vunpack.c.l.b16 %v383
    %v579 = vunpack.c.h.b16 %v383
    %v580 = vunpack.c.l.b16 %v384
    %v581 = vunpack.c.h.b16 %v384
    %v582 = vunpack.c.l.b16 %v385
    %v583 = vunpack.c.h.b16 %v385
    %v584 = vunpack.c.l.b16 %v386
    %v585 = vunpack.c.h.b16 %v386
    %v586 = vunpack.c.l.b16 %v387
    %v587 = vunpack.c.h.b16 %v387
    %v588 = vunpack.c.l.b16 %v388
    %v589 = vunpack.c.h.b16 %v388
    %v590 = vunpack.c.l.b16 %v389
    %v591 = vunpack.c.h.b16 %v389
    %v592 = vunpack.c.l.b16 %v390
    %v593 = vunpack.c.h.b16 %v390
    %v594 = vunpack.c.l.b16 %v391
    %v595 = vunpack.c.h.b16 %v391
    %v596 = vunpack.c.l.b16 %v392
    %v597 = vunpack.c.h.b16 %v392
    %v598 = vunpack.c.l.b16 %v393
    %v599 = vunpack.c.h.b16 %v393
    %v600 = vunpack.c.l.b16 %v394
    %v601 = vunpack.c.h.b16 %v394
    %v602 = vunpack.c.l.b16 %v395
    %v603 = vunpack.c.h.b16 %v395
    %v604 = vunpack.c.l.b16 %v396
    %v605 = vunpack.c.h.b16 %v396
    %v606 = vunpack.c.l.b16 %v397
    %v607 = vunpack.c.h.b16 %v397
    %v608 = vunpack.c.l.b16 %v398
    %v609 = vunpack.c.h.b16 %v398
    %v610 = vunpack.c.l.b16 %v399
    %v611 = vunpack.c.h.b16 %v399
    %v612 = vunpack.c.l.b16 %v400
    %v613 = vunpack.c.h.b16 %v400
    %v614 = vunpack.c.l.b16 %v401
    %v615 = vunpack.c.h.b16 %v401
    %v616 = vunpack.c.l.b16 %v402
    %v617 = vunpack.c.h.b16 %v402
    %v618 = vunpack.c.l.b16 %v403
    %v619 = vunpack.c.h.b16 %v403
    %v620 = vunpack.c.l.b16 %v404
    %v621 = vunpack.c.h.b16 %v404
    %v622 = vunpack.c.l.b16 %v405
    %v623 = vunpack.c.h.b16 %v405
    %v624 = vunpack.c.l.b16 %v406
    %v625 = vunpack.c.h.b16 %v406
    %v626 = vunpack.c.l.b16 %v407
    %v627 = vunpack.c.h.b16 %v407
    %v628 = vunpack.c.l.b16 %v408
    %v629 = vunpack.c.h.b16 %v408
    %v630 = vunpack.c.l.b16 %v409
    %v631 = vunpack.c.h.b16 %v409
    %v632 = vunpack.c.l.b16 %v410
    %v633 = vunpack.c.h.b16 %v410
    %v634 = vunpack.c.l.b16 %v411
    %v635 = vunpack.c.h.b16 %v411
    %v636 = vunpack.c.l.b16 %v412
    %v637 = vunpack.c.h.b16 %v412
    %v638 = vunpack.c.l.b16 %v413
    %v639 = vunpack.c.h.b16 %v413
    %v640 = vunpack.c.l.b16 %v414
    %v641 = vunpack.c.h.b16 %v414
    %v642 = vunpack.c.l.b16 %v415
    %v643 = vunpack.c.h.b16 %v415
    %v644 = vunpack.c.l.b16 %v416
    %v645 = vunpack.c.h.b16 %v416
    %v646 = vunpack.c.l.b16 %v417
    %v647 = vunpack.c.h.b16 %v417
    %v648 = vunpack.c.l.b16 %v418
    %v649 = vunpack.c.h.b16 %v418
    %v650 = vunpack.c.l.b16 %v419
    %v651 = vunpack.c.h.b16 %v419
    %v652 = vunpack.c.l.b16 %v420
    %v653 = vunpack.c.h.b16 %v420
    %v654 = vunpack.c.l.b16 %v421
    %v655 = vunpack.c.h.b16 %v421
    %v656 = vpack.c.b16 %v536, %v528
    %v657 = vpack.c.b16 %v537, %v529
    %v658 = vpack.c.b16 %v538, %v530
    %v659 = vpack.c.b16 %v539, %v531
    %v660 = vpack.c.b16 %v540, %v532
    %v661 = vpack.c.b16 %v541, %v533
    %v662 = vpack.c.b16 %v542, %v534
    %v663 = vpack.c.b16 %v543, %v535
    %v664 = vpack.c.b16 %v552, %v544
    %v665 = vpack.c.b16 %v553, %v545
    %v666 = vpack.c.b16 %v554, %v546
    %v667 = vpack.c.b16 %v555, %v547
    %v668 = vpack.c.b16 %v556, %v548
    %v669 = vpack.c.b16 %v557, %v549
    %v670 = vpack.c.b16 %v558, %v550
    %v671 = vpack.c.b16 %v559, %v551
    %v672 = vpack.c.b16 %v568, %v560
    %v673 = vpack.c.b16 %v569, %v561
    %v674 = vpack.c.b16 %v570, %v562
    %v675 = vpack.c.b16 %v571, %v563
    %v676 = vpack.c.b16 %v572, %v564
    %v677 = vpack.c.b16 %v573, %v565
    %v678 = vpack.c.b16 %v574, %v566
    %v679 = vpack.c.b16 %v575, %v567
    %v680 = vpack.c.b16 %v584, %v576
    %v681 = vpack.c.b16 %v585, %v577
    %v682 = vpack.c.b16 %v586, %v578
    %v683 = vpack.c.b16 %v587, %v579
    %v684 = vpack.c.b16 %v588, %v580
    %v685 = vpack.c.b16 %v589, %v581
    %v686 = vpack.c.b16 %v590, %v582
    %v687 = vpack.c.b16 %v591, %v583
    %v688 = vpack.c.b16 %v600, %v592
    %v689 = vpack.c.b16 %v601, %v593
    %v690 = vpack.c.b16 %v602, %v594
    %v691 = vpack.c.b16 %v603, %v595
    %v692 = vpack.c.b16 %v604, %v596
    %v693 = vpack.c.b16 %v605, %v597
    %v694 = vpack.c.b16 %v606, %v598
    %v695 = vpack.c.b16 %v607, %v599
    %v696 = vpack.c.b16 %v616, %v608
    %v697 = vpack.c.b16 %v617, %v609
    %v698 = vpack.c.b16 %v618, %v610
    %v699 = vpack.c.b16 %v619, %v611
    %v700 = vpack.c.b16 %v620, %v612
    %v701 = vpack.c.b16 %v621, %v613
    %v702 = vpack.c.b16 %v622, %v614
    %v703 = vpack.c.b16 %v623, %v615
    %v704 = vpack.c.b16 %v632, %v624
    %v705 = vpack.c.b16 %v633, %v625
    %v706 = vpack.c.b16 %v634, %v626
    %v707 = vpack.c.b16 %v635, %v627
    %v708 = vpack.c.b16 %v636, %v628
    %v709 = vpack.c.b16 %v637, %v629
    %v710 = vpack.c.b16 %v638, %v630
    %v711 = vpack.c.b16 %v639, %v631
    %v712 = vpack.c.b16 %v648, %v640
    %v713 = vpack.c.b16 %v649, %v641
    %v714 = vpack.c.b16 %v650, %v642
    %v715 = vpack.c.b16 %v651, %v643
    %v716 = vpack.c.b16 %v652, %v644
    %v717 = vpack.c.b16 %v653, %v645
    %v718 = vpack.c.b16 %v654, %v646
    %v719 = vpack.c.b16 %v655, %v647
    %784 = vmatprep.subr.bf16.mxu0 %v713
    %785 = vmatpush1.bf16.msra.mxu0 %v712
    %786 = vmatprep.subr.bf16.mxu0 %v705
    %787 = vmatpush1.bf16.msra.mxu0 %v704
    %788 = vmatprep.subr.bf16.mxu0 %v697
    %789 = vmatpush1.bf16.msra.mxu0 %v696
    %790 = vmatprep.subr.bf16.mxu0 %v689
    %791 = vmatpush1.bf16.msra.mxu0 %v688
    %792 = vmatprep.subr.bf16.mxu0 %v681
    %793 = vmatpush1.bf16.msra.mxu0 %v680
    %794 = vmatprep.subr.bf16.mxu0 %v673
    %795 = vmatpush1.bf16.msra.mxu0 %v672
    %796 = vmatprep.subr.bf16.mxu0 %v665
    %797 = vmatpush1.bf16.msra.mxu0 %v664
    %798 = vmatprep.subr.bf16.mxu0 %v657
    %799 = vmatpush1.bf16.msra.mxu0 %v656
    %800 = vmatprep.subr.bf16.mxu0 0
    %801 = vmatpush2.bf16.msra.mxu0 0
    %802 = vmatprep.subr.bf16.mxu0 0
    %803 = vmatpush2.bf16.msra.mxu0 0
    %804 = vmatprep.subr.bf16.mxu0 0
    %805 = vmatpush2.bf16.msra.mxu0 0
    %806 = vmatprep.subr.bf16.mxu0 0
    %807 = vmatpush2.bf16.msra.mxu0 0
    %808 = vmatprep.subr.bf16.mxu0 0
    %809 = vmatpush2.bf16.msra.mxu0 0
    %810 = vmatprep.subr.bf16.mxu0 0
    %811 = vmatpush2.bf16.msra.mxu0 0
    %812 = vmatprep.subr.bf16.mxu0 0
    %813 = vmatpush2.bf16.msra.mxu0 0
    %814 = vmatprep.subr.bf16.mxu0 0
    %815 = vmatpush2.bf16.msra.mxu0 0
    %816 = vmatprep.mubr.bf16.mxu0 0
    %817 = vmatmul.mubr.bf16.gmra.mxu0 %v357
    %v818 = vpop.f32.mrf.mxu0
    %v819 = vadd.f32 %v427, %v818
    %v820 = vpop.f32.mrf.mxu0
    %v821 = vadd.f32 %v431, %v820
    %v822 = vpop.f32.mrf.mxu0
    %v823 = vpop.f32.mrf.mxu0
    %824 = vdwg.mxu0
    %825 = vmatprep.subr.bf16.mxu0 %v715
    %826 = vmatpush1.bf16.msra.mxu0 %v714
    %827 = vmatprep.subr.bf16.mxu0 %v707
    %828 = vmatpush1.bf16.msra.mxu0 %v706
    %829 = vmatprep.subr.bf16.mxu0 %v699
    %830 = vmatpush1.bf16.msra.mxu0 %v698
    %831 = vmatprep.subr.bf16.mxu0 %v691
    %832 = vmatpush1.bf16.msra.mxu0 %v690
    %833 = vmatprep.subr.bf16.mxu0 %v683
    %834 = vmatpush1.bf16.msra.mxu0 %v682
    %835 = vmatprep.subr.bf16.mxu0 %v675
    %836 = vmatpush1.bf16.msra.mxu0 %v674
    %837 = vmatprep.subr.bf16.mxu0 %v667
    %838 = vmatpush1.bf16.msra.mxu0 %v666
    %839 = vmatprep.subr.bf16.mxu0 %v659
    %840 = vmatpush1.bf16.msra.mxu0 %v658
    %841 = vmatprep.subr.bf16.mxu0 0
    %842 = vmatpush2.bf16.msra.mxu0 0
    %843 = vmatprep.subr.bf16.mxu0 0
    %844 = vmatpush2.bf16.msra.mxu0 0
    %845 = vmatprep.subr.bf16.mxu0 0
    %846 = vmatpush2.bf16.msra.mxu0 0
    %847 = vmatprep.subr.bf16.mxu0 0
    %848 = vmatpush2.bf16.msra.mxu0 0
    %849 = vmatprep.subr.bf16.mxu0 0
    %850 = vmatpush2.bf16.msra.mxu0 0
    %851 = vmatprep.subr.bf16.mxu0 0
    %852 = vmatpush2.bf16.msra.mxu0 0
    %853 = vmatprep.subr.bf16.mxu0 0
    %854 = vmatpush2.bf16.msra.mxu0 0
    %855 = vmatprep.subr.bf16.mxu0 0
    %856 = vmatpush2.bf16.msra.mxu0 0
    %857 = vmatprep.mubr.bf16.mxu0 0
    %858 = vmatmul.mubr.bf16.gmra.mxu0 %v357
    %v859 = vpop.f32.mrf.mxu0
    %v860 = vadd.f32 %v435, %v859
    %v861 = vpop.f32.mrf.mxu0
    %v862 = vadd.f32 %v439, %v861
    %v863 = vpop.f32.mrf.mxu0
    %v864 = vpop.f32.mrf.mxu0
    %865 = vdwg.mxu0
    %866 = vmatprep.subr.bf16.mxu0 %v717
    %867 = vmatpush1.bf16.msra.mxu0 %v716
    %868 = vmatprep.subr.bf16.mxu0 %v709
    %869 = vmatpush1.bf16.msra.mxu0 %v708
    %870 = vmatprep.subr.bf16.mxu0 %v701
    %871 = vmatpush1.bf16.msra.mxu0 %v700
    %872 = vmatprep.subr.bf16.mxu0 %v693
    %873 = vmatpush1.bf16.msra.mxu0 %v692
    %874 = vmatprep.subr.bf16.mxu0 %v685
    %875 = vmatpush1.bf16.msra.mxu0 %v684
    %876 = vmatprep.subr.bf16.mxu0 %v677
    %877 = vmatpush1.bf16.msra.mxu0 %v676
    %878 = vmatprep.subr.bf16.mxu0 %v669
    %879 = vmatpush1.bf16.msra.mxu0 %v668
    %880 = vmatprep.subr.bf16.mxu0 %v661
    %881 = vmatpush1.bf16.msra.mxu0 %v660
    %882 = vmatprep.subr.bf16.mxu0 0
    %883 = vmatpush2.bf16.msra.mxu0 0
    %884 = vmatprep.subr.bf16.mxu0 0
    %885 = vmatpush2.bf16.msra.mxu0 0
    %886 = vmatprep.subr.bf16.mxu0 0
    %887 = vmatpush2.bf16.msra.mxu0 0
    %888 = vmatprep.subr.bf16.mxu0 0
    %889 = vmatpush2.bf16.msra.mxu0 0
    %890 = vmatprep.subr.bf16.mxu0 0
    %891 = vmatpush2.bf16.msra.mxu0 0
    %892 = vmatprep.subr.bf16.mxu0 0
    %893 = vmatpush2.bf16.msra.mxu0 0
    %894 = vmatprep.subr.bf16.mxu0 0
    %895 = vmatpush2.bf16.msra.mxu0 0
    %896 = vmatprep.subr.bf16.mxu0 0
    %897 = vmatpush2.bf16.msra.mxu0 0
    %898 = vmatprep.mubr.bf16.mxu0 0
    %899 = vmatmul.mubr.bf16.gmra.mxu0 %v357
    %v900 = vpop.f32.mrf.mxu0
    %v901 = vadd.f32 %v443, %v900
    %v902 = vpop.f32.mrf.mxu0
    %v903 = vadd.f32 %v447, %v902
    %v904 = vpop.f32.mrf.mxu0
    %v905 = vpop.f32.mrf.mxu0
    %906 = vdwg.mxu0
    %907 = vmatprep.subr.bf16.mxu0 %v719
    %908 = vmatpush1.bf16.msra.mxu0 %v718
    %909 = vmatprep.subr.bf16.mxu0 %v711
    %910 = vmatpush1.bf16.msra.mxu0 %v710
    %911 = vmatprep.subr.bf16.mxu0 %v703
    %912 = vmatpush1.bf16.msra.mxu0 %v702
    %913 = vmatprep.subr.bf16.mxu0 %v695
    %914 = vmatpush1.bf16.msra.mxu0 %v694
    %915 = vmatprep.subr.bf16.mxu0 %v687
    %916 = vmatpush1.bf16.msra.mxu0 %v686
    %917 = vmatprep.subr.bf16.mxu0 %v679
    %918 = vmatpush1.bf16.msra.mxu0 %v678
    %919 = vmatprep.subr.bf16.mxu0 %v671
    %920 = vmatpush1.bf16.msra.mxu0 %v670
    %921 = vmatprep.subr.bf16.mxu0 %v663
    %922 = vmatpush1.bf16.msra.mxu0 %v662
    %923 = vmatprep.subr.bf16.mxu0 0
    %924 = vmatpush2.bf16.msra.mxu0 0
    %925 = vmatprep.subr.bf16.mxu0 0
    %926 = vmatpush2.bf16.msra.mxu0 0
    %927 = vmatprep.subr.bf16.mxu0 0
    %928 = vmatpush2.bf16.msra.mxu0 0
    %929 = vmatprep.subr.bf16.mxu0 0
    %930 = vmatpush2.bf16.msra.mxu0 0
    %931 = vmatprep.subr.bf16.mxu0 0
    %932 = vmatpush2.bf16.msra.mxu0 0
    %933 = vmatprep.subr.bf16.mxu0 0
    %934 = vmatpush2.bf16.msra.mxu0 0
    %935 = vmatprep.subr.bf16.mxu0 0
    %936 = vmatpush2.bf16.msra.mxu0 0
    %937 = vmatprep.subr.bf16.mxu0 0
    %938 = vmatpush2.bf16.msra.mxu0 0
    %939 = vmatprep.mubr.bf16.mxu0 0
    %940 = vmatmul.mubr.bf16.gmra.mxu0 %v357
    %v941 = vpop.f32.mrf.mxu0
    %v942 = vadd.f32 %v451, %v941
    %v943 = vpop.f32.mrf.mxu0
    %v944 = vadd.f32 %v455, %v943
    %v945 = vpop.f32.mrf.mxu0
    %v946 = vpop.f32.mrf.mxu0
    %947 = vdwg.mxu0
    %v948 = vmax.f32 %v819, 0.0
    %v949 = vmax.f32 %v821, 0.0
    %v950 = vmax.f32 %v860, 0.0
    %v951 = vmax.f32 %v862, 0.0
    %v952 = vmax.f32 %v901, 0.0
    %v953 = vmax.f32 %v903, 0.0
    %v954 = vmax.f32 %v942, 0.0
    %v955 = vmax.f32 %v944, 0.0
    %v956 = vpack.c.bf16 %v948, %v948
    %v957 = vpack.c.bf16 %v949, %v949
    %v958 = vpack.c.bf16 %v950, %v950
    %v959 = vpack.c.bf16 %v951, %v951
    %v960 = vpack.c.bf16 %v952, %v952
    %v961 = vpack.c.bf16 %v953, %v953
    %v962 = vpack.c.bf16 %v954, %v954
    %v963 = vpack.c.bf16 %v955, %v955
    %v964 = vld [vmem:[#allocation11] sm:$0xff]
    %v965 = vld [vmem:[#allocation11 + $0x8] sm:$0xff]
    %v966 = vld [vmem:[#allocation11 + $0x10] sm:$0xff]
    %v967 = vld [vmem:[#allocation11 + $0x18] sm:$0xff]
    %v968 = vld [vmem:[#allocation11 + $0x20] sm:$0xff]
    %v969 = vld [vmem:[#allocation11 + $0x28] sm:$0xff]
    %v970 = vld [vmem:[#allocation11 + $0x30] sm:$0xff]
    %v971 = vld [vmem:[#allocation11 + $0x38] sm:$0xff]
    %v972 = vld [vmem:[#allocation11 + $0x40] sm:$0xff]
    %v973 = vld [vmem:[#allocation11 + $0x48] sm:$0xff]
    %v974 = vld [vmem:[#allocation11 + $0x50] sm:$0xff]
    %v975 = vld [vmem:[#allocation11 + $0x58] sm:$0xff]
    %v976 = vld [vmem:[#allocation11 + $0x60] sm:$0xff]
    %v977 = vld [vmem:[#allocation11 + $0x68] sm:$0xff]
    %v978 = vld [vmem:[#allocation11 + $0x70] sm:$0xff]
    %v979 = vld [vmem:[#allocation11 + $0x78] sm:$0xff]
    %v980 = vld [vmem:[#allocation11 + $0x80] sm:$0xff]
    %v981 = vld [vmem:[#allocation11 + $0x88] sm:$0xff]
    %v982 = vld [vmem:[#allocation11 + $0x90] sm:$0xff]
    %v983 = vld [vmem:[#allocation11 + $0x98] sm:$0xff]
    %v984 = vld [vmem:[#allocation11 + $0xa0] sm:$0xff]
    %v985 = vld [vmem:[#allocation11 + $0xa8] sm:$0xff]
    %v986 = vld [vmem:[#allocation11 + $0xb0] sm:$0xff]
    %v987 = vld [vmem:[#allocation11 + $0xb8] sm:$0xff]
    %v988 = vld [vmem:[#allocation11 + $0xc0] sm:$0xff]
    %v989 = vld [vmem:[#allocation11 + $0xc8] sm:$0xff]
    %v990 = vld [vmem:[#allocation11 + $0xd0] sm:$0xff]
    %v991 = vld [vmem:[#allocation11 + $0xd8] sm:$0xff]
    %v992 = vld [vmem:[#allocation11 + $0xe0] sm:$0xff]
    %v993 = vld [vmem:[#allocation11 + $0xe8] sm:$0xff]
    %v994 = vld [vmem:[#allocation11 + $0xf0] sm:$0xff]
    %v995 = vld [vmem:[#allocation11 + $0xf8] sm:$0xff]
    %v996 = vld [vmem:[#allocation11 + $0x100] sm:$0xff]
    %v997 = vld [vmem:[#allocation11 + $0x108] sm:$0xff]
    %v998 = vld [vmem:[#allocation11 + $0x110] sm:$0xff]
    %v999 = vld [vmem:[#allocation11 + $0x118] sm:$0xff]
    %v1000 = vld [vmem:[#allocation11 + $0x120] sm:$0xff]
    %v1001 = vld [vmem:[#allocation11 + $0x128] sm:$0xff]
    %v1002 = vld [vmem:[#allocation11 + $0x130] sm:$0xff]
    %v1003 = vld [vmem:[#allocation11 + $0x138] sm:$0xff]
    %v1004 = vld [vmem:[#allocation11 + $0x140] sm:$0xff]
    %v1005 = vld [vmem:[#allocation11 + $0x148] sm:$0xff]
    %v1006 = vld [vmem:[#allocation11 + $0x150] sm:$0xff]
    %v1007 = vld [vmem:[#allocation11 + $0x158] sm:$0xff]
    %v1008 = vld [vmem:[#allocation11 + $0x160] sm:$0xff]
    %v1009 = vld [vmem:[#allocation11 + $0x168] sm:$0xff]
    %v1010 = vld [vmem:[#allocation11 + $0x170] sm:$0xff]
    %v1011 = vld [vmem:[#allocation11 + $0x178] sm:$0xff]
    %v1012 = vld [vmem:[#allocation11 + $0x180] sm:$0xff]
    %v1013 = vld [vmem:[#allocation11 + $0x188] sm:$0xff]
    %v1014 = vld [vmem:[#allocation11 + $0x190] sm:$0xff]
    %v1015 = vld [vmem:[#allocation11 + $0x198] sm:$0xff]
    %v1016 = vld [vmem:[#allocation11 + $0x1a0] sm:$0xff]
    %v1017 = vld [vmem:[#allocation11 + $0x1a8] sm:$0xff]
    %v1018 = vld [vmem:[#allocation11 + $0x1b0] sm:$0xff]
    %v1019 = vld [vmem:[#allocation11 + $0x1b8] sm:$0xff]
    %v1020 = vld [vmem:[#allocation11 + $0x1c0] sm:$0xff]
    %v1021 = vld [vmem:[#allocation11 + $0x1c8] sm:$0xff]
    %v1022 = vld [vmem:[#allocation11 + $0x1d0] sm:$0xff]
    %v1023 = vld [vmem:[#allocation11 + $0x1d8] sm:$0xff]
    %v1024 = vld [vmem:[#allocation11 + $0x1e0] sm:$0xff]
    %v1025 = vld [vmem:[#allocation11 + $0x1e8] sm:$0xff]
    %v1026 = vld [vmem:[#allocation11 + $0x1f0] sm:$0xff]
    %v1027 = vld [vmem:[#allocation11 + $0x1f8] sm:$0xff]
    %v1028 = vld [vmem:[#allocation11 + $0x200] sm:$0xff]
    %v1029 = vld [vmem:[#allocation11 + $0x208] sm:$0xff]
    %v1030 = vld [vmem:[#allocation11 + $0x210] sm:$0xff]
    %v1031 = vld [vmem:[#allocation11 + $0x218] sm:$0xff]
    %v1032 = vld [vmem:[#allocation11 + $0x220] sm:$0xff]
    %v1033 = vld [vmem:[#allocation11 + $0x228] sm:$0xff]
    %v1034 = vld [vmem:[#allocation11 + $0x230] sm:$0xff]
    %v1035 = vld [vmem:[#allocation11 + $0x238] sm:$0xff]
    %v1036 = vld [vmem:[#allocation11 + $0x240] sm:$0xff]
    %v1037 = vld [vmem:[#allocation11 + $0x248] sm:$0xff]
    %v1038 = vld [vmem:[#allocation11 + $0x250] sm:$0xff]
    %v1039 = vld [vmem:[#allocation11 + $0x258] sm:$0xff]
    %v1040 = vld [vmem:[#allocation11 + $0x260] sm:$0xff]
    %v1041 = vld [vmem:[#allocation11 + $0x268] sm:$0xff]
    %v1042 = vld [vmem:[#allocation11 + $0x270] sm:$0xff]
    %v1043 = vld [vmem:[#allocation11 + $0x278] sm:$0xff]
    %v1044 = vld [vmem:[#allocation11 + $0x280] sm:$0xff]
    %v1045 = vld [vmem:[#allocation11 + $0x288] sm:$0xff]
    %v1046 = vld [vmem:[#allocation11 + $0x290] sm:$0xff]
    %v1047 = vld [vmem:[#allocation11 + $0x298] sm:$0xff]
    %v1048 = vld [vmem:[#allocation11 + $0x2a0] sm:$0xff]
    %v1049 = vld [vmem:[#allocation11 + $0x2a8] sm:$0xff]
    %v1050 = vld [vmem:[#allocation11 + $0x2b0] sm:$0xff]
    %v1051 = vld [vmem:[#allocation11 + $0x2b8] sm:$0xff]
    %v1052 = vld [vmem:[#allocation11 + $0x2c0] sm:$0xff]
    %v1053 = vld [vmem:[#allocation11 + $0x2c8] sm:$0xff]
    %v1054 = vld [vmem:[#allocation11 + $0x2d0] sm:$0xff]
    %v1055 = vld [vmem:[#allocation11 + $0x2d8] sm:$0xff]
    %v1056 = vld [vmem:[#allocation11 + $0x2e0] sm:$0xff]
    %v1057 = vld [vmem:[#allocation11 + $0x2e8] sm:$0xff]
    %v1058 = vld [vmem:[#allocation11 + $0x2f0] sm:$0xff]
    %v1059 = vld [vmem:[#allocation11 + $0x2f8] sm:$0xff]
    %v1060 = vld [vmem:[#allocation11 + $0x300] sm:$0xff]
    %v1061 = vld [vmem:[#allocation11 + $0x308] sm:$0xff]
    %v1062 = vld [vmem:[#allocation11 + $0x310] sm:$0xff]
    %v1063 = vld [vmem:[#allocation11 + $0x318] sm:$0xff]
    %v1064 = vld [vmem:[#allocation11 + $0x320] sm:$0xff]
    %v1065 = vld [vmem:[#allocation11 + $0x328] sm:$0xff]
    %v1066 = vld [vmem:[#allocation11 + $0x330] sm:$0xff]
    %v1067 = vld [vmem:[#allocation11 + $0x338] sm:$0xff]
    %v1068 = vld [vmem:[#allocation11 + $0x340] sm:$0xff]
    %v1069 = vld [vmem:[#allocation11 + $0x348] sm:$0xff]
    %v1070 = vld [vmem:[#allocation11 + $0x350] sm:$0xff]
    %v1071 = vld [vmem:[#allocation11 + $0x358] sm:$0xff]
    %v1072 = vld [vmem:[#allocation11 + $0x360] sm:$0xff]
    %v1073 = vld [vmem:[#allocation11 + $0x368] sm:$0xff]
    %v1074 = vld [vmem:[#allocation11 + $0x370] sm:$0xff]
    %v1075 = vld [vmem:[#allocation11 + $0x378] sm:$0xff]
    %v1076 = vld [vmem:[#allocation11 + $0x380] sm:$0xff]
    %v1077 = vld [vmem:[#allocation11 + $0x388] sm:$0xff]
    %v1078 = vld [vmem:[#allocation11 + $0x390] sm:$0xff]
    %v1079 = vld [vmem:[#allocation11 + $0x398] sm:$0xff]
    %v1080 = vld [vmem:[#allocation11 + $0x3a0] sm:$0xff]
    %v1081 = vld [vmem:[#allocation11 + $0x3a8] sm:$0xff]
    %v1082 = vld [vmem:[#allocation11 + $0x3b0] sm:$0xff]
    %v1083 = vld [vmem:[#allocation11 + $0x3b8] sm:$0xff]
    %v1084 = vld [vmem:[#allocation11 + $0x3c0] sm:$0xff]
    %v1085 = vld [vmem:[#allocation11 + $0x3c8] sm:$0xff]
    %v1086 = vld [vmem:[#allocation11 + $0x3d0] sm:$0xff]
    %v1087 = vld [vmem:[#allocation11 + $0x3d8] sm:$0xff]
    %v1088 = vld [vmem:[#allocation11 + $0x3e0] sm:$0xff]
    %v1089 = vld [vmem:[#allocation11 + $0x3e8] sm:$0xff]
    %v1090 = vld [vmem:[#allocation11 + $0x3f0] sm:$0xff]
    %v1091 = vld [vmem:[#allocation11 + $0x3f8] sm:$0xff]
    %v1092 = vld [vmem:[#allocation11 + $0x400] sm:$0xff]
    %v1093 = vld [vmem:[#allocation11 + $0x408] sm:$0xff]
    %v1094 = vld [vmem:[#allocation11 + $0x410] sm:$0xff]
    %v1095 = vld [vmem:[#allocation11 + $0x418] sm:$0xff]
    %v1096 = vld [vmem:[#allocation11 + $0x420] sm:$0xff]
    %v1097 = vld [vmem:[#allocation11 + $0x428] sm:$0xff]
    %v1098 = vld [vmem:[#allocation11 + $0x430] sm:$0xff]
    %v1099 = vld [vmem:[#allocation11 + $0x438] sm:$0xff]
    %v1100 = vld [vmem:[#allocation11 + $0x440] sm:$0xff]
    %v1101 = vld [vmem:[#allocation11 + $0x448] sm:$0xff]
    %v1102 = vld [vmem:[#allocation11 + $0x450] sm:$0xff]
    %v1103 = vld [vmem:[#allocation11 + $0x458] sm:$0xff]
    %v1104 = vld [vmem:[#allocation11 + $0x460] sm:$0xff]
    %v1105 = vld [vmem:[#allocation11 + $0x468] sm:$0xff]
    %v1106 = vld [vmem:[#allocation11 + $0x470] sm:$0xff]
    %v1107 = vld [vmem:[#allocation11 + $0x478] sm:$0xff]
    %v1108 = vld [vmem:[#allocation11 + $0x480] sm:$0xff]
    %v1109 = vld [vmem:[#allocation11 + $0x488] sm:$0xff]
    %v1110 = vld [vmem:[#allocation11 + $0x490] sm:$0xff]
    %v1111 = vld [vmem:[#allocation11 + $0x498] sm:$0xff]
    %v1112 = vld [vmem:[#allocation11 + $0x4a0] sm:$0xff]
    %v1113 = vld [vmem:[#allocation11 + $0x4a8] sm:$0xff]
    %v1114 = vld [vmem:[#allocation11 + $0x4b0] sm:$0xff]
    %v1115 = vld [vmem:[#allocation11 + $0x4b8] sm:$0xff]
    %v1116 = vld [vmem:[#allocation11 + $0x4c0] sm:$0xff]
    %v1117 = vld [vmem:[#allocation11 + $0x4c8] sm:$0xff]
    %v1118 = vld [vmem:[#allocation11 + $0x4d0] sm:$0xff]
    %v1119 = vld [vmem:[#allocation11 + $0x4d8] sm:$0xff]
    %v1120 = vld [vmem:[#allocation11 + $0x4e0] sm:$0xff]
    %v1121 = vld [vmem:[#allocation11 + $0x4e8] sm:$0xff]
    %v1122 = vld [vmem:[#allocation11 + $0x4f0] sm:$0xff]
    %v1123 = vld [vmem:[#allocation11 + $0x4f8] sm:$0xff]
    %v1124 = vld [vmem:[#allocation11 + $0x500] sm:$0xff]
    %v1125 = vld [vmem:[#allocation11 + $0x508] sm:$0xff]
    %v1126 = vld [vmem:[#allocation11 + $0x510] sm:$0xff]
    %v1127 = vld [vmem:[#allocation11 + $0x518] sm:$0xff]
    %v1128 = vld [vmem:[#allocation11 + $0x520] sm:$0xff]
    %v1129 = vld [vmem:[#allocation11 + $0x528] sm:$0xff]
    %v1130 = vld [vmem:[#allocation11 + $0x530] sm:$0xff]
    %v1131 = vld [vmem:[#allocation11 + $0x538] sm:$0xff]
    %v1132 = vld [vmem:[#allocation11 + $0x540] sm:$0xff]
    %v1133 = vld [vmem:[#allocation11 + $0x548] sm:$0xff]
    %v1134 = vld [vmem:[#allocation11 + $0x550] sm:$0xff]
    %v1135 = vld [vmem:[#allocation11 + $0x558] sm:$0xff]
    %v1136 = vld [vmem:[#allocation11 + $0x560] sm:$0xff]
    %v1137 = vld [vmem:[#allocation11 + $0x568] sm:$0xff]
    %v1138 = vld [vmem:[#allocation11 + $0x570] sm:$0xff]
    %v1139 = vld [vmem:[#allocation11 + $0x578] sm:$0xff]
    %v1140 = vld [vmem:[#allocation11 + $0x580] sm:$0xff]
    %v1141 = vld [vmem:[#allocation11 + $0x588] sm:$0xff]
    %v1142 = vld [vmem:[#allocation11 + $0x590] sm:$0xff]
    %v1143 = vld [vmem:[#allocation11 + $0x598] sm:$0xff]
    %v1144 = vld [vmem:[#allocation11 + $0x5a0] sm:$0xff]
    %v1145 = vld [vmem:[#allocation11 + $0x5a8] sm:$0xff]
    %v1146 = vld [vmem:[#allocation11 + $0x5b0] sm:$0xff]
    %v1147 = vld [vmem:[#allocation11 + $0x5b8] sm:$0xff]
    %v1148 = vld [vmem:[#allocation11 + $0x5c0] sm:$0xff]
    %v1149 = vld [vmem:[#allocation11 + $0x5c8] sm:$0xff]
    %v1150 = vld [vmem:[#allocation11 + $0x5d0] sm:$0xff]
    %v1151 = vld [vmem:[#allocation11 + $0x5d8] sm:$0xff]
    %v1152 = vld [vmem:[#allocation11 + $0x5e0] sm:$0xff]
    %v1153 = vld [vmem:[#allocation11 + $0x5e8] sm:$0xff]
    %v1154 = vld [vmem:[#allocation11 + $0x5f0] sm:$0xff]
    %v1155 = vld [vmem:[#allocation11 + $0x5f8] sm:$0xff]
    %v1156 = vld [vmem:[#allocation11 + $0x600] sm:$0xff]
    %v1157 = vld [vmem:[#allocation11 + $0x608] sm:$0xff]
    %v1158 = vld [vmem:[#allocation11 + $0x610] sm:$0xff]
    %v1159 = vld [vmem:[#allocation11 + $0x618] sm:$0xff]
    %v1160 = vld [vmem:[#allocation11 + $0x620] sm:$0xff]
    %v1161 = vld [vmem:[#allocation11 + $0x628] sm:$0xff]
    %v1162 = vld [vmem:[#allocation11 + $0x630] sm:$0xff]
    %v1163 = vld [vmem:[#allocation11 + $0x638] sm:$0xff]
    %v1164 = vld [vmem:[#allocation11 + $0x640] sm:$0xff]
    %v1165 = vld [vmem:[#allocation11 + $0x648] sm:$0xff]
    %v1166 = vld [vmem:[#allocation11 + $0x650] sm:$0xff]
    %v1167 = vld [vmem:[#allocation11 + $0x658] sm:$0xff]
    %v1168 = vld [vmem:[#allocation11 + $0x660] sm:$0xff]
    %v1169 = vld [vmem:[#allocation11 + $0x668] sm:$0xff]
    %v1170 = vld [vmem:[#allocation11 + $0x670] sm:$0xff]
    %v1171 = vld [vmem:[#allocation11 + $0x678] sm:$0xff]
    %v1172 = vld [vmem:[#allocation11 + $0x680] sm:$0xff]
    %v1173 = vld [vmem:[#allocation11 + $0x688] sm:$0xff]
    %v1174 = vld [vmem:[#allocation11 + $0x690] sm:$0xff]
    %v1175 = vld [vmem:[#allocation11 + $0x698] sm:$0xff]
    %v1176 = vld [vmem:[#allocation11 + $0x6a0] sm:$0xff]
    %v1177 = vld [vmem:[#allocation11 + $0x6a8] sm:$0xff]
    %v1178 = vld [vmem:[#allocation11 + $0x6b0] sm:$0xff]
    %v1179 = vld [vmem:[#allocation11 + $0x6b8] sm:$0xff]
    %v1180 = vld [vmem:[#allocation11 + $0x6c0] sm:$0xff]
    %v1181 = vld [vmem:[#allocation11 + $0x6c8] sm:$0xff]
    %v1182 = vld [vmem:[#allocation11 + $0x6d0] sm:$0xff]
    %v1183 = vld [vmem:[#allocation11 + $0x6d8] sm:$0xff]
    %v1184 = vld [vmem:[#allocation11 + $0x6e0] sm:$0xff]
    %v1185 = vld [vmem:[#allocation11 + $0x6e8] sm:$0xff]
    %v1186 = vld [vmem:[#allocation11 + $0x6f0] sm:$0xff]
    %v1187 = vld [vmem:[#allocation11 + $0x6f8] sm:$0xff]
    %v1188 = vld [vmem:[#allocation11 + $0x700] sm:$0xff]
    %v1189 = vld [vmem:[#allocation11 + $0x708] sm:$0xff]
    %v1190 = vld [vmem:[#allocation11 + $0x710] sm:$0xff]
    %v1191 = vld [vmem:[#allocation11 + $0x718] sm:$0xff]
    %v1192 = vld [vmem:[#allocation11 + $0x720] sm:$0xff]
    %v1193 = vld [vmem:[#allocation11 + $0x728] sm:$0xff]
    %v1194 = vld [vmem:[#allocation11 + $0x730] sm:$0xff]
    %v1195 = vld [vmem:[#allocation11 + $0x738] sm:$0xff]
    %v1196 = vld [vmem:[#allocation11 + $0x740] sm:$0xff]
    %v1197 = vld [vmem:[#allocation11 + $0x748] sm:$0xff]
    %v1198 = vld [vmem:[#allocation11 + $0x750] sm:$0xff]
    %v1199 = vld [vmem:[#allocation11 + $0x758] sm:$0xff]
    %v1200 = vld [vmem:[#allocation11 + $0x760] sm:$0xff]
    %v1201 = vld [vmem:[#allocation11 + $0x768] sm:$0xff]
    %v1202 = vld [vmem:[#allocation11 + $0x770] sm:$0xff]
    %v1203 = vld [vmem:[#allocation11 + $0x778] sm:$0xff]
    %v1204 = vld [vmem:[#allocation11 + $0x780] sm:$0xff]
    %v1205 = vld [vmem:[#allocation11 + $0x788] sm:$0xff]
    %v1206 = vld [vmem:[#allocation11 + $0x790] sm:$0xff]
    %v1207 = vld [vmem:[#allocation11 + $0x798] sm:$0xff]
    %v1208 = vld [vmem:[#allocation11 + $0x7a0] sm:$0xff]
    %v1209 = vld [vmem:[#allocation11 + $0x7a8] sm:$0xff]
    %v1210 = vld [vmem:[#allocation11 + $0x7b0] sm:$0xff]
    %v1211 = vld [vmem:[#allocation11 + $0x7b8] sm:$0xff]
    %v1212 = vld [vmem:[#allocation11 + $0x7c0] sm:$0xff]
    %v1213 = vld [vmem:[#allocation11 + $0x7c8] sm:$0xff]
    %v1214 = vld [vmem:[#allocation11 + $0x7d0] sm:$0xff]
    %v1215 = vld [vmem:[#allocation11 + $0x7d8] sm:$0xff]
    %v1216 = vld [vmem:[#allocation11 + $0x7e0] sm:$0xff]
    %v1217 = vld [vmem:[#allocation11 + $0x7e8] sm:$0xff]
    %v1218 = vld [vmem:[#allocation11 + $0x7f0] sm:$0xff]
    %v1219 = vld [vmem:[#allocation11 + $0x7f8] sm:$0xff]
    %v1220 = vld [vmem:[#allocation11 + $0x800] sm:$0xff]
    %v1221 = vld [vmem:[#allocation11 + $0x808] sm:$0xff]
    %v1222 = vld [vmem:[#allocation11 + $0x810] sm:$0xff]
    %v1223 = vld [vmem:[#allocation11 + $0x818] sm:$0xff]
    %v1224 = vld [vmem:[#allocation11 + $0x820] sm:$0xff]
    %v1225 = vld [vmem:[#allocation11 + $0x828] sm:$0xff]
    %v1226 = vld [vmem:[#allocation11 + $0x830] sm:$0xff]
    %v1227 = vld [vmem:[#allocation11 + $0x838] sm:$0xff]
    %v1228 = vld [vmem:[#allocation11 + $0x840] sm:$0xff]
    %v1229 = vld [vmem:[#allocation11 + $0x848] sm:$0xff]
    %v1230 = vld [vmem:[#allocation11 + $0x850] sm:$0xff]
    %v1231 = vld [vmem:[#allocation11 + $0x858] sm:$0xff]
    %v1232 = vld [vmem:[#allocation11 + $0x860] sm:$0xff]
    %v1233 = vld [vmem:[#allocation11 + $0x868] sm:$0xff]
    %v1234 = vld [vmem:[#allocation11 + $0x870] sm:$0xff]
    %v1235 = vld [vmem:[#allocation11 + $0x878] sm:$0xff]
    %v1236 = vld [vmem:[#allocation11 + $0x880] sm:$0xff]
    %v1237 = vld [vmem:[#allocation11 + $0x888] sm:$0xff]
    %v1238 = vld [vmem:[#allocation11 + $0x890] sm:$0xff]
    %v1239 = vld [vmem:[#allocation11 + $0x898] sm:$0xff]
    %v1240 = vld [vmem:[#allocation11 + $0x8a0] sm:$0xff]
    %v1241 = vld [vmem:[#allocation11 + $0x8a8] sm:$0xff]
    %v1242 = vld [vmem:[#allocation11 + $0x8b0] sm:$0xff]
    %v1243 = vld [vmem:[#allocation11 + $0x8b8] sm:$0xff]
    %v1244 = vld [vmem:[#allocation11 + $0x8c0] sm:$0xff]
    %v1245 = vld [vmem:[#allocation11 + $0x8c8] sm:$0xff]
    %v1246 = vld [vmem:[#allocation11 + $0x8d0] sm:$0xff]
    %v1247 = vld [vmem:[#allocation11 + $0x8d8] sm:$0xff]
    %v1248 = vld [vmem:[#allocation11 + $0x8e0] sm:$0xff]
    %v1249 = vld [vmem:[#allocation11 + $0x8e8] sm:$0xff]
    %v1250 = vld [vmem:[#allocation11 + $0x8f0] sm:$0xff]
    %v1251 = vld [vmem:[#allocation11 + $0x8f8] sm:$0xff]
    %v1252 = vld [vmem:[#allocation11 + $0x900] sm:$0xff]
    %v1253 = vld [vmem:[#allocation11 + $0x908] sm:$0xff]
    %v1254 = vld [vmem:[#allocation11 + $0x910] sm:$0xff]
    %v1255 = vld [vmem:[#allocation11 + $0x918] sm:$0xff]
    %v1256 = vld [vmem:[#allocation11 + $0x920] sm:$0xff]
    %v1257 = vld [vmem:[#allocation11 + $0x928] sm:$0xff]
    %v1258 = vld [vmem:[#allocation11 + $0x930] sm:$0xff]
    %v1259 = vld [vmem:[#allocation11 + $0x938] sm:$0xff]
    %v1260 = vld [vmem:[#allocation11 + $0x940] sm:$0xff]
    %v1261 = vld [vmem:[#allocation11 + $0x948] sm:$0xff]
    %v1262 = vld [vmem:[#allocation11 + $0x950] sm:$0xff]
    %v1263 = vld [vmem:[#allocation11 + $0x958] sm:$0xff]
    %v1264 = vld [vmem:[#allocation11 + $0x960] sm:$0xff]
    %v1265 = vld [vmem:[#allocation11 + $0x968] sm:$0xff]
    %v1266 = vld [vmem:[#allocation11 + $0x970] sm:$0xff]
    %v1267 = vld [vmem:[#allocation11 + $0x978] sm:$0xff]
    %v1268 = vld [vmem:[#allocation11 + $0x980] sm:$0xff]
    %v1269 = vld [vmem:[#allocation11 + $0x988] sm:$0xff]
    %v1270 = vld [vmem:[#allocation11 + $0x990] sm:$0xff]
    %v1271 = vld [vmem:[#allocation11 + $0x998] sm:$0xff]
    %v1272 = vld [vmem:[#allocation11 + $0x9a0] sm:$0xff]
    %v1273 = vld [vmem:[#allocation11 + $0x9a8] sm:$0xff]
    %v1274 = vld [vmem:[#allocation11 + $0x9b0] sm:$0xff]
    %v1275 = vld [vmem:[#allocation11 + $0x9b8] sm:$0xff]
    %v1276 = vld [vmem:[#allocation11 + $0x9c0] sm:$0xff]
    %v1277 = vld [vmem:[#allocation11 + $0x9c8] sm:$0xff]
    %v1278 = vld [vmem:[#allocation11 + $0x9d0] sm:$0xff]
    %v1279 = vld [vmem:[#allocation11 + $0x9d8] sm:$0xff]
    %v1280 = vld [vmem:[#allocation11 + $0x9e0] sm:$0xff]
    %v1281 = vld [vmem:[#allocation11 + $0x9e8] sm:$0xff]
    %v1282 = vld [vmem:[#allocation11 + $0x9f0] sm:$0xff]
    %v1283 = vld [vmem:[#allocation11 + $0x9f8] sm:$0xff]
    %v1284 = vld [vmem:[#allocation11 + $0xa00] sm:$0xff]
    %v1285 = vld [vmem:[#allocation11 + $0xa08] sm:$0xff]
    %v1286 = vld [vmem:[#allocation11 + $0xa10] sm:$0xff]
    %v1287 = vld [vmem:[#allocation11 + $0xa18] sm:$0xff]
    %v1288 = vld [vmem:[#allocation11 + $0xa20] sm:$0xff]
    %v1289 = vld [vmem:[#allocation11 + $0xa28] sm:$0xff]
    %v1290 = vld [vmem:[#allocation11 + $0xa30] sm:$0xff]
    %v1291 = vld [vmem:[#allocation11 + $0xa38] sm:$0xff]
    %v1292 = vld [vmem:[#allocation11 + $0xa40] sm:$0xff]
    %v1293 = vld [vmem:[#allocation11 + $0xa48] sm:$0xff]
    %v1294 = vld [vmem:[#allocation11 + $0xa50] sm:$0xff]
    %v1295 = vld [vmem:[#allocation11 + $0xa58] sm:$0xff]
    %v1296 = vld [vmem:[#allocation11 + $0xa60] sm:$0xff]
    %v1297 = vld [vmem:[#allocation11 + $0xa68] sm:$0xff]
    %v1298 = vld [vmem:[#allocation11 + $0xa70] sm:$0xff]
    %v1299 = vld [vmem:[#allocation11 + $0xa78] sm:$0xff]
    %v1300 = vld [vmem:[#allocation11 + $0xa80] sm:$0xff]
    %v1301 = vld [vmem:[#allocation11 + $0xa88] sm:$0xff]
    %v1302 = vld [vmem:[#allocation11 + $0xa90] sm:$0xff]
    %v1303 = vld [vmem:[#allocation11 + $0xa98] sm:$0xff]
    %v1304 = vld [vmem:[#allocation11 + $0xaa0] sm:$0xff]
    %v1305 = vld [vmem:[#allocation11 + $0xaa8] sm:$0xff]
    %v1306 = vld [vmem:[#allocation11 + $0xab0] sm:$0xff]
    %v1307 = vld [vmem:[#allocation11 + $0xab8] sm:$0xff]
    %v1308 = vld [vmem:[#allocation11 + $0xac0] sm:$0xff]
    %v1309 = vld [vmem:[#allocation11 + $0xac8] sm:$0xff]
    %v1310 = vld [vmem:[#allocation11 + $0xad0] sm:$0xff]
    %v1311 = vld [vmem:[#allocation11 + $0xad8] sm:$0xff]
    %v1312 = vld [vmem:[#allocation11 + $0xae0] sm:$0xff]
    %v1313 = vld [vmem:[#allocation11 + $0xae8] sm:$0xff]
    %v1314 = vld [vmem:[#allocation11 + $0xaf0] sm:$0xff]
    %v1315 = vld [vmem:[#allocation11 + $0xaf8] sm:$0xff]
    %v1316 = vld [vmem:[#allocation11 + $0xb00] sm:$0xff]
    %v1317 = vld [vmem:[#allocation11 + $0xb08] sm:$0xff]
    %v1318 = vld [vmem:[#allocation11 + $0xb10] sm:$0xff]
    %v1319 = vld [vmem:[#allocation11 + $0xb18] sm:$0xff]
    %v1320 = vld [vmem:[#allocation11 + $0xb20] sm:$0xff]
    %v1321 = vld [vmem:[#allocation11 + $0xb28] sm:$0xff]
    %v1322 = vld [vmem:[#allocation11 + $0xb30] sm:$0xff]
    %v1323 = vld [vmem:[#allocation11 + $0xb38] sm:$0xff]
    %v1324 = vld [vmem:[#allocation11 + $0xb40] sm:$0xff]
    %v1325 = vld [vmem:[#allocation11 + $0xb48] sm:$0xff]
    %v1326 = vld [vmem:[#allocation11 + $0xb50] sm:$0xff]
    %v1327 = vld [vmem:[#allocation11 + $0xb58] sm:$0xff]
    %v1328 = vld [vmem:[#allocation11 + $0xb60] sm:$0xff]
    %v1329 = vld [vmem:[#allocation11 + $0xb68] sm:$0xff]
    %v1330 = vld [vmem:[#allocation11 + $0xb70] sm:$0xff]
    %v1331 = vld [vmem:[#allocation11 + $0xb78] sm:$0xff]
    %v1332 = vld [vmem:[#allocation11 + $0xb80] sm:$0xff]
    %v1333 = vld [vmem:[#allocation11 + $0xb88] sm:$0xff]
    %v1334 = vld [vmem:[#allocation11 + $0xb90] sm:$0xff]
    %v1335 = vld [vmem:[#allocation11 + $0xb98] sm:$0xff]
    %v1336 = vld [vmem:[#allocation11 + $0xba0] sm:$0xff]
    %v1337 = vld [vmem:[#allocation11 + $0xba8] sm:$0xff]
    %v1338 = vld [vmem:[#allocation11 + $0xbb0] sm:$0xff]
    %v1339 = vld [vmem:[#allocation11 + $0xbb8] sm:$0xff]
    %v1340 = vld [vmem:[#allocation11 + $0xbc0] sm:$0xff]
    %v1341 = vld [vmem:[#allocation11 + $0xbc8] sm:$0xff]
    %v1342 = vld [vmem:[#allocation11 + $0xbd0] sm:$0xff]
    %v1343 = vld [vmem:[#allocation11 + $0xbd8] sm:$0xff]
    %v1344 = vld [vmem:[#allocation11 + $0xbe0] sm:$0xff]
    %v1345 = vld [vmem:[#allocation11 + $0xbe8] sm:$0xff]
    %v1346 = vld [vmem:[#allocation11 + $0xbf0] sm:$0xff]
    %v1347 = vld [vmem:[#allocation11 + $0xbf8] sm:$0xff]
    %v1348 = vld [vmem:[#allocation11 + $0xc00] sm:$0xff]
    %v1349 = vld [vmem:[#allocation11 + $0xc08] sm:$0xff]
    %v1350 = vld [vmem:[#allocation11 + $0xc10] sm:$0xff]
    %v1351 = vld [vmem:[#allocation11 + $0xc18] sm:$0xff]
    %v1352 = vld [vmem:[#allocation11 + $0xc20] sm:$0xff]
    %v1353 = vld [vmem:[#allocation11 + $0xc28] sm:$0xff]
    %v1354 = vld [vmem:[#allocation11 + $0xc30] sm:$0xff]
    %v1355 = vld [vmem:[#allocation11 + $0xc38] sm:$0xff]
    %v1356 = vld [vmem:[#allocation11 + $0xc40] sm:$0xff]
    %v1357 = vld [vmem:[#allocation11 + $0xc48] sm:$0xff]
    %v1358 = vld [vmem:[#allocation11 + $0xc50] sm:$0xff]
    %v1359 = vld [vmem:[#allocation11 + $0xc58] sm:$0xff]
    %v1360 = vld [vmem:[#allocation11 + $0xc60] sm:$0xff]
    %v1361 = vld [vmem:[#allocation11 + $0xc68] sm:$0xff]
    %v1362 = vld [vmem:[#allocation11 + $0xc70] sm:$0xff]
    %v1363 = vld [vmem:[#allocation11 + $0xc78] sm:$0xff]
    %v1364 = vld [vmem:[#allocation11 + $0xc80] sm:$0xff]
    %v1365 = vld [vmem:[#allocation11 + $0xc88] sm:$0xff]
    %v1366 = vld [vmem:[#allocation11 + $0xc90] sm:$0xff]
    %v1367 = vld [vmem:[#allocation11 + $0xc98] sm:$0xff]
    %v1368 = vld [vmem:[#allocation11 + $0xca0] sm:$0xff]
    %v1369 = vld [vmem:[#allocation11 + $0xca8] sm:$0xff]
    %v1370 = vld [vmem:[#allocation11 + $0xcb0] sm:$0xff]
    %v1371 = vld [vmem:[#allocation11 + $0xcb8] sm:$0xff]
    %v1372 = vld [vmem:[#allocation11 + $0xcc0] sm:$0xff]
    %v1373 = vld [vmem:[#allocation11 + $0xcc8] sm:$0xff]
    %v1374 = vld [vmem:[#allocation11 + $0xcd0] sm:$0xff]
    %v1375 = vld [vmem:[#allocation11 + $0xcd8] sm:$0xff]
    %v1376 = vld [vmem:[#allocation11 + $0xce0] sm:$0xff]
    %v1377 = vld [vmem:[#allocation11 + $0xce8] sm:$0xff]
    %v1378 = vld [vmem:[#allocation11 + $0xcf0] sm:$0xff]
    %v1379 = vld [vmem:[#allocation11 + $0xcf8] sm:$0xff]
    %v1380 = vld [vmem:[#allocation11 + $0xd00] sm:$0xff]
    %v1381 = vld [vmem:[#allocation11 + $0xd08] sm:$0xff]
    %v1382 = vld [vmem:[#allocation11 + $0xd10] sm:$0xff]
    %v1383 = vld [vmem:[#allocation11 + $0xd18] sm:$0xff]
    %v1384 = vld [vmem:[#allocation11 + $0xd20] sm:$0xff]
    %v1385 = vld [vmem:[#allocation11 + $0xd28] sm:$0xff]
    %v1386 = vld [vmem:[#allocation11 + $0xd30] sm:$0xff]
    %v1387 = vld [vmem:[#allocation11 + $0xd38] sm:$0xff]
    %v1388 = vld [vmem:[#allocation11 + $0xd40] sm:$0xff]
    %v1389 = vld [vmem:[#allocation11 + $0xd48] sm:$0xff]
    %v1390 = vld [vmem:[#allocation11 + $0xd50] sm:$0xff]
    %v1391 = vld [vmem:[#allocation11 + $0xd58] sm:$0xff]
    %v1392 = vld [vmem:[#allocation11 + $0xd60] sm:$0xff]
    %v1393 = vld [vmem:[#allocation11 + $0xd68] sm:$0xff]
    %v1394 = vld [vmem:[#allocation11 + $0xd70] sm:$0xff]
    %v1395 = vld [vmem:[#allocation11 + $0xd78] sm:$0xff]
    %v1396 = vld [vmem:[#allocation11 + $0xd80] sm:$0xff]
    %v1397 = vld [vmem:[#allocation11 + $0xd88] sm:$0xff]
    %v1398 = vld [vmem:[#allocation11 + $0xd90] sm:$0xff]
    %v1399 = vld [vmem:[#allocation11 + $0xd98] sm:$0xff]
    %v1400 = vld [vmem:[#allocation11 + $0xda0] sm:$0xff]
    %v1401 = vld [vmem:[#allocation11 + $0xda8] sm:$0xff]
    %v1402 = vld [vmem:[#allocation11 + $0xdb0] sm:$0xff]
    %v1403 = vld [vmem:[#allocation11 + $0xdb8] sm:$0xff]
    %v1404 = vld [vmem:[#allocation11 + $0xdc0] sm:$0xff]
    %v1405 = vld [vmem:[#allocation11 + $0xdc8] sm:$0xff]
    %v1406 = vld [vmem:[#allocation11 + $0xdd0] sm:$0xff]
    %v1407 = vld [vmem:[#allocation11 + $0xdd8] sm:$0xff]
    %v1408 = vld [vmem:[#allocation11 + $0xde0] sm:$0xff]
    %v1409 = vld [vmem:[#allocation11 + $0xde8] sm:$0xff]
    %v1410 = vld [vmem:[#allocation11 + $0xdf0] sm:$0xff]
    %v1411 = vld [vmem:[#allocation11 + $0xdf8] sm:$0xff]
    %v1412 = vld [vmem:[#allocation11 + $0xe00] sm:$0xff]
    %v1413 = vld [vmem:[#allocation11 + $0xe08] sm:$0xff]
    %v1414 = vld [vmem:[#allocation11 + $0xe10] sm:$0xff]
    %v1415 = vld [vmem:[#allocation11 + $0xe18] sm:$0xff]
    %v1416 = vld [vmem:[#allocation11 + $0xe20] sm:$0xff]
    %v1417 = vld [vmem:[#allocation11 + $0xe28] sm:$0xff]
    %v1418 = vld [vmem:[#allocation11 + $0xe30] sm:$0xff]
    %v1419 = vld [vmem:[#allocation11 + $0xe38] sm:$0xff]
    %v1420 = vld [vmem:[#allocation11 + $0xe40] sm:$0xff]
    %v1421 = vld [vmem:[#allocation11 + $0xe48] sm:$0xff]
    %v1422 = vld [vmem:[#allocation11 + $0xe50] sm:$0xff]
    %v1423 = vld [vmem:[#allocation11 + $0xe58] sm:$0xff]
    %v1424 = vld [vmem:[#allocation11 + $0xe60] sm:$0xff]
    %v1425 = vld [vmem:[#allocation11 + $0xe68] sm:$0xff]
    %v1426 = vld [vmem:[#allocation11 + $0xe70] sm:$0xff]
    %v1427 = vld [vmem:[#allocation11 + $0xe78] sm:$0xff]
    %v1428 = vld [vmem:[#allocation11 + $0xe80] sm:$0xff]
    %v1429 = vld [vmem:[#allocation11 + $0xe88] sm:$0xff]
    %v1430 = vld [vmem:[#allocation11 + $0xe90] sm:$0xff]
    %v1431 = vld [vmem:[#allocation11 + $0xe98] sm:$0xff]
    %v1432 = vld [vmem:[#allocation11 + $0xea0] sm:$0xff]
    %v1433 = vld [vmem:[#allocation11 + $0xea8] sm:$0xff]
    %v1434 = vld [vmem:[#allocation11 + $0xeb0] sm:$0xff]
    %v1435 = vld [vmem:[#allocation11 + $0xeb8] sm:$0xff]
    %v1436 = vld [vmem:[#allocation11 + $0xec0] sm:$0xff]
    %v1437 = vld [vmem:[#allocation11 + $0xec8] sm:$0xff]
    %v1438 = vld [vmem:[#allocation11 + $0xed0] sm:$0xff]
    %v1439 = vld [vmem:[#allocation11 + $0xed8] sm:$0xff]
    %v1440 = vld [vmem:[#allocation11 + $0xee0] sm:$0xff]
    %v1441 = vld [vmem:[#allocation11 + $0xee8] sm:$0xff]
    %v1442 = vld [vmem:[#allocation11 + $0xef0] sm:$0xff]
    %v1443 = vld [vmem:[#allocation11 + $0xef8] sm:$0xff]
    %v1444 = vld [vmem:[#allocation11 + $0xf00] sm:$0xff]
    %v1445 = vld [vmem:[#allocation11 + $0xf08] sm:$0xff]
    %v1446 = vld [vmem:[#allocation11 + $0xf10] sm:$0xff]
    %v1447 = vld [vmem:[#allocation11 + $0xf18] sm:$0xff]
    %v1448 = vld [vmem:[#allocation11 + $0xf20] sm:$0xff]
    %v1449 = vld [vmem:[#allocation11 + $0xf28] sm:$0xff]
    %v1450 = vld [vmem:[#allocation11 + $0xf30] sm:$0xff]
    %v1451 = vld [vmem:[#allocation11 + $0xf38] sm:$0xff]
    %v1452 = vld [vmem:[#allocation11 + $0xf40] sm:$0xff]
    %v1453 = vld [vmem:[#allocation11 + $0xf48] sm:$0xff]
    %v1454 = vld [vmem:[#allocation11 + $0xf50] sm:$0xff]
    %v1455 = vld [vmem:[#allocation11 + $0xf58] sm:$0xff]
    %v1456 = vld [vmem:[#allocation11 + $0xf60] sm:$0xff]
    %v1457 = vld [vmem:[#allocation11 + $0xf68] sm:$0xff]
    %v1458 = vld [vmem:[#allocation11 + $0xf70] sm:$0xff]
    %v1459 = vld [vmem:[#allocation11 + $0xf78] sm:$0xff]
    %v1460 = vld [vmem:[#allocation11 + $0xf80] sm:$0xff]
    %v1461 = vld [vmem:[#allocation11 + $0xf88] sm:$0xff]
    %v1462 = vld [vmem:[#allocation11 + $0xf90] sm:$0xff]
    %v1463 = vld [vmem:[#allocation11 + $0xf98] sm:$0xff]
    %v1464 = vld [vmem:[#allocation11 + $0xfa0] sm:$0xff]
    %v1465 = vld [vmem:[#allocation11 + $0xfa8] sm:$0xff]
    %v1466 = vld [vmem:[#allocation11 + $0xfb0] sm:$0xff]
    %v1467 = vld [vmem:[#allocation11 + $0xfb8] sm:$0xff]
    %v1468 = vld [vmem:[#allocation11 + $0xfc0] sm:$0xff]
    %v1469 = vld [vmem:[#allocation11 + $0xfc8] sm:$0xff]
    %v1470 = vld [vmem:[#allocation11 + $0xfd0] sm:$0xff]
    %v1471 = vld [vmem:[#allocation11 + $0xfd8] sm:$0xff]
    %v1472 = vld [vmem:[#allocation11 + $0xfe0] sm:$0xff]
    %v1473 = vld [vmem:[#allocation11 + $0xfe8] sm:$0xff]
    %v1474 = vld [vmem:[#allocation11 + $0xff0] sm:$0xff]
    %v1475 = vld [vmem:[#allocation11 + $0xff8] sm:$0xff]
    %v1476 = vld [vmem:[#allocation13] sm:$0xff]
    %v1478 = vlaneseq
    %v1479 = vshrl.u32 %v1478, 7
    %v1480 = vsub.s32 0, %v1479
    %v1481 = vrot.slane %v1476, %v1480
    %v1482 = vlaneseq
    %v1483 = vshrl.u32 %v1482, 7
    %v1484 = vsub.s32 1, %v1483
    %v1485 = vrot.slane %v1476, %v1484
    %v1486 = vlaneseq
    %v1487 = vshrl.u32 %v1486, 7
    %v1488 = vsub.s32 2, %v1487
    %v1489 = vrot.slane %v1476, %v1488
    %v1490 = vlaneseq
    %v1491 = vshrl.u32 %v1490, 7
    %v1492 = vsub.s32 3, %v1491
    %v1493 = vrot.slane %v1476, %v1492
    %v1494 = vlaneseq
    %v1495 = vshrl.u32 %v1494, 7
    %v1496 = vsub.s32 4, %v1495
    %v1497 = vrot.slane %v1476, %v1496
    %v1498 = vlaneseq
    %v1499 = vshrl.u32 %v1498, 7
    %v1500 = vsub.s32 5, %v1499
    %v1501 = vrot.slane %v1476, %v1500
    %v1502 = vlaneseq
    %v1503 = vshrl.u32 %v1502, 7
    %v1504 = vsub.s32 6, %v1503
    %v1505 = vrot.slane %v1476, %v1504
    %v1506 = vlaneseq
    %v1507 = vshrl.u32 %v1506, 7
    %v1508 = vsub.s32 7, %v1507
    %v1509 = vrot.slane %v1476, %v1508
    %v2030 = vunpack.c.l.b16 %v964
    %v2031 = vunpack.c.h.b16 %v964
    %v2032 = vunpack.c.l.b16 %v965
    %v2033 = vunpack.c.h.b16 %v965
    %v2034 = vunpack.c.l.b16 %v966
    %v2035 = vunpack.c.h.b16 %v966
    %v2036 = vunpack.c.l.b16 %v967
    %v2037 = vunpack.c.h.b16 %v967
    %v2038 = vunpack.c.l.b16 %v968
    %v2039 = vunpack.c.h.b16 %v968
    %v2040 = vunpack.c.l.b16 %v969
    %v2041 = vunpack.c.h.b16 %v969
    %v2042 = vunpack.c.l.b16 %v970
    %v2043 = vunpack.c.h.b16 %v970
    %v2044 = vunpack.c.l.b16 %v971
    %v2045 = vunpack.c.h.b16 %v971
    %v2046 = vunpack.c.l.b16 %v972
    %v2047 = vunpack.c.h.b16 %v972
    %v2048 = vunpack.c.l.b16 %v973
    %v2049 = vunpack.c.h.b16 %v973
    %v2050 = vunpack.c.l.b16 %v974
    %v2051 = vunpack.c.h.b16 %v974
    %v2052 = vunpack.c.l.b16 %v975
    %v2053 = vunpack.c.h.b16 %v975
    %v2054 = vunpack.c.l.b16 %v976
    %v2055 = vunpack.c.h.b16 %v976
    %v2056 = vunpack.c.l.b16 %v977
    %v2057 = vunpack.c.h.b16 %v977
    %v2058 = vunpack.c.l.b16 %v978
    %v2059 = vunpack.c.h.b16 %v978
    %v2060 = vunpack.c.l.b16 %v979
    %v2061 = vunpack.c.h.b16 %v979
    %v2062 = vunpack.c.l.b16 %v980
    %v2063 = vunpack.c.h.b16 %v980
    %v2064 = vunpack.c.l.b16 %v981
    %v2065 = vunpack.c.h.b16 %v981
    %v2066 = vunpack.c.l.b16 %v982
    %v2067 = vunpack.c.h.b16 %v982
    %v2068 = vunpack.c.l.b16 %v983
    %v2069 = vunpack.c.h.b16 %v983
    %v2070 = vunpack.c.l.b16 %v984
    %v2071 = vunpack.c.h.b16 %v984
    %v2072 = vunpack.c.l.b16 %v985
    %v2073 = vunpack.c.h.b16 %v985
    %v2074 = vunpack.c.l.b16 %v986
    %v2075 = vunpack.c.h.b16 %v986
    %v2076 = vunpack.c.l.b16 %v987
    %v2077 = vunpack.c.h.b16 %v987
    %v2078 = vunpack.c.l.b16 %v988
    %v2079 = vunpack.c.h.b16 %v988
    %v2080 = vunpack.c.l.b16 %v989
    %v2081 = vunpack.c.h.b16 %v989
    %v2082 = vunpack.c.l.b16 %v990
    %v2083 = vunpack.c.h.b16 %v990
    %v2084 = vunpack.c.l.b16 %v991
    %v2085 = vunpack.c.h.b16 %v991
    %v2086 = vunpack.c.l.b16 %v992
    %v2087 = vunpack.c.h.b16 %v992
    %v2088 = vunpack.c.l.b16 %v993
    %v2089 = vunpack.c.h.b16 %v993
    %v2090 = vunpack.c.l.b16 %v994
    %v2091 = vunpack.c.h.b16 %v994
    %v2092 = vunpack.c.l.b16 %v995
    %v2093 = vunpack.c.h.b16 %v995
    %v2094 = vunpack.c.l.b16 %v996
    %v2095 = vunpack.c.h.b16 %v996
    %v2096 = vunpack.c.l.b16 %v997
    %v2097 = vunpack.c.h.b16 %v997
    %v2098 = vunpack.c.l.b16 %v998
    %v2099 = vunpack.c.h.b16 %v998
    %v2100 = vunpack.c.l.b16 %v999
    %v2101 = vunpack.c.h.b16 %v999
    %v2102 = vunpack.c.l.b16 %v1000
    %v2103 = vunpack.c.h.b16 %v1000
    %v2104 = vunpack.c.l.b16 %v1001
    %v2105 = vunpack.c.h.b16 %v1001
    %v2106 = vunpack.c.l.b16 %v1002
    %v2107 = vunpack.c.h.b16 %v1002
    %v2108 = vunpack.c.l.b16 %v1003
    %v2109 = vunpack.c.h.b16 %v1003
    %v2110 = vunpack.c.l.b16 %v1004
    %v2111 = vunpack.c.h.b16 %v1004
    %v2112 = vunpack.c.l.b16 %v1005
    %v2113 = vunpack.c.h.b16 %v1005
    %v2114 = vunpack.c.l.b16 %v1006
    %v2115 = vunpack.c.h.b16 %v1006
    %v2116 = vunpack.c.l.b16 %v1007
    %v2117 = vunpack.c.h.b16 %v1007
    %v2118 = vunpack.c.l.b16 %v1008
    %v2119 = vunpack.c.h.b16 %v1008
    %v2120 = vunpack.c.l.b16 %v1009
    %v2121 = vunpack.c.h.b16 %v1009
    %v2122 = vunpack.c.l.b16 %v1010
    %v2123 = vunpack.c.h.b16 %v1010
    %v2124 = vunpack.c.l.b16 %v1011
    %v2125 = vunpack.c.h.b16 %v1011
    %v2126 = vunpack.c.l.b16 %v1012
    %v2127 = vunpack.c.h.b16 %v1012
    %v2128 = vunpack.c.l.b16 %v1013
    %v2129 = vunpack.c.h.b16 %v1013
    %v2130 = vunpack.c.l.b16 %v1014
    %v2131 = vunpack.c.h.b16 %v1014
    %v2132 = vunpack.c.l.b16 %v1015
    %v2133 = vunpack.c.h.b16 %v1015
    %v2134 = vunpack.c.l.b16 %v1016
    %v2135 = vunpack.c.h.b16 %v1016
    %v2136 = vunpack.c.l.b16 %v1017
    %v2137 = vunpack.c.h.b16 %v1017
    %v2138 = vunpack.c.l.b16 %v1018
    %v2139 = vunpack.c.h.b16 %v1018
    %v2140 = vunpack.c.l.b16 %v1019
    %v2141 = vunpack.c.h.b16 %v1019
    %v2142 = vunpack.c.l.b16 %v1020
    %v2143 = vunpack.c.h.b16 %v1020
    %v2144 = vunpack.c.l.b16 %v1021
    %v2145 = vunpack.c.h.b16 %v1021
    %v2146 = vunpack.c.l.b16 %v1022
    %v2147 = vunpack.c.h.b16 %v1022
    %v2148 = vunpack.c.l.b16 %v1023
    %v2149 = vunpack.c.h.b16 %v1023
    %v2150 = vunpack.c.l.b16 %v1024
    %v2151 = vunpack.c.h.b16 %v1024
    %v2152 = vunpack.c.l.b16 %v1025
    %v2153 = vunpack.c.h.b16 %v1025
    %v2154 = vunpack.c.l.b16 %v1026
    %v2155 = vunpack.c.h.b16 %v1026
    %v2156 = vunpack.c.l.b16 %v1027
    %v2157 = vunpack.c.h.b16 %v1027
    %v2158 = vunpack.c.l.b16 %v1028
    %v2159 = vunpack.c.h.b16 %v1028
    %v2160 = vunpack.c.l.b16 %v1029
    %v2161 = vunpack.c.h.b16 %v1029
    %v2162 = vunpack.c.l.b16 %v1030
    %v2163 = vunpack.c.h.b16 %v1030
    %v2164 = vunpack.c.l.b16 %v1031
    %v2165 = vunpack.c.h.b16 %v1031
    %v2166 = vunpack.c.l.b16 %v1032
    %v2167 = vunpack.c.h.b16 %v1032
    %v2168 = vunpack.c.l.b16 %v1033
    %v2169 = vunpack.c.h.b16 %v1033
    %v2170 = vunpack.c.l.b16 %v1034
    %v2171 = vunpack.c.h.b16 %v1034
    %v2172 = vunpack.c.l.b16 %v1035
    %v2173 = vunpack.c.h.b16 %v1035
    %v2174 = vunpack.c.l.b16 %v1036
    %v2175 = vunpack.c.h.b16 %v1036
    %v2176 = vunpack.c.l.b16 %v1037
    %v2177 = vunpack.c.h.b16 %v1037
    %v2178 = vunpack.c.l.b16 %v1038
    %v2179 = vunpack.c.h.b16 %v1038
    %v2180 = vunpack.c.l.b16 %v1039
    %v2181 = vunpack.c.h.b16 %v1039
    %v2182 = vunpack.c.l.b16 %v1040
    %v2183 = vunpack.c.h.b16 %v1040
    %v2184 = vunpack.c.l.b16 %v1041
    %v2185 = vunpack.c.h.b16 %v1041
    %v2186 = vunpack.c.l.b16 %v1042
    %v2187 = vunpack.c.h.b16 %v1042
    %v2188 = vunpack.c.l.b16 %v1043
    %v2189 = vunpack.c.h.b16 %v1043
    %v2190 = vunpack.c.l.b16 %v1044
    %v2191 = vunpack.c.h.b16 %v1044
    %v2192 = vunpack.c.l.b16 %v1045
    %v2193 = vunpack.c.h.b16 %v1045
    %v2194 = vunpack.c.l.b16 %v1046
    %v2195 = vunpack.c.h.b16 %v1046
    %v2196 = vunpack.c.l.b16 %v1047
    %v2197 = vunpack.c.h.b16 %v1047
    %v2198 = vunpack.c.l.b16 %v1048
    %v2199 = vunpack.c.h.b16 %v1048
    %v2200 = vunpack.c.l.b16 %v1049
    %v2201 = vunpack.c.h.b16 %v1049
    %v2202 = vunpack.c.l.b16 %v1050
    %v2203 = vunpack.c.h.b16 %v1050
    %v2204 = vunpack.c.l.b16 %v1051
    %v2205 = vunpack.c.h.b16 %v1051
    %v2206 = vunpack.c.l.b16 %v1052
    %v2207 = vunpack.c.h.b16 %v1052
    %v2208 = vunpack.c.l.b16 %v1053
    %v2209 = vunpack.c.h.b16 %v1053
    %v2210 = vunpack.c.l.b16 %v1054
    %v2211 = vunpack.c.h.b16 %v1054
    %v2212 = vunpack.c.l.b16 %v1055
    %v2213 = vunpack.c.h.b16 %v1055
    %v2214 = vunpack.c.l.b16 %v1056
    %v2215 = vunpack.c.h.b16 %v1056
    %v2216 = vunpack.c.l.b16 %v1057
    %v2217 = vunpack.c.h.b16 %v1057
    %v2218 = vunpack.c.l.b16 %v1058
    %v2219 = vunpack.c.h.b16 %v1058
    %v2220 = vunpack.c.l.b16 %v1059
    %v2221 = vunpack.c.h.b16 %v1059
    %v2222 = vunpack.c.l.b16 %v1060
    %v2223 = vunpack.c.h.b16 %v1060
    %v2224 = vunpack.c.l.b16 %v1061
    %v2225 = vunpack.c.h.b16 %v1061
    %v2226 = vunpack.c.l.b16 %v1062
    %v2227 = vunpack.c.h.b16 %v1062
    %v2228 = vunpack.c.l.b16 %v1063
    %v2229 = vunpack.c.h.b16 %v1063
    %v2230 = vunpack.c.l.b16 %v1064
    %v2231 = vunpack.c.h.b16 %v1064
    %v2232 = vunpack.c.l.b16 %v1065
    %v2233 = vunpack.c.h.b16 %v1065
    %v2234 = vunpack.c.l.b16 %v1066
    %v2235 = vunpack.c.h.b16 %v1066
    %v2236 = vunpack.c.l.b16 %v1067
    %v2237 = vunpack.c.h.b16 %v1067
    %v2238 = vunpack.c.l.b16 %v1068
    %v2239 = vunpack.c.h.b16 %v1068
    %v2240 = vunpack.c.l.b16 %v1069
    %v2241 = vunpack.c.h.b16 %v1069
    %v2242 = vunpack.c.l.b16 %v1070
    %v2243 = vunpack.c.h.b16 %v1070
    %v2244 = vunpack.c.l.b16 %v1071
    %v2245 = vunpack.c.h.b16 %v1071
    %v2246 = vunpack.c.l.b16 %v1072
    %v2247 = vunpack.c.h.b16 %v1072
    %v2248 = vunpack.c.l.b16 %v1073
    %v2249 = vunpack.c.h.b16 %v1073
    %v2250 = vunpack.c.l.b16 %v1074
    %v2251 = vunpack.c.h.b16 %v1074
    %v2252 = vunpack.c.l.b16 %v1075
    %v2253 = vunpack.c.h.b16 %v1075
    %v2254 = vunpack.c.l.b16 %v1076
    %v2255 = vunpack.c.h.b16 %v1076
    %v2256 = vunpack.c.l.b16 %v1077
    %v2257 = vunpack.c.h.b16 %v1077
    %v2258 = vunpack.c.l.b16 %v1078
    %v2259 = vunpack.c.h.b16 %v1078
    %v2260 = vunpack.c.l.b16 %v1079
    %v2261 = vunpack.c.h.b16 %v1079
    %v2262 = vunpack.c.l.b16 %v1080
    %v2263 = vunpack.c.h.b16 %v1080
    %v2264 = vunpack.c.l.b16 %v1081
    %v2265 = vunpack.c.h.b16 %v1081
    %v2266 = vunpack.c.l.b16 %v1082
    %v2267 = vunpack.c.h.b16 %v1082
    %v2268 = vunpack.c.l.b16 %v1083
    %v2269 = vunpack.c.h.b16 %v1083
    %v2270 = vunpack.c.l.b16 %v1084
    %v2271 = vunpack.c.h.b16 %v1084
    %v2272 = vunpack.c.l.b16 %v1085
    %v2273 = vunpack.c.h.b16 %v1085
    %v2274 = vunpack.c.l.b16 %v1086
    %v2275 = vunpack.c.h.b16 %v1086
    %v2276 = vunpack.c.l.b16 %v1087
    %v2277 = vunpack.c.h.b16 %v1087
    %v2278 = vunpack.c.l.b16 %v1088
    %v2279 = vunpack.c.h.b16 %v1088
    %v2280 = vunpack.c.l.b16 %v1089
    %v2281 = vunpack.c.h.b16 %v1089
    %v2282 = vunpack.c.l.b16 %v1090
    %v2283 = vunpack.c.h.b16 %v1090
    %v2284 = vunpack.c.l.b16 %v1091
    %v2285 = vunpack.c.h.b16 %v1091
    %v2286 = vunpack.c.l.b16 %v1092
    %v2287 = vunpack.c.h.b16 %v1092
    %v2288 = vunpack.c.l.b16 %v1093
    %v2289 = vunpack.c.h.b16 %v1093
    %v2290 = vunpack.c.l.b16 %v1094
    %v2291 = vunpack.c.h.b16 %v1094
    %v2292 = vunpack.c.l.b16 %v1095
    %v2293 = vunpack.c.h.b16 %v1095
    %v2294 = vunpack.c.l.b16 %v1096
    %v2295 = vunpack.c.h.b16 %v1096
    %v2296 = vunpack.c.l.b16 %v1097
    %v2297 = vunpack.c.h.b16 %v1097
    %v2298 = vunpack.c.l.b16 %v1098
    %v2299 = vunpack.c.h.b16 %v1098
    %v2300 = vunpack.c.l.b16 %v1099
    %v2301 = vunpack.c.h.b16 %v1099
    %v2302 = vunpack.c.l.b16 %v1100
    %v2303 = vunpack.c.h.b16 %v1100
    %v2304 = vunpack.c.l.b16 %v1101
    %v2305 = vunpack.c.h.b16 %v1101
    %v2306 = vunpack.c.l.b16 %v1102
    %v2307 = vunpack.c.h.b16 %v1102
    %v2308 = vunpack.c.l.b16 %v1103
    %v2309 = vunpack.c.h.b16 %v1103
    %v2310 = vunpack.c.l.b16 %v1104
    %v2311 = vunpack.c.h.b16 %v1104
    %v2312 = vunpack.c.l.b16 %v1105
    %v2313 = vunpack.c.h.b16 %v1105
    %v2314 = vunpack.c.l.b16 %v1106
    %v2315 = vunpack.c.h.b16 %v1106
    %v2316 = vunpack.c.l.b16 %v1107
    %v2317 = vunpack.c.h.b16 %v1107
    %v2318 = vunpack.c.l.b16 %v1108
    %v2319 = vunpack.c.h.b16 %v1108
    %v2320 = vunpack.c.l.b16 %v1109
    %v2321 = vunpack.c.h.b16 %v1109
    %v2322 = vunpack.c.l.b16 %v1110
    %v2323 = vunpack.c.h.b16 %v1110
    %v2324 = vunpack.c.l.b16 %v1111
    %v2325 = vunpack.c.h.b16 %v1111
    %v2326 = vunpack.c.l.b16 %v1112
    %v2327 = vunpack.c.h.b16 %v1112
    %v2328 = vunpack.c.l.b16 %v1113
    %v2329 = vunpack.c.h.b16 %v1113
    %v2330 = vunpack.c.l.b16 %v1114
    %v2331 = vunpack.c.h.b16 %v1114
    %v2332 = vunpack.c.l.b16 %v1115
    %v2333 = vunpack.c.h.b16 %v1115
    %v2334 = vunpack.c.l.b16 %v1116
    %v2335 = vunpack.c.h.b16 %v1116
    %v2336 = vunpack.c.l.b16 %v1117
    %v2337 = vunpack.c.h.b16 %v1117
    %v2338 = vunpack.c.l.b16 %v1118
    %v2339 = vunpack.c.h.b16 %v1118
    %v2340 = vunpack.c.l.b16 %v1119
    %v2341 = vunpack.c.h.b16 %v1119
    %v2342 = vunpack.c.l.b16 %v1120
    %v2343 = vunpack.c.h.b16 %v1120
    %v2344 = vunpack.c.l.b16 %v1121
    %v2345 = vunpack.c.h.b16 %v1121
    %v2346 = vunpack.c.l.b16 %v1122
    %v2347 = vunpack.c.h.b16 %v1122
    %v2348 = vunpack.c.l.b16 %v1123
    %v2349 = vunpack.c.h.b16 %v1123
    %v2350 = vunpack.c.l.b16 %v1124
    %v2351 = vunpack.c.h.b16 %v1124
    %v2352 = vunpack.c.l.b16 %v1125
    %v2353 = vunpack.c.h.b16 %v1125
    %v2354 = vunpack.c.l.b16 %v1126
    %v2355 = vunpack.c.h.b16 %v1126
    %v2356 = vunpack.c.l.b16 %v1127
    %v2357 = vunpack.c.h.b16 %v1127
    %v2358 = vunpack.c.l.b16 %v1128
    %v2359 = vunpack.c.h.b16 %v1128
    %v2360 = vunpack.c.l.b16 %v1129
    %v2361 = vunpack.c.h.b16 %v1129
    %v2362 = vunpack.c.l.b16 %v1130
    %v2363 = vunpack.c.h.b16 %v1130
    %v2364 = vunpack.c.l.b16 %v1131
    %v2365 = vunpack.c.h.b16 %v1131
    %v2366 = vunpack.c.l.b16 %v1132
    %v2367 = vunpack.c.h.b16 %v1132
    %v2368 = vunpack.c.l.b16 %v1133
    %v2369 = vunpack.c.h.b16 %v1133
    %v2370 = vunpack.c.l.b16 %v1134
    %v2371 = vunpack.c.h.b16 %v1134
    %v2372 = vunpack.c.l.b16 %v1135
    %v2373 = vunpack.c.h.b16 %v1135
    %v2374 = vunpack.c.l.b16 %v1136
    %v2375 = vunpack.c.h.b16 %v1136
    %v2376 = vunpack.c.l.b16 %v1137
    %v2377 = vunpack.c.h.b16 %v1137
    %v2378 = vunpack.c.l.b16 %v1138
    %v2379 = vunpack.c.h.b16 %v1138
    %v2380 = vunpack.c.l.b16 %v1139
    %v2381 = vunpack.c.h.b16 %v1139
    %v2382 = vunpack.c.l.b16 %v1140
    %v2383 = vunpack.c.h.b16 %v1140
    %v2384 = vunpack.c.l.b16 %v1141
    %v2385 = vunpack.c.h.b16 %v1141
    %v2386 = vunpack.c.l.b16 %v1142
    %v2387 = vunpack.c.h.b16 %v1142
    %v2388 = vunpack.c.l.b16 %v1143
    %v2389 = vunpack.c.h.b16 %v1143
    %v2390 = vunpack.c.l.b16 %v1144
    %v2391 = vunpack.c.h.b16 %v1144
    %v2392 = vunpack.c.l.b16 %v1145
    %v2393 = vunpack.c.h.b16 %v1145
    %v2394 = vunpack.c.l.b16 %v1146
    %v2395 = vunpack.c.h.b16 %v1146
    %v2396 = vunpack.c.l.b16 %v1147
    %v2397 = vunpack.c.h.b16 %v1147
    %v2398 = vunpack.c.l.b16 %v1148
    %v2399 = vunpack.c.h.b16 %v1148
    %v2400 = vunpack.c.l.b16 %v1149
    %v2401 = vunpack.c.h.b16 %v1149
    %v2402 = vunpack.c.l.b16 %v1150
    %v2403 = vunpack.c.h.b16 %v1150
    %v2404 = vunpack.c.l.b16 %v1151
    %v2405 = vunpack.c.h.b16 %v1151
    %v2406 = vunpack.c.l.b16 %v1152
    %v2407 = vunpack.c.h.b16 %v1152
    %v2408 = vunpack.c.l.b16 %v1153
    %v2409 = vunpack.c.h.b16 %v1153
    %v2410 = vunpack.c.l.b16 %v1154
    %v2411 = vunpack.c.h.b16 %v1154
    %v2412 = vunpack.c.l.b16 %v1155
    %v2413 = vunpack.c.h.b16 %v1155
    %v2414 = vunpack.c.l.b16 %v1156
    %v2415 = vunpack.c.h.b16 %v1156
    %v2416 = vunpack.c.l.b16 %v1157
    %v2417 = vunpack.c.h.b16 %v1157
    %v2418 = vunpack.c.l.b16 %v1158
    %v2419 = vunpack.c.h.b16 %v1158
    %v2420 = vunpack.c.l.b16 %v1159
    %v2421 = vunpack.c.h.b16 %v1159
    %v2422 = vunpack.c.l.b16 %v1160
    %v2423 = vunpack.c.h.b16 %v1160
    %v2424 = vunpack.c.l.b16 %v1161
    %v2425 = vunpack.c.h.b16 %v1161
    %v2426 = vunpack.c.l.b16 %v1162
    %v2427 = vunpack.c.h.b16 %v1162
    %v2428 = vunpack.c.l.b16 %v1163
    %v2429 = vunpack.c.h.b16 %v1163
    %v2430 = vunpack.c.l.b16 %v1164
    %v2431 = vunpack.c.h.b16 %v1164
    %v2432 = vunpack.c.l.b16 %v1165
    %v2433 = vunpack.c.h.b16 %v1165
    %v2434 = vunpack.c.l.b16 %v1166
    %v2435 = vunpack.c.h.b16 %v1166
    %v2436 = vunpack.c.l.b16 %v1167
    %v2437 = vunpack.c.h.b16 %v1167
    %v2438 = vunpack.c.l.b16 %v1168
    %v2439 = vunpack.c.h.b16 %v1168
    %v2440 = vunpack.c.l.b16 %v1169
    %v2441 = vunpack.c.h.b16 %v1169
    %v2442 = vunpack.c.l.b16 %v1170
    %v2443 = vunpack.c.h.b16 %v1170
    %v2444 = vunpack.c.l.b16 %v1171
    %v2445 = vunpack.c.h.b16 %v1171
    %v2446 = vunpack.c.l.b16 %v1172
    %v2447 = vunpack.c.h.b16 %v1172
    %v2448 = vunpack.c.l.b16 %v1173
    %v2449 = vunpack.c.h.b16 %v1173
    %v2450 = vunpack.c.l.b16 %v1174
    %v2451 = vunpack.c.h.b16 %v1174
    %v2452 = vunpack.c.l.b16 %v1175
    %v2453 = vunpack.c.h.b16 %v1175
    %v2454 = vunpack.c.l.b16 %v1176
    %v2455 = vunpack.c.h.b16 %v1176
    %v2456 = vunpack.c.l.b16 %v1177
    %v2457 = vunpack.c.h.b16 %v1177
    %v2458 = vunpack.c.l.b16 %v1178
    %v2459 = vunpack.c.h.b16 %v1178
    %v2460 = vunpack.c.l.b16 %v1179
    %v2461 = vunpack.c.h.b16 %v1179
    %v2462 = vunpack.c.l.b16 %v1180
    %v2463 = vunpack.c.h.b16 %v1180
    %v2464 = vunpack.c.l.b16 %v1181
    %v2465 = vunpack.c.h.b16 %v1181
    %v2466 = vunpack.c.l.b16 %v1182
    %v2467 = vunpack.c.h.b16 %v1182
    %v2468 = vunpack.c.l.b16 %v1183
    %v2469 = vunpack.c.h.b16 %v1183
    %v2470 = vunpack.c.l.b16 %v1184
    %v2471 = vunpack.c.h.b16 %v1184
    %v2472 = vunpack.c.l.b16 %v1185
    %v2473 = vunpack.c.h.b16 %v1185
    %v2474 = vunpack.c.l.b16 %v1186
    %v2475 = vunpack.c.h.b16 %v1186
    %v2476 = vunpack.c.l.b16 %v1187
    %v2477 = vunpack.c.h.b16 %v1187
    %v2478 = vunpack.c.l.b16 %v1188
    %v2479 = vunpack.c.h.b16 %v1188
    %v2480 = vunpack.c.l.b16 %v1189
    %v2481 = vunpack.c.h.b16 %v1189
    %v2482 = vunpack.c.l.b16 %v1190
    %v2483 = vunpack.c.h.b16 %v1190
    %v2484 = vunpack.c.l.b16 %v1191
    %v2485 = vunpack.c.h.b16 %v1191
    %v2486 = vunpack.c.l.b16 %v1192
    %v2487 = vunpack.c.h.b16 %v1192
    %v2488 = vunpack.c.l.b16 %v1193
    %v2489 = vunpack.c.h.b16 %v1193
    %v2490 = vunpack.c.l.b16 %v1194
    %v2491 = vunpack.c.h.b16 %v1194
    %v2492 = vunpack.c.l.b16 %v1195
    %v2493 = vunpack.c.h.b16 %v1195
    %v2494 = vunpack.c.l.b16 %v1196
    %v2495 = vunpack.c.h.b16 %v1196
    %v2496 = vunpack.c.l.b16 %v1197
    %v2497 = vunpack.c.h.b16 %v1197
    %v2498 = vunpack.c.l.b16 %v1198
    %v2499 = vunpack.c.h.b16 %v1198
    %v2500 = vunpack.c.l.b16 %v1199
    %v2501 = vunpack.c.h.b16 %v1199
    %v2502 = vunpack.c.l.b16 %v1200
    %v2503 = vunpack.c.h.b16 %v1200
    %v2504 = vunpack.c.l.b16 %v1201
    %v2505 = vunpack.c.h.b16 %v1201
    %v2506 = vunpack.c.l.b16 %v1202
    %v2507 = vunpack.c.h.b16 %v1202
    %v2508 = vunpack.c.l.b16 %v1203
    %v2509 = vunpack.c.h.b16 %v1203
    %v2510 = vunpack.c.l.b16 %v1204
    %v2511 = vunpack.c.h.b16 %v1204
    %v2512 = vunpack.c.l.b16 %v1205
    %v2513 = vunpack.c.h.b16 %v1205
    %v2514 = vunpack.c.l.b16 %v1206
    %v2515 = vunpack.c.h.b16 %v1206
    %v2516 = vunpack.c.l.b16 %v1207
    %v2517 = vunpack.c.h.b16 %v1207
    %v2518 = vunpack.c.l.b16 %v1208
    %v2519 = vunpack.c.h.b16 %v1208
    %v2520 = vunpack.c.l.b16 %v1209
    %v2521 = vunpack.c.h.b16 %v1209
    %v2522 = vunpack.c.l.b16 %v1210
    %v2523 = vunpack.c.h.b16 %v1210
    %v2524 = vunpack.c.l.b16 %v1211
    %v2525 = vunpack.c.h.b16 %v1211
    %v2526 = vunpack.c.l.b16 %v1212
    %v2527 = vunpack.c.h.b16 %v1212
    %v2528 = vunpack.c.l.b16 %v1213
    %v2529 = vunpack.c.h.b16 %v1213
    %v2530 = vunpack.c.l.b16 %v1214
    %v2531 = vunpack.c.h.b16 %v1214
    %v2532 = vunpack.c.l.b16 %v1215
    %v2533 = vunpack.c.h.b16 %v1215
    %v2534 = vunpack.c.l.b16 %v1216
    %v2535 = vunpack.c.h.b16 %v1216
    %v2536 = vunpack.c.l.b16 %v1217
    %v2537 = vunpack.c.h.b16 %v1217
    %v2538 = vunpack.c.l.b16 %v1218
    %v2539 = vunpack.c.h.b16 %v1218
    %v2540 = vunpack.c.l.b16 %v1219
    %v2541 = vunpack.c.h.b16 %v1219
    %v2542 = vunpack.c.l.b16 %v1220
    %v2543 = vunpack.c.h.b16 %v1220
    %v2544 = vunpack.c.l.b16 %v1221
    %v2545 = vunpack.c.h.b16 %v1221
    %v2546 = vunpack.c.l.b16 %v1222
    %v2547 = vunpack.c.h.b16 %v1222
    %v2548 = vunpack.c.l.b16 %v1223
    %v2549 = vunpack.c.h.b16 %v1223
    %v2550 = vunpack.c.l.b16 %v1224
    %v2551 = vunpack.c.h.b16 %v1224
    %v2552 = vunpack.c.l.b16 %v1225
    %v2553 = vunpack.c.h.b16 %v1225
    %v2554 = vunpack.c.l.b16 %v1226
    %v2555 = vunpack.c.h.b16 %v1226
    %v2556 = vunpack.c.l.b16 %v1227
    %v2557 = vunpack.c.h.b16 %v1227
    %v2558 = vunpack.c.l.b16 %v1228
    %v2559 = vunpack.c.h.b16 %v1228
    %v2560 = vunpack.c.l.b16 %v1229
    %v2561 = vunpack.c.h.b16 %v1229
    %v2562 = vunpack.c.l.b16 %v1230
    %v2563 = vunpack.c.h.b16 %v1230
    %v2564 = vunpack.c.l.b16 %v1231
    %v2565 = vunpack.c.h.b16 %v1231
    %v2566 = vunpack.c.l.b16 %v1232
    %v2567 = vunpack.c.h.b16 %v1232
    %v2568 = vunpack.c.l.b16 %v1233
    %v2569 = vunpack.c.h.b16 %v1233
    %v2570 = vunpack.c.l.b16 %v1234
    %v2571 = vunpack.c.h.b16 %v1234
    %v2572 = vunpack.c.l.b16 %v1235
    %v2573 = vunpack.c.h.b16 %v1235
    %v2574 = vunpack.c.l.b16 %v1236
    %v2575 = vunpack.c.h.b16 %v1236
    %v2576 = vunpack.c.l.b16 %v1237
    %v2577 = vunpack.c.h.b16 %v1237
    %v2578 = vunpack.c.l.b16 %v1238
    %v2579 = vunpack.c.h.b16 %v1238
    %v2580 = vunpack.c.l.b16 %v1239
    %v2581 = vunpack.c.h.b16 %v1239
    %v2582 = vunpack.c.l.b16 %v1240
    %v2583 = vunpack.c.h.b16 %v1240
    %v2584 = vunpack.c.l.b16 %v1241
    %v2585 = vunpack.c.h.b16 %v1241
    %v2586 = vunpack.c.l.b16 %v1242
    %v2587 = vunpack.c.h.b16 %v1242
    %v2588 = vunpack.c.l.b16 %v1243
    %v2589 = vunpack.c.h.b16 %v1243
    %v2590 = vunpack.c.l.b16 %v1244
    %v2591 = vunpack.c.h.b16 %v1244
    %v2592 = vunpack.c.l.b16 %v1245
    %v2593 = vunpack.c.h.b16 %v1245
    %v2594 = vunpack.c.l.b16 %v1246
    %v2595 = vunpack.c.h.b16 %v1246
    %v2596 = vunpack.c.l.b16 %v1247
    %v2597 = vunpack.c.h.b16 %v1247
    %v2598 = vunpack.c.l.b16 %v1248
    %v2599 = vunpack.c.h.b16 %v1248
    %v2600 = vunpack.c.l.b16 %v1249
    %v2601 = vunpack.c.h.b16 %v1249
    %v2602 = vunpack.c.l.b16 %v1250
    %v2603 = vunpack.c.h.b16 %v1250
    %v2604 = vunpack.c.l.b16 %v1251
    %v2605 = vunpack.c.h.b16 %v1251
    %v2606 = vunpack.c.l.b16 %v1252
    %v2607 = vunpack.c.h.b16 %v1252
    %v2608 = vunpack.c.l.b16 %v1253
    %v2609 = vunpack.c.h.b16 %v1253
    %v2610 = vunpack.c.l.b16 %v1254
    %v2611 = vunpack.c.h.b16 %v1254
    %v2612 = vunpack.c.l.b16 %v1255
    %v2613 = vunpack.c.h.b16 %v1255
    %v2614 = vunpack.c.l.b16 %v1256
    %v2615 = vunpack.c.h.b16 %v1256
    %v2616 = vunpack.c.l.b16 %v1257
    %v2617 = vunpack.c.h.b16 %v1257
    %v2618 = vunpack.c.l.b16 %v1258
    %v2619 = vunpack.c.h.b16 %v1258
    %v2620 = vunpack.c.l.b16 %v1259
    %v2621 = vunpack.c.h.b16 %v1259
    %v2622 = vunpack.c.l.b16 %v1260
    %v2623 = vunpack.c.h.b16 %v1260
    %v2624 = vunpack.c.l.b16 %v1261
    %v2625 = vunpack.c.h.b16 %v1261
    %v2626 = vunpack.c.l.b16 %v1262
    %v2627 = vunpack.c.h.b16 %v1262
    %v2628 = vunpack.c.l.b16 %v1263
    %v2629 = vunpack.c.h.b16 %v1263
    %v2630 = vunpack.c.l.b16 %v1264
    %v2631 = vunpack.c.h.b16 %v1264
    %v2632 = vunpack.c.l.b16 %v1265
    %v2633 = vunpack.c.h.b16 %v1265
    %v2634 = vunpack.c.l.b16 %v1266
    %v2635 = vunpack.c.h.b16 %v1266
    %v2636 = vunpack.c.l.b16 %v1267
    %v2637 = vunpack.c.h.b16 %v1267
    %v2638 = vunpack.c.l.b16 %v1268
    %v2639 = vunpack.c.h.b16 %v1268
    %v2640 = vunpack.c.l.b16 %v1269
    %v2641 = vunpack.c.h.b16 %v1269
    %v2642 = vunpack.c.l.b16 %v1270
    %v2643 = vunpack.c.h.b16 %v1270
    %v2644 = vunpack.c.l.b16 %v1271
    %v2645 = vunpack.c.h.b16 %v1271
    %v2646 = vunpack.c.l.b16 %v1272
    %v2647 = vunpack.c.h.b16 %v1272
    %v2648 = vunpack.c.l.b16 %v1273
    %v2649 = vunpack.c.h.b16 %v1273
    %v2650 = vunpack.c.l.b16 %v1274
    %v2651 = vunpack.c.h.b16 %v1274
    %v2652 = vunpack.c.l.b16 %v1275
    %v2653 = vunpack.c.h.b16 %v1275
    %v2654 = vunpack.c.l.b16 %v1276
    %v2655 = vunpack.c.h.b16 %v1276
    %v2656 = vunpack.c.l.b16 %v1277
    %v2657 = vunpack.c.h.b16 %v1277
    %v2658 = vunpack.c.l.b16 %v1278
    %v2659 = vunpack.c.h.b16 %v1278
    %v2660 = vunpack.c.l.b16 %v1279
    %v2661 = vunpack.c.h.b16 %v1279
    %v2662 = vunpack.c.l.b16 %v1280
    %v2663 = vunpack.c.h.b16 %v1280
    %v2664 = vunpack.c.l.b16 %v1281
    %v2665 = vunpack.c.h.b16 %v1281
    %v2666 = vunpack.c.l.b16 %v1282
    %v2667 = vunpack.c.h.b16 %v1282
    %v2668 = vunpack.c.l.b16 %v1283
    %v2669 = vunpack.c.h.b16 %v1283
    %v2670 = vunpack.c.l.b16 %v1284
    %v2671 = vunpack.c.h.b16 %v1284
    %v2672 = vunpack.c.l.b16 %v1285
    %v2673 = vunpack.c.h.b16 %v1285
    %v2674 = vunpack.c.l.b16 %v1286
    %v2675 = vunpack.c.h.b16 %v1286
    %v2676 = vunpack.c.l.b16 %v1287
    %v2677 = vunpack.c.h.b16 %v1287
    %v2678 = vunpack.c.l.b16 %v1288
    %v2679 = vunpack.c.h.b16 %v1288
    %v2680 = vunpack.c.l.b16 %v1289
    %v2681 = vunpack.c.h.b16 %v1289
    %v2682 = vunpack.c.l.b16 %v1290
    %v2683 = vunpack.c.h.b16 %v1290
    %v2684 = vunpack.c.l.b16 %v1291
    %v2685 = vunpack.c.h.b16 %v1291
    %v2686 = vunpack.c.l.b16 %v1292
    %v2687 = vunpack.c.h.b16 %v1292
    %v2688 = vunpack.c.l.b16 %v1293
    %v2689 = vunpack.c.h.b16 %v1293
    %v2690 = vunpack.c.l.b16 %v1294
    %v2691 = vunpack.c.h.b16 %v1294
    %v2692 = vunpack.c.l.b16 %v1295
    %v2693 = vunpack.c.h.b16 %v1295
    %v2694 = vunpack.c.l.b16 %v1296
    %v2695 = vunpack.c.h.b16 %v1296
    %v2696 = vunpack.c.l.b16 %v1297
    %v2697 = vunpack.c.h.b16 %v1297
    %v2698 = vunpack.c.l.b16 %v1298
    %v2699 = vunpack.c.h.b16 %v1298
    %v2700 = vunpack.c.l.b16 %v1299
    %v2701 = vunpack.c.h.b16 %v1299
    %v2702 = vunpack.c.l.b16 %v1300
    %v2703 = vunpack.c.h.b16 %v1300
    %v2704 = vunpack.c.l.b16 %v1301
    %v2705 = vunpack.c.h.b16 %v1301
    %v2706 = vunpack.c.l.b16 %v1302
    %v2707 = vunpack.c.h.b16 %v1302
    %v2708 = vunpack.c.l.b16 %v1303
    %v2709 = vunpack.c.h.b16 %v1303
    %v2710 = vunpack.c.l.b16 %v1304
    %v2711 = vunpack.c.h.b16 %v1304
    %v2712 = vunpack.c.l.b16 %v1305
    %v2713 = vunpack.c.h.b16 %v1305
    %v2714 = vunpack.c.l.b16 %v1306
    %v2715 = vunpack.c.h.b16 %v1306
    %v2716 = vunpack.c.l.b16 %v1307
    %v2717 = vunpack.c.h.b16 %v1307
    %v2718 = vunpack.c.l.b16 %v1308
    %v2719 = vunpack.c.h.b16 %v1308
    %v2720 = vunpack.c.l.b16 %v1309
    %v2721 = vunpack.c.h.b16 %v1309
    %v2722 = vunpack.c.l.b16 %v1310
    %v2723 = vunpack.c.h.b16 %v1310
    %v2724 = vunpack.c.l.b16 %v1311
    %v2725 = vunpack.c.h.b16 %v1311
    %v2726 = vunpack.c.l.b16 %v1312
    %v2727 = vunpack.c.h.b16 %v1312
    %v2728 = vunpack.c.l.b16 %v1313
    %v2729 = vunpack.c.h.b16 %v1313
    %v2730 = vunpack.c.l.b16 %v1314
    %v2731 = vunpack.c.h.b16 %v1314
    %v2732 = vunpack.c.l.b16 %v1315
    %v2733 = vunpack.c.h.b16 %v1315
    %v2734 = vunpack.c.l.b16 %v1316
    %v2735 = vunpack.c.h.b16 %v1316
    %v2736 = vunpack.c.l.b16 %v1317
    %v2737 = vunpack.c.h.b16 %v1317
    %v2738 = vunpack.c.l.b16 %v1318
    %v2739 = vunpack.c.h.b16 %v1318
    %v2740 = vunpack.c.l.b16 %v1319
    %v2741 = vunpack.c.h.b16 %v1319
    %v2742 = vunpack.c.l.b16 %v1320
    %v2743 = vunpack.c.h.b16 %v1320
    %v2744 = vunpack.c.l.b16 %v1321
    %v2745 = vunpack.c.h.b16 %v1321
    %v2746 = vunpack.c.l.b16 %v1322
    %v2747 = vunpack.c.h.b16 %v1322
    %v2748 = vunpack.c.l.b16 %v1323
    %v2749 = vunpack.c.h.b16 %v1323
    %v2750 = vunpack.c.l.b16 %v1324
    %v2751 = vunpack.c.h.b16 %v1324
    %v2752 = vunpack.c.l.b16 %v1325
    %v2753 = vunpack.c.h.b16 %v1325
    %v2754 = vunpack.c.l.b16 %v1326
    %v2755 = vunpack.c.h.b16 %v1326
    %v2756 = vunpack.c.l.b16 %v1327
    %v2757 = vunpack.c.h.b16 %v1327
    %v2758 = vunpack.c.l.b16 %v1328
    %v2759 = vunpack.c.h.b16 %v1328
    %v2760 = vunpack.c.l.b16 %v1329
    %v2761 = vunpack.c.h.b16 %v1329
    %v2762 = vunpack.c.l.b16 %v1330
    %v2763 = vunpack.c.h.b16 %v1330
    %v2764 = vunpack.c.l.b16 %v1331
    %v2765 = vunpack.c.h.b16 %v1331
    %v2766 = vunpack.c.l.b16 %v1332
    %v2767 = vunpack.c.h.b16 %v1332
    %v2768 = vunpack.c.l.b16 %v1333
    %v2769 = vunpack.c.h.b16 %v1333
    %v2770 = vunpack.c.l.b16 %v1334
    %v2771 = vunpack.c.h.b16 %v1334
    %v2772 = vunpack.c.l.b16 %v1335
    %v2773 = vunpack.c.h.b16 %v1335
    %v2774 = vunpack.c.l.b16 %v1336
    %v2775 = vunpack.c.h.b16 %v1336
    %v2776 = vunpack.c.l.b16 %v1337
    %v2777 = vunpack.c.h.b16 %v1337
    %v2778 = vunpack.c.l.b16 %v1338
    %v2779 = vunpack.c.h.b16 %v1338
    %v2780 = vunpack.c.l.b16 %v1339
    %v2781 = vunpack.c.h.b16 %v1339
    %v2782 = vunpack.c.l.b16 %v1340
    %v2783 = vunpack.c.h.b16 %v1340
    %v2784 = vunpack.c.l.b16 %v1341
    %v2785 = vunpack.c.h.b16 %v1341
    %v2786 = vunpack.c.l.b16 %v1342
    %v2787 = vunpack.c.h.b16 %v1342
    %v2788 = vunpack.c.l.b16 %v1343
    %v2789 = vunpack.c.h.b16 %v1343
    %v2790 = vunpack.c.l.b16 %v1344
    %v2791 = vunpack.c.h.b16 %v1344
    %v2792 = vunpack.c.l.b16 %v1345
    %v2793 = vunpack.c.h.b16 %v1345
    %v2794 = vunpack.c.l.b16 %v1346
    %v2795 = vunpack.c.h.b16 %v1346
    %v2796 = vunpack.c.l.b16 %v1347
    %v2797 = vunpack.c.h.b16 %v1347
    %v2798 = vunpack.c.l.b16 %v1348
    %v2799 = vunpack.c.h.b16 %v1348
    %v2800 = vunpack.c.l.b16 %v1349
    %v2801 = vunpack.c.h.b16 %v1349
    %v2802 = vunpack.c.l.b16 %v1350
    %v2803 = vunpack.c.h.b16 %v1350
    %v2804 = vunpack.c.l.b16 %v1351
    %v2805 = vunpack.c.h.b16 %v1351
    %v2806 = vunpack.c.l.b16 %v1352
    %v2807 = vunpack.c.h.b16 %v1352
    %v2808 = vunpack.c.l.b16 %v1353
    %v2809 = vunpack.c.h.b16 %v1353
    %v2810 = vunpack.c.l.b16 %v1354
    %v2811 = vunpack.c.h.b16 %v1354
    %v2812 = vunpack.c.l.b16 %v1355
    %v2813 = vunpack.c.h.b16 %v1355
    %v2814 = vunpack.c.l.b16 %v1356
    %v2815 = vunpack.c.h.b16 %v1356
    %v2816 = vunpack.c.l.b16 %v1357
    %v2817 = vunpack.c.h.b16 %v1357
    %v2818 = vunpack.c.l.b16 %v1358
    %v2819 = vunpack.c.h.b16 %v1358
    %v2820 = vunpack.c.l.b16 %v1359
    %v2821 = vunpack.c.h.b16 %v1359
    %v2822 = vunpack.c.l.b16 %v1360
    %v2823 = vunpack.c.h.b16 %v1360
    %v2824 = vunpack.c.l.b16 %v1361
    %v2825 = vunpack.c.h.b16 %v1361
    %v2826 = vunpack.c.l.b16 %v1362
    %v2827 = vunpack.c.h.b16 %v1362
    %v2828 = vunpack.c.l.b16 %v1363
    %v2829 = vunpack.c.h.b16 %v1363
    %v2830 = vunpack.c.l.b16 %v1364
    %v2831 = vunpack.c.h.b16 %v1364
    %v2832 = vunpack.c.l.b16 %v1365
    %v2833 = vunpack.c.h.b16 %v1365
    %v2834 = vunpack.c.l.b16 %v1366
    %v2835 = vunpack.c.h.b16 %v1366
    %v2836 = vunpack.c.l.b16 %v1367
    %v2837 = vunpack.c.h.b16 %v1367
    %v2838 = vunpack.c.l.b16 %v1368
    %v2839 = vunpack.c.h.b16 %v1368
    %v2840 = vunpack.c.l.b16 %v1369
    %v2841 = vunpack.c.h.b16 %v1369
    %v2842 = vunpack.c.l.b16 %v1370
    %v2843 = vunpack.c.h.b16 %v1370
    %v2844 = vunpack.c.l.b16 %v1371
    %v2845 = vunpack.c.h.b16 %v1371
    %v2846 = vunpack.c.l.b16 %v1372
    %v2847 = vunpack.c.h.b16 %v1372
    %v2848 = vunpack.c.l.b16 %v1373
    %v2849 = vunpack.c.h.b16 %v1373
    %v2850 = vunpack.c.l.b16 %v1374
    %v2851 = vunpack.c.h.b16 %v1374
    %v2852 = vunpack.c.l.b16 %v1375
    %v2853 = vunpack.c.h.b16 %v1375
    %v2854 = vunpack.c.l.b16 %v1376
    %v2855 = vunpack.c.h.b16 %v1376
    %v2856 = vunpack.c.l.b16 %v1377
    %v2857 = vunpack.c.h.b16 %v1377
    %v2858 = vunpack.c.l.b16 %v1378
    %v2859 = vunpack.c.h.b16 %v1378
    %v2860 = vunpack.c.l.b16 %v1379
    %v2861 = vunpack.c.h.b16 %v1379
    %v2862 = vunpack.c.l.b16 %v1380
    %v2863 = vunpack.c.h.b16 %v1380
    %v2864 = vunpack.c.l.b16 %v1381
    %v2865 = vunpack.c.h.b16 %v1381
    %v2866 = vunpack.c.l.b16 %v1382
    %v2867 = vunpack.c.h.b16 %v1382
    %v2868 = vunpack.c.l.b16 %v1383
    %v2869 = vunpack.c.h.b16 %v1383
    %v2870 = vunpack.c.l.b16 %v1384
    %v2871 = vunpack.c.h.b16 %v1384
    %v2872 = vunpack.c.l.b16 %v1385
    %v2873 = vunpack.c.h.b16 %v1385
    %v2874 = vunpack.c.l.b16 %v1386
    %v2875 = vunpack.c.h.b16 %v1386
    %v2876 = vunpack.c.l.b16 %v1387
    %v2877 = vunpack.c.h.b16 %v1387
    %v2878 = vunpack.c.l.b16 %v1388
    %v2879 = vunpack.c.h.b16 %v1388
    %v2880 = vunpack.c.l.b16 %v1389
    %v2881 = vunpack.c.h.b16 %v1389
    %v2882 = vunpack.c.l.b16 %v1390
    %v2883 = vunpack.c.h.b16 %v1390
    %v2884 = vunpack.c.l.b16 %v1391
    %v2885 = vunpack.c.h.b16 %v1391
    %v2886 = vunpack.c.l.b16 %v1392
    %v2887 = vunpack.c.h.b16 %v1392
    %v2888 = vunpack.c.l.b16 %v1393
    %v2889 = vunpack.c.h.b16 %v1393
    %v2890 = vunpack.c.l.b16 %v1394
    %v2891 = vunpack.c.h.b16 %v1394
    %v2892 = vunpack.c.l.b16 %v1395
    %v2893 = vunpack.c.h.b16 %v1395
    %v2894 = vunpack.c.l.b16 %v1396
    %v2895 = vunpack.c.h.b16 %v1396
    %v2896 = vunpack.c.l.b16 %v1397
    %v2897 = vunpack.c.h.b16 %v1397
    %v2898 = vunpack.c.l.b16 %v1398
    %v2899 = vunpack.c.h.b16 %v1398
    %v2900 = vunpack.c.l.b16 %v1399
    %v2901 = vunpack.c.h.b16 %v1399
    %v2902 = vunpack.c.l.b16 %v1400
    %v2903 = vunpack.c.h.b16 %v1400
    %v2904 = vunpack.c.l.b16 %v1401
    %v2905 = vunpack.c.h.b16 %v1401
    %v2906 = vunpack.c.l.b16 %v1402
    %v2907 = vunpack.c.h.b16 %v1402
    %v2908 = vunpack.c.l.b16 %v1403
    %v2909 = vunpack.c.h.b16 %v1403
    %v2910 = vunpack.c.l.b16 %v1404
    %v2911 = vunpack.c.h.b16 %v1404
    %v2912 = vunpack.c.l.b16 %v1405
    %v2913 = vunpack.c.h.b16 %v1405
    %v2914 = vunpack.c.l.b16 %v1406
    %v2915 = vunpack.c.h.b16 %v1406
    %v2916 = vunpack.c.l.b16 %v1407
    %v2917 = vunpack.c.h.b16 %v1407
    %v2918 = vunpack.c.l.b16 %v1408
    %v2919 = vunpack.c.h.b16 %v1408
    %v2920 = vunpack.c.l.b16 %v1409
    %v2921 = vunpack.c.h.b16 %v1409
    %v2922 = vunpack.c.l.b16 %v1410
    %v2923 = vunpack.c.h.b16 %v1410
    %v2924 = vunpack.c.l.b16 %v1411
    %v2925 = vunpack.c.h.b16 %v1411
    %v2926 = vunpack.c.l.b16 %v1412
    %v2927 = vunpack.c.h.b16 %v1412
    %v2928 = vunpack.c.l.b16 %v1413
    %v2929 = vunpack.c.h.b16 %v1413
    %v2930 = vunpack.c.l.b16 %v1414
    %v2931 = vunpack.c.h.b16 %v1414
    %v2932 = vunpack.c.l.b16 %v1415
    %v2933 = vunpack.c.h.b16 %v1415
    %v2934 = vunpack.c.l.b16 %v1416
    %v2935 = vunpack.c.h.b16 %v1416
    %v2936 = vunpack.c.l.b16 %v1417
    %v2937 = vunpack.c.h.b16 %v1417
    %v2938 = vunpack.c.l.b16 %v1418
    %v2939 = vunpack.c.h.b16 %v1418
    %v2940 = vunpack.c.l.b16 %v1419
    %v2941 = vunpack.c.h.b16 %v1419
    %v2942 = vunpack.c.l.b16 %v1420
    %v2943 = vunpack.c.h.b16 %v1420
    %v2944 = vunpack.c.l.b16 %v1421
    %v2945 = vunpack.c.h.b16 %v1421
    %v2946 = vunpack.c.l.b16 %v1422
    %v2947 = vunpack.c.h.b16 %v1422
    %v2948 = vunpack.c.l.b16 %v1423
    %v2949 = vunpack.c.h.b16 %v1423
    %v2950 = vunpack.c.l.b16 %v1424
    %v2951 = vunpack.c.h.b16 %v1424
    %v2952 = vunpack.c.l.b16 %v1425
    %v2953 = vunpack.c.h.b16 %v1425
    %v2954 = vunpack.c.l.b16 %v1426
    %v2955 = vunpack.c.h.b16 %v1426
    %v2956 = vunpack.c.l.b16 %v1427
    %v2957 = vunpack.c.h.b16 %v1427
    %v2958 = vunpack.c.l.b16 %v1428
    %v2959 = vunpack.c.h.b16 %v1428
    %v2960 = vunpack.c.l.b16 %v1429
    %v2961 = vunpack.c.h.b16 %v1429
    %v2962 = vunpack.c.l.b16 %v1430
    %v2963 = vunpack.c.h.b16 %v1430
    %v2964 = vunpack.c.l.b16 %v1431
    %v2965 = vunpack.c.h.b16 %v1431
    %v2966 = vunpack.c.l.b16 %v1432
    %v2967 = vunpack.c.h.b16 %v1432
    %v2968 = vunpack.c.l.b16 %v1433
    %v2969 = vunpack.c.h.b16 %v1433
    %v2970 = vunpack.c.l.b16 %v1434
    %v2971 = vunpack.c.h.b16 %v1434
    %v2972 = vunpack.c.l.b16 %v1435
    %v2973 = vunpack.c.h.b16 %v1435
    %v2974 = vunpack.c.l.b16 %v1436
    %v2975 = vunpack.c.h.b16 %v1436
    %v2976 = vunpack.c.l.b16 %v1437
    %v2977 = vunpack.c.h.b16 %v1437
    %v2978 = vunpack.c.l.b16 %v1438
    %v2979 = vunpack.c.h.b16 %v1438
    %v2980 = vunpack.c.l.b16 %v1439
    %v2981 = vunpack.c.h.b16 %v1439
    %v2982 = vunpack.c.l.b16 %v1440
    %v2983 = vunpack.c.h.b16 %v1440
    %v2984 = vunpack.c.l.b16 %v1441
    %v2985 = vunpack.c.h.b16 %v1441
    %v2986 = vunpack.c.l.b16 %v1442
    %v2987 = vunpack.c.h.b16 %v1442
    %v2988 = vunpack.c.l.b16 %v1443
    %v2989 = vunpack.c.h.b16 %v1443
    %v2990 = vunpack.c.l.b16 %v1444
    %v2991 = vunpack.c.h.b16 %v1444
    %v2992 = vunpack.c.l.b16 %v1445
    %v2993 = vunpack.c.h.b16 %v1445
    %v2994 = vunpack.c.l.b16 %v1446
    %v2995 = vunpack.c.h.b16 %v1446
    %v2996 = vunpack.c.l.b16 %v1447
    %v2997 = vunpack.c.h.b16 %v1447
    %v2998 = vunpack.c.l.b16 %v1448
    %v2999 = vunpack.c.h.b16 %v1448
    %v3000 = vunpack.c.l.b16 %v1449
    %v3001 = vunpack.c.h.b16 %v1449
    %v3002 = vunpack.c.l.b16 %v1450
    %v3003 = vunpack.c.h.b16 %v1450
    %v3004 = vunpack.c.l.b16 %v1451
    %v3005 = vunpack.c.h.b16 %v1451
    %v3006 = vunpack.c.l.b16 %v1452
    %v3007 = vunpack.c.h.b16 %v1452
    %v3008 = vunpack.c.l.b16 %v1453
    %v3009 = vunpack.c.h.b16 %v1453
    %v3010 = vunpack.c.l.b16 %v1454
    %v3011 = vunpack.c.h.b16 %v1454
    %v3012 = vunpack.c.l.b16 %v1455
    %v3013 = vunpack.c.h.b16 %v1455
    %v3014 = vunpack.c.l.b16 %v1456
    %v3015 = vunpack.c.h.b16 %v1456
    %v3016 = vunpack.c.l.b16 %v1457
    %v3017 = vunpack.c.h.b16 %v1457
    %v3018 = vunpack.c.l.b16 %v1458
    %v3019 = vunpack.c.h.b16 %v1458
    %v3020 = vunpack.c.l.b16 %v1459
    %v3021 = vunpack.c.h.b16 %v1459
    %v3022 = vunpack.c.l.b16 %v1460
    %v3023 = vunpack.c.h.b16 %v1460
    %v3024 = vunpack.c.l.b16 %v1461
    %v3025 = vunpack.c.h.b16 %v1461
    %v3026 = vunpack.c.l.b16 %v1462
    %v3027 = vunpack.c.h.b16 %v1462
    %v3028 = vunpack.c.l.b16 %v1463
    %v3029 = vunpack.c.h.b16 %v1463
    %v3030 = vunpack.c.l.b16 %v1464
    %v3031 = vunpack.c.h.b16 %v1464
    %v3032 = vunpack.c.l.b16 %v1465
    %v3033 = vunpack.c.h.b16 %v1465
    %v3034 = vunpack.c.l.b16 %v1466
    %v3035 = vunpack.c.h.b16 %v1466
    %v3036 = vunpack.c.l.b16 %v1467
    %v3037 = vunpack.c.h.b16 %v1467
    %v3038 = vunpack.c.l.b16 %v1468
    %v3039 = vunpack.c.h.b16 %v1468
    %v3040 = vunpack.c.l.b16 %v1469
    %v3041 = vunpack.c.h.b16 %v1469
    %v3042 = vunpack.c.l.b16 %v1470
    %v3043 = vunpack.c.h.b16 %v1470
    %v3044 = vunpack.c.l.b16 %v1471
    %v3045 = vunpack.c.h.b16 %v1471
    %v3046 = vunpack.c.l.b16 %v1472
    %v3047 = vunpack.c.h.b16 %v1472
    %v3048 = vunpack.c.l.b16 %v1473
    %v3049 = vunpack.c.h.b16 %v1473
    %v3050 = vunpack.c.l.b16 %v1474
    %v3051 = vunpack.c.h.b16 %v1474
    %v3052 = vunpack.c.l.b16 %v1475
    %v3053 = vunpack.c.h.b16 %v1475
    %v3054 = vpack.c.b16 %v2038, %v2030
    %v3055 = vpack.c.b16 %v2039, %v2031
    %v3056 = vpack.c.b16 %v2040, %v2032
    %v3057 = vpack.c.b16 %v2041, %v2033
    %v3058 = vpack.c.b16 %v2042, %v2034
    %v3059 = vpack.c.b16 %v2043, %v2035
    %v3060 = vpack.c.b16 %v2044, %v2036
    %v3061 = vpack.c.b16 %v2045, %v2037
    %v3062 = vpack.c.b16 %v2054, %v2046
    %v3063 = vpack.c.b16 %v2055, %v2047
    %v3064 = vpack.c.b16 %v2056, %v2048
    %v3065 = vpack.c.b16 %v2057, %v2049
    %v3066 = vpack.c.b16 %v2058, %v2050
    %v3067 = vpack.c.b16 %v2059, %v2051
    %v3068 = vpack.c.b16 %v2060, %v2052
    %v3069 = vpack.c.b16 %v2061, %v2053
    %v3070 = vpack.c.b16 %v2070, %v2062
    %v3071 = vpack.c.b16 %v2071, %v2063
    %v3072 = vpack.c.b16 %v2072, %v2064
    %v3073 = vpack.c.b16 %v2073, %v2065
    %v3074 = vpack.c.b16 %v2074, %v2066
    %v3075 = vpack.c.b16 %v2075, %v2067
    %v3076 = vpack.c.b16 %v2076, %v2068
    %v3077 = vpack.c.b16 %v2077, %v2069
    %v3078 = vpack.c.b16 %v2086, %v2078
    %v3079 = vpack.c.b16 %v2087, %v2079
    %v3080 = vpack.c.b16 %v2088, %v2080
    %v3081 = vpack.c.b16 %v2089, %v2081
    %v3082 = vpack.c.b16 %v2090, %v2082
    %v3083 = vpack.c.b16 %v2091, %v2083
    %v3084 = vpack.c.b16 %v2092, %v2084
    %v3085 = vpack.c.b16 %v2093, %v2085
    %v3086 = vpack.c.b16 %v2102, %v2094
    %v3087 = vpack.c.b16 %v2103, %v2095
    %v3088 = vpack.c.b16 %v2104, %v2096
    %v3089 = vpack.c.b16 %v2105, %v2097
    %v3090 = vpack.c.b16 %v2106, %v2098
    %v3091 = vpack.c.b16 %v2107, %v2099
    %v3092 = vpack.c.b16 %v2108, %v2100
    %v3093 = vpack.c.b16 %v2109, %v2101
    %v3094 = vpack.c.b16 %v2118, %v2110
    %v3095 = vpack.c.b16 %v2119, %v2111
    %v3096 = vpack.c.b16 %v2120, %v2112
    %v3097 = vpack.c.b16 %v2121, %v2113
    %v3098 = vpack.c.b16 %v2122, %v2114
    %v3099 = vpack.c.b16 %v2123, %v2115
    %v3100 = vpack.c.b16 %v2124, %v2116
    %v3101 = vpack.c.b16 %v2125, %v2117
    %v3102 = vpack.c.b16 %v2134, %v2126
    %v3103 = vpack.c.b16 %v2135, %v2127
    %v3104 = vpack.c.b16 %v2136, %v2128
    %v3105 = vpack.c.b16 %v2137, %v2129
    %v3106 = vpack.c.b16 %v2138, %v2130
    %v3107 = vpack.c.b16 %v2139, %v2131
    %v3108 = vpack.c.b16 %v2140, %v2132
    %v3109 = vpack.c.b16 %v2141, %v2133
    %v3110 = vpack.c.b16 %v2150, %v2142
    %v3111 = vpack.c.b16 %v2151, %v2143
    %v3112 = vpack.c.b16 %v2152, %v2144
    %v3113 = vpack.c.b16 %v2153, %v2145
    %v3114 = vpack.c.b16 %v2154, %v2146
    %v3115 = vpack.c.b16 %v2155, %v2147
    %v3116 = vpack.c.b16 %v2156, %v2148
    %v3117 = vpack.c.b16 %v2157, %v2149
    %v3118 = vpack.c.b16 %v2166, %v2158
    %v3119 = vpack.c.b16 %v2167, %v2159
    %v3120 = vpack.c.b16 %v2168, %v2160
    %v3121 = vpack.c.b16 %v2169, %v2161
    %v3122 = vpack.c.b16 %v2170, %v2162
    %v3123 = vpack.c.b16 %v2171, %v2163
    %v3124 = vpack.c.b16 %v2172, %v2164
    %v3125 = vpack.c.b16 %v2173, %v2165
    %v3126 = vpack.c.b16 %v2182, %v2174
    %v3127 = vpack.c.b16 %v2183, %v2175
    %v3128 = vpack.c.b16 %v2184, %v2176
    %v3129 = vpack.c.b16 %v2185, %v2177
    %v3130 = vpack.c.b16 %v2186, %v2178
    %v3131 = vpack.c.b16 %v2187, %v2179
    %v3132 = vpack.c.b16 %v2188, %v2180
    %v3133 = vpack.c.b16 %v2189, %v2181
    %v3134 = vpack.c.b16 %v2198, %v2190
    %v3135 = vpack.c.b16 %v2199, %v2191
    %v3136 = vpack.c.b16 %v2200, %v2192
    %v3137 = vpack.c.b16 %v2201, %v2193
    %v3138 = vpack.c.b16 %v2202, %v2194
    %v3139 = vpack.c.b16 %v2203, %v2195
    %v3140 = vpack.c.b16 %v2204, %v2196
    %v3141 = vpack.c.b16 %v2205, %v2197
    %v3142 = vpack.c.b16 %v2214, %v2206
    %v3143 = vpack.c.b16 %v2215, %v2207
    %v3144 = vpack.c.b16 %v2216, %v2208
    %v3145 = vpack.c.b16 %v2217, %v2209
    %v3146 = vpack.c.b16 %v2218, %v2210
    %v3147 = vpack.c.b16 %v2219, %v2211
    %v3148 = vpack.c.b16 %v2220, %v2212
    %v3149 = vpack.c.b16 %v2221, %v2213
    %v3150 = vpack.c.b16 %v2230, %v2222
    %v3151 = vpack.c.b16 %v2231, %v2223
    %v3152 = vpack.c.b16 %v2232, %v2224
    %v3153 = vpack.c.b16 %v2233, %v2225
    %v3154 = vpack.c.b16 %v2234, %v2226
    %v3155 = vpack.c.b16 %v2235, %v2227
    %v3156 = vpack.c.b16 %v2236, %v2228
    %v3157 = vpack.c.b16 %v2237, %v2229
    %v3158 = vpack.c.b16 %v2246, %v2238
    %v3159 = vpack.c.b16 %v2247, %v2239
    %v3160 = vpack.c.b16 %v2248, %v2240
    %v3161 = vpack.c.b16 %v2249, %v2241
    %v3162 = vpack.c.b16 %v2250, %v2242
    %v3163 = vpack.c.b16 %v2251, %v2243
    %v3164 = vpack.c.b16 %v2252, %v2244
    %v3165 = vpack.c.b16 %v2253, %v2245
    %v3166 = vpack.c.b16 %v2262, %v2254
    %v3167 = vpack.c.b16 %v2263, %v2255
    %v3168 = vpack.c.b16 %v2264, %v2256
    %v3169 = vpack.c.b16 %v2265, %v2257
    %v3170 = vpack.c.b16 %v2266, %v2258
    %v3171 = vpack.c.b16 %v2267, %v2259
    %v3172 = vpack.c.b16 %v2268, %v2260
    %v3173 = vpack.c.b16 %v2269, %v2261
    %v3174 = vpack.c.b16 %v2278, %v2270
    %v3175 = vpack.c.b16 %v2279, %v2271
    %v3176 = vpack.c.b16 %v2280, %v2272
    %v3177 = vpack.c.b16 %v2281, %v2273
    %v3178 = vpack.c.b16 %v2282, %v2274
    %v3179 = vpack.c.b16 %v2283, %v2275
    %v3180 = vpack.c.b16 %v2284, %v2276
    %v3181 = vpack.c.b16 %v2285, %v2277
    %v3182 = vpack.c.b16 %v2294, %v2286
    %v3183 = vpack.c.b16 %v2295, %v2287
    %v3184 = vpack.c.b16 %v2296, %v2288
    %v3185 = vpack.c.b16 %v2297, %v2289
    %v3186 = vpack.c.b16 %v2298, %v2290
    %v3187 = vpack.c.b16 %v2299, %v2291
    %v3188 = vpack.c.b16 %v2300, %v2292
    %v3189 = vpack.c.b16 %v2301, %v2293
    %v3190 = vpack.c.b16 %v2310, %v2302
    %v3191 = vpack.c.b16 %v2311, %v2303
    %v3192 = vpack.c.b16 %v2312, %v2304
    %v3193 = vpack.c.b16 %v2313, %v2305
    %v3194 = vpack.c.b16 %v2314, %v2306
    %v3195 = vpack.c.b16 %v2315, %v2307
    %v3196 = vpack.c.b16 %v2316, %v2308
    %v3197 = vpack.c.b16 %v2317, %v2309
    %v3198 = vpack.c.b16 %v2326, %v2318
    %v3199 = vpack.c.b16 %v2327, %v2319
    %v3200 = vpack.c.b16 %v2328, %v2320
    %v3201 = vpack.c.b16 %v2329, %v2321
    %v3202 = vpack.c.b16 %v2330, %v2322
    %v3203 = vpack.c.b16 %v2331, %v2323
    %v3204 = vpack.c.b16 %v2332, %v2324
    %v3205 = vpack.c.b16 %v2333, %v2325
    %v3206 = vpack.c.b16 %v2342, %v2334
    %v3207 = vpack.c.b16 %v2343, %v2335
    %v3208 = vpack.c.b16 %v2344, %v2336
    %v3209 = vpack.c.b16 %v2345, %v2337
    %v3210 = vpack.c.b16 %v2346, %v2338
    %v3211 = vpack.c.b16 %v2347, %v2339
    %v3212 = vpack.c.b16 %v2348, %v2340
    %v3213 = vpack.c.b16 %v2349, %v2341
    %v3214 = vpack.c.b16 %v2358, %v2350
    %v3215 = vpack.c.b16 %v2359, %v2351
    %v3216 = vpack.c.b16 %v2360, %v2352
    %v3217 = vpack.c.b16 %v2361, %v2353
    %v3218 = vpack.c.b16 %v2362, %v2354
    %v3219 = vpack.c.b16 %v2363, %v2355
    %v3220 = vpack.c.b16 %v2364, %v2356
    %v3221 = vpack.c.b16 %v2365, %v2357
    %v3222 = vpack.c.b16 %v2374, %v2366
    %v3223 = vpack.c.b16 %v2375, %v2367
    %v3224 = vpack.c.b16 %v2376, %v2368
    %v3225 = vpack.c.b16 %v2377, %v2369
    %v3226 = vpack.c.b16 %v2378, %v2370
    %v3227 = vpack.c.b16 %v2379, %v2371
    %v3228 = vpack.c.b16 %v2380, %v2372
    %v3229 = vpack.c.b16 %v2381, %v2373
    %v3230 = vpack.c.b16 %v2390, %v2382
    %v3231 = vpack.c.b16 %v2391, %v2383
    %v3232 = vpack.c.b16 %v2392, %v2384
    %v3233 = vpack.c.b16 %v2393, %v2385
    %v3234 = vpack.c.b16 %v2394, %v2386
    %v3235 = vpack.c.b16 %v2395, %v2387
    %v3236 = vpack.c.b16 %v2396, %v2388
    %v3237 = vpack.c.b16 %v2397, %v2389
    %v3238 = vpack.c.b16 %v2406, %v2398
    %v3239 = vpack.c.b16 %v2407, %v2399
    %v3240 = vpack.c.b16 %v2408, %v2400
    %v3241 = vpack.c.b16 %v2409, %v2401
    %v3242 = vpack.c.b16 %v2410, %v2402
    %v3243 = vpack.c.b16 %v2411, %v2403
    %v3244 = vpack.c.b16 %v2412, %v2404
    %v3245 = vpack.c.b16 %v2413, %v2405
    %v3246 = vpack.c.b16 %v2422, %v2414
    %v3247 = vpack.c.b16 %v2423, %v2415
    %v3248 = vpack.c.b16 %v2424, %v2416
    %v3249 = vpack.c.b16 %v2425, %v2417
    %v3250 = vpack.c.b16 %v2426, %v2418
    %v3251 = vpack.c.b16 %v2427, %v2419
    %v3252 = vpack.c.b16 %v2428, %v2420
    %v3253 = vpack.c.b16 %v2429, %v2421
    %v3254 = vpack.c.b16 %v2438, %v2430
    %v3255 = vpack.c.b16 %v2439, %v2431
    %v3256 = vpack.c.b16 %v2440, %v2432
    %v3257 = vpack.c.b16 %v2441, %v2433
    %v3258 = vpack.c.b16 %v2442, %v2434
    %v3259 = vpack.c.b16 %v2443, %v2435
    %v3260 = vpack.c.b16 %v2444, %v2436
    %v3261 = vpack.c.b16 %v2445, %v2437
    %v3262 = vpack.c.b16 %v2454, %v2446
    %v3263 = vpack.c.b16 %v2455, %v2447
    %v3264 = vpack.c.b16 %v2456, %v2448
    %v3265 = vpack.c.b16 %v2457, %v2449
    %v3266 = vpack.c.b16 %v2458, %v2450
    %v3267 = vpack.c.b16 %v2459, %v2451
    %v3268 = vpack.c.b16 %v2460, %v2452
    %v3269 = vpack.c.b16 %v2461, %v2453
    %v3270 = vpack.c.b16 %v2470, %v2462
    %v3271 = vpack.c.b16 %v2471, %v2463
    %v3272 = vpack.c.b16 %v2472, %v2464
    %v3273 = vpack.c.b16 %v2473, %v2465
    %v3274 = vpack.c.b16 %v2474, %v2466
    %v3275 = vpack.c.b16 %v2475, %v2467
    %v3276 = vpack.c.b16 %v2476, %v2468
    %v3277 = vpack.c.b16 %v2477, %v2469
    %v3278 = vpack.c.b16 %v2486, %v2478
    %v3279 = vpack.c.b16 %v2487, %v2479
    %v3280 = vpack.c.b16 %v2488, %v2480
    %v3281 = vpack.c.b16 %v2489, %v2481
    %v3282 = vpack.c.b16 %v2490, %v2482
    %v3283 = vpack.c.b16 %v2491, %v2483
    %v3284 = vpack.c.b16 %v2492, %v2484
    %v3285 = vpack.c.b16 %v2493, %v2485
    %v3286 = vpack.c.b16 %v2502, %v2494
    %v3287 = vpack.c.b16 %v2503, %v2495
    %v3288 = vpack.c.b16 %v2504, %v2496
    %v3289 = vpack.c.b16 %v2505, %v2497
    %v3290 = vpack.c.b16 %v2506, %v2498
    %v3291 = vpack.c.b16 %v2507, %v2499
    %v3292 = vpack.c.b16 %v2508, %v2500
    %v3293 = vpack.c.b16 %v2509, %v2501
    %v3294 = vpack.c.b16 %v2518, %v2510
    %v3295 = vpack.c.b16 %v2519, %v2511
    %v3296 = vpack.c.b16 %v2520, %v2512
    %v3297 = vpack.c.b16 %v2521, %v2513
    %v3298 = vpack.c.b16 %v2522, %v2514
    %v3299 = vpack.c.b16 %v2523, %v2515
    %v3300 = vpack.c.b16 %v2524, %v2516
    %v3301 = vpack.c.b16 %v2525, %v2517
    %v3302 = vpack.c.b16 %v2534, %v2526
    %v3303 = vpack.c.b16 %v2535, %v2527
    %v3304 = vpack.c.b16 %v2536, %v2528
    %v3305 = vpack.c.b16 %v2537, %v2529
    %v3306 = vpack.c.b16 %v2538, %v2530
    %v3307 = vpack.c.b16 %v2539, %v2531
    %v3308 = vpack.c.b16 %v2540, %v2532
    %v3309 = vpack.c.b16 %v2541, %v2533
    %v3310 = vpack.c.b16 %v2550, %v2542
    %v3311 = vpack.c.b16 %v2551, %v2543
    %v3312 = vpack.c.b16 %v2552, %v2544
    %v3313 = vpack.c.b16 %v2553, %v2545
    %v3314 = vpack.c.b16 %v2554, %v2546
    %v3315 = vpack.c.b16 %v2555, %v2547
    %v3316 = vpack.c.b16 %v2556, %v2548
    %v3317 = vpack.c.b16 %v2557, %v2549
    %v3318 = vpack.c.b16 %v2566, %v2558
    %v3319 = vpack.c.b16 %v2567, %v2559
    %v3320 = vpack.c.b16 %v2568, %v2560
    %v3321 = vpack.c.b16 %v2569, %v2561
    %v3322 = vpack.c.b16 %v2570, %v2562
    %v3323 = vpack.c.b16 %v2571, %v2563
    %v3324 = vpack.c.b16 %v2572, %v2564
    %v3325 = vpack.c.b16 %v2573, %v2565
    %v3326 = vpack.c.b16 %v2582, %v2574
    %v3327 = vpack.c.b16 %v2583, %v2575
    %v3328 = vpack.c.b16 %v2584, %v2576
    %v3329 = vpack.c.b16 %v2585, %v2577
    %v3330 = vpack.c.b16 %v2586, %v2578
    %v3331 = vpack.c.b16 %v2587, %v2579
    %v3332 = vpack.c.b16 %v2588, %v2580
    %v3333 = vpack.c.b16 %v2589, %v2581
    %v3334 = vpack.c.b16 %v2598, %v2590
    %v3335 = vpack.c.b16 %v2599, %v2591
    %v3336 = vpack.c.b16 %v2600, %v2592
    %v3337 = vpack.c.b16 %v2601, %v2593
    %v3338 = vpack.c.b16 %v2602, %v2594
    %v3339 = vpack.c.b16 %v2603, %v2595
    %v3340 = vpack.c.b16 %v2604, %v2596
    %v3341 = vpack.c.b16 %v2605, %v2597
    %v3342 = vpack.c.b16 %v2614, %v2606
    %v3343 = vpack.c.b16 %v2615, %v2607
    %v3344 = vpack.c.b16 %v2616, %v2608
    %v3345 = vpack.c.b16 %v2617, %v2609
    %v3346 = vpack.c.b16 %v2618, %v2610
    %v3347 = vpack.c.b16 %v2619, %v2611
    %v3348 = vpack.c.b16 %v2620, %v2612
    %v3349 = vpack.c.b16 %v2621, %v2613
    %v3350 = vpack.c.b16 %v2630, %v2622
    %v3351 = vpack.c.b16 %v2631, %v2623
    %v3352 = vpack.c.b16 %v2632, %v2624
    %v3353 = vpack.c.b16 %v2633, %v2625
    %v3354 = vpack.c.b16 %v2634, %v2626
    %v3355 = vpack.c.b16 %v2635, %v2627
    %v3356 = vpack.c.b16 %v2636, %v2628
    %v3357 = vpack.c.b16 %v2637, %v2629
    %v3358 = vpack.c.b16 %v2646, %v2638
    %v3359 = vpack.c.b16 %v2647, %v2639
    %v3360 = vpack.c.b16 %v2648, %v2640
    %v3361 = vpack.c.b16 %v2649, %v2641
    %v3362 = vpack.c.b16 %v2650, %v2642
    %v3363 = vpack.c.b16 %v2651, %v2643
    %v3364 = vpack.c.b16 %v2652, %v2644
    %v3365 = vpack.c.b16 %v2653, %v2645
    %v3366 = vpack.c.b16 %v2662, %v2654
    %v3367 = vpack.c.b16 %v2663, %v2655
    %v3368 = vpack.c.b16 %v2664, %v2656
    %v3369 = vpack.c.b16 %v2665, %v2657
    %v3370 = vpack.c.b16 %v2666, %v2658
    %v3371 = vpack.c.b16 %v2667, %v2659
    %v3372 = vpack.c.b16 %v2668, %v2660
    %v3373 = vpack.c.b16 %v2669, %v2661
    %v3374 = vpack.c.b16 %v2678, %v2670
    %v3375 = vpack.c.b16 %v2679, %v2671
    %v3376 = vpack.c.b16 %v2680, %v2672
    %v3377 = vpack.c.b16 %v2681, %v2673
    %v3378 = vpack.c.b16 %v2682, %v2674
    %v3379 = vpack.c.b16 %v2683, %v2675
    %v3380 = vpack.c.b16 %v2684, %v2676
    %v3381 = vpack.c.b16 %v2685, %v2677
    %v3382 = vpack.c.b16 %v2694, %v2686
    %v3383 = vpack.c.b16 %v2695, %v2687
    %v3384 = vpack.c.b16 %v2696, %v2688
    %v3385 = vpack.c.b16 %v2697, %v2689
    %v3386 = vpack.c.b16 %v2698, %v2690
    %v3387 = vpack.c.b16 %v2699, %v2691
    %v3388 = vpack.c.b16 %v2700, %v2692
    %v3389 = vpack.c.b16 %v2701, %v2693
    %v3390 = vpack.c.b16 %v2710, %v2702
    %v3391 = vpack.c.b16 %v2711, %v2703
    %v3392 = vpack.c.b16 %v2712, %v2704
    %v3393 = vpack.c.b16 %v2713, %v2705
    %v3394 = vpack.c.b16 %v2714, %v2706
    %v3395 = vpack.c.b16 %v2715, %v2707
    %v3396 = vpack.c.b16 %v2716, %v2708
    %v3397 = vpack.c.b16 %v2717, %v2709
    %v3398 = vpack.c.b16 %v2726, %v2718
    %v3399 = vpack.c.b16 %v2727, %v2719
    %v3400 = vpack.c.b16 %v2728, %v2720
    %v3401 = vpack.c.b16 %v2729, %v2721
    %v3402 = vpack.c.b16 %v2730, %v2722
    %v3403 = vpack.c.b16 %v2731, %v2723
    %v3404 = vpack.c.b16 %v2732, %v2724
    %v3405 = vpack.c.b16 %v2733, %v2725
    %v3406 = vpack.c.b16 %v2742, %v2734
    %v3407 = vpack.c.b16 %v2743, %v2735
    %v3408 = vpack.c.b16 %v2744, %v2736
    %v3409 = vpack.c.b16 %v2745, %v2737
    %v3410 = vpack.c.b16 %v2746, %v2738
    %v3411 = vpack.c.b16 %v2747, %v2739
    %v3412 = vpack.c.b16 %v2748, %v2740
    %v3413 = vpack.c.b16 %v2749, %v2741
    %v3414 = vpack.c.b16 %v2758, %v2750
    %v3415 = vpack.c.b16 %v2759, %v2751
    %v3416 = vpack.c.b16 %v2760, %v2752
    %v3417 = vpack.c.b16 %v2761, %v2753
    %v3418 = vpack.c.b16 %v2762, %v2754
    %v3419 = vpack.c.b16 %v2763, %v2755
    %v3420 = vpack.c.b16 %v2764, %v2756
    %v3421 = vpack.c.b16 %v2765, %v2757
    %v3422 = vpack.c.b16 %v2774, %v2766
    %v3423 = vpack.c.b16 %v2775, %v2767
    %v3424 = vpack.c.b16 %v2776, %v2768
    %v3425 = vpack.c.b16 %v2777, %v2769
    %v3426 = vpack.c.b16 %v2778, %v2770
    %v3427 = vpack.c.b16 %v2779, %v2771
    %v3428 = vpack.c.b16 %v2780, %v2772
    %v3429 = vpack.c.b16 %v2781, %v2773
    %v3430 = vpack.c.b16 %v2790, %v2782
    %v3431 = vpack.c.b16 %v2791, %v2783
    %v3432 = vpack.c.b16 %v2792, %v2784
    %v3433 = vpack.c.b16 %v2793, %v2785
    %v3434 = vpack.c.b16 %v2794, %v2786
    %v3435 = vpack.c.b16 %v2795, %v2787
    %v3436 = vpack.c.b16 %v2796, %v2788
    %v3437 = vpack.c.b16 %v2797, %v2789
    %v3438 = vpack.c.b16 %v2806, %v2798
    %v3439 = vpack.c.b16 %v2807, %v2799
    %v3440 = vpack.c.b16 %v2808, %v2800
    %v3441 = vpack.c.b16 %v2809, %v2801
    %v3442 = vpack.c.b16 %v2810, %v2802
    %v3443 = vpack.c.b16 %v2811, %v2803
    %v3444 = vpack.c.b16 %v2812, %v2804
    %v3445 = vpack.c.b16 %v2813, %v2805
    %v3446 = vpack.c.b16 %v2822, %v2814
    %v3447 = vpack.c.b16 %v2823, %v2815
    %v3448 = vpack.c.b16 %v2824, %v2816
    %v3449 = vpack.c.b16 %v2825, %v2817
    %v3450 = vpack.c.b16 %v2826, %v2818
    %v3451 = vpack.c.b16 %v2827, %v2819
    %v3452 = vpack.c.b16 %v2828, %v2820
    %v3453 = vpack.c.b16 %v2829, %v2821
    %v3454 = vpack.c.b16 %v2838, %v2830
    %v3455 = vpack.c.b16 %v2839, %v2831
    %v3456 = vpack.c.b16 %v2840, %v2832
    %v3457 = vpack.c.b16 %v2841, %v2833
    %v3458 = vpack.c.b16 %v2842, %v2834
    %v3459 = vpack.c.b16 %v2843, %v2835
    %v3460 = vpack.c.b16 %v2844, %v2836
    %v3461 = vpack.c.b16 %v2845, %v2837
    %v3462 = vpack.c.b16 %v2854, %v2846
    %v3463 = vpack.c.b16 %v2855, %v2847
    %v3464 = vpack.c.b16 %v2856, %v2848
    %v3465 = vpack.c.b16 %v2857, %v2849
    %v3466 = vpack.c.b16 %v2858, %v2850
    %v3467 = vpack.c.b16 %v2859, %v2851
    %v3468 = vpack.c.b16 %v2860, %v2852
    %v3469 = vpack.c.b16 %v2861, %v2853
    %v3470 = vpack.c.b16 %v2870, %v2862
    %v3471 = vpack.c.b16 %v2871, %v2863
    %v3472 = vpack.c.b16 %v2872, %v2864
    %v3473 = vpack.c.b16 %v2873, %v2865
    %v3474 = vpack.c.b16 %v2874, %v2866
    %v3475 = vpack.c.b16 %v2875, %v2867
    %v3476 = vpack.c.b16 %v2876, %v2868
    %v3477 = vpack.c.b16 %v2877, %v2869
    %v3478 = vpack.c.b16 %v2886, %v2878
    %v3479 = vpack.c.b16 %v2887, %v2879
    %v3480 = vpack.c.b16 %v2888, %v2880
    %v3481 = vpack.c.b16 %v2889, %v2881
    %v3482 = vpack.c.b16 %v2890, %v2882
    %v3483 = vpack.c.b16 %v2891, %v2883
    %v3484 = vpack.c.b16 %v2892, %v2884
    %v3485 = vpack.c.b16 %v2893, %v2885
    %v3486 = vpack.c.b16 %v2902, %v2894
    %v3487 = vpack.c.b16 %v2903, %v2895
    %v3488 = vpack.c.b16 %v2904, %v2896
    %v3489 = vpack.c.b16 %v2905, %v2897
    %v3490 = vpack.c.b16 %v2906, %v2898
    %v3491 = vpack.c.b16 %v2907, %v2899
    %v3492 = vpack.c.b16 %v2908, %v2900
    %v3493 = vpack.c.b16 %v2909, %v2901
    %v3494 = vpack.c.b16 %v2918, %v2910
    %v3495 = vpack.c.b16 %v2919, %v2911
    %v3496 = vpack.c.b16 %v2920, %v2912
    %v3497 = vpack.c.b16 %v2921, %v2913
    %v3498 = vpack.c.b16 %v2922, %v2914
    %v3499 = vpack.c.b16 %v2923, %v2915
    %v3500 = vpack.c.b16 %v2924, %v2916
    %v3501 = vpack.c.b16 %v2925, %v2917
    %v3502 = vpack.c.b16 %v2934, %v2926
    %v3503 = vpack.c.b16 %v2935, %v2927
    %v3504 = vpack.c.b16 %v2936, %v2928
    %v3505 = vpack.c.b16 %v2937, %v2929
    %v3506 = vpack.c.b16 %v2938, %v2930
    %v3507 = vpack.c.b16 %v2939, %v2931
    %v3508 = vpack.c.b16 %v2940, %v2932
    %v3509 = vpack.c.b16 %v2941, %v2933
    %v3510 = vpack.c.b16 %v2950, %v2942
    %v3511 = vpack.c.b16 %v2951, %v2943
    %v3512 = vpack.c.b16 %v2952, %v2944
    %v3513 = vpack.c.b16 %v2953, %v2945
    %v3514 = vpack.c.b16 %v2954, %v2946
    %v3515 = vpack.c.b16 %v2955, %v2947
    %v3516 = vpack.c.b16 %v2956, %v2948
    %v3517 = vpack.c.b16 %v2957, %v2949
    %v3518 = vpack.c.b16 %v2966, %v2958
    %v3519 = vpack.c.b16 %v2967, %v2959
    %v3520 = vpack.c.b16 %v2968, %v2960
    %v3521 = vpack.c.b16 %v2969, %v2961
    %v3522 = vpack.c.b16 %v2970, %v2962
    %v3523 = vpack.c.b16 %v2971, %v2963
    %v3524 = vpack.c.b16 %v2972, %v2964
    %v3525 = vpack.c.b16 %v2973, %v2965
    %v3526 = vpack.c.b16 %v2982, %v2974
    %v3527 = vpack.c.b16 %v2983, %v2975
    %v3528 = vpack.c.b16 %v2984, %v2976
    %v3529 = vpack.c.b16 %v2985, %v2977
    %v3530 = vpack.c.b16 %v2986, %v2978
    %v3531 = vpack.c.b16 %v2987, %v2979
    %v3532 = vpack.c.b16 %v2988, %v2980
    %v3533 = vpack.c.b16 %v2989, %v2981
    %v3534 = vpack.c.b16 %v2998, %v2990
    %v3535 = vpack.c.b16 %v2999, %v2991
    %v3536 = vpack.c.b16 %v3000, %v2992
    %v3537 = vpack.c.b16 %v3001, %v2993
    %v3538 = vpack.c.b16 %v3002, %v2994
    %v3539 = vpack.c.b16 %v3003, %v2995
    %v3540 = vpack.c.b16 %v3004, %v2996
    %v3541 = vpack.c.b16 %v3005, %v2997
    %v3542 = vpack.c.b16 %v3014, %v3006
    %v3543 = vpack.c.b16 %v3015, %v3007
    %v3544 = vpack.c.b16 %v3016, %v3008
    %v3545 = vpack.c.b16 %v3017, %v3009
    %v3546 = vpack.c.b16 %v3018, %v3010
    %v3547 = vpack.c.b16 %v3019, %v3011
    %v3548 = vpack.c.b16 %v3020, %v3012
    %v3549 = vpack.c.b16 %v3021, %v3013
    %v3550 = vpack.c.b16 %v3030, %v3022
    %v3551 = vpack.c.b16 %v3031, %v3023
    %v3552 = vpack.c.b16 %v3032, %v3024
    %v3553 = vpack.c.b16 %v3033, %v3025
    %v3554 = vpack.c.b16 %v3034, %v3026
    %v3555 = vpack.c.b16 %v3035, %v3027
    %v3556 = vpack.c.b16 %v3036, %v3028
    %v3557 = vpack.c.b16 %v3037, %v3029
    %v3558 = vpack.c.b16 %v3046, %v3038
    %v3559 = vpack.c.b16 %v3047, %v3039
    %v3560 = vpack.c.b16 %v3048, %v3040
    %v3561 = vpack.c.b16 %v3049, %v3041
    %v3562 = vpack.c.b16 %v3050, %v3042
    %v3563 = vpack.c.b16 %v3051, %v3043
    %v3564 = vpack.c.b16 %v3052, %v3044
    %v3565 = vpack.c.b16 %v3053, %v3045
    %4078 = vmatprep.subr.bf16.mxu0 %v3111
    %4079 = vmatpush1.bf16.msra.mxu0 %v3110
    %4080 = vmatprep.subr.bf16.mxu0 %v3103
    %4081 = vmatpush1.bf16.msra.mxu0 %v3102
    %4082 = vmatprep.subr.bf16.mxu0 %v3095
    %4083 = vmatpush1.bf16.msra.mxu0 %v3094
    %4084 = vmatprep.subr.bf16.mxu0 %v3087
    %4085 = vmatpush1.bf16.msra.mxu0 %v3086
    %4086 = vmatprep.subr.bf16.mxu0 %v3079
    %4087 = vmatpush1.bf16.msra.mxu0 %v3078
    %4088 = vmatprep.subr.bf16.mxu0 %v3071
    %4089 = vmatpush1.bf16.msra.mxu0 %v3070
    %4090 = vmatprep.subr.bf16.mxu0 %v3063
    %4091 = vmatpush1.bf16.msra.mxu0 %v3062
    %4092 = vmatprep.subr.bf16.mxu0 %v3055
    %4093 = vmatpush1.bf16.msra.mxu0 %v3054
    %4094 = vmatprep.subr.bf16.mxu0 %v3175
    %4095 = vmatpush2.bf16.msra.mxu0 %v3174
    %4096 = vmatprep.subr.bf16.mxu0 %v3167
    %4097 = vmatpush2.bf16.msra.mxu0 %v3166
    %4098 = vmatprep.subr.bf16.mxu0 %v3159
    %4099 = vmatpush2.bf16.msra.mxu0 %v3158
    %4100 = vmatprep.subr.bf16.mxu0 %v3151
    %4101 = vmatpush2.bf16.msra.mxu0 %v3150
    %4102 = vmatprep.subr.bf16.mxu0 %v3143
    %4103 = vmatpush2.bf16.msra.mxu0 %v3142
    %4104 = vmatprep.subr.bf16.mxu0 %v3135
    %4105 = vmatpush2.bf16.msra.mxu0 %v3134
    %4106 = vmatprep.subr.bf16.mxu0 %v3127
    %4107 = vmatpush2.bf16.msra.mxu0 %v3126
    %4108 = vmatprep.subr.bf16.mxu0 %v3119
    %4109 = vmatpush2.bf16.msra.mxu0 %v3118
    %4110 = vmatprep.mubr.bf16.mxu0 %v957
    %4111 = vmatmul.mubr.bf16.gmra.mxu0 %v956
    %v4112 = vpop.f32.mrf.mxu0
    %v4113 = vadd.f32 %v1481, %v4112
    %v4114 = vpop.f32.mrf.mxu0
    %v4115 = vadd.f32 %v1485, %v4114
    %v4116 = vpop.f32.mrf.mxu0
    %v4117 = vpop.f32.mrf.mxu0
    %4118 = vdwg.mxu0
    %4119 = vmatprep.subr.bf16.mxu0 %v3239
    %4120 = vmatpush1.bf16.msra.mxu0 %v3238
    %4121 = vmatprep.subr.bf16.mxu0 %v3231
    %4122 = vmatpush1.bf16.msra.mxu0 %v3230
    %4123 = vmatprep.subr.bf16.mxu0 %v3223
    %4124 = vmatpush1.bf16.msra.mxu0 %v3222
    %4125 = vmatprep.subr.bf16.mxu0 %v3215
    %4126 = vmatpush1.bf16.msra.mxu0 %v3214
    %4127 = vmatprep.subr.bf16.mxu0 %v3207
    %4128 = vmatpush1.bf16.msra.mxu0 %v3206
    %4129 = vmatprep.subr.bf16.mxu0 %v3199
    %4130 = vmatpush1.bf16.msra.mxu0 %v3198
    %4131 = vmatprep.subr.bf16.mxu0 %v3191
    %4132 = vmatpush1.bf16.msra.mxu0 %v3190
    %4133 = vmatprep.subr.bf16.mxu0 %v3183
    %4134 = vmatpush1.bf16.msra.mxu0 %v3182
    %4135 = vmatprep.subr.bf16.mxu0 %v3303
    %4136 = vmatpush2.bf16.msra.mxu0 %v3302
    %4137 = vmatprep.subr.bf16.mxu0 %v3295
    %4138 = vmatpush2.bf16.msra.mxu0 %v3294
    %4139 = vmatprep.subr.bf16.mxu0 %v3287
    %4140 = vmatpush2.bf16.msra.mxu0 %v3286
    %4141 = vmatprep.subr.bf16.mxu0 %v3279
    %4142 = vmatpush2.bf16.msra.mxu0 %v3278
    %4143 = vmatprep.subr.bf16.mxu0 %v3271
    %4144 = vmatpush2.bf16.msra.mxu0 %v3270
    %4145 = vmatprep.subr.bf16.mxu0 %v3263
    %4146 = vmatpush2.bf16.msra.mxu0 %v3262
    %4147 = vmatprep.subr.bf16.mxu0 %v3255
    %4148 = vmatpush2.bf16.msra.mxu0 %v3254
    %4149 = vmatprep.subr.bf16.mxu0 %v3247
    %4150 = vmatpush2.bf16.msra.mxu0 %v3246
    %4151 = vmatprep.mubr.bf16.mxu0 %v959
    %4152 = vmatmul.mubr.bf16.gmra.mxu0 %v958
    %v4153 = vpop.f32.mrf.mxu0
    %v4154 = vadd.f32 %v4113, %v4153
    %v4155 = vpop.f32.mrf.mxu0
    %v4156 = vadd.f32 %v4115, %v4155
    %v4157 = vpop.f32.mrf.mxu0
    %v4158 = vpop.f32.mrf.mxu0
    %4159 = vdwg.mxu0
    %4160 = vmatprep.subr.bf16.mxu0 %v3367
    %4161 = vmatpush1.bf16.msra.mxu0 %v3366
    %4162 = vmatprep.subr.bf16.mxu0 %v3359
    %4163 = vmatpush1.bf16.msra.mxu0 %v3358
    %4164 = vmatprep.subr.bf16.mxu0 %v3351
    %4165 = vmatpush1.bf16.msra.mxu0 %v3350
    %4166 = vmatprep.subr.bf16.mxu0 %v3343
    %4167 = vmatpush1.bf16.msra.mxu0 %v3342
    %4168 = vmatprep.subr.bf16.mxu0 %v3335
    %4169 = vmatpush1.bf16.msra.mxu0 %v3334
    %4170 = vmatprep.subr.bf16.mxu0 %v3327
    %4171 = vmatpush1.bf16.msra.mxu0 %v3326
    %4172 = vmatprep.subr.bf16.mxu0 %v3319
    %4173 = vmatpush1.bf16.msra.mxu0 %v3318
    %4174 = vmatprep.subr.bf16.mxu0 %v3311
    %4175 = vmatpush1.bf16.msra.mxu0 %v3310
    %4176 = vmatprep.subr.bf16.mxu0 %v3431
    %4177 = vmatpush2.bf16.msra.mxu0 %v3430
    %4178 = vmatprep.subr.bf16.mxu0 %v3423
    %4179 = vmatpush2.bf16.msra.mxu0 %v3422
    %4180 = vmatprep.subr.bf16.mxu0 %v3415
    %4181 = vmatpush2.bf16.msra.mxu0 %v3414
    %4182 = vmatprep.subr.bf16.mxu0 %v3407
    %4183 = vmatpush2.bf16.msra.mxu0 %v3406
    %4184 = vmatprep.subr.bf16.mxu0 %v3399
    %4185 = vmatpush2.bf16.msra.mxu0 %v3398
    %4186 = vmatprep.subr.bf16.mxu0 %v3391
    %4187 = vmatpush2.bf16.msra.mxu0 %v3390
    %4188 = vmatprep.subr.bf16.mxu0 %v3383
    %4189 = vmatpush2.bf16.msra.mxu0 %v3382
    %4190 = vmatprep.subr.bf16.mxu0 %v3375
    %4191 = vmatpush2.bf16.msra.mxu0 %v3374
    %4192 = vmatprep.mubr.bf16.mxu0 %v961
    %4193 = vmatmul.mubr.bf16.gmra.mxu0 %v960
    %v4194 = vpop.f32.mrf.mxu0
    %v4195 = vadd.f32 %v4154, %v4194
    %v4196 = vpop.f32.mrf.mxu0
    %v4197 = vadd.f32 %v4156, %v4196
    %v4198 = vpop.f32.mrf.mxu0
    %v4199 = vpop.f32.mrf.mxu0
    %4200 = vdwg.mxu0
    %4201 = vmatprep.subr.bf16.mxu0 %v3495
    %4202 = vmatpush1.bf16.msra.mxu0 %v3494
    %4203 = vmatprep.subr.bf16.mxu0 %v3487
    %4204 = vmatpush1.bf16.msra.mxu0 %v3486
    %4205 = vmatprep.subr.bf16.mxu0 %v3479
    %4206 = vmatpush1.bf16.msra.mxu0 %v3478
    %4207 = vmatprep.subr.bf16.mxu0 %v3471
    %4208 = vmatpush1.bf16.msra.mxu0 %v3470
    %4209 = vmatprep.subr.bf16.mxu0 %v3463
    %4210 = vmatpush1.bf16.msra.mxu0 %v3462
    %4211 = vmatprep.subr.bf16.mxu0 %v3455
    %4212 = vmatpush1.bf16.msra.mxu0 %v3454
    %4213 = vmatprep.subr.bf16.mxu0 %v3447
    %4214 = vmatpush1.bf16.msra.mxu0 %v3446
    %4215 = vmatprep.subr.bf16.mxu0 %v3439
    %4216 = vmatpush1.bf16.msra.mxu0 %v3438
    %4217 = vmatprep.subr.bf16.mxu0 %v3559
    %4218 = vmatpush2.bf16.msra.mxu0 %v3558
    %4219 = vmatprep.subr.bf16.mxu0 %v3551
    %4220 = vmatpush2.bf16.msra.mxu0 %v3550
    %4221 = vmatprep.subr.bf16.mxu0 %v3543
    %4222 = vmatpush2.bf16.msra.mxu0 %v3542
    %4223 = vmatprep.subr.bf16.mxu0 %v3535
    %4224 = vmatpush2.bf16.msra.mxu0 %v3534
    %4225 = vmatprep.subr.bf16.mxu0 %v3527
    %4226 = vmatpush2.bf16.msra.mxu0 %v3526
    %4227 = vmatprep.subr.bf16.mxu0 %v3519
    %4228 = vmatpush2.bf16.msra.mxu0 %v3518
    %4229 = vmatprep.subr.bf16.mxu0 %v3511
    %4230 = vmatpush2.bf16.msra.mxu0 %v3510
    %4231 = vmatprep.subr.bf16.mxu0 %v3503
    %4232 = vmatpush2.bf16.msra.mxu0 %v3502
    %4233 = vmatprep.mubr.bf16.mxu0 %v963
    %4234 = vmatmul.mubr.bf16.gmra.mxu0 %v962
    %v4235 = vpop.f32.mrf.mxu0
    %v4236 = vadd.f32 %v4195, %v4235
    %v4237 = vpop.f32.mrf.mxu0
    %v4238 = vadd.f32 %v4197, %v4237
    %v4239 = vpop.f32.mrf.mxu0
    %v4240 = vpop.f32.mrf.mxu0
    %4241 = vdwg.mxu0
    %4242 = vmatprep.subr.bf16.mxu0 %v3113
    %4243 = vmatpush1.bf16.msra.mxu0 %v3112
    %4244 = vmatprep.subr.bf16.mxu0 %v3105
    %4245 = vmatpush1.bf16.msra.mxu0 %v3104
    %4246 = vmatprep.subr.bf16.mxu0 %v3097
    %4247 = vmatpush1.bf16.msra.mxu0 %v3096
    %4248 = vmatprep.subr.bf16.mxu0 %v3089
    %4249 = vmatpush1.bf16.msra.mxu0 %v3088
    %4250 = vmatprep.subr.bf16.mxu0 %v3081
    %4251 = vmatpush1.bf16.msra.mxu0 %v3080
    %4252 = vmatprep.subr.bf16.mxu0 %v3073
    %4253 = vmatpush1.bf16.msra.mxu0 %v3072
    %4254 = vmatprep.subr.bf16.mxu0 %v3065
    %4255 = vmatpush1.bf16.msra.mxu0 %v3064
    %4256 = vmatprep.subr.bf16.mxu0 %v3057
    %4257 = vmatpush1.bf16.msra.mxu0 %v3056
    %4258 = vmatprep.subr.bf16.mxu0 %v3177
    %4259 = vmatpush2.bf16.msra.mxu0 %v3176
    %4260 = vmatprep.subr.bf16.mxu0 %v3169
    %4261 = vmatpush2.bf16.msra.mxu0 %v3168
    %4262 = vmatprep.subr.bf16.mxu0 %v3161
    %4263 = vmatpush2.bf16.msra.mxu0 %v3160
    %4264 = vmatprep.subr.bf16.mxu0 %v3153
    %4265 = vmatpush2.bf16.msra.mxu0 %v3152
    %4266 = vmatprep.subr.bf16.mxu0 %v3145
    %4267 = vmatpush2.bf16.msra.mxu0 %v3144
    %4268 = vmatprep.subr.bf16.mxu0 %v3137
    %4269 = vmatpush2.bf16.msra.mxu0 %v3136
    %4270 = vmatprep.subr.bf16.mxu0 %v3129
    %4271 = vmatpush2.bf16.msra.mxu0 %v3128
    %4272 = vmatprep.subr.bf16.mxu0 %v3121
    %4273 = vmatpush2.bf16.msra.mxu0 %v3120
    %4274 = vmatprep.mubr.bf16.mxu0 %v957
    %4275 = vmatmul.mubr.bf16.gmra.mxu0 %v956
    %v4276 = vpop.f32.mrf.mxu0
    %v4277 = vadd.f32 %v1489, %v4276
    %v4278 = vpop.f32.mrf.mxu0
    %v4279 = vadd.f32 %v1493, %v4278
    %v4280 = vpop.f32.mrf.mxu0
    %v4281 = vpop.f32.mrf.mxu0
    %4282 = vdwg.mxu0
    %4283 = vmatprep.subr.bf16.mxu0 %v3241
    %4284 = vmatpush1.bf16.msra.mxu0 %v3240
    %4285 = vmatprep.subr.bf16.mxu0 %v3233
    %4286 = vmatpush1.bf16.msra.mxu0 %v3232
    %4287 = vmatprep.subr.bf16.mxu0 %v3225
    %4288 = vmatpush1.bf16.msra.mxu0 %v3224
    %4289 = vmatprep.subr.bf16.mxu0 %v3217
    %4290 = vmatpush1.bf16.msra.mxu0 %v3216
    %4291 = vmatprep.subr.bf16.mxu0 %v3209
    %4292 = vmatpush1.bf16.msra.mxu0 %v3208
    %4293 = vmatprep.subr.bf16.mxu0 %v3201
    %4294 = vmatpush1.bf16.msra.mxu0 %v3200
    %4295 = vmatprep.subr.bf16.mxu0 %v3193
    %4296 = vmatpush1.bf16.msra.mxu0 %v3192
    %4297 = vmatprep.subr.bf16.mxu0 %v3185
    %4298 = vmatpush1.bf16.msra.mxu0 %v3184
    %4299 = vmatprep.subr.bf16.mxu0 %v3305
    %4300 = vmatpush2.bf16.msra.mxu0 %v3304
    %4301 = vmatprep.subr.bf16.mxu0 %v3297
    %4302 = vmatpush2.bf16.msra.mxu0 %v3296
    %4303 = vmatprep.subr.bf16.mxu0 %v3289
    %4304 = vmatpush2.bf16.msra.mxu0 %v3288
    %4305 = vmatprep.subr.bf16.mxu0 %v3281
    %4306 = vmatpush2.bf16.msra.mxu0 %v3280
    %4307 = vmatprep.subr.bf16.mxu0 %v3273
    %4308 = vmatpush2.bf16.msra.mxu0 %v3272
    %4309 = vmatprep.subr.bf16.mxu0 %v3265
    %4310 = vmatpush2.bf16.msra.mxu0 %v3264
    %4311 = vmatprep.subr.bf16.mxu0 %v3257
    %4312 = vmatpush2.bf16.msra.mxu0 %v3256
    %4313 = vmatprep.subr.bf16.mxu0 %v3249
    %4314 = vmatpush2.bf16.msra.mxu0 %v3248
    %4315 = vmatprep.mubr.bf16.mxu0 %v959
    %4316 = vmatmul.mubr.bf16.gmra.mxu0 %v958
    %v4317 = vpop.f32.mrf.mxu0
    %v4318 = vadd.f32 %v4277, %v4317
    %v4319 = vpop.f32.mrf.mxu0
    %v4320 = vadd.f32 %v4279, %v4319
    %v4321 = vpop.f32.mrf.mxu0
    %v4322 = vpop.f32.mrf.mxu0
    %4323 = vdwg.mxu0
    %4324 = vmatprep.subr.bf16.mxu0 %v3369
    %4325 = vmatpush1.bf16.msra.mxu0 %v3368
    %4326 = vmatprep.subr.bf16.mxu0 %v3361
    %4327 = vmatpush1.bf16.msra.mxu0 %v3360
    %4328 = vmatprep.subr.bf16.mxu0 %v3353
    %4329 = vmatpush1.bf16.msra.mxu0 %v3352
    %4330 = vmatprep.subr.bf16.mxu0 %v3345
    %4331 = vmatpush1.bf16.msra.mxu0 %v3344
    %4332 = vmatprep.subr.bf16.mxu0 %v3337
    %4333 = vmatpush1.bf16.msra.mxu0 %v3336
    %4334 = vmatprep.subr.bf16.mxu0 %v3329
    %4335 = vmatpush1.bf16.msra.mxu0 %v3328
    %4336 = vmatprep.subr.bf16.mxu0 %v3321
    %4337 = vmatpush1.bf16.msra.mxu0 %v3320
    %4338 = vmatprep.subr.bf16.mxu0 %v3313
    %4339 = vmatpush1.bf16.msra.mxu0 %v3312
    %4340 = vmatprep.subr.bf16.mxu0 %v3433
    %4341 = vmatpush2.bf16.msra.mxu0 %v3432
    %4342 = vmatprep.subr.bf16.mxu0 %v3425
    %4343 = vmatpush2.bf16.msra.mxu0 %v3424
    %4344 = vmatprep.subr.bf16.mxu0 %v3417
    %4345 = vmatpush2.bf16.msra.mxu0 %v3416
    %4346 = vmatprep.subr.bf16.mxu0 %v3409
    %4347 = vmatpush2.bf16.msra.mxu0 %v3408
    %4348 = vmatprep.subr.bf16.mxu0 %v3401
    %4349 = vmatpush2.bf16.msra.mxu0 %v3400
    %4350 = vmatprep.subr.bf16.mxu0 %v3393
    %4351 = vmatpush2.bf16.msra.mxu0 %v3392
    %4352 = vmatprep.subr.bf16.mxu0 %v3385
    %4353 = vmatpush2.bf16.msra.mxu0 %v3384
    %4354 = vmatprep.subr.bf16.mxu0 %v3377
    %4355 = vmatpush2.bf16.msra.mxu0 %v3376
    %4356 = vmatprep.mubr.bf16.mxu0 %v961
    %4357 = vmatmul.mubr.bf16.gmra.mxu0 %v960
    %v4358 = vpop.f32.mrf.mxu0
    %v4359 = vadd.f32 %v4318, %v4358
    %v4360 = vpop.f32.mrf.mxu0
    %v4361 = vadd.f32 %v4320, %v4360
    %v4362 = vpop.f32.mrf.mxu0
    %v4363 = vpop.f32.mrf.mxu0
    %4364 = vdwg.mxu0
    %4365 = vmatprep.subr.bf16.mxu0 %v3497
    %4366 = vmatpush1.bf16.msra.mxu0 %v3496
    %4367 = vmatprep.subr.bf16.mxu0 %v3489
    %4368 = vmatpush1.bf16.msra.mxu0 %v3488
    %4369 = vmatprep.subr.bf16.mxu0 %v3481
    %4370 = vmatpush1.bf16.msra.mxu0 %v3480
    %4371 = vmatprep.subr.bf16.mxu0 %v3473
    %4372 = vmatpush1.bf16.msra.mxu0 %v3472
    %4373 = vmatprep.subr.bf16.mxu0 %v3465
    %4374 = vmatpush1.bf16.msra.mxu0 %v3464
    %4375 = vmatprep.subr.bf16.mxu0 %v3457
    %4376 = vmatpush1.bf16.msra.mxu0 %v3456
    %4377 = vmatprep.subr.bf16.mxu0 %v3449
    %4378 = vmatpush1.bf16.msra.mxu0 %v3448
    %4379 = vmatprep.subr.bf16.mxu0 %v3441
    %4380 = vmatpush1.bf16.msra.mxu0 %v3440
    %4381 = vmatprep.subr.bf16.mxu0 %v3561
    %4382 = vmatpush2.bf16.msra.mxu0 %v3560
    %4383 = vmatprep.subr.bf16.mxu0 %v3553
    %4384 = vmatpush2.bf16.msra.mxu0 %v3552
    %4385 = vmatprep.subr.bf16.mxu0 %v3545
    %4386 = vmatpush2.bf16.msra.mxu0 %v3544
    %4387 = vmatprep.subr.bf16.mxu0 %v3537
    %4388 = vmatpush2.bf16.msra.mxu0 %v3536
    %4389 = vmatprep.subr.bf16.mxu0 %v3529
    %4390 = vmatpush2.bf16.msra.mxu0 %v3528
    %4391 = vmatprep.subr.bf16.mxu0 %v3521
    %4392 = vmatpush2.bf16.msra.mxu0 %v3520
    %4393 = vmatprep.subr.bf16.mxu0 %v3513
    %4394 = vmatpush2.bf16.msra.mxu0 %v3512
    %4395 = vmatprep.subr.bf16.mxu0 %v3505
    %4396 = vmatpush2.bf16.msra.mxu0 %v3504
    %4397 = vmatprep.mubr.bf16.mxu0 %v963
    %4398 = vmatmul.mubr.bf16.gmra.mxu0 %v962
    %v4399 = vpop.f32.mrf.mxu0
    %v4400 = vadd.f32 %v4359, %v4399
    %v4401 = vpop.f32.mrf.mxu0
    %v4402 = vadd.f32 %v4361, %v4401
    %v4403 = vpop.f32.mrf.mxu0
    %v4404 = vpop.f32.mrf.mxu0
    %4405 = vdwg.mxu0
    %4406 = vmatprep.subr.bf16.mxu0 %v3115
    %4407 = vmatpush1.bf16.msra.mxu0 %v3114
    %4408 = vmatprep.subr.bf16.mxu0 %v3107
    %4409 = vmatpush1.bf16.msra.mxu0 %v3106
    %4410 = vmatprep.subr.bf16.mxu0 %v3099
    %4411 = vmatpush1.bf16.msra.mxu0 %v3098
    %4412 = vmatprep.subr.bf16.mxu0 %v3091
    %4413 = vmatpush1.bf16.msra.mxu0 %v3090
    %4414 = vmatprep.subr.bf16.mxu0 %v3083
    %4415 = vmatpush1.bf16.msra.mxu0 %v3082
    %4416 = vmatprep.subr.bf16.mxu0 %v3075
    %4417 = vmatpush1.bf16.msra.mxu0 %v3074
    %4418 = vmatprep.subr.bf16.mxu0 %v3067
    %4419 = vmatpush1.bf16.msra.mxu0 %v3066
    %4420 = vmatprep.subr.bf16.mxu0 %v3059
    %4421 = vmatpush1.bf16.msra.mxu0 %v3058
    %4422 = vmatprep.subr.bf16.mxu0 %v3179
    %4423 = vmatpush2.bf16.msra.mxu0 %v3178
    %4424 = vmatprep.subr.bf16.mxu0 %v3171
    %4425 = vmatpush2.bf16.msra.mxu0 %v3170
    %4426 = vmatprep.subr.bf16.mxu0 %v3163
    %4427 = vmatpush2.bf16.msra.mxu0 %v3162
    %4428 = vmatprep.subr.bf16.mxu0 %v3155
    %4429 = vmatpush2.bf16.msra.mxu0 %v3154
    %4430 = vmatprep.subr.bf16.mxu0 %v3147
    %4431 = vmatpush2.bf16.msra.mxu0 %v3146
    %4432 = vmatprep.subr.bf16.mxu0 %v3139
    %4433 = vmatpush2.bf16.msra.mxu0 %v3138
    %4434 = vmatprep.subr.bf16.mxu0 %v3131
    %4435 = vmatpush2.bf16.msra.mxu0 %v3130
    %4436 = vmatprep.subr.bf16.mxu0 %v3123
    %4437 = vmatpush2.bf16.msra.mxu0 %v3122
    %4438 = vmatprep.mubr.bf16.mxu0 %v957
    %4439 = vmatmul.mubr.bf16.gmra.mxu0 %v956
    %v4440 = vpop.f32.mrf.mxu0
    %v4441 = vadd.f32 %v1497, %v4440
    %v4442 = vpop.f32.mrf.mxu0
    %v4443 = vadd.f32 %v1501, %v4442
    %v4444 = vpop.f32.mrf.mxu0
    %v4445 = vpop.f32.mrf.mxu0
    %4446 = vdwg.mxu0
    %4447 = vmatprep.subr.bf16.mxu0 %v3243
    %4448 = vmatpush1.bf16.msra.mxu0 %v3242
    %4449 = vmatprep.subr.bf16.mxu0 %v3235
    %4450 = vmatpush1.bf16.msra.mxu0 %v3234
    %4451 = vmatprep.subr.bf16.mxu0 %v3227
    %4452 = vmatpush1.bf16.msra.mxu0 %v3226
    %4453 = vmatprep.subr.bf16.mxu0 %v3219
    %4454 = vmatpush1.bf16.msra.mxu0 %v3218
    %4455 = vmatprep.subr.bf16.mxu0 %v3211
    %4456 = vmatpush1.bf16.msra.mxu0 %v3210
    %4457 = vmatprep.subr.bf16.mxu0 %v3203
    %4458 = vmatpush1.bf16.msra.mxu0 %v3202
    %4459 = vmatprep.subr.bf16.mxu0 %v3195
    %4460 = vmatpush1.bf16.msra.mxu0 %v3194
    %4461 = vmatprep.subr.bf16.mxu0 %v3187
    %4462 = vmatpush1.bf16.msra.mxu0 %v3186
    %4463 = vmatprep.subr.bf16.mxu0 %v3307
    %4464 = vmatpush2.bf16.msra.mxu0 %v3306
    %4465 = vmatprep.subr.bf16.mxu0 %v3299
    %4466 = vmatpush2.bf16.msra.mxu0 %v3298
    %4467 = vmatprep.subr.bf16.mxu0 %v3291
    %4468 = vmatpush2.bf16.msra.mxu0 %v3290
    %4469 = vmatprep.subr.bf16.mxu0 %v3283
    %4470 = vmatpush2.bf16.msra.mxu0 %v3282
    %4471 = vmatprep.subr.bf16.mxu0 %v3275
    %4472 = vmatpush2.bf16.msra.mxu0 %v3274
    %4473 = vmatprep.subr.bf16.mxu0 %v3267
    %4474 = vmatpush2.bf16.msra.mxu0 %v3266
    %4475 = vmatprep.subr.bf16.mxu0 %v3259
    %4476 = vmatpush2.bf16.msra.mxu0 %v3258
    %4477 = vmatprep.subr.bf16.mxu0 %v3251
    %4478 = vmatpush2.bf16.msra.mxu0 %v3250
    %4479 = vmatprep.mubr.bf16.mxu0 %v959
    %4480 = vmatmul.mubr.bf16.gmra.mxu0 %v958
    %v4481 = vpop.f32.mrf.mxu0
    %v4482 = vadd.f32 %v4441, %v4481
    %v4483 = vpop.f32.mrf.mxu0
    %v4484 = vadd.f32 %v4443, %v4483
    %v4485 = vpop.f32.mrf.mxu0
    %v4486 = vpop.f32.mrf.mxu0
    %4487 = vdwg.mxu0
    %4488 = vmatprep.subr.bf16.mxu0 %v3371
    %4489 = vmatpush1.bf16.msra.mxu0 %v3370
    %4490 = vmatprep.subr.bf16.mxu0 %v3363
    %4491 = vmatpush1.bf16.msra.mxu0 %v3362
    %4492 = vmatprep.subr.bf16.mxu0 %v3355
    %4493 = vmatpush1.bf16.msra.mxu0 %v3354
    %4494 = vmatprep.subr.bf16.mxu0 %v3347
    %4495 = vmatpush1.bf16.msra.mxu0 %v3346
    %4496 = vmatprep.subr.bf16.mxu0 %v3339
    %4497 = vmatpush1.bf16.msra.mxu0 %v3338
    %4498 = vmatprep.subr.bf16.mxu0 %v3331
    %4499 = vmatpush1.bf16.msra.mxu0 %v3330
    %4500 = vmatprep.subr.bf16.mxu0 %v3323
    %4501 = vmatpush1.bf16.msra.mxu0 %v3322
    %4502 = vmatprep.subr.bf16.mxu0 %v3315
    %4503 = vmatpush1.bf16.msra.mxu0 %v3314
    %4504 = vmatprep.subr.bf16.mxu0 %v3435
    %4505 = vmatpush2.bf16.msra.mxu0 %v3434
    %4506 = vmatprep.subr.bf16.mxu0 %v3427
    %4507 = vmatpush2.bf16.msra.mxu0 %v3426
    %4508 = vmatprep.subr.bf16.mxu0 %v3419
    %4509 = vmatpush2.bf16.msra.mxu0 %v3418
    %4510 = vmatprep.subr.bf16.mxu0 %v3411
    %4511 = vmatpush2.bf16.msra.mxu0 %v3410
    %4512 = vmatprep.subr.bf16.mxu0 %v3403
    %4513 = vmatpush2.bf16.msra.mxu0 %v3402
    %4514 = vmatprep.subr.bf16.mxu0 %v3395
    %4515 = vmatpush2.bf16.msra.mxu0 %v3394
    %4516 = vmatprep.subr.bf16.mxu0 %v3387
    %4517 = vmatpush2.bf16.msra.mxu0 %v3386
    %4518 = vmatprep.subr.bf16.mxu0 %v3379
    %4519 = vmatpush2.bf16.msra.mxu0 %v3378
    %4520 = vmatprep.mubr.bf16.mxu0 %v961
    %4521 = vmatmul.mubr.bf16.gmra.mxu0 %v960
    %v4522 = vpop.f32.mrf.mxu0
    %v4523 = vadd.f32 %v4482, %v4522
    %v4524 = vpop.f32.mrf.mxu0
    %v4525 = vadd.f32 %v4484, %v4524
    %v4526 = vpop.f32.mrf.mxu0
    %v4527 = vpop.f32.mrf.mxu0
    %4528 = vdwg.mxu0
    %4529 = vmatprep.subr.bf16.mxu0 %v3499
    %4530 = vmatpush1.bf16.msra.mxu0 %v3498
    %4531 = vmatprep.subr.bf16.mxu0 %v3491
    %4532 = vmatpush1.bf16.msra.mxu0 %v3490
    %4533 = vmatprep.subr.bf16.mxu0 %v3483
    %4534 = vmatpush1.bf16.msra.mxu0 %v3482
    %4535 = vmatprep.subr.bf16.mxu0 %v3475
    %4536 = vmatpush1.bf16.msra.mxu0 %v3474
    %4537 = vmatprep.subr.bf16.mxu0 %v3467
    %4538 = vmatpush1.bf16.msra.mxu0 %v3466
    %4539 = vmatprep.subr.bf16.mxu0 %v3459
    %4540 = vmatpush1.bf16.msra.mxu0 %v3458
    %4541 = vmatprep.subr.bf16.mxu0 %v3451
    %4542 = vmatpush1.bf16.msra.mxu0 %v3450
    %4543 = vmatprep.subr.bf16.mxu0 %v3443
    %4544 = vmatpush1.bf16.msra.mxu0 %v3442
    %4545 = vmatprep.subr.bf16.mxu0 %v3563
    %4546 = vmatpush2.bf16.msra.mxu0 %v3562
    %4547 = vmatprep.subr.bf16.mxu0 %v3555
    %4548 = vmatpush2.bf16.msra.mxu0 %v3554
    %4549 = vmatprep.subr.bf16.mxu0 %v3547
    %4550 = vmatpush2.bf16.msra.mxu0 %v3546
    %4551 = vmatprep.subr.bf16.mxu0 %v3539
    %4552 = vmatpush2.bf16.msra.mxu0 %v3538
    %4553 = vmatprep.subr.bf16.mxu0 %v3531
    %4554 = vmatpush2.bf16.msra.mxu0 %v3530
    %4555 = vmatprep.subr.bf16.mxu0 %v3523
    %4556 = vmatpush2.bf16.msra.mxu0 %v3522
    %4557 = vmatprep.subr.bf16.mxu0 %v3515
    %4558 = vmatpush2.bf16.msra.mxu0 %v3514
    %4559 = vmatprep.subr.bf16.mxu0 %v3507
    %4560 = vmatpush2.bf16.msra.mxu0 %v3506
    %4561 = vmatprep.mubr.bf16.mxu0 %v963
    %4562 = vmatmul.mubr.bf16.gmra.mxu0 %v962
    %v4563 = vpop.f32.mrf.mxu0
    %v4564 = vadd.f32 %v4523, %v4563
    %v4565 = vpop.f32.mrf.mxu0
    %v4566 = vadd.f32 %v4525, %v4565
    %v4567 = vpop.f32.mrf.mxu0
    %v4568 = vpop.f32.mrf.mxu0
    %4569 = vdwg.mxu0
    %4570 = vmatprep.subr.bf16.mxu0 %v3117
    %4571 = vmatpush1.bf16.msra.mxu0 %v3116
    %4572 = vmatprep.subr.bf16.mxu0 %v3109
    %4573 = vmatpush1.bf16.msra.mxu0 %v3108
    %4574 = vmatprep.subr.bf16.mxu0 %v3101
    %4575 = vmatpush1.bf16.msra.mxu0 %v3100
    %4576 = vmatprep.subr.bf16.mxu0 %v3093
    %4577 = vmatpush1.bf16.msra.mxu0 %v3092
    %4578 = vmatprep.subr.bf16.mxu0 %v3085
    %4579 = vmatpush1.bf16.msra.mxu0 %v3084
    %4580 = vmatprep.subr.bf16.mxu0 %v3077
    %4581 = vmatpush1.bf16.msra.mxu0 %v3076
    %4582 = vmatprep.subr.bf16.mxu0 %v3069
    %4583 = vmatpush1.bf16.msra.mxu0 %v3068
    %4584 = vmatprep.subr.bf16.mxu0 %v3061
    %4585 = vmatpush1.bf16.msra.mxu0 %v3060
    %4586 = vmatprep.subr.bf16.mxu0 %v3181
    %4587 = vmatpush2.bf16.msra.mxu0 %v3180
    %4588 = vmatprep.subr.bf16.mxu0 %v3173
    %4589 = vmatpush2.bf16.msra.mxu0 %v3172
    %4590 = vmatprep.subr.bf16.mxu0 %v3165
    %4591 = vmatpush2.bf16.msra.mxu0 %v3164
    %4592 = vmatprep.subr.bf16.mxu0 %v3157
    %4593 = vmatpush2.bf16.msra.mxu0 %v3156
    %4594 = vmatprep.subr.bf16.mxu0 %v3149
    %4595 = vmatpush2.bf16.msra.mxu0 %v3148
    %4596 = vmatprep.subr.bf16.mxu0 %v3141
    %4597 = vmatpush2.bf16.msra.mxu0 %v3140
    %4598 = vmatprep.subr.bf16.mxu0 %v3133
    %4599 = vmatpush2.bf16.msra.mxu0 %v3132
    %4600 = vmatprep.subr.bf16.mxu0 %v3125
    %4601 = vmatpush2.bf16.msra.mxu0 %v3124
    %4602 = vmatprep.mubr.bf16.mxu0 %v957
    %4603 = vmatmul.mubr.bf16.gmra.mxu0 %v956
    %v4604 = vpop.f32.mrf.mxu0
    %v4605 = vadd.f32 %v1505, %v4604
    %v4606 = vpop.f32.mrf.mxu0
    %v4607 = vadd.f32 %v1509, %v4606
    %v4608 = vpop.f32.mrf.mxu0
    %v4609 = vpop.f32.mrf.mxu0
    %4610 = vdwg.mxu0
    %4611 = vmatprep.subr.bf16.mxu0 %v3245
    %4612 = vmatpush1.bf16.msra.mxu0 %v3244
    %4613 = vmatprep.subr.bf16.mxu0 %v3237
    %4614 = vmatpush1.bf16.msra.mxu0 %v3236
    %4615 = vmatprep.subr.bf16.mxu0 %v3229
    %4616 = vmatpush1.bf16.msra.mxu0 %v3228
    %4617 = vmatprep.subr.bf16.mxu0 %v3221
    %4618 = vmatpush1.bf16.msra.mxu0 %v3220
    %4619 = vmatprep.subr.bf16.mxu0 %v3213
    %4620 = vmatpush1.bf16.msra.mxu0 %v3212
    %4621 = vmatprep.subr.bf16.mxu0 %v3205
    %4622 = vmatpush1.bf16.msra.mxu0 %v3204
    %4623 = vmatprep.subr.bf16.mxu0 %v3197
    %4624 = vmatpush1.bf16.msra.mxu0 %v3196
    %4625 = vmatprep.subr.bf16.mxu0 %v3189
    %4626 = vmatpush1.bf16.msra.mxu0 %v3188
    %4627 = vmatprep.subr.bf16.mxu0 %v3309
    %4628 = vmatpush2.bf16.msra.mxu0 %v3308
    %4629 = vmatprep.subr.bf16.mxu0 %v3301
    %4630 = vmatpush2.bf16.msra.mxu0 %v3300
    %4631 = vmatprep.subr.bf16.mxu0 %v3293
    %4632 = vmatpush2.bf16.msra.mxu0 %v3292
    %4633 = vmatprep.subr.bf16.mxu0 %v3285
    %4634 = vmatpush2.bf16.msra.mxu0 %v3284
    %4635 = vmatprep.subr.bf16.mxu0 %v3277
    %4636 = vmatpush2.bf16.msra.mxu0 %v3276
    %4637 = vmatprep.subr.bf16.mxu0 %v3269
    %4638 = vmatpush2.bf16.msra.mxu0 %v3268
    %4639 = vmatprep.subr.bf16.mxu0 %v3261
    %4640 = vmatpush2.bf16.msra.mxu0 %v3260
    %4641 = vmatprep.subr.bf16.mxu0 %v3253
    %4642 = vmatpush2.bf16.msra.mxu0 %v3252
    %4643 = vmatprep.mubr.bf16.mxu0 %v959
    %4644 = vmatmul.mubr.bf16.gmra.mxu0 %v958
    %v4645 = vpop.f32.mrf.mxu0
    %v4646 = vadd.f32 %v4605, %v4645
    %v4647 = vpop.f32.mrf.mxu0
    %v4648 = vadd.f32 %v4607, %v4647
    %v4649 = vpop.f32.mrf.mxu0
    %v4650 = vpop.f32.mrf.mxu0
    %4651 = vdwg.mxu0
    %4652 = vmatprep.subr.bf16.mxu0 %v3373
    %4653 = vmatpush1.bf16.msra.mxu0 %v3372
    %4654 = vmatprep.subr.bf16.mxu0 %v3365
    %4655 = vmatpush1.bf16.msra.mxu0 %v3364
    %4656 = vmatprep.subr.bf16.mxu0 %v3357
    %4657 = vmatpush1.bf16.msra.mxu0 %v3356
    %4658 = vmatprep.subr.bf16.mxu0 %v3349
    %4659 = vmatpush1.bf16.msra.mxu0 %v3348
    %4660 = vmatprep.subr.bf16.mxu0 %v3341
    %4661 = vmatpush1.bf16.msra.mxu0 %v3340
    %4662 = vmatprep.subr.bf16.mxu0 %v3333
    %4663 = vmatpush1.bf16.msra.mxu0 %v3332
    %4664 = vmatprep.subr.bf16.mxu0 %v3325
    %4665 = vmatpush1.bf16.msra.mxu0 %v3324
    %4666 = vmatprep.subr.bf16.mxu0 %v3317
    %4667 = vmatpush1.bf16.msra.mxu0 %v3316
    %4668 = vmatprep.subr.bf16.mxu0 %v3437
    %4669 = vmatpush2.bf16.msra.mxu0 %v3436
    %4670 = vmatprep.subr.bf16.mxu0 %v3429
    %4671 = vmatpush2.bf16.msra.mxu0 %v3428
    %4672 = vmatprep.subr.bf16.mxu0 %v3421
    %4673 = vmatpush2.bf16.msra.mxu0 %v3420
    %4674 = vmatprep.subr.bf16.mxu0 %v3413
    %4675 = vmatpush2.bf16.msra.mxu0 %v3412
    %4676 = vmatprep.subr.bf16.mxu0 %v3405
    %4677 = vmatpush2.bf16.msra.mxu0 %v3404
    %4678 = vmatprep.subr.bf16.mxu0 %v3397
    %4679 = vmatpush2.bf16.msra.mxu0 %v3396
    %4680 = vmatprep.subr.bf16.mxu0 %v3389
    %4681 = vmatpush2.bf16.msra.mxu0 %v3388
    %4682 = vmatprep.subr.bf16.mxu0 %v3381
    %4683 = vmatpush2.bf16.msra.mxu0 %v3380
    %4684 = vmatprep.mubr.bf16.mxu0 %v961
    %4685 = vmatmul.mubr.bf16.gmra.mxu0 %v960
    %v4686 = vpop.f32.mrf.mxu0
    %v4687 = vadd.f32 %v4646, %v4686
    %v4688 = vpop.f32.mrf.mxu0
    %v4689 = vadd.f32 %v4648, %v4688
    %v4690 = vpop.f32.mrf.mxu0
    %v4691 = vpop.f32.mrf.mxu0
    %4692 = vdwg.mxu0
    %4693 = vmatprep.subr.bf16.mxu0 %v3501
    %4694 = vmatpush1.bf16.msra.mxu0 %v3500
    %4695 = vmatprep.subr.bf16.mxu0 %v3493
    %4696 = vmatpush1.bf16.msra.mxu0 %v3492
    %4697 = vmatprep.subr.bf16.mxu0 %v3485
    %4698 = vmatpush1.bf16.msra.mxu0 %v3484
    %4699 = vmatprep.subr.bf16.mxu0 %v3477
    %4700 = vmatpush1.bf16.msra.mxu0 %v3476
    %4701 = vmatprep.subr.bf16.mxu0 %v3469
    %4702 = vmatpush1.bf16.msra.mxu0 %v3468
    %4703 = vmatprep.subr.bf16.mxu0 %v3461
    %4704 = vmatpush1.bf16.msra.mxu0 %v3460
    %4705 = vmatprep.subr.bf16.mxu0 %v3453
    %4706 = vmatpush1.bf16.msra.mxu0 %v3452
    %4707 = vmatprep.subr.bf16.mxu0 %v3445
    %4708 = vmatpush1.bf16.msra.mxu0 %v3444
    %4709 = vmatprep.subr.bf16.mxu0 %v3565
    %4710 = vmatpush2.bf16.msra.mxu0 %v3564
    %4711 = vmatprep.subr.bf16.mxu0 %v3557
    %4712 = vmatpush2.bf16.msra.mxu0 %v3556
    %4713 = vmatprep.subr.bf16.mxu0 %v3549
    %4714 = vmatpush2.bf16.msra.mxu0 %v3548
    %4715 = vmatprep.subr.bf16.mxu0 %v3541
    %4716 = vmatpush2.bf16.msra.mxu0 %v3540
    %4717 = vmatprep.subr.bf16.mxu0 %v3533
    %4718 = vmatpush2.bf16.msra.mxu0 %v3532
    %4719 = vmatprep.subr.bf16.mxu0 %v3525
    %4720 = vmatpush2.bf16.msra.mxu0 %v3524
    %4721 = vmatprep.subr.bf16.mxu0 %v3517
    %4722 = vmatpush2.bf16.msra.mxu0 %v3516
    %4723 = vmatprep.subr.bf16.mxu0 %v3509
    %4724 = vmatpush2.bf16.msra.mxu0 %v3508
    %4725 = vmatprep.mubr.bf16.mxu0 %v963
    %4726 = vmatmul.mubr.bf16.gmra.mxu0 %v962
    %v4727 = vpop.f32.mrf.mxu0
    %v4728 = vadd.f32 %v4687, %v4727
    %v4729 = vpop.f32.mrf.mxu0
    %v4730 = vadd.f32 %v4689, %v4729
    %v4731 = vpop.f32.mrf.mxu0
    %v4732 = vpop.f32.mrf.mxu0
    %4733 = vdwg.mxu0
    %v4734 = vmax.f32 %v4236, 0.0
    %v4735 = vmax.f32 %v4238, 0.0
    %v4736 = vmax.f32 %v4400, 0.0
    %v4737 = vmax.f32 %v4402, 0.0
    %v4738 = vmax.f32 %v4564, 0.0
    %v4739 = vmax.f32 %v4566, 0.0
    %v4740 = vmax.f32 %v4728, 0.0
    %v4741 = vmax.f32 %v4730, 0.0
    %v4742 = vpack.c.bf16 %v4734, %v4734
    %v4743 = vpack.c.bf16 %v4735, %v4735
    %v4744 = vpack.c.bf16 %v4736, %v4736
    %v4745 = vpack.c.bf16 %v4737, %v4737
    %v4746 = vpack.c.bf16 %v4738, %v4738
    %v4747 = vpack.c.bf16 %v4739, %v4739
    %v4748 = vpack.c.bf16 %v4740, %v4740
    %v4749 = vpack.c.bf16 %v4741, %v4741
    %v4750 = vld [vmem:[#allocation14] sm:$0xf]
    %v4751 = vld [vmem:[#allocation14 + $0x4] sm:$0xf]
    %v4752 = vld [vmem:[#allocation14 + $0x8] sm:$0xf]
    %v4753 = vld [vmem:[#allocation14 + $0xc] sm:$0xf]
    %v4754 = vld [vmem:[#allocation14 + $0x10] sm:$0xf]
    %v4755 = vld [vmem:[#allocation14 + $0x14] sm:$0xf]
    %v4756 = vld [vmem:[#allocation14 + $0x18] sm:$0xf]
    %v4757 = vld [vmem:[#allocation14 + $0x1c] sm:$0xf]
    %v4758 = vld [vmem:[#allocation14 + $0x20] sm:$0xf]
    %v4759 = vld [vmem:[#allocation14 + $0x24] sm:$0xf]
    %v4760 = vld [vmem:[#allocation14 + $0x28] sm:$0xf]
    %v4761 = vld [vmem:[#allocation14 + $0x2c] sm:$0xf]
    %v4762 = vld [vmem:[#allocation14 + $0x30] sm:$0xf]
    %v4763 = vld [vmem:[#allocation14 + $0x34] sm:$0xf]
    %v4764 = vld [vmem:[#allocation14 + $0x38] sm:$0xf]
    %v4765 = vld [vmem:[#allocation14 + $0x3c] sm:$0xf]
    %v4766 = vld [vmem:[#allocation14 + $0x40] sm:$0xf]
    %v4767 = vld [vmem:[#allocation14 + $0x44] sm:$0xf]
    %v4768 = vld [vmem:[#allocation14 + $0x48] sm:$0xf]
    %v4769 = vld [vmem:[#allocation14 + $0x4c] sm:$0xf]
    %v4770 = vld [vmem:[#allocation14 + $0x50] sm:$0xf]
    %v4771 = vld [vmem:[#allocation14 + $0x54] sm:$0xf]
    %v4772 = vld [vmem:[#allocation14 + $0x58] sm:$0xf]
    %v4773 = vld [vmem:[#allocation14 + $0x5c] sm:$0xf]
    %v4774 = vld [vmem:[#allocation14 + $0x60] sm:$0xf]
    %v4775 = vld [vmem:[#allocation14 + $0x64] sm:$0xf]
    %v4776 = vld [vmem:[#allocation14 + $0x68] sm:$0xf]
    %v4777 = vld [vmem:[#allocation14 + $0x6c] sm:$0xf]
    %v4778 = vld [vmem:[#allocation14 + $0x70] sm:$0xf]
    %v4779 = vld [vmem:[#allocation14 + $0x74] sm:$0xf]
    %v4780 = vld [vmem:[#allocation14 + $0x78] sm:$0xf]
    %v4781 = vld [vmem:[#allocation14 + $0x7c] sm:$0xf]
    %v4782 = vld [vmem:[#allocation14 + $0x80] sm:$0xf]
    %v4783 = vld [vmem:[#allocation14 + $0x84] sm:$0xf]
    %v4784 = vld [vmem:[#allocation14 + $0x88] sm:$0xf]
    %v4785 = vld [vmem:[#allocation14 + $0x8c] sm:$0xf]
    %v4786 = vld [vmem:[#allocation14 + $0x90] sm:$0xf]
    %v4787 = vld [vmem:[#allocation14 + $0x94] sm:$0xf]
    %v4788 = vld [vmem:[#allocation14 + $0x98] sm:$0xf]
    %v4789 = vld [vmem:[#allocation14 + $0x9c] sm:$0xf]
    %v4790 = vld [vmem:[#allocation14 + $0xa0] sm:$0xf]
    %v4791 = vld [vmem:[#allocation14 + $0xa4] sm:$0xf]
    %v4792 = vld [vmem:[#allocation14 + $0xa8] sm:$0xf]
    %v4793 = vld [vmem:[#allocation14 + $0xac] sm:$0xf]
    %v4794 = vld [vmem:[#allocation14 + $0xb0] sm:$0xf]
    %v4795 = vld [vmem:[#allocation14 + $0xb4] sm:$0xf]
    %v4796 = vld [vmem:[#allocation14 + $0xb8] sm:$0xf]
    %v4797 = vld [vmem:[#allocation14 + $0xbc] sm:$0xf]
    %v4798 = vld [vmem:[#allocation14 + $0xc0] sm:$0xf]
    %v4799 = vld [vmem:[#allocation14 + $0xc4] sm:$0xf]
    %v4800 = vld [vmem:[#allocation14 + $0xc8] sm:$0xf]
    %v4801 = vld [vmem:[#allocation14 + $0xcc] sm:$0xf]
    %v4802 = vld [vmem:[#allocation14 + $0xd0] sm:$0xf]
    %v4803 = vld [vmem:[#allocation14 + $0xd4] sm:$0xf]
    %v4804 = vld [vmem:[#allocation14 + $0xd8] sm:$0xf]
    %v4805 = vld [vmem:[#allocation14 + $0xdc] sm:$0xf]
    %v4806 = vld [vmem:[#allocation14 + $0xe0] sm:$0xf]
    %v4807 = vld [vmem:[#allocation14 + $0xe4] sm:$0xf]
    %v4808 = vld [vmem:[#allocation14 + $0xe8] sm:$0xf]
    %v4809 = vld [vmem:[#allocation14 + $0xec] sm:$0xf]
    %v4810 = vld [vmem:[#allocation14 + $0xf0] sm:$0xf]
    %v4811 = vld [vmem:[#allocation14 + $0xf4] sm:$0xf]
    %v4812 = vld [vmem:[#allocation14 + $0xf8] sm:$0xf]
    %v4813 = vld [vmem:[#allocation14 + $0xfc] sm:$0xf]
    %v4814 = vld [vmem:[#allocation14 + $0x100] sm:$0xf]
    %v4815 = vld [vmem:[#allocation14 + $0x104] sm:$0xf]
    %v4816 = vld [vmem:[#allocation14 + $0x108] sm:$0xf]
    %v4817 = vld [vmem:[#allocation14 + $0x10c] sm:$0xf]
    %v4818 = vld [vmem:[#allocation14 + $0x110] sm:$0xf]
    %v4819 = vld [vmem:[#allocation14 + $0x114] sm:$0xf]
    %v4820 = vld [vmem:[#allocation14 + $0x118] sm:$0xf]
    %v4821 = vld [vmem:[#allocation14 + $0x11c] sm:$0xf]
    %v4822 = vld [vmem:[#allocation14 + $0x120] sm:$0xf]
    %v4823 = vld [vmem:[#allocation14 + $0x124] sm:$0xf]
    %v4824 = vld [vmem:[#allocation14 + $0x128] sm:$0xf]
    %v4825 = vld [vmem:[#allocation14 + $0x12c] sm:$0xf]
    %v4826 = vld [vmem:[#allocation14 + $0x130] sm:$0xf]
    %v4827 = vld [vmem:[#allocation14 + $0x134] sm:$0xf]
    %v4828 = vld [vmem:[#allocation14 + $0x138] sm:$0xf]
    %v4829 = vld [vmem:[#allocation14 + $0x13c] sm:$0xf]
    %v4830 = vld [vmem:[#allocation14 + $0x140] sm:$0xf]
    %v4831 = vld [vmem:[#allocation14 + $0x144] sm:$0xf]
    %v4832 = vld [vmem:[#allocation14 + $0x148] sm:$0xf]
    %v4833 = vld [vmem:[#allocation14 + $0x14c] sm:$0xf]
    %v4834 = vld [vmem:[#allocation14 + $0x150] sm:$0xf]
    %v4835 = vld [vmem:[#allocation14 + $0x154] sm:$0xf]
    %v4836 = vld [vmem:[#allocation14 + $0x158] sm:$0xf]
    %v4837 = vld [vmem:[#allocation14 + $0x15c] sm:$0xf]
    %v4838 = vld [vmem:[#allocation14 + $0x160] sm:$0xf]
    %v4839 = vld [vmem:[#allocation14 + $0x164] sm:$0xf]
    %v4840 = vld [vmem:[#allocation14 + $0x168] sm:$0xf]
    %v4841 = vld [vmem:[#allocation14 + $0x16c] sm:$0xf]
    %v4842 = vld [vmem:[#allocation14 + $0x170] sm:$0xf]
    %v4843 = vld [vmem:[#allocation14 + $0x174] sm:$0xf]
    %v4844 = vld [vmem:[#allocation14 + $0x178] sm:$0xf]
    %v4845 = vld [vmem:[#allocation14 + $0x17c] sm:$0xf]
    %v4846 = vld [vmem:[#allocation14 + $0x180] sm:$0xf]
    %v4847 = vld [vmem:[#allocation14 + $0x184] sm:$0xf]
    %v4848 = vld [vmem:[#allocation14 + $0x188] sm:$0xf]
    %v4849 = vld [vmem:[#allocation14 + $0x18c] sm:$0xf]
    %v4850 = vld [vmem:[#allocation14 + $0x190] sm:$0xf]
    %v4851 = vld [vmem:[#allocation14 + $0x194] sm:$0xf]
    %v4852 = vld [vmem:[#allocation14 + $0x198] sm:$0xf]
    %v4853 = vld [vmem:[#allocation14 + $0x19c] sm:$0xf]
    %v4854 = vld [vmem:[#allocation14 + $0x1a0] sm:$0xf]
    %v4855 = vld [vmem:[#allocation14 + $0x1a4] sm:$0xf]
    %v4856 = vld [vmem:[#allocation14 + $0x1a8] sm:$0xf]
    %v4857 = vld [vmem:[#allocation14 + $0x1ac] sm:$0xf]
    %v4858 = vld [vmem:[#allocation14 + $0x1b0] sm:$0xf]
    %v4859 = vld [vmem:[#allocation14 + $0x1b4] sm:$0xf]
    %v4860 = vld [vmem:[#allocation14 + $0x1b8] sm:$0xf]
    %v4861 = vld [vmem:[#allocation14 + $0x1bc] sm:$0xf]
    %v4862 = vld [vmem:[#allocation14 + $0x1c0] sm:$0xf]
    %v4863 = vld [vmem:[#allocation14 + $0x1c4] sm:$0xf]
    %v4864 = vld [vmem:[#allocation14 + $0x1c8] sm:$0xf]
    %v4865 = vld [vmem:[#allocation14 + $0x1cc] sm:$0xf]
    %v4866 = vld [vmem:[#allocation14 + $0x1d0] sm:$0xf]
    %v4867 = vld [vmem:[#allocation14 + $0x1d4] sm:$0xf]
    %v4868 = vld [vmem:[#allocation14 + $0x1d8] sm:$0xf]
    %v4869 = vld [vmem:[#allocation14 + $0x1dc] sm:$0xf]
    %v4870 = vld [vmem:[#allocation14 + $0x1e0] sm:$0xf]
    %v4871 = vld [vmem:[#allocation14 + $0x1e4] sm:$0xf]
    %v4872 = vld [vmem:[#allocation14 + $0x1e8] sm:$0xf]
    %v4873 = vld [vmem:[#allocation14 + $0x1ec] sm:$0xf]
    %v4874 = vld [vmem:[#allocation14 + $0x1f0] sm:$0xf]
    %v4875 = vld [vmem:[#allocation14 + $0x1f4] sm:$0xf]
    %v4876 = vld [vmem:[#allocation14 + $0x1f8] sm:$0xf]
    %v4877 = vld [vmem:[#allocation14 + $0x1fc] sm:$0xf]
    %v4878 = vld [vmem:[#allocation16] sm:$0x1]
    %v4880 = vlaneseq
    %v4881 = vshrl.u32 %v4880, 7
    %v4882 = vsub.s32 0, %v4881
    %v4883 = vrot.slane %v4878, %v4882
    %v5013 = vunpack.c.l.b16 %v4750
    %v5014 = vunpack.c.l.b16 %v4751
    %v5015 = vunpack.c.l.b16 %v4752
    %v5016 = vunpack.c.l.b16 %v4753
    %v5017 = vunpack.c.l.b16 %v4754
    %v5018 = vunpack.c.l.b16 %v4755
    %v5019 = vunpack.c.l.b16 %v4756
    %v5020 = vunpack.c.l.b16 %v4757
    %v5021 = vunpack.c.l.b16 %v4758
    %v5022 = vunpack.c.l.b16 %v4759
    %v5023 = vunpack.c.l.b16 %v4760
    %v5024 = vunpack.c.l.b16 %v4761
    %v5025 = vunpack.c.l.b16 %v4762
    %v5026 = vunpack.c.l.b16 %v4763
    %v5027 = vunpack.c.l.b16 %v4764
    %v5028 = vunpack.c.l.b16 %v4765
    %v5029 = vunpack.c.l.b16 %v4766
    %v5030 = vunpack.c.l.b16 %v4767
    %v5031 = vunpack.c.l.b16 %v4768
    %v5032 = vunpack.c.l.b16 %v4769
    %v5033 = vunpack.c.l.b16 %v4770
    %v5034 = vunpack.c.l.b16 %v4771
    %v5035 = vunpack.c.l.b16 %v4772
    %v5036 = vunpack.c.l.b16 %v4773
    %v5037 = vunpack.c.l.b16 %v4774
    %v5038 = vunpack.c.l.b16 %v4775
    %v5039 = vunpack.c.l.b16 %v4776
    %v5040 = vunpack.c.l.b16 %v4777
    %v5041 = vunpack.c.l.b16 %v4778
    %v5042 = vunpack.c.l.b16 %v4779
    %v5043 = vunpack.c.l.b16 %v4780
    %v5044 = vunpack.c.l.b16 %v4781
    %v5045 = vunpack.c.l.b16 %v4782
    %v5046 = vunpack.c.l.b16 %v4783
    %v5047 = vunpack.c.l.b16 %v4784
    %v5048 = vunpack.c.l.b16 %v4785
    %v5049 = vunpack.c.l.b16 %v4786
    %v5050 = vunpack.c.l.b16 %v4787
    %v5051 = vunpack.c.l.b16 %v4788
    %v5052 = vunpack.c.l.b16 %v4789
    %v5053 = vunpack.c.l.b16 %v4790
    %v5054 = vunpack.c.l.b16 %v4791
    %v5055 = vunpack.c.l.b16 %v4792
    %v5056 = vunpack.c.l.b16 %v4793
    %v5057 = vunpack.c.l.b16 %v4794
    %v5058 = vunpack.c.l.b16 %v4795
    %v5059 = vunpack.c.l.b16 %v4796
    %v5060 = vunpack.c.l.b16 %v4797
    %v5061 = vunpack.c.l.b16 %v4798
    %v5062 = vunpack.c.l.b16 %v4799
    %v5063 = vunpack.c.l.b16 %v4800
    %v5064 = vunpack.c.l.b16 %v4801
    %v5065 = vunpack.c.l.b16 %v4802
    %v5066 = vunpack.c.l.b16 %v4803
    %v5067 = vunpack.c.l.b16 %v4804
    %v5068 = vunpack.c.l.b16 %v4805
    %v5069 = vunpack.c.l.b16 %v4806
    %v5070 = vunpack.c.l.b16 %v4807
    %v5071 = vunpack.c.l.b16 %v4808
    %v5072 = vunpack.c.l.b16 %v4809
    %v5073 = vunpack.c.l.b16 %v4810
    %v5074 = vunpack.c.l.b16 %v4811
    %v5075 = vunpack.c.l.b16 %v4812
    %v5076 = vunpack.c.l.b16 %v4813
    %v5077 = vunpack.c.l.b16 %v4814
    %v5078 = vunpack.c.l.b16 %v4815
    %v5079 = vunpack.c.l.b16 %v4816
    %v5080 = vunpack.c.l.b16 %v4817
    %v5081 = vunpack.c.l.b16 %v4818
    %v5082 = vunpack.c.l.b16 %v4819
    %v5083 = vunpack.c.l.b16 %v4820
    %v5084 = vunpack.c.l.b16 %v4821
    %v5085 = vunpack.c.l.b16 %v4822
    %v5086 = vunpack.c.l.b16 %v4823
    %v5087 = vunpack.c.l.b16 %v4824
    %v5088 = vunpack.c.l.b16 %v4825
    %v5089 = vunpack.c.l.b16 %v4826
    %v5090 = vunpack.c.l.b16 %v4827
    %v5091 = vunpack.c.l.b16 %v4828
    %v5092 = vunpack.c.l.b16 %v4829
    %v5093 = vunpack.c.l.b16 %v4830
    %v5094 = vunpack.c.l.b16 %v4831
    %v5095 = vunpack.c.l.b16 %v4832
    %v5096 = vunpack.c.l.b16 %v4833
    %v5097 = vunpack.c.l.b16 %v4834
    %v5098 = vunpack.c.l.b16 %v4835
    %v5099 = vunpack.c.l.b16 %v4836
    %v5100 = vunpack.c.l.b16 %v4837
    %v5101 = vunpack.c.l.b16 %v4838
    %v5102 = vunpack.c.l.b16 %v4839
    %v5103 = vunpack.c.l.b16 %v4840
    %v5104 = vunpack.c.l.b16 %v4841
    %v5105 = vunpack.c.l.b16 %v4842
    %v5106 = vunpack.c.l.b16 %v4843
    %v5107 = vunpack.c.l.b16 %v4844
    %v5108 = vunpack.c.l.b16 %v4845
    %v5109 = vunpack.c.l.b16 %v4846
    %v5110 = vunpack.c.l.b16 %v4847
    %v5111 = vunpack.c.l.b16 %v4848
    %v5112 = vunpack.c.l.b16 %v4849
    %v5113 = vunpack.c.l.b16 %v4850
    %v5114 = vunpack.c.l.b16 %v4851
    %v5115 = vunpack.c.l.b16 %v4852
    %v5116 = vunpack.c.l.b16 %v4853
    %v5117 = vunpack.c.l.b16 %v4854
    %v5118 = vunpack.c.l.b16 %v4855
    %v5119 = vunpack.c.l.b16 %v4856
    %v5120 = vunpack.c.l.b16 %v4857
    %v5121 = vunpack.c.l.b16 %v4858
    %v5122 = vunpack.c.l.b16 %v4859
    %v5123 = vunpack.c.l.b16 %v4860
    %v5124 = vunpack.c.l.b16 %v4861
    %v5125 = vunpack.c.l.b16 %v4862
    %v5126 = vunpack.c.l.b16 %v4863
    %v5127 = vunpack.c.l.b16 %v4864
    %v5128 = vunpack.c.l.b16 %v4865
    %v5129 = vunpack.c.l.b16 %v4866
    %v5130 = vunpack.c.l.b16 %v4867
    %v5131 = vunpack.c.l.b16 %v4868
    %v5132 = vunpack.c.l.b16 %v4869
    %v5133 = vunpack.c.l.b16 %v4870
    %v5134 = vunpack.c.l.b16 %v4871
    %v5135 = vunpack.c.l.b16 %v4872
    %v5136 = vunpack.c.l.b16 %v4873
    %v5137 = vunpack.c.l.b16 %v4874
    %v5138 = vunpack.c.l.b16 %v4875
    %v5139 = vunpack.c.l.b16 %v4876
    %v5140 = vunpack.c.l.b16 %v4877
    %v5141 = vpack.c.b16 %v5014, %v5013
    %v5142 = vpack.c.b16 %v5016, %v5015
    %v5143 = vpack.c.b16 %v5018, %v5017
    %v5144 = vpack.c.b16 %v5020, %v5019
    %v5145 = vpack.c.b16 %v5022, %v5021
    %v5146 = vpack.c.b16 %v5024, %v5023
    %v5147 = vpack.c.b16 %v5026, %v5025
    %v5148 = vpack.c.b16 %v5028, %v5027
    %v5149 = vpack.c.b16 %v5030, %v5029
    %v5150 = vpack.c.b16 %v5032, %v5031
    %v5151 = vpack.c.b16 %v5034, %v5033
    %v5152 = vpack.c.b16 %v5036, %v5035
    %v5153 = vpack.c.b16 %v5038, %v5037
    %v5154 = vpack.c.b16 %v5040, %v5039
    %v5155 = vpack.c.b16 %v5042, %v5041
    %v5156 = vpack.c.b16 %v5044, %v5043
    %v5157 = vpack.c.b16 %v5046, %v5045
    %v5158 = vpack.c.b16 %v5048, %v5047
    %v5159 = vpack.c.b16 %v5050, %v5049
    %v5160 = vpack.c.b16 %v5052, %v5051
    %v5161 = vpack.c.b16 %v5054, %v5053
    %v5162 = vpack.c.b16 %v5056, %v5055
    %v5163 = vpack.c.b16 %v5058, %v5057
    %v5164 = vpack.c.b16 %v5060, %v5059
    %v5165 = vpack.c.b16 %v5062, %v5061
    %v5166 = vpack.c.b16 %v5064, %v5063
    %v5167 = vpack.c.b16 %v5066, %v5065
    %v5168 = vpack.c.b16 %v5068, %v5067
    %v5169 = vpack.c.b16 %v5070, %v5069
    %v5170 = vpack.c.b16 %v5072, %v5071
    %v5171 = vpack.c.b16 %v5074, %v5073
    %v5172 = vpack.c.b16 %v5076, %v5075
    %v5173 = vpack.c.b16 %v5078, %v5077
    %v5174 = vpack.c.b16 %v5080, %v5079
    %v5175 = vpack.c.b16 %v5082, %v5081
    %v5176 = vpack.c.b16 %v5084, %v5083
    %v5177 = vpack.c.b16 %v5086, %v5085
    %v5178 = vpack.c.b16 %v5088, %v5087
    %v5179 = vpack.c.b16 %v5090, %v5089
    %v5180 = vpack.c.b16 %v5092, %v5091
    %v5181 = vpack.c.b16 %v5094, %v5093
    %v5182 = vpack.c.b16 %v5096, %v5095
    %v5183 = vpack.c.b16 %v5098, %v5097
    %v5184 = vpack.c.b16 %v5100, %v5099
    %v5185 = vpack.c.b16 %v5102, %v5101
    %v5186 = vpack.c.b16 %v5104, %v5103
    %v5187 = vpack.c.b16 %v5106, %v5105
    %v5188 = vpack.c.b16 %v5108, %v5107
    %v5189 = vpack.c.b16 %v5110, %v5109
    %v5190 = vpack.c.b16 %v5112, %v5111
    %v5191 = vpack.c.b16 %v5114, %v5113
    %v5192 = vpack.c.b16 %v5116, %v5115
    %v5193 = vpack.c.b16 %v5118, %v5117
    %v5194 = vpack.c.b16 %v5120, %v5119
    %v5195 = vpack.c.b16 %v5122, %v5121
    %v5196 = vpack.c.b16 %v5124, %v5123
    %v5197 = vpack.c.b16 %v5126, %v5125
    %v5198 = vpack.c.b16 %v5128, %v5127
    %v5199 = vpack.c.b16 %v5130, %v5129
    %v5200 = vpack.c.b16 %v5132, %v5131
    %v5201 = vpack.c.b16 %v5134, %v5133
    %v5202 = vpack.c.b16 %v5136, %v5135
    %v5203 = vpack.c.b16 %v5138, %v5137
    %v5204 = vpack.c.b16 %v5140, %v5139
    %5269 = vmatprep.subr.bf16.mxu0 0
    %5270 = vmatpush1.bf16.msra.mxu0 %v5148
    %5271 = vmatprep.subr.bf16.mxu0 0
    %5272 = vmatpush1.bf16.msra.mxu0 %v5147
    %5273 = vmatprep.subr.bf16.mxu0 0
    %5274 = vmatpush1.bf16.msra.mxu0 %v5146
    %5275 = vmatprep.subr.bf16.mxu0 0
    %5276 = vmatpush1.bf16.msra.mxu0 %v5145
    %5277 = vmatprep.subr.bf16.mxu0 0
    %5278 = vmatpush1.bf16.msra.mxu0 %v5144
    %5279 = vmatprep.subr.bf16.mxu0 0
    %5280 = vmatpush1.bf16.msra.mxu0 %v5143
    %5281 = vmatprep.subr.bf16.mxu0 0
    %5282 = vmatpush1.bf16.msra.mxu0 %v5142
    %5283 = vmatprep.subr.bf16.mxu0 0
    %5284 = vmatpush1.bf16.msra.mxu0 %v5141
    %5285 = vmatprep.subr.bf16.mxu0 0
    %5286 = vmatpush2.bf16.msra.mxu0 %v5156
    %5287 = vmatprep.subr.bf16.mxu0 0
    %5288 = vmatpush2.bf16.msra.mxu0 %v5155
    %5289 = vmatprep.subr.bf16.mxu0 0
    %5290 = vmatpush2.bf16.msra.mxu0 %v5154
    %5291 = vmatprep.subr.bf16.mxu0 0
    %5292 = vmatpush2.bf16.msra.mxu0 %v5153
    %5293 = vmatprep.subr.bf16.mxu0 0
    %5294 = vmatpush2.bf16.msra.mxu0 %v5152
    %5295 = vmatprep.subr.bf16.mxu0 0
    %5296 = vmatpush2.bf16.msra.mxu0 %v5151
    %5297 = vmatprep.subr.bf16.mxu0 0
    %5298 = vmatpush2.bf16.msra.mxu0 %v5150
    %5299 = vmatprep.subr.bf16.mxu0 0
    %5300 = vmatpush2.bf16.msra.mxu0 %v5149
    %5301 = vmatprep.mubr.bf16.mxu0 %v4743
    %5302 = vmatmul.mubr.bf16.gmra.mxu0 %v4742
    %v5303 = vpop.f32.mrf.mxu0
    %v5304 = vadd.f32 %v4883, %v5303
    %v5305 = vpop.f32.mrf.mxu0
    %v5306 = vpop.f32.mrf.mxu0
    %v5307 = vpop.f32.mrf.mxu0
    %5308 = vdwg.mxu0
    %5309 = vmatprep.subr.bf16.mxu0 0
    %5310 = vmatpush1.bf16.msra.mxu0 %v5164
    %5311 = vmatprep.subr.bf16.mxu0 0
    %5312 = vmatpush1.bf16.msra.mxu0 %v5163
    %5313 = vmatprep.subr.bf16.mxu0 0
    %5314 = vmatpush1.bf16.msra.mxu0 %v5162
    %5315 = vmatprep.subr.bf16.mxu0 0
    %5316 = vmatpush1.bf16.msra.mxu0 %v5161
    %5317 = vmatprep.subr.bf16.mxu0 0
    %5318 = vmatpush1.bf16.msra.mxu0 %v5160
    %5319 = vmatprep.subr.bf16.mxu0 0
    %5320 = vmatpush1.bf16.msra.mxu0 %v5159
    %5321 = vmatprep.subr.bf16.mxu0 0
    %5322 = vmatpush1.bf16.msra.mxu0 %v5158
    %5323 = vmatprep.subr.bf16.mxu0 0
    %5324 = vmatpush1.bf16.msra.mxu0 %v5157
    %5325 = vmatprep.subr.bf16.mxu0 0
    %5326 = vmatpush2.bf16.msra.mxu0 %v5172
    %5327 = vmatprep.subr.bf16.mxu0 0
    %5328 = vmatpush2.bf16.msra.mxu0 %v5171
    %5329 = vmatprep.subr.bf16.mxu0 0
    %5330 = vmatpush2.bf16.msra.mxu0 %v5170
    %5331 = vmatprep.subr.bf16.mxu0 0
    %5332 = vmatpush2.bf16.msra.mxu0 %v5169
    %5333 = vmatprep.subr.bf16.mxu0 0
    %5334 = vmatpush2.bf16.msra.mxu0 %v5168
    %5335 = vmatprep.subr.bf16.mxu0 0
    %5336 = vmatpush2.bf16.msra.mxu0 %v5167
    %5337 = vmatprep.subr.bf16.mxu0 0
    %5338 = vmatpush2.bf16.msra.mxu0 %v5166
    %5339 = vmatprep.subr.bf16.mxu0 0
    %5340 = vmatpush2.bf16.msra.mxu0 %v5165
    %5341 = vmatprep.mubr.bf16.mxu0 %v4745
    %5342 = vmatmul.mubr.bf16.gmra.mxu0 %v4744
    %v5343 = vpop.f32.mrf.mxu0
    %v5344 = vadd.f32 %v5304, %v5343
    %v5345 = vpop.f32.mrf.mxu0
    %v5346 = vpop.f32.mrf.mxu0
    %v5347 = vpop.f32.mrf.mxu0
    %5348 = vdwg.mxu0
    %5349 = vmatprep.subr.bf16.mxu0 0
    %5350 = vmatpush1.bf16.msra.mxu0 %v5180
    %5351 = vmatprep.subr.bf16.mxu0 0
    %5352 = vmatpush1.bf16.msra.mxu0 %v5179
    %5353 = vmatprep.subr.bf16.mxu0 0
    %5354 = vmatpush1.bf16.msra.mxu0 %v5178
    %5355 = vmatprep.subr.bf16.mxu0 0
    %5356 = vmatpush1.bf16.msra.mxu0 %v5177
    %5357 = vmatprep.subr.bf16.mxu0 0
    %5358 = vmatpush1.bf16.msra.mxu0 %v5176
    %5359 = vmatprep.subr.bf16.mxu0 0
    %5360 = vmatpush1.bf16.msra.mxu0 %v5175
    %5361 = vmatprep.subr.bf16.mxu0 0
    %5362 = vmatpush1.bf16.msra.mxu0 %v5174
    %5363 = vmatprep.subr.bf16.mxu0 0
    %5364 = vmatpush1.bf16.msra.mxu0 %v5173
    %5365 = vmatprep.subr.bf16.mxu0 0
    %5366 = vmatpush2.bf16.msra.mxu0 %v5188
    %5367 = vmatprep.subr.bf16.mxu0 0
    %5368 = vmatpush2.bf16.msra.mxu0 %v5187
    %5369 = vmatprep.subr.bf16.mxu0 0
    %5370 = vmatpush2.bf16.msra.mxu0 %v5186
    %5371 = vmatprep.subr.bf16.mxu0 0
    %5372 = vmatpush2.bf16.msra.mxu0 %v5185
    %5373 = vmatprep.subr.bf16.mxu0 0
    %5374 = vmatpush2.bf16.msra.mxu0 %v5184
    %5375 = vmatprep.subr.bf16.mxu0 0
    %5376 = vmatpush2.bf16.msra.mxu0 %v5183
    %5377 = vmatprep.subr.bf16.mxu0 0
    %5378 = vmatpush2.bf16.msra.mxu0 %v5182
    %5379 = vmatprep.subr.bf16.mxu0 0
    %5380 = vmatpush2.bf16.msra.mxu0 %v5181
    %5381 = vmatprep.mubr.bf16.mxu0 %v4747
    %5382 = vmatmul.mubr.bf16.gmra.mxu0 %v4746
    %v5383 = vpop.f32.mrf.mxu0
    %v5384 = vadd.f32 %v5344, %v5383
    %v5385 = vpop.f32.mrf.mxu0
    %v5386 = vpop.f32.mrf.mxu0
    %v5387 = vpop.f32.mrf.mxu0
    %5388 = vdwg.mxu0
    %5389 = vmatprep.subr.bf16.mxu0 0
    %5390 = vmatpush1.bf16.msra.mxu0 %v5196
    %5391 = vmatprep.subr.bf16.mxu0 0
    %5392 = vmatpush1.bf16.msra.mxu0 %v5195
    %5393 = vmatprep.subr.bf16.mxu0 0
    %5394 = vmatpush1.bf16.msra.mxu0 %v5194
    %5395 = vmatprep.subr.bf16.mxu0 0
    %5396 = vmatpush1.bf16.msra.mxu0 %v5193
    %5397 = vmatprep.subr.bf16.mxu0 0
    %5398 = vmatpush1.bf16.msra.mxu0 %v5192
    %5399 = vmatprep.subr.bf16.mxu0 0
    %5400 = vmatpush1.bf16.msra.mxu0 %v5191
    %5401 = vmatprep.subr.bf16.mxu0 0
    %5402 = vmatpush1.bf16.msra.mxu0 %v5190
    %5403 = vmatprep.subr.bf16.mxu0 0
    %5404 = vmatpush1.bf16.msra.mxu0 %v5189
    %5405 = vmatprep.subr.bf16.mxu0 0
    %5406 = vmatpush2.bf16.msra.mxu0 %v5204
    %5407 = vmatprep.subr.bf16.mxu0 0
    %5408 = vmatpush2.bf16.msra.mxu0 %v5203
    %5409 = vmatprep.subr.bf16.mxu0 0
    %5410 = vmatpush2.bf16.msra.mxu0 %v5202
    %5411 = vmatprep.subr.bf16.mxu0 0
    %5412 = vmatpush2.bf16.msra.mxu0 %v5201
    %5413 = vmatprep.subr.bf16.mxu0 0
    %5414 = vmatpush2.bf16.msra.mxu0 %v5200
    %5415 = vmatprep.subr.bf16.mxu0 0
    %5416 = vmatpush2.bf16.msra.mxu0 %v5199
    %5417 = vmatprep.subr.bf16.mxu0 0
    %5418 = vmatpush2.bf16.msra.mxu0 %v5198
    %5419 = vmatprep.subr.bf16.mxu0 0
    %5420 = vmatpush2.bf16.msra.mxu0 %v5197
    %5421 = vmatprep.mubr.bf16.mxu0 %v4749
    %5422 = vmatmul.mubr.bf16.gmra.mxu0 %v4748
    %v5423 = vpop.f32.mrf.mxu0
    %v5424 = vadd.f32 %v5384, %v5423
    %v5425 = vpop.f32.mrf.mxu0
    %v5426 = vpop.f32.mrf.mxu0
    %v5427 = vpop.f32.mrf.mxu0
    %5428 = vdwg.mxu0
    %5429 = vst [vmem:[#allocation17] sm:$0xff] %v5424
    // Predicated region
    $region74: #{tpu_custom_call.1} parent=1 // pred_check
      _
    $region75: #{tpu_custom_call.1} parent=1 // pred_check_branch
      %5431 = sbr.rel (0) target = $region77
    $region76: #{tpu_custom_call.1} parent=1 // pred_region
      %s5433 = ssub.s32 128, 128
      %5434 = vsyncadd [#allocation4], %s5433
      %s5436 = sshll.u32 [#allocation17], 4
      %s5437 = int_to_ptr.vmem [resolvable:$true] %s5436
      %5439 = dma.vmem_to_hbm [thread:$0]  %s5437, 128, %s9, [#allocation4]
    $region77: #{tpu_custom_call.1} parent=1 // pred_fallthru
      _
    // Predicated region
    $region78: #{tpu_custom_call.1} parent=1 // pred_check
      _
    $region79: #{tpu_custom_call.1} parent=1 // pred_check_branch
      %5441 = sbr.rel (0) target = $region81
    $region80: #{tpu_custom_call.1} parent=1 // pred_region
      %5442 = dma.done [#allocation4], 128
    $region81: #{tpu_custom_call.1} parent=1 // pred_fallthru
      _
    %5443 = vsyncpa [#allocation3], 1
    %5444 = vsyncpa [#allocation6], 1
    %5445 = vsyncpa [#allocation9], 1
    %5446 = vsyncpa [#allocation12], 1
    %5447 = vsyncpa [#allocation15], 1
    %5448 = vsyncpa [#allocation4], 1

</llo_original>
